<compile_context>
chip_gen: v7x
topology: tpu7x:2x2x1
jax: 0.10.0
libtpu: 0.0.40
codegen_flags: <defaults>
</compile_context>

<pallas_src>
import functools

import jax
import jax.numpy as jnp
from jax.experimental import pallas as pl
from jax.experimental.pallas import tpu as pltpu

C = 62           # channels
L = 5            # spatial length (conv2 k=5 forces L == 5 for the matmul)
CL = C * L       # 310 flat width
CLP = 384        # flat width padded to 3 * 128 lanes
WN = 133         # fused-weight cols: 0:62 conv2, 128:133 conv1 (vreg-aligned)
EPS = 1e-5


def _round_up(n, m):
    return ((n + m - 1) // m) * m


# --------------------------------------------------------------------------- #
# Kernels
# --------------------------------------------------------------------------- #
def _stats_kernel(xf_ref, wf_ref, pk_ref, st_ref, *, batch, tile_b):
    """Pass 1: fused conv matmul per B tile; accumulate BN sum / sum-of-squares.

    xf_ref : (TB, 384)  input tile, flat NCL layout, zero-padded rows/cols
    wf_ref : (384, 133) fused conv weights (resident)
    pk_ref : (8, 128)   packed params (resident): rows 0-2 b2/g2/bt2 (62 lanes),
                        rows 3-5 b1/g1/bt1 replicated over 5 lanes
    st_ref : (8, 128)   accumulator: row0 sum2, row1 sumsq2 (62 lanes),
                        row2 sum1, row3 sumsq1 (5 lanes)
    """
    t = pl.program_id(0)

    @pl.when(t == 0)
    def _():
        st_ref[...] = jnp.zeros_like(st_ref)

    fused = jnp.dot(xf_ref[...], wf_ref[...],
                    preferred_element_type=jnp.float32,
                    precision=jax.lax.Precision.HIGHEST)          # (TB, 133)
    out2 = fused[:, 0:C] + pk_ref[0:1, 0:C]                       # (TB, 62)
    out1 = fused[:, 128:128 + L] + pk_ref[3:4, 0:L]               # (TB, 5)

    # Mask batch-padding rows out of the statistics.
    row = jax.lax.broadcasted_iota(jnp.int32, (tile_b, 1), 0) + t * tile_b
    valid = (row < batch).astype(jnp.float32)                     # (TB, 1)
    o2 = out2 * valid
    o1 = out1 * valid

    st_ref[0:1, 0:C] += jnp.sum(o2, axis=0, keepdims=True)
    st_ref[1:2, 0:C] += jnp.sum(o2 * out2, axis=0, keepdims=True)
    st_ref[2:3, 0:L] += jnp.sum(o1, axis=0, keepdims=True)
    st_ref[3:4, 0:L] += jnp.sum(o1 * out1, axis=0, keepdims=True)


def _apply_kernel(xf_ref, wf_ref, pk_ref, e2_ref, st_ref, o_ref, *, batch):
    """Pass 2: recompute convs per tile, apply training-mode BN + relu,
    expand to the flat layout and multiply with the input."""
    inv_n2 = 1.0 / float(batch)          # bn2: per-channel stats over B
    inv_n1 = 1.0 / float(batch * L)      # bn1: single channel, stats over B*L

    xt = xf_ref[...]                                              # (TB, 384)
    fused = jnp.dot(xt, wf_ref[...],
                    preferred_element_type=jnp.float32,
                    precision=jax.lax.Precision.HIGHEST)          # (TB, 133)
    out2 = fused[:, 0:C] + pk_ref[0:1, 0:C]                       # (TB, 62)
    out1 = fused[:, 128:128 + L] + pk_ref[3:4, 0:L]               # (TB, 5)

    # bn2 (biased variance, training mode) + relu.
    mean2 = st_ref[0:1, 0:C] * inv_n2                             # (1, 62)
    var2 = jnp.maximum(st_ref[1:2, 0:C] * inv_n2 - mean2 * mean2, 0.0)
    scale2 = pk_ref[1:2, 0:C] * jax.lax.rsqrt(var2 + EPS)
    shift2 = pk_ref[2:3, 0:C] - mean2 * scale2
    y2 = jnp.maximum(out2 * scale2 + shift2, 0.0)                 # (TB, 62)

    # bn1 + relu.
    sum1 = jnp.sum(st_ref[2:3, 0:L], axis=1, keepdims=True)       # (1, 1)
    ssq1 = jnp.sum(st_ref[3:4, 0:L], axis=1, keepdims=True)       # (1, 1)
    mean1 = sum1 * inv_n1
    var1 = jnp.maximum(ssq1 * inv_n1 - mean1 * mean1, 0.0)
    scale1 = pk_ref[4:5, 0:L] * jax.lax.rsqrt(var1 + EPS)         # (1, 5)
    shift1 = pk_ref[5:6, 0:L] - mean1 * scale1
    y1 = jnp.maximum(out1 * scale1 + shift1, 0.0)                 # (TB, 5)

    # Lane-dense broadcasts: o[b, c*L + l] = xf[b, c*L + l] * y2[b, c] * y1[b, l].
    # E1[c, j] = (c*L <= j < c*L + L) generated in-kernel (iota + compares only,
    # no HBM traffic); the tiny E2 (j % L == l) ships as a resident constant.
    jj = jax.lax.broadcasted_iota(jnp.int32, (C, CLP), 1)
    cc = jax.lax.broadcasted_iota(jnp.int32, (C, CLP), 0) * L
    e1 = ((jj >= cc) & (jj < cc + L)).astype(jnp.float32)         # (62, 384)

    y2f = jnp.dot(y2, e1, preferred_element_type=jnp.float32,
                  precision=jax.lax.Precision.HIGHEST)            # (TB, 384)
    y1f = jnp.dot(y1, e2_ref[...], preferred_element_type=jnp.float32,
                  precision=jax.lax.Precision.HIGHEST)            # (TB, 384)

    o_ref[...] = xt * y2f * y1f


# --------------------------------------------------------------------------- #
# Wrapper
# --------------------------------------------------------------------------- #
def prepare_params(params):
    """Build kernel-side constant operands ONCE (hoisted out of the forward)."""
    w1, b1, g1, bt1, w2, b2, g2, bt2 = params

    # Fused conv weight (384, 133): cols 0:62 = conv2 (flattened, transposed),
    # cols 128:133 = conv1 scattered at rows c*L + l (vreg-aligned slices).
    w2t = w2.reshape(C, CL).T.astype(jnp.float32)                 # (310, 62)
    w1v = w1.reshape(C).astype(jnp.float32)                       # (62,)
    rows = jnp.arange(CL)
    wf = jnp.zeros((CLP, WN), jnp.float32)
    wf = wf.at[:CL, :C].set(w2t)
    wf = wf.at[rows, 128 + rows % L].set(w1v[rows // L])

    # Packed per-channel / scalar parameters (8, 128).
    pk = jnp.zeros((8, 128), jnp.float32)
    pk = pk.at[0, :C].set(b2.astype(jnp.float32))
    pk = pk.at[1, :C].set(g2.astype(jnp.float32))
    pk = pk.at[2, :C].set(bt2.astype(jnp.float32))
    pk = pk.at[3, :L].set(jnp.full((L,), b1[0], jnp.float32))
    pk = pk.at[4, :L].set(jnp.full((L,), g1[0], jnp.float32))
    pk = pk.at[5, :L].set(jnp.full((L,), bt1[0], jnp.float32))

    # One-hot expander E2[l, j] = (j % L == l), (5, 384).
    j = jnp.arange(CLP)
    e2 = (j[None, :] % L == jnp.arange(L)[:, None]).astype(jnp.float32)
    return wf, pk, e2


def attention_forward(x, wf, pk, e2, *, tile_b=512):
    """x: (B, 62, 5) float32, NCL layout. Returns (B, 62, 5) float32."""
    B = x.shape[0]
    assert x.shape[1:] == (C, L), "module semantics require (B, 62, 5) input"
    assert B > 1, "training-mode BatchNorm needs more than one sample"

    TB = _round_up(min(tile_b, _round_up(B, 8)), 8)   # rows per tile
    Bp = _round_up(B, TB)                             # padded batch
    nt = Bp // TB                                     # grid size

    xf = x.reshape(B, CL).astype(jnp.float32)
    xf = jnp.pad(xf, ((0, Bp - B), (0, CLP - CL)))    # (Bp, 384), zero-padded

    xf_spec = pl.BlockSpec((TB, CLP), lambda t: (t, 0))
    wf_spec = pl.BlockSpec((CLP, WN), lambda t: (0, 0))
    pk_spec = pl.BlockSpec((8, 128), lambda t: (0, 0))
    e2_spec = pl.BlockSpec((L, CLP), lambda t: (0, 0))
    st_spec = pl.BlockSpec((8, 128), lambda t: (0, 0))

    wbytes = (CLP * WN + 8 * 128 + L * CLP) * 4

    # Pass 1: BN batch statistics, accumulated across B tiles into one
    # resident (8, 128) output block ("arbitrary" reduction axis).
    stats = pl.pallas_call(
        functools.partial(_stats_kernel, batch=B, tile_b=TB),
        grid=(nt,),
        in_specs=[xf_spec, wf_spec, pk_spec],
        out_specs=st_spec,
        out_shape=jax.ShapeDtypeStruct((8, 128), jnp.float32),
        compiler_params=pltpu.CompilerParams(
            dimension_semantics=("arbitrary",)),
        cost_estimate=pl.CostEstimate(
            flops=int(2 * Bp * CLP * WN + 6 * Bp * (C + L)),
            transcendentals=0,
            bytes_accessed=int(Bp * CLP * 4 + wbytes + 8 * 128 * 4)),
    )(xf, wf, pk)

    # Pass 2: per-tile conv recompute + BN apply + expansion + elementwise.
    # Tiles are independent -> "parallel" (sharded across both TCs on v7x).
    out_flat = pl.pallas_call(
        functools.partial(_apply_kernel, batch=B),
        grid=(nt,),
        in_specs=[xf_spec, wf_spec, pk_spec, e2_spec, st_spec],
        out_specs=xf_spec,
        out_shape=jax.ShapeDtypeStruct((Bp, CLP), jnp.float32),
        compiler_params=pltpu.CompilerParams(
            dimension_semantics=("parallel",)),
        cost_estimate=pl.CostEstimate(
            flops=int(2 * Bp * CLP * (WN + C + L) + 12 * Bp * CLP),
            transcendentals=2 * nt,
            bytes_accessed=int(2 * Bp * CLP * 4 + wbytes + 2 * 8 * 128 * 4)),
    )(xf, wf, pk, e2, stats)

    return out_flat[:B, :CL].reshape(B, C, L)


# --------------------------------------------------------------------------- #
# Init + pure-JAX reference
# --------------------------------------------------------------------------- #
def init_params(key):
    """Deterministic, PyTorch-default-style init."""
    K = 5
    k1, k2, k3, k4 = jax.random.split(key, 4)
    bound1 = 1.0 / jnp.sqrt(C * 1.0)       # conv1 fan_in = 62*1
    bound2 = 1.0 / jnp.sqrt(C * K * 1.0)   # conv2 fan_in = 62*5
    w1 = jax.random.uniform(k1, (1, C, 1), jnp.float32, -bound1, bound1)
    b1 = jax.random.uniform(k2, (1,), jnp.float32, -bound1, bound1)
    w2 = jax.random.uniform(k3, (C, C, K), jnp.float32, -bound2, bound2)
    b2 = jax.random.uniform(k4, (C,), jnp.float32, -bound2, bound2)
    g1, bt1 = jnp.ones((1,), jnp.float32), jnp.zeros((1,), jnp.float32)   # bn1
    g2, bt2 = jnp.ones((C,), jnp.float32), jnp.zeros((C,), jnp.float32)   # bn2
    return (w1, b1, g1, bt1, w2, b2, g2, bt2)


def attention_reference(x, params):
    """Pure-JAX reference of the same PyTorch forward (training-mode BN)."""
    w1, b1, g1, bt1, w2, b2, g2, bt2 = params
    eps = 1e-5
    # conv1 (k=1) -> (B, 1, L)
    out1 = jnp.einsum('bcl,oc->bol', x, w1[:, :, 0]) + b1[None, :, None]
    m1 = jnp.mean(out1, axis=(0, 2), keepdims=True)
    v1 = jnp.mean(jnp.square(out1 - m1), axis=(0, 2), keepdims=True)
    x1 = jax.nn.relu((out1 - m1) / jnp.sqrt(v1 + eps) * g1[None, :, None]
                     + bt1[None, :, None])
    # conv2 (k=5, L=5) -> (B, C, 1)
    out2 = jnp.einsum('bck,ock->bo', x, w2) + b2[None, :]
    out2 = out2[:, :, None]
    m2 = jnp.mean(out2, axis=(0, 2), keepdims=True)
    v2 = jnp.mean(jnp.square(out2 - m2), axis=(0, 2), keepdims=True)
    x2 = jax.nn.relu((out2 - m2) / jnp.sqrt(v2 + eps) * g2[None, :, None]
                     + bt2[None, :, None])
    x_ = jnp.matmul(x2, x1)                       # (B, C, L)
    return x * x_


if __name__ == "__main__":
    key = jax.random.PRNGKey(0)
    kx, kp, kx2 = jax.random.split(key, 3)
    params = init_params(kp)
    wf, pk, e2 = prepare_params(params)            # built once, reused per call

    fwd = jax.jit(attention_forward, static_argnames=("tile_b",))

    # Small-shape example (B=2): single 8-row tile, padded rows masked in stats.
    B = 2
    x = jax.random.normal(kx, (B, C, L), jnp.float32)
    out = jax.block_until_ready(fwd(x, wf, pk, e2))
    ref = attention_reference(x, params)
    assert out.shape == (B, C, L)
    # HIGHEST-precision MXU keeps the error ~1e-5; margin left for the
    # rsqrt(var+eps) amplification when the batch variance is tiny.
    assert jnp.allclose(out, ref, atol=1e-3, rtol=1e-3), "mismatch vs reference (B=2)"

    # Multi-tile path: 3 tiles of 128 rows, last tile partially masked.
    B2 = 300
    x2 = jax.random.normal(kx2, (B2, C, L), jnp.float32)
    out2 = jax.block_until_ready(fwd(x2, wf, pk, e2, tile_b=128))
    ref2 = attention_reference(x2, params)
    assert jnp.allclose(out2, ref2, atol=1e-3, rtol=1e-3), "mismatch vs reference (B=300)"

    print("KERNEL_OK")
</pallas_src>

<mosaic_0001>
module attributes {stable_mosaic.version = 11 : i64} {
  func.func @_stats_kernel(%arg0: i32, %arg1: memref<8x384xf32, #tpu.memory_space<vmem>>, %arg2: memref<384x133xf32, #tpu.memory_space<vmem>>, %arg3: memref<8x128xf32, #tpu.memory_space<vmem>>, %arg4: memref<8x128xf32, #tpu.memory_space<vmem>>) attributes {dimension_semantics = [#tpu.dimension_semantics<arbitrary>], iteration_bounds = array<i64: 1>, scalar_prefetch = 0 : i64, scratch_operands = 0 : i64, tpu.core_type = #tpu.core_type<tc>, window_params = [{transform_indices = @transform_0, window_bounds = array<i64: 8, 384>}, {pipeline_mode = #tpu.pipeline_mode<synchronous>, transform_indices = @transform_1, window_bounds = array<i64: 384, 133>}, {pipeline_mode = #tpu.pipeline_mode<synchronous>, transform_indices = @transform_2, window_bounds = array<i64: 8, 128>}, {pipeline_mode = #tpu.pipeline_mode<synchronous>, transform_indices = @transform_3, window_bounds = array<i64: 8, 128>}]} {
    %c0_i32 = arith.constant 0 : i32
    %0 = arith.cmpi eq, %arg0, %c0_i32 : i32
    %1 = arith.extui %0 : i1 to i32
    %c0_i32_0 = arith.constant 0 : i32
    %2 = arith.cmpi ne, %1, %c0_i32_0 : i32
    scf.if %2 {
      %cst_25 = arith.constant 0.000000e+00 : f32
      %48 = vector.broadcast %cst_25 : f32 to vector<8x128xf32>
      %c0_26 = arith.constant 0 : index
      %c0_27 = arith.constant 0 : index
      %49 = vector.load %arg4[%c0_26, %c0_27] : memref<8x128xf32, #tpu.memory_space<vmem>>, vector<8x128xf32>
      tpu.vector_store %arg4[%c0_26, %c0_27], %48 {strides = array<i32>} : memref<8x128xf32, #tpu.memory_space<vmem>>, vector<8x128xf32>,
    } else {
    }
    %c0 = arith.constant 0 : index
    %c0_1 = arith.constant 0 : index
    %3 = vector.load %arg1[%c0, %c0_1] : memref<8x384xf32, #tpu.memory_space<vmem>>, vector<8x384xf32>
    %c0_2 = arith.constant 0 : index
    %c0_3 = arith.constant 0 : index
    %4 = vector.load %arg2[%c0_2, %c0_3] : memref<384x133xf32, #tpu.memory_space<vmem>>, vector<384x133xf32>
    %cst = arith.constant dense<0.000000e+00> : vector<8x133xf32>
    %5 = tpu.matmul %3, %4, %cst {dimension_numbers = #tpu.dot_dimension_numbers<[1], [0], [0], [1], [0, 0, 1, 1], [], []>, precision = #tpu.contract_precision<fp32>} : vector<8x384xf32>, vector<384x133xf32>, vector<8x133xf32> -> vector<8x133xf32>
    %6 = vector.extract_strided_slice %5 {offsets = [0, 0], sizes = [8, 62], strides = [1, 1]} : vector<8x133xf32> to vector<8x62xf32>
    %c0_4 = arith.constant 0 : index
    %c0_5 = arith.constant 0 : index
    %7 = vector.load %arg3[%c0_4, %c0_5] : memref<8x128xf32, #tpu.memory_space<vmem>>, vector<1x62xf32>
    %8 = vector.broadcast %7 : vector<1x62xf32> to vector<8x62xf32>
    %9 = arith.addf %6, %8 : vector<8x62xf32>
    %10 = vector.extract_strided_slice %5 {offsets = [0, 128], sizes = [8, 5], strides = [1, 1]} : vector<8x133xf32> to vector<8x5xf32>
    %c3 = arith.constant 3 : index
    %c0_6 = arith.constant 0 : index
    %11 = vector.load %arg3[%c3, %c0_6] : memref<8x128xf32, #tpu.memory_space<vmem>>, vector<1x5xf32>
    %12 = vector.broadcast %11 : vector<1x5xf32> to vector<8x5xf32>
    %13 = arith.addf %10, %12 : vector<8x5xf32>
    %14 = tpu.iota {dimensions = array<i32: 0>} : vector<8x1xi32>
    %c8_i32 = arith.constant 8 : i32
    %15 = arith.muli %arg0, %c8_i32 : i32
    %16 = vector.broadcast %15 : i32 to vector<8x1xi32>
    %17 = arith.addi %14, %16 : vector<8x1xi32>
    %c2_i32 = arith.constant 2 : i32
    %18 = vector.broadcast %c2_i32 : i32 to vector<8x1xi32>
    %19 = arith.cmpi slt, %17, %18 : vector<8x1xi32>
    %20 = arith.extui %19 : vector<8x1xi1> to vector<8x1xi32>
    %21 = arith.sitofp %20 : vector<8x1xi32> to vector<8x1xf32>
    %22 = vector.broadcast %21 : vector<8x1xf32> to vector<8x62xf32>
    %23 = arith.mulf %9, %22 : vector<8x62xf32>
    %24 = vector.broadcast %21 : vector<8x1xf32> to vector<8x5xf32>
    %25 = arith.mulf %13, %24 : vector<8x5xf32>
    %c0_7 = arith.constant 0 : index
    %c0_8 = arith.constant 0 : index
    %26 = vector.load %arg4[%c0_7, %c0_8] : memref<8x128xf32, #tpu.memory_space<vmem>>, vector<1x62xf32>
    %cst_9 = arith.constant dense<0.000000e+00> : vector<62xf32>
    %27 = vector.multi_reduction <add>, %23, %cst_9 [0] : vector<8x62xf32> to vector<62xf32>
    %28 = vector.shape_cast %27 : vector<62xf32> to vector<1x62xf32>
    %29 = arith.addf %26, %28 : vector<1x62xf32>
    %c0_10 = arith.constant 0 : index
    %c0_11 = arith.constant 0 : index
    %30 = vector.load %arg4[%c0_10, %c0_11] : memref<8x128xf32, #tpu.memory_space<vmem>>, vector<1x62xf32>
    tpu.vector_store %arg4[%c0_10, %c0_11], %29 {strides = array<i32>} : memref<8x128xf32, #tpu.memory_space<vmem>>, vector<1x62xf32>,
    %c1 = arith.constant 1 : index
    %c0_12 = arith.constant 0 : index
    %31 = vector.load %arg4[%c1, %c0_12] : memref<8x128xf32, #tpu.memory_space<vmem>>, vector<1x62xf32>
    %32 = arith.mulf %23, %9 : vector<8x62xf32>
    %cst_13 = arith.constant dense<0.000000e+00> : vector<62xf32>
    %33 = vector.multi_reduction <add>, %32, %cst_13 [0] : vector<8x62xf32> to vector<62xf32>
    %34 = vector.shape_cast %33 : vector<62xf32> to vector<1x62xf32>
    %35 = arith.addf %31, %34 : vector<1x62xf32>
    %c1_14 = arith.constant 1 : index
    %c0_15 = arith.constant 0 : index
    %36 = vector.load %arg4[%c1_14, %c0_15] : memref<8x128xf32, #tpu.memory_space<vmem>>, vector<1x62xf32>
    tpu.vector_store %arg4[%c1_14, %c0_15], %35 {strides = array<i32>} : memref<8x128xf32, #tpu.memory_space<vmem>>, vector<1x62xf32>,
    %c2 = arith.constant 2 : index
    %c0_16 = arith.constant 0 : index
    %37 = vector.load %arg4[%c2, %c0_16] : memref<8x128xf32, #tpu.memory_space<vmem>>, vector<1x5xf32>
    %cst_17 = arith.constant dense<0.000000e+00> : vector<5xf32>
    %38 = vector.multi_reduction <add>, %25, %cst_17 [0] : vector<8x5xf32> to vector<5xf32>
    %39 = vector.shape_cast %38 : vector<5xf32> to vector<1x5xf32>
    %40 = arith.addf %37, %39 : vector<1x5xf32>
    %c2_18 = arith.constant 2 : index
    %c0_19 = arith.constant 0 : index
    %41 = vector.load %arg4[%c2_18, %c0_19] : memref<8x128xf32, #tpu.memory_space<vmem>>, vector<1x5xf32>
    tpu.vector_store %arg4[%c2_18, %c0_19], %40 {strides = array<i32>} : memref<8x128xf32, #tpu.memory_space<vmem>>, vector<1x5xf32>,
    %c3_20 = arith.constant 3 : index
    %c0_21 = arith.constant 0 : index
    %42 = vector.load %arg4[%c3_20, %c0_21] : memref<8x128xf32, #tpu.memory_space<vmem>>, vector<1x5xf32>
    %43 = arith.mulf %25, %13 : vector<8x5xf32>
    %cst_22 = arith.constant dense<0.000000e+00> : vector<5xf32>
    %44 = vector.multi_reduction <add>, %43, %cst_22 [0] : vector<8x5xf32> to vector<5xf32>
    %45 = vector.shape_cast %44 : vector<5xf32> to vector<1x5xf32>
    %46 = arith.addf %42, %45 : vector<1x5xf32>
    %c3_23 = arith.constant 3 : index
    %c0_24 = arith.constant 0 : index
    %47 = vector.load %arg4[%c3_23, %c0_24] : memref<8x128xf32, #tpu.memory_space<vmem>>, vector<1x5xf32>
    tpu.vector_store %arg4[%c3_23, %c0_24], %46 {strides = array<i32>} : memref<8x128xf32, #tpu.memory_space<vmem>>, vector<1x5xf32>,
    return
  }
  func.func @transform_0(%arg0: i32) -> (i32, i32) {
    %c0_i32 = arith.constant 0 : i32
    %c0_i32_0 = arith.constant 0 : i32
    return %arg0, %c0_i32 : i32, i32
  }
  func.func @transform_1(%arg0: i32) -> (i32, i32) {
    %c0_i32 = arith.constant 0 : i32
    %c0_i32_0 = arith.constant 0 : i32
    %c0_i32_1 = arith.constant 0 : i32
    return %c0_i32, %c0_i32_0 : i32, i32
  }
  func.func @transform_2(%arg0: i32) -> (i32, i32) {
    %c0_i32 = arith.constant 0 : i32
    %c0_i32_0 = arith.constant 0 : i32
    %c0_i32_1 = arith.constant 0 : i32
    return %c0_i32, %c0_i32_0 : i32, i32
  }
  func.func @transform_3(%arg0: i32) -> (i32, i32) {
    %c0_i32 = arith.constant 0 : i32
    %c0_i32_0 = arith.constant 0 : i32
    %c0_i32_1 = arith.constant 0 : i32
    return %c0_i32, %c0_i32_0 : i32, i32
  }
}

module attributes {stable_mosaic.version = 11 : i64} {
  func.func @_apply_kernel(%arg0: i32, %arg1: memref<8x384xf32, #tpu.memory_space<vmem>>, %arg2: memref<384x133xf32, #tpu.memory_space<vmem>>, %arg3: memref<8x128xf32, #tpu.memory_space<vmem>>, %arg4: memref<5x384xf32, #tpu.memory_space<vmem>>, %arg5: memref<8x128xf32, #tpu.memory_space<vmem>>, %arg6: memref<8x384xf32, #tpu.memory_space<vmem>>) attributes {dimension_semantics = [#tpu.dimension_semantics<parallel>], iteration_bounds = array<i64: 1>, scalar_prefetch = 0 : i64, scratch_operands = 0 : i64, tpu.core_type = #tpu.core_type<tc>, window_params = [{transform_indices = @transform_0, window_bounds = array<i64: 8, 384>}, {pipeline_mode = #tpu.pipeline_mode<synchronous>, transform_indices = @transform_1, window_bounds = array<i64: 384, 133>}, {pipeline_mode = #tpu.pipeline_mode<synchronous>, transform_indices = @transform_2, window_bounds = array<i64: 8, 128>}, {pipeline_mode = #tpu.pipeline_mode<synchronous>, transform_indices = @transform_3, window_bounds = array<i64: 5, 384>}, {pipeline_mode = #tpu.pipeline_mode<synchronous>, transform_indices = @transform_4, window_bounds = array<i64: 8, 128>}, {transform_indices = @transform_5, window_bounds = array<i64: 8, 384>}]} {
    %c0 = arith.constant 0 : index
    %c0_0 = arith.constant 0 : index
    %0 = vector.load %arg1[%c0, %c0_0] : memref<8x384xf32, #tpu.memory_space<vmem>>, vector<8x384xf32>
    %c0_1 = arith.constant 0 : index
    %c0_2 = arith.constant 0 : index
    %1 = vector.load %arg2[%c0_1, %c0_2] : memref<384x133xf32, #tpu.memory_space<vmem>>, vector<384x133xf32>
    %cst = arith.constant dense<0.000000e+00> : vector<8x133xf32>
    %2 = tpu.matmul %0, %1, %cst {dimension_numbers = #tpu.dot_dimension_numbers<[1], [0], [0], [1], [0, 0, 1, 1], [], []>, precision = #tpu.contract_precision<fp32>} : vector<8x384xf32>, vector<384x133xf32>, vector<8x133xf32> -> vector<8x133xf32>
    %3 = vector.extract_strided_slice %2 {offsets = [0, 0], sizes = [8, 62], strides = [1, 1]} : vector<8x133xf32> to vector<8x62xf32>
    %c0_3 = arith.constant 0 : index
    %c0_4 = arith.constant 0 : index
    %4 = vector.load %arg3[%c0_3, %c0_4] : memref<8x128xf32, #tpu.memory_space<vmem>>, vector<1x62xf32>
    %5 = vector.broadcast %4 : vector<1x62xf32> to vector<8x62xf32>
    %6 = arith.addf %3, %5 : vector<8x62xf32>
    %7 = vector.extract_strided_slice %2 {offsets = [0, 128], sizes = [8, 5], strides = [1, 1]} : vector<8x133xf32> to vector<8x5xf32>
    %c3 = arith.constant 3 : index
    %c0_5 = arith.constant 0 : index
    %8 = vector.load %arg3[%c3, %c0_5] : memref<8x128xf32, #tpu.memory_space<vmem>>, vector<1x5xf32>
    %9 = vector.broadcast %8 : vector<1x5xf32> to vector<8x5xf32>
    %10 = arith.addf %7, %9 : vector<8x5xf32>
    %c0_6 = arith.constant 0 : index
    %c0_7 = arith.constant 0 : index
    %11 = vector.load %arg5[%c0_6, %c0_7] : memref<8x128xf32, #tpu.memory_space<vmem>>, vector<1x62xf32>
    %cst_8 = arith.constant 5.000000e-01 : f32
    %12 = vector.broadcast %cst_8 : f32 to vector<1x62xf32>
    %13 = arith.mulf %11, %12 : vector<1x62xf32>
    %c1 = arith.constant 1 : index
    %c0_9 = arith.constant 0 : index
    %14 = vector.load %arg5[%c1, %c0_9] : memref<8x128xf32, #tpu.memory_space<vmem>>, vector<1x62xf32>
    %cst_10 = arith.constant 5.000000e-01 : f32
    %15 = vector.broadcast %cst_10 : f32 to vector<1x62xf32>
    %16 = arith.mulf %14, %15 : vector<1x62xf32>
    %17 = arith.mulf %13, %13 : vector<1x62xf32>
    %18 = arith.subf %16, %17 : vector<1x62xf32>
    %cst_11 = arith.constant 0.000000e+00 : f32
    %19 = vector.broadcast %cst_11 : f32 to vector<1x62xf32>
    %20 = arith.maximumf %18, %19 : vector<1x62xf32>
    %c1_12 = arith.constant 1 : index
    %c0_13 = arith.constant 0 : index
    %21 = vector.load %arg3[%c1_12, %c0_13] : memref<8x128xf32, #tpu.memory_space<vmem>>, vector<1x62xf32>
    %cst_14 = arith.constant 9.99999974E-6 : f32
    %22 = vector.broadcast %cst_14 : f32 to vector<1x62xf32>
    %23 = arith.addf %20, %22 : vector<1x62xf32>
    %24 = math.rsqrt %23 : vector<1x62xf32>
    %25 = arith.mulf %21, %24 : vector<1x62xf32>
    %c2 = arith.constant 2 : index
    %c0_15 = arith.constant 0 : index
    %26 = vector.load %arg3[%c2, %c0_15] : memref<8x128xf32, #tpu.memory_space<vmem>>, vector<1x62xf32>
    %27 = arith.mulf %13, %25 : vector<1x62xf32>
    %28 = arith.subf %26, %27 : vector<1x62xf32>
    %29 = vector.broadcast %25 : vector<1x62xf32> to vector<8x62xf32>
    %30 = arith.mulf %6, %29 : vector<8x62xf32>
    %31 = vector.broadcast %28 : vector<1x62xf32> to vector<8x62xf32>
    %32 = arith.addf %30, %31 : vector<8x62xf32>
    %cst_16 = arith.constant 0.000000e+00 : f32
    %33 = vector.broadcast %cst_16 : f32 to vector<8x62xf32>
    %34 = arith.maximumf %32, %33 : vector<8x62xf32>
    %c2_17 = arith.constant 2 : index
    %c0_18 = arith.constant 0 : index
    %35 = vector.load %arg5[%c2_17, %c0_18] : memref<8x128xf32, #tpu.memory_space<vmem>>, vector<1x5xf32>
    %cst_19 = arith.constant dense<0.000000e+00> : vector<1xf32>
    %36 = vector.multi_reduction <add>, %35, %cst_19 [1] : vector<1x5xf32> to vector<1xf32>
    %37 = vector.shape_cast %36 : vector<1xf32> to vector<1x1xf32>
    %c3_20 = arith.constant 3 : index
    %c0_21 = arith.constant 0 : index
    %38 = vector.load %arg5[%c3_20, %c0_21] : memref<8x128xf32, #tpu.memory_space<vmem>>, vector<1x5xf32>
    %cst_22 = arith.constant dense<0.000000e+00> : vector<1xf32>
    %39 = vector.multi_reduction <add>, %38, %cst_22 [1] : vector<1x5xf32> to vector<1xf32>
    %40 = vector.shape_cast %39 : vector<1xf32> to vector<1x1xf32>
    %cst_23 = arith.constant 1.000000e-01 : f32
    %41 = vector.broadcast %cst_23 : f32 to vector<1x1xf32>
    %42 = arith.mulf %37, %41 : vector<1x1xf32>
    %cst_24 = arith.constant 1.000000e-01 : f32
    %43 = vector.broadcast %cst_24 : f32 to vector<1x1xf32>
    %44 = arith.mulf %40, %43 : vector<1x1xf32>
    %45 = arith.mulf %42, %42 : vector<1x1xf32>
    %46 = arith.subf %44, %45 : vector<1x1xf32>
    %cst_25 = arith.constant 0.000000e+00 : f32
    %47 = vector.broadcast %cst_25 : f32 to vector<1x1xf32>
    %48 = arith.maximumf %46, %47 : vector<1x1xf32>
    %c4 = arith.constant 4 : index
    %c0_26 = arith.constant 0 : index
    %49 = vector.load %arg3[%c4, %c0_26] : memref<8x128xf32, #tpu.memory_space<vmem>>, vector<1x5xf32>
    %cst_27 = arith.constant 9.99999974E-6 : f32
    %50 = vector.broadcast %cst_27 : f32 to vector<1x1xf32>
    %51 = arith.addf %48, %50 : vector<1x1xf32>
    %52 = math.rsqrt %51 : vector<1x1xf32>
    %53 = vector.broadcast %52 : vector<1x1xf32> to vector<1x5xf32>
    %54 = arith.mulf %49, %53 : vector<1x5xf32>
    %c5 = arith.constant 5 : index
    %c0_28 = arith.constant 0 : index
    %55 = vector.load %arg3[%c5, %c0_28] : memref<8x128xf32, #tpu.memory_space<vmem>>, vector<1x5xf32>
    %56 = vector.broadcast %42 : vector<1x1xf32> to vector<1x5xf32>
    %57 = arith.mulf %56, %54 : vector<1x5xf32>
    %58 = arith.subf %55, %57 : vector<1x5xf32>
    %59 = vector.broadcast %54 : vector<1x5xf32> to vector<8x5xf32>
    %60 = arith.mulf %10, %59 : vector<8x5xf32>
    %61 = vector.broadcast %58 : vector<1x5xf32> to vector<8x5xf32>
    %62 = arith.addf %60, %61 : vector<8x5xf32>
    %cst_29 = arith.constant 0.000000e+00 : f32
    %63 = vector.broadcast %cst_29 : f32 to vector<8x5xf32>
    %64 = arith.maximumf %62, %63 : vector<8x5xf32>
    %65 = tpu.iota {dimensions = array<i32: 1>} : vector<62x384xi32>
    %66 = tpu.iota {dimensions = array<i32: 0>} : vector<62x384xi32>
    %c5_i32 = arith.constant 5 : i32
    %67 = vector.broadcast %c5_i32 : i32 to vector<62x384xi32>
    %68 = arith.muli %66, %67 : vector<62x384xi32>
    %69 = arith.cmpi sge, %65, %68 : vector<62x384xi32>
    %c5_i32_30 = arith.constant 5 : i32
    %70 = vector.broadcast %c5_i32_30 : i32 to vector<62x384xi32>
    %71 = arith.addi %68, %70 : vector<62x384xi32>
    %72 = arith.cmpi slt, %65, %71 : vector<62x384xi32>
    %73 = arith.andi %69, %72 : vector<62x384xi1>
    %74 = arith.extui %73 : vector<62x384xi1> to vector<62x384xi32>
    %75 = arith.sitofp %74 : vector<62x384xi32> to vector<62x384xf32>
    %cst_31 = arith.constant dense<0.000000e+00> : vector<8x384xf32>
    %76 = tpu.matmul %34, %75, %cst_31 {dimension_numbers = #tpu.dot_dimension_numbers<[1], [0], [0], [1], [0, 0, 1, 1], [], []>, precision = #tpu.contract_precision<fp32>} : vector<8x62xf32>, vector<62x384xf32>, vector<8x384xf32> -> vector<8x384xf32>
    %c0_32 = arith.constant 0 : index
    %c0_33 = arith.constant 0 : index
    %77 = vector.load %arg4[%c0_32, %c0_33] : memref<5x384xf32, #tpu.memory_space<vmem>>, vector<5x384xf32>
    %cst_34 = arith.constant dense<0.000000e+00> : vector<8x384xf32>
    %78 = tpu.matmul %64, %77, %cst_34 {dimension_numbers = #tpu.dot_dimension_numbers<[1], [0], [0], [1], [0, 0, 1, 1], [], []>, precision = #tpu.contract_precision<fp32>} : vector<8x5xf32>, vector<5x384xf32>, vector<8x384xf32> -> vector<8x384xf32>
    %79 = arith.mulf %0, %76 : vector<8x384xf32>
    %80 = arith.mulf %79, %78 : vector<8x384xf32>
    %c0_35 = arith.constant 0 : index
    %c0_36 = arith.constant 0 : index
    %81 = vector.load %arg6[%c0_35, %c0_36] : memref<8x384xf32, #tpu.memory_space<vmem>>, vector<8x384xf32>
    tpu.vector_store %arg6[%c0_35, %c0_36], %80 {strides = array<i32>} : memref<8x384xf32, #tpu.memory_space<vmem>>, vector<8x384xf32>,
    return
  }
  func.func @transform_0(%arg0: i32) -> (i32, i32) {
    %c0_i32 = arith.constant 0 : i32
    %c0_i32_0 = arith.constant 0 : i32
    return %arg0, %c0_i32 : i32, i32
  }
  func.func @transform_1(%arg0: i32) -> (i32, i32) {
    %c0_i32 = arith.constant 0 : i32
    %c0_i32_0 = arith.constant 0 : i32
    %c0_i32_1 = arith.constant 0 : i32
    return %c0_i32, %c0_i32_0 : i32, i32
  }
  func.func @transform_2(%arg0: i32) -> (i32, i32) {
    %c0_i32 = arith.constant 0 : i32
    %c0_i32_0 = arith.constant 0 : i32
    %c0_i32_1 = arith.constant 0 : i32
    return %c0_i32, %c0_i32_0 : i32, i32
  }
  func.func @transform_3(%arg0: i32) -> (i32, i32) {
    %c0_i32 = arith.constant 0 : i32
    %c0_i32_0 = arith.constant 0 : i32
    %c0_i32_1 = arith.constant 0 : i32
    return %c0_i32, %c0_i32_0 : i32, i32
  }
  func.func @transform_4(%arg0: i32) -> (i32, i32) {
    %c0_i32 = arith.constant 0 : i32
    %c0_i32_0 = arith.constant 0 : i32
    %c0_i32_1 = arith.constant 0 : i32
    return %c0_i32, %c0_i32_0 : i32, i32
  }
  func.func @transform_5(%arg0: i32) -> (i32, i32) {
    %c0_i32 = arith.constant 0 : i32
    %c0_i32_0 = arith.constant 0 : i32
    return %arg0, %c0_i32 : i32, i32
  }
}

</mosaic_0001>

<llo_original>
// kernel: attention_forward.2
$region0: #{attention_forward.2}
  #allocation0 [shape = 'u32[]', space=smem, size = 0x4, offset = 0x4, fixed_abs, tag = 'smem constant byte address 0x4 - core index']
  #allocation1 [shape = 'u32[144,128]{1,0:T(1,128)}', space=vmem, size = 0x12000, scoped, tag = 'internal scratch']
  %s0 = inlined_call_operand.vmem [shape: f32[8,384], index: 0, kind: input, shape index: {}]
  %s1 = inlined_call_operand.vmem [shape: f32[384,133], index: 1, kind: input, shape index: {}]
  %s2 = inlined_call_operand.vmem [shape: f32[8,128], index: 2, kind: input, shape index: {}]
  %s3 = inlined_call_operand.vmem [shape: f32[8,128], index: 3, kind: output, shape index: {}]
  %s4 = sld [smem:[#allocation0]]
  $region26: #{attention_forward.2} parent=0
    _
  %s6 = ssub.s32 1, %s4
  %s7 = scalar_select 0, %s6, %s4
  // Predicated region
  $region2: #{attention_forward.2} parent=0 // pred_check
    _
  $region3: #{attention_forward.2} parent=0 // pred_check_branch
    %9 = sbr.rel (0) target = $region5
  $region4: #{attention_forward.2} parent=0 // pred_region
    _
  $region5: #{attention_forward.2} parent=0 // pred_fallthru
    _
  // Predicated region
  $region6: #{attention_forward.2} parent=0 // pred_check
    _
  $region7: #{attention_forward.2} parent=0 // pred_check_branch
    %11 = sbr.rel (0) target = $region9
  $region8: #{attention_forward.2} parent=0 // pred_region
    _
  $region9: #{attention_forward.2} parent=0 // pred_fallthru
    _
  // Predicated region
  $region10: #{attention_forward.2} parent=0 // pred_check
    _
  $region11: #{attention_forward.2} parent=0 // pred_check_branch
    %13 = sbr.rel (0) target = $region13
  $region12: #{attention_forward.2} parent=0 // pred_region
    _
  $region13: #{attention_forward.2} parent=0 // pred_fallthru
    _
  %p14 = scmp.eq.s32.totalorder 0, 0
  // Predicated region
  $region14: #{attention_forward.2} parent=0 // pred_check
    %p15 = pneg %p14
  $region15: #{attention_forward.2} parent=0 // pred_check_branch
    %17 = sbr.rel (%p15) target = $region17
  $region16: #{attention_forward.2} parent=0 // pred_region
    %18 = vst [vmem:[%s3] sm:$0xff] 0.0
  $region17: #{attention_forward.2} parent=0 // pred_fallthru
    _
  %v19 = vld [vmem:[%s0] sm:$0xff]
  %v20 = vld [vmem:[%s0 + $0x8] sm:$0xff]
  %v21 = vld [vmem:[%s0 + $0x10] sm:$0xff]
  %v22 = vld [vmem:[%s1] sm:$0xff]
  %v23 = vld [vmem:[%s1 + $0x8] sm:$0xff]
  %v24 = vld [vmem:[%s1 + $0x10] sm:$0xff]
  %v25 = vld [vmem:[%s1 + $0x18] sm:$0xff]
  %v26 = vld [vmem:[%s1 + $0x20] sm:$0xff]
  %v27 = vld [vmem:[%s1 + $0x28] sm:$0xff]
  %v28 = vld [vmem:[%s1 + $0x30] sm:$0xff]
  %v29 = vld [vmem:[%s1 + $0x38] sm:$0xff]
  %v30 = vld [vmem:[%s1 + $0x40] sm:$0xff]
  %v31 = vld [vmem:[%s1 + $0x48] sm:$0xff]
  %v32 = vld [vmem:[%s1 + $0x50] sm:$0xff]
  %v33 = vld [vmem:[%s1 + $0x58] sm:$0xff]
  %v34 = vld [vmem:[%s1 + $0x60] sm:$0xff]
  %v35 = vld [vmem:[%s1 + $0x68] sm:$0xff]
  %v36 = vld [vmem:[%s1 + $0x70] sm:$0xff]
  %v37 = vld [vmem:[%s1 + $0x78] sm:$0xff]
  %v38 = vld [vmem:[%s1 + $0x80] sm:$0xff]
  %v39 = vld [vmem:[%s1 + $0x88] sm:$0xff]
  %v40 = vld [vmem:[%s1 + $0x90] sm:$0xff]
  %v41 = vld [vmem:[%s1 + $0x98] sm:$0xff]
  %v42 = vld [vmem:[%s1 + $0xa0] sm:$0xff]
  %v43 = vld [vmem:[%s1 + $0xa8] sm:$0xff]
  %v44 = vld [vmem:[%s1 + $0xb0] sm:$0xff]
  %v45 = vld [vmem:[%s1 + $0xb8] sm:$0xff]
  %v46 = vld [vmem:[%s1 + $0xc0] sm:$0xff]
  %v47 = vld [vmem:[%s1 + $0xc8] sm:$0xff]
  %v48 = vld [vmem:[%s1 + $0xd0] sm:$0xff]
  %v49 = vld [vmem:[%s1 + $0xd8] sm:$0xff]
  %v50 = vld [vmem:[%s1 + $0xe0] sm:$0xff]
  %v51 = vld [vmem:[%s1 + $0xe8] sm:$0xff]
  %v52 = vld [vmem:[%s1 + $0xf0] sm:$0xff]
  %v53 = vld [vmem:[%s1 + $0xf8] sm:$0xff]
  %v54 = vld [vmem:[%s1 + $0x100] sm:$0xff]
  %v55 = vld [vmem:[%s1 + $0x108] sm:$0xff]
  %v56 = vld [vmem:[%s1 + $0x110] sm:$0xff]
  %v57 = vld [vmem:[%s1 + $0x118] sm:$0xff]
  %v58 = vld [vmem:[%s1 + $0x120] sm:$0xff]
  %v59 = vld [vmem:[%s1 + $0x128] sm:$0xff]
  %v60 = vld [vmem:[%s1 + $0x130] sm:$0xff]
  %v61 = vld [vmem:[%s1 + $0x138] sm:$0xff]
  %v62 = vld [vmem:[%s1 + $0x140] sm:$0xff]
  %v63 = vld [vmem:[%s1 + $0x148] sm:$0xff]
  %v64 = vld [vmem:[%s1 + $0x150] sm:$0xff]
  %v65 = vld [vmem:[%s1 + $0x158] sm:$0xff]
  %v66 = vld [vmem:[%s1 + $0x160] sm:$0xff]
  %v67 = vld [vmem:[%s1 + $0x168] sm:$0xff]
  %v68 = vld [vmem:[%s1 + $0x170] sm:$0xff]
  %v69 = vld [vmem:[%s1 + $0x178] sm:$0xff]
  %v70 = vld [vmem:[%s1 + $0x180] sm:$0xff]
  %v71 = vld [vmem:[%s1 + $0x188] sm:$0xff]
  %v72 = vld [vmem:[%s1 + $0x190] sm:$0xff]
  %v73 = vld [vmem:[%s1 + $0x198] sm:$0xff]
  %v74 = vld [vmem:[%s1 + $0x1a0] sm:$0xff]
  %v75 = vld [vmem:[%s1 + $0x1a8] sm:$0xff]
  %v76 = vld [vmem:[%s1 + $0x1b0] sm:$0xff]
  %v77 = vld [vmem:[%s1 + $0x1b8] sm:$0xff]
  %v78 = vld [vmem:[%s1 + $0x1c0] sm:$0xff]
  %v79 = vld [vmem:[%s1 + $0x1c8] sm:$0xff]
  %v80 = vld [vmem:[%s1 + $0x1d0] sm:$0xff]
  %v81 = vld [vmem:[%s1 + $0x1d8] sm:$0xff]
  %v82 = vld [vmem:[%s1 + $0x1e0] sm:$0xff]
  %v83 = vld [vmem:[%s1 + $0x1e8] sm:$0xff]
  %v84 = vld [vmem:[%s1 + $0x1f0] sm:$0xff]
  %v85 = vld [vmem:[%s1 + $0x1f8] sm:$0xff]
  %v86 = vld [vmem:[%s1 + $0x200] sm:$0xff]
  %v87 = vld [vmem:[%s1 + $0x208] sm:$0xff]
  %v88 = vld [vmem:[%s1 + $0x210] sm:$0xff]
  %v89 = vld [vmem:[%s1 + $0x218] sm:$0xff]
  %v90 = vld [vmem:[%s1 + $0x220] sm:$0xff]
  %v91 = vld [vmem:[%s1 + $0x228] sm:$0xff]
  %v92 = vld [vmem:[%s1 + $0x230] sm:$0xff]
  %v93 = vld [vmem:[%s1 + $0x238] sm:$0xff]
  %v94 = vld [vmem:[%s1 + $0x240] sm:$0xff]
  %v95 = vld [vmem:[%s1 + $0x248] sm:$0xff]
  %v96 = vld [vmem:[%s1 + $0x250] sm:$0xff]
  %v97 = vld [vmem:[%s1 + $0x258] sm:$0xff]
  %v98 = vld [vmem:[%s1 + $0x260] sm:$0xff]
  %v99 = vld [vmem:[%s1 + $0x268] sm:$0xff]
  %v100 = vld [vmem:[%s1 + $0x270] sm:$0xff]
  %v101 = vld [vmem:[%s1 + $0x278] sm:$0xff]
  %v102 = vld [vmem:[%s1 + $0x280] sm:$0xff]
  %v103 = vld [vmem:[%s1 + $0x288] sm:$0xff]
  %v104 = vld [vmem:[%s1 + $0x290] sm:$0xff]
  %v105 = vld [vmem:[%s1 + $0x298] sm:$0xff]
  %v106 = vld [vmem:[%s1 + $0x2a0] sm:$0xff]
  %v107 = vld [vmem:[%s1 + $0x2a8] sm:$0xff]
  %v108 = vld [vmem:[%s1 + $0x2b0] sm:$0xff]
  %v109 = vld [vmem:[%s1 + $0x2b8] sm:$0xff]
  %v110 = vld [vmem:[%s1 + $0x2c0] sm:$0xff]
  %v111 = vld [vmem:[%s1 + $0x2c8] sm:$0xff]
  %v112 = vld [vmem:[%s1 + $0x2d0] sm:$0xff]
  %v113 = vld [vmem:[%s1 + $0x2d8] sm:$0xff]
  %v114 = vld [vmem:[%s1 + $0x2e0] sm:$0xff]
  %v115 = vld [vmem:[%s1 + $0x2e8] sm:$0xff]
  %v116 = vld [vmem:[%s1 + $0x2f0] sm:$0xff]
  %v117 = vld [vmem:[%s1 + $0x2f8] sm:$0xff]
  %v118 = vand.u32 %v23, 4294901760
  %119 = vmatprep.subr.mxu0 %v118
  %v120 = vand.u32 %v22, 4294901760
  %121 = vmatpush1.msra.mxu0 %v120
  %v122 = vand.u32 %v25, 4294901760
  %123 = vmatprep.subr.mxu0 %v122
  %v124 = vand.u32 %v24, 4294901760
  %125 = vmatpush1.msra.mxu0 %v124
  %v126 = vand.u32 %v27, 4294901760
  %127 = vmatprep.subr.mxu0 %v126
  %v128 = vand.u32 %v26, 4294901760
  %129 = vmatpush1.msra.mxu0 %v128
  %v130 = vand.u32 %v29, 4294901760
  %131 = vmatprep.subr.mxu0 %v130
  %v132 = vand.u32 %v28, 4294901760
  %133 = vmatpush1.msra.mxu0 %v132
  %v134 = vand.u32 %v31, 4294901760
  %135 = vmatprep.subr.mxu0 %v134
  %v136 = vand.u32 %v30, 4294901760
  %137 = vmatpush1.msra.mxu0 %v136
  %v138 = vand.u32 %v33, 4294901760
  %139 = vmatprep.subr.mxu0 %v138
  %v140 = vand.u32 %v32, 4294901760
  %141 = vmatpush1.msra.mxu0 %v140
  %v142 = vand.u32 %v35, 4294901760
  %143 = vmatprep.subr.mxu0 %v142
  %v144 = vand.u32 %v34, 4294901760
  %145 = vmatpush1.msra.mxu0 %v144
  %v146 = vand.u32 %v37, 4294901760
  %147 = vmatprep.subr.mxu0 %v146
  %v148 = vand.u32 %v36, 4294901760
  %149 = vmatpush1.msra.mxu0 %v148
  %v150 = vand.u32 %v39, 4294901760
  %151 = vmatprep.subr.mxu0 %v150
  %v152 = vand.u32 %v38, 4294901760
  %153 = vmatpush1.msra.mxu0 %v152
  %v154 = vand.u32 %v41, 4294901760
  %155 = vmatprep.subr.mxu0 %v154
  %v156 = vand.u32 %v40, 4294901760
  %157 = vmatpush1.msra.mxu0 %v156
  %v158 = vand.u32 %v43, 4294901760
  %159 = vmatprep.subr.mxu0 %v158
  %v160 = vand.u32 %v42, 4294901760
  %161 = vmatpush1.msra.mxu0 %v160
  %v162 = vand.u32 %v45, 4294901760
  %163 = vmatprep.subr.mxu0 %v162
  %v164 = vand.u32 %v44, 4294901760
  %165 = vmatpush1.msra.mxu0 %v164
  %v166 = vand.u32 %v47, 4294901760
  %167 = vmatprep.subr.mxu0 %v166
  %v168 = vand.u32 %v46, 4294901760
  %169 = vmatpush1.msra.mxu0 %v168
  %v170 = vand.u32 %v49, 4294901760
  %171 = vmatprep.subr.mxu0 %v170
  %v172 = vand.u32 %v48, 4294901760
  %173 = vmatpush1.msra.mxu0 %v172
  %v174 = vand.u32 %v51, 4294901760
  %175 = vmatprep.subr.mxu0 %v174
  %v176 = vand.u32 %v50, 4294901760
  %177 = vmatpush1.msra.mxu0 %v176
  %v178 = vand.u32 %v53, 4294901760
  %179 = vmatprep.subr.mxu0 %v178
  %v180 = vand.u32 %v52, 4294901760
  %181 = vmatpush1.msra.mxu0 %v180
  %v182 = vand.u32 %v55, 4294901760
  %183 = vmatprep.subr.mxu0 %v182
  %v184 = vand.u32 %v54, 4294901760
  %185 = vmatpush1.msra.mxu0 %v184
  %v186 = vand.u32 %v57, 4294901760
  %187 = vmatprep.subr.mxu0 %v186
  %v188 = vand.u32 %v56, 4294901760
  %189 = vmatpush1.msra.mxu0 %v188
  %v190 = vand.u32 %v59, 4294901760
  %191 = vmatprep.subr.mxu0 %v190
  %v192 = vand.u32 %v58, 4294901760
  %193 = vmatpush1.msra.mxu0 %v192
  %v194 = vand.u32 %v61, 4294901760
  %195 = vmatprep.subr.mxu0 %v194
  %v196 = vand.u32 %v60, 4294901760
  %197 = vmatpush1.msra.mxu0 %v196
  %v198 = vand.u32 %v63, 4294901760
  %199 = vmatprep.subr.mxu0 %v198
  %v200 = vand.u32 %v62, 4294901760
  %201 = vmatpush1.msra.mxu0 %v200
  %v202 = vand.u32 %v65, 4294901760
  %203 = vmatprep.subr.mxu0 %v202
  %v204 = vand.u32 %v64, 4294901760
  %205 = vmatpush1.msra.mxu0 %v204
  %v206 = vand.u32 %v67, 4294901760
  %207 = vmatprep.subr.mxu0 %v206
  %v208 = vand.u32 %v66, 4294901760
  %209 = vmatpush1.msra.mxu0 %v208
  %v210 = vand.u32 %v69, 4294901760
  %211 = vmatprep.subr.mxu0 %v210
  %v212 = vand.u32 %v68, 4294901760
  %213 = vmatpush1.msra.mxu0 %v212
  %v214 = vand.u32 %v71, 4294901760
  %215 = vmatprep.subr.mxu0 %v214
  %v216 = vand.u32 %v70, 4294901760
  %217 = vmatpush1.msra.mxu0 %v216
  %v218 = vand.u32 %v73, 4294901760
  %219 = vmatprep.subr.mxu0 %v218
  %v220 = vand.u32 %v72, 4294901760
  %221 = vmatpush1.msra.mxu0 %v220
  %v222 = vand.u32 %v75, 4294901760
  %223 = vmatprep.subr.mxu0 %v222
  %v224 = vand.u32 %v74, 4294901760
  %225 = vmatpush1.msra.mxu0 %v224
  %v226 = vand.u32 %v77, 4294901760
  %227 = vmatprep.subr.mxu0 %v226
  %v228 = vand.u32 %v76, 4294901760
  %229 = vmatpush1.msra.mxu0 %v228
  %v230 = vand.u32 %v79, 4294901760
  %231 = vmatprep.subr.mxu0 %v230
  %v232 = vand.u32 %v78, 4294901760
  %233 = vmatpush1.msra.mxu0 %v232
  %v234 = vand.u32 %v81, 4294901760
  %235 = vmatprep.subr.mxu0 %v234
  %v236 = vand.u32 %v80, 4294901760
  %237 = vmatpush1.msra.mxu0 %v236
  %v238 = vand.u32 %v83, 4294901760
  %239 = vmatprep.subr.mxu0 %v238
  %v240 = vand.u32 %v82, 4294901760
  %241 = vmatpush1.msra.mxu0 %v240
  %v242 = vand.u32 %v85, 4294901760
  %243 = vmatprep.subr.mxu0 %v242
  %v244 = vand.u32 %v84, 4294901760
  %245 = vmatpush1.msra.mxu0 %v244
  %v246 = vand.u32 %v20, 4294901760
  %v247 = vsub.f32 %v20, %v246
  %v248 = vand.u32 %v247, 4294901760
  %v249 = vsub.f32 %v247, %v248
  %v250 = vand.u32 %v249, 4294901760
  %251 = vmatprep.mubr.f32.mxu0 %v250
  %v252 = vand.u32 %v19, 4294901760
  %v253 = vsub.f32 %v19, %v252
  %v254 = vand.u32 %v253, 4294901760
  %v255 = vsub.f32 %v253, %v254
  %v256 = vand.u32 %v255, 4294901760
  %257 = vmatmul.mubr.f32.gmra.mrb[0].mxu0 %v256
  %v258 = vpop.f32.mrb[0].mxu0
  %v259 = vadd.f32 0.0, %v258
  %v260 = vpop.f32.mrb[0].mxu0
  %v261 = vadd.f32 0.0, %v260
  %262 = vdwg.mxu0
  %v263 = vand.u32 %v23, 4294901760
  %v264 = vsub.f32 %v23, %v263
  %v265 = vand.u32 %v264, 4294901760
  %v266 = vsub.f32 %v264, %v265
  %v267 = vand.u32 %v266, 4294901760
  %268 = vmatprep.subr.mxu0 %v267
  %v269 = vand.u32 %v22, 4294901760
  %v270 = vsub.f32 %v22, %v269
  %v271 = vand.u32 %v270, 4294901760
  %v272 = vsub.f32 %v270, %v271
  %v273 = vand.u32 %v272, 4294901760
  %274 = vmatpush1.msra.mxu0 %v273
  %v275 = vand.u32 %v25, 4294901760
  %v276 = vsub.f32 %v25, %v275
  %v277 = vand.u32 %v276, 4294901760
  %v278 = vsub.f32 %v276, %v277
  %v279 = vand.u32 %v278, 4294901760
  %280 = vmatprep.subr.mxu0 %v279
  %v281 = vand.u32 %v24, 4294901760
  %v282 = vsub.f32 %v24, %v281
  %v283 = vand.u32 %v282, 4294901760
  %v284 = vsub.f32 %v282, %v283
  %v285 = vand.u32 %v284, 4294901760
  %286 = vmatpush1.msra.mxu0 %v285
  %v287 = vand.u32 %v27, 4294901760
  %v288 = vsub.f32 %v27, %v287
  %v289 = vand.u32 %v288, 4294901760
  %v290 = vsub.f32 %v288, %v289
  %v291 = vand.u32 %v290, 4294901760
  %292 = vmatprep.subr.mxu0 %v291
  %v293 = vand.u32 %v26, 4294901760
  %v294 = vsub.f32 %v26, %v293
  %v295 = vand.u32 %v294, 4294901760
  %v296 = vsub.f32 %v294, %v295
  %v297 = vand.u32 %v296, 4294901760
  %298 = vmatpush1.msra.mxu0 %v297
  %v299 = vand.u32 %v29, 4294901760
  %v300 = vsub.f32 %v29, %v299
  %v301 = vand.u32 %v300, 4294901760
  %v302 = vsub.f32 %v300, %v301
  %v303 = vand.u32 %v302, 4294901760
  %304 = vmatprep.subr.mxu0 %v303
  %v305 = vand.u32 %v28, 4294901760
  %v306 = vsub.f32 %v28, %v305
  %v307 = vand.u32 %v306, 4294901760
  %v308 = vsub.f32 %v306, %v307
  %v309 = vand.u32 %v308, 4294901760
  %310 = vmatpush1.msra.mxu0 %v309
  %v311 = vand.u32 %v31, 4294901760
  %v312 = vsub.f32 %v31, %v311
  %v313 = vand.u32 %v312, 4294901760
  %v314 = vsub.f32 %v312, %v313
  %v315 = vand.u32 %v314, 4294901760
  %316 = vmatprep.subr.mxu0 %v315
  %v317 = vand.u32 %v30, 4294901760
  %v318 = vsub.f32 %v30, %v317
  %v319 = vand.u32 %v318, 4294901760
  %v320 = vsub.f32 %v318, %v319
  %v321 = vand.u32 %v320, 4294901760
  %322 = vmatpush1.msra.mxu0 %v321
  %v323 = vand.u32 %v33, 4294901760
  %v324 = vsub.f32 %v33, %v323
  %v325 = vand.u32 %v324, 4294901760
  %v326 = vsub.f32 %v324, %v325
  %v327 = vand.u32 %v326, 4294901760
  %328 = vmatprep.subr.mxu0 %v327
  %v329 = vand.u32 %v32, 4294901760
  %v330 = vsub.f32 %v32, %v329
  %v331 = vand.u32 %v330, 4294901760
  %v332 = vsub.f32 %v330, %v331
  %v333 = vand.u32 %v332, 4294901760
  %334 = vmatpush1.msra.mxu0 %v333
  %v335 = vand.u32 %v35, 4294901760
  %v336 = vsub.f32 %v35, %v335
  %v337 = vand.u32 %v336, 4294901760
  %v338 = vsub.f32 %v336, %v337
  %v339 = vand.u32 %v338, 4294901760
  %340 = vmatprep.subr.mxu0 %v339
  %v341 = vand.u32 %v34, 4294901760
  %v342 = vsub.f32 %v34, %v341
  %v343 = vand.u32 %v342, 4294901760
  %v344 = vsub.f32 %v342, %v343
  %v345 = vand.u32 %v344, 4294901760
  %346 = vmatpush1.msra.mxu0 %v345
  %v347 = vand.u32 %v37, 4294901760
  %v348 = vsub.f32 %v37, %v347
  %v349 = vand.u32 %v348, 4294901760
  %v350 = vsub.f32 %v348, %v349
  %v351 = vand.u32 %v350, 4294901760
  %352 = vmatprep.subr.mxu0 %v351
  %v353 = vand.u32 %v36, 4294901760
  %v354 = vsub.f32 %v36, %v353
  %v355 = vand.u32 %v354, 4294901760
  %v356 = vsub.f32 %v354, %v355
  %v357 = vand.u32 %v356, 4294901760
  %358 = vmatpush1.msra.mxu0 %v357
  %v359 = vand.u32 %v39, 4294901760
  %v360 = vsub.f32 %v39, %v359
  %v361 = vand.u32 %v360, 4294901760
  %v362 = vsub.f32 %v360, %v361
  %v363 = vand.u32 %v362, 4294901760
  %364 = vmatprep.subr.mxu0 %v363
  %v365 = vand.u32 %v38, 4294901760
  %v366 = vsub.f32 %v38, %v365
  %v367 = vand.u32 %v366, 4294901760
  %v368 = vsub.f32 %v366, %v367
  %v369 = vand.u32 %v368, 4294901760
  %370 = vmatpush1.msra.mxu0 %v369
  %v371 = vand.u32 %v41, 4294901760
  %v372 = vsub.f32 %v41, %v371
  %v373 = vand.u32 %v372, 4294901760
  %v374 = vsub.f32 %v372, %v373
  %v375 = vand.u32 %v374, 4294901760
  %376 = vmatprep.subr.mxu0 %v375
  %v377 = vand.u32 %v40, 4294901760
  %v378 = vsub.f32 %v40, %v377
  %v379 = vand.u32 %v378, 4294901760
  %v380 = vsub.f32 %v378, %v379
  %v381 = vand.u32 %v380, 4294901760
  %382 = vmatpush1.msra.mxu0 %v381
  %v383 = vand.u32 %v43, 4294901760
  %v384 = vsub.f32 %v43, %v383
  %v385 = vand.u32 %v384, 4294901760
  %v386 = vsub.f32 %v384, %v385
  %v387 = vand.u32 %v386, 4294901760
  %388 = vmatprep.subr.mxu0 %v387
  %v389 = vand.u32 %v42, 4294901760
  %v390 = vsub.f32 %v42, %v389
  %v391 = vand.u32 %v390, 4294901760
  %v392 = vsub.f32 %v390, %v391
  %v393 = vand.u32 %v392, 4294901760
  %394 = vmatpush1.msra.mxu0 %v393
  %v395 = vand.u32 %v45, 4294901760
  %v396 = vsub.f32 %v45, %v395
  %v397 = vand.u32 %v396, 4294901760
  %v398 = vsub.f32 %v396, %v397
  %v399 = vand.u32 %v398, 4294901760
  %400 = vmatprep.subr.mxu0 %v399
  %v401 = vand.u32 %v44, 4294901760
  %v402 = vsub.f32 %v44, %v401
  %v403 = vand.u32 %v402, 4294901760
  %v404 = vsub.f32 %v402, %v403
  %v405 = vand.u32 %v404, 4294901760
  %406 = vmatpush1.msra.mxu0 %v405
  %v407 = vand.u32 %v47, 4294901760
  %v408 = vsub.f32 %v47, %v407
  %v409 = vand.u32 %v408, 4294901760
  %v410 = vsub.f32 %v408, %v409
  %v411 = vand.u32 %v410, 4294901760
  %412 = vmatprep.subr.mxu0 %v411
  %v413 = vand.u32 %v46, 4294901760
  %v414 = vsub.f32 %v46, %v413
  %v415 = vand.u32 %v414, 4294901760
  %v416 = vsub.f32 %v414, %v415
  %v417 = vand.u32 %v416, 4294901760
  %418 = vmatpush1.msra.mxu0 %v417
  %v419 = vand.u32 %v49, 4294901760
  %v420 = vsub.f32 %v49, %v419
  %v421 = vand.u32 %v420, 4294901760
  %v422 = vsub.f32 %v420, %v421
  %v423 = vand.u32 %v422, 4294901760
  %424 = vmatprep.subr.mxu0 %v423
  %v425 = vand.u32 %v48, 4294901760
  %v426 = vsub.f32 %v48, %v425
  %v427 = vand.u32 %v426, 4294901760
  %v428 = vsub.f32 %v426, %v427
  %v429 = vand.u32 %v428, 4294901760
  %430 = vmatpush1.msra.mxu0 %v429
  %v431 = vand.u32 %v51, 4294901760
  %v432 = vsub.f32 %v51, %v431
  %v433 = vand.u32 %v432, 4294901760
  %v434 = vsub.f32 %v432, %v433
  %v435 = vand.u32 %v434, 4294901760
  %436 = vmatprep.subr.mxu0 %v435
  %v437 = vand.u32 %v50, 4294901760
  %v438 = vsub.f32 %v50, %v437
  %v439 = vand.u32 %v438, 4294901760
  %v440 = vsub.f32 %v438, %v439
  %v441 = vand.u32 %v440, 4294901760
  %442 = vmatpush1.msra.mxu0 %v441
  %v443 = vand.u32 %v53, 4294901760
  %v444 = vsub.f32 %v53, %v443
  %v445 = vand.u32 %v444, 4294901760
  %v446 = vsub.f32 %v444, %v445
  %v447 = vand.u32 %v446, 4294901760
  %448 = vmatprep.subr.mxu0 %v447
  %v449 = vand.u32 %v52, 4294901760
  %v450 = vsub.f32 %v52, %v449
  %v451 = vand.u32 %v450, 4294901760
  %v452 = vsub.f32 %v450, %v451
  %v453 = vand.u32 %v452, 4294901760
  %454 = vmatpush1.msra.mxu0 %v453
  %v455 = vand.u32 %v55, 4294901760
  %v456 = vsub.f32 %v55, %v455
  %v457 = vand.u32 %v456, 4294901760
  %v458 = vsub.f32 %v456, %v457
  %v459 = vand.u32 %v458, 4294901760
  %460 = vmatprep.subr.mxu0 %v459
  %v461 = vand.u32 %v54, 4294901760
  %v462 = vsub.f32 %v54, %v461
  %v463 = vand.u32 %v462, 4294901760
  %v464 = vsub.f32 %v462, %v463
  %v465 = vand.u32 %v464, 4294901760
  %466 = vmatpush1.msra.mxu0 %v465
  %v467 = vand.u32 %v57, 4294901760
  %v468 = vsub.f32 %v57, %v467
  %v469 = vand.u32 %v468, 4294901760
  %v470 = vsub.f32 %v468, %v469
  %v471 = vand.u32 %v470, 4294901760
  %472 = vmatprep.subr.mxu0 %v471
  %v473 = vand.u32 %v56, 4294901760
  %v474 = vsub.f32 %v56, %v473
  %v475 = vand.u32 %v474, 4294901760
  %v476 = vsub.f32 %v474, %v475
  %v477 = vand.u32 %v476, 4294901760
  %478 = vmatpush1.msra.mxu0 %v477
  %v479 = vand.u32 %v59, 4294901760
  %v480 = vsub.f32 %v59, %v479
  %v481 = vand.u32 %v480, 4294901760
  %v482 = vsub.f32 %v480, %v481
  %v483 = vand.u32 %v482, 4294901760
  %484 = vmatprep.subr.mxu0 %v483
  %v485 = vand.u32 %v58, 4294901760
  %v486 = vsub.f32 %v58, %v485
  %v487 = vand.u32 %v486, 4294901760
  %v488 = vsub.f32 %v486, %v487
  %v489 = vand.u32 %v488, 4294901760
  %490 = vmatpush1.msra.mxu0 %v489
  %v491 = vand.u32 %v61, 4294901760
  %v492 = vsub.f32 %v61, %v491
  %v493 = vand.u32 %v492, 4294901760
  %v494 = vsub.f32 %v492, %v493
  %v495 = vand.u32 %v494, 4294901760
  %496 = vmatprep.subr.mxu0 %v495
  %v497 = vand.u32 %v60, 4294901760
  %v498 = vsub.f32 %v60, %v497
  %v499 = vand.u32 %v498, 4294901760
  %v500 = vsub.f32 %v498, %v499
  %v501 = vand.u32 %v500, 4294901760
  %502 = vmatpush1.msra.mxu0 %v501
  %v503 = vand.u32 %v63, 4294901760
  %v504 = vsub.f32 %v63, %v503
  %v505 = vand.u32 %v504, 4294901760
  %v506 = vsub.f32 %v504, %v505
  %v507 = vand.u32 %v506, 4294901760
  %508 = vmatprep.subr.mxu0 %v507
  %v509 = vand.u32 %v62, 4294901760
  %v510 = vsub.f32 %v62, %v509
  %v511 = vand.u32 %v510, 4294901760
  %v512 = vsub.f32 %v510, %v511
  %v513 = vand.u32 %v512, 4294901760
  %514 = vmatpush1.msra.mxu0 %v513
  %v515 = vand.u32 %v65, 4294901760
  %v516 = vsub.f32 %v65, %v515
  %v517 = vand.u32 %v516, 4294901760
  %v518 = vsub.f32 %v516, %v517
  %v519 = vand.u32 %v518, 4294901760
  %520 = vmatprep.subr.mxu0 %v519
  %v521 = vand.u32 %v64, 4294901760
  %v522 = vsub.f32 %v64, %v521
  %v523 = vand.u32 %v522, 4294901760
  %v524 = vsub.f32 %v522, %v523
  %v525 = vand.u32 %v524, 4294901760
  %526 = vmatpush1.msra.mxu0 %v525
  %v527 = vand.u32 %v67, 4294901760
  %v528 = vsub.f32 %v67, %v527
  %v529 = vand.u32 %v528, 4294901760
  %v530 = vsub.f32 %v528, %v529
  %v531 = vand.u32 %v530, 4294901760
  %532 = vmatprep.subr.mxu0 %v531
  %v533 = vand.u32 %v66, 4294901760
  %v534 = vsub.f32 %v66, %v533
  %v535 = vand.u32 %v534, 4294901760
  %v536 = vsub.f32 %v534, %v535
  %v537 = vand.u32 %v536, 4294901760
  %538 = vmatpush1.msra.mxu0 %v537
  %v539 = vand.u32 %v69, 4294901760
  %v540 = vsub.f32 %v69, %v539
  %v541 = vand.u32 %v540, 4294901760
  %v542 = vsub.f32 %v540, %v541
  %v543 = vand.u32 %v542, 4294901760
  %544 = vmatprep.subr.mxu0 %v543
  %v545 = vand.u32 %v68, 4294901760
  %v546 = vsub.f32 %v68, %v545
  %v547 = vand.u32 %v546, 4294901760
  %v548 = vsub.f32 %v546, %v547
  %v549 = vand.u32 %v548, 4294901760
  %550 = vmatpush1.msra.mxu0 %v549
  %v551 = vand.u32 %v71, 4294901760
  %v552 = vsub.f32 %v71, %v551
  %v553 = vand.u32 %v552, 4294901760
  %v554 = vsub.f32 %v552, %v553
  %v555 = vand.u32 %v554, 4294901760
  %556 = vmatprep.subr.mxu0 %v555
  %v557 = vand.u32 %v70, 4294901760
  %v558 = vsub.f32 %v70, %v557
  %v559 = vand.u32 %v558, 4294901760
  %v560 = vsub.f32 %v558, %v559
  %v561 = vand.u32 %v560, 4294901760
  %562 = vmatpush1.msra.mxu0 %v561
  %v563 = vand.u32 %v73, 4294901760
  %v564 = vsub.f32 %v73, %v563
  %v565 = vand.u32 %v564, 4294901760
  %v566 = vsub.f32 %v564, %v565
  %v567 = vand.u32 %v566, 4294901760
  %568 = vmatprep.subr.mxu0 %v567
  %v569 = vand.u32 %v72, 4294901760
  %v570 = vsub.f32 %v72, %v569
  %v571 = vand.u32 %v570, 4294901760
  %v572 = vsub.f32 %v570, %v571
  %v573 = vand.u32 %v572, 4294901760
  %574 = vmatpush1.msra.mxu0 %v573
  %v575 = vand.u32 %v75, 4294901760
  %v576 = vsub.f32 %v75, %v575
  %v577 = vand.u32 %v576, 4294901760
  %v578 = vsub.f32 %v576, %v577
  %v579 = vand.u32 %v578, 4294901760
  %580 = vmatprep.subr.mxu0 %v579
  %v581 = vand.u32 %v74, 4294901760
  %v582 = vsub.f32 %v74, %v581
  %v583 = vand.u32 %v582, 4294901760
  %v584 = vsub.f32 %v582, %v583
  %v585 = vand.u32 %v584, 4294901760
  %586 = vmatpush1.msra.mxu0 %v585
  %v587 = vand.u32 %v77, 4294901760
  %v588 = vsub.f32 %v77, %v587
  %v589 = vand.u32 %v588, 4294901760
  %v590 = vsub.f32 %v588, %v589
  %v591 = vand.u32 %v590, 4294901760
  %592 = vmatprep.subr.mxu0 %v591
  %v593 = vand.u32 %v76, 4294901760
  %v594 = vsub.f32 %v76, %v593
  %v595 = vand.u32 %v594, 4294901760
  %v596 = vsub.f32 %v594, %v595
  %v597 = vand.u32 %v596, 4294901760
  %598 = vmatpush1.msra.mxu0 %v597
  %v599 = vand.u32 %v79, 4294901760
  %v600 = vsub.f32 %v79, %v599
  %v601 = vand.u32 %v600, 4294901760
  %v602 = vsub.f32 %v600, %v601
  %v603 = vand.u32 %v602, 4294901760
  %604 = vmatprep.subr.mxu0 %v603
  %v605 = vand.u32 %v78, 4294901760
  %v606 = vsub.f32 %v78, %v605
  %v607 = vand.u32 %v606, 4294901760
  %v608 = vsub.f32 %v606, %v607
  %v609 = vand.u32 %v608, 4294901760
  %610 = vmatpush1.msra.mxu0 %v609
  %v611 = vand.u32 %v81, 4294901760
  %v612 = vsub.f32 %v81, %v611
  %v613 = vand.u32 %v612, 4294901760
  %v614 = vsub.f32 %v612, %v613
  %v615 = vand.u32 %v614, 4294901760
  %616 = vmatprep.subr.mxu0 %v615
  %v617 = vand.u32 %v80, 4294901760
  %v618 = vsub.f32 %v80, %v617
  %v619 = vand.u32 %v618, 4294901760
  %v620 = vsub.f32 %v618, %v619
  %v621 = vand.u32 %v620, 4294901760
  %622 = vmatpush1.msra.mxu0 %v621
  %v623 = vand.u32 %v83, 4294901760
  %v624 = vsub.f32 %v83, %v623
  %v625 = vand.u32 %v624, 4294901760
  %v626 = vsub.f32 %v624, %v625
  %v627 = vand.u32 %v626, 4294901760
  %628 = vmatprep.subr.mxu0 %v627
  %v629 = vand.u32 %v82, 4294901760
  %v630 = vsub.f32 %v82, %v629
  %v631 = vand.u32 %v630, 4294901760
  %v632 = vsub.f32 %v630, %v631
  %v633 = vand.u32 %v632, 4294901760
  %634 = vmatpush1.msra.mxu0 %v633
  %v635 = vand.u32 %v85, 4294901760
  %v636 = vsub.f32 %v85, %v635
  %v637 = vand.u32 %v636, 4294901760
  %v638 = vsub.f32 %v636, %v637
  %v639 = vand.u32 %v638, 4294901760
  %640 = vmatprep.subr.mxu0 %v639
  %v641 = vand.u32 %v84, 4294901760
  %v642 = vsub.f32 %v84, %v641
  %v643 = vand.u32 %v642, 4294901760
  %v644 = vsub.f32 %v642, %v643
  %v645 = vand.u32 %v644, 4294901760
  %646 = vmatpush1.msra.mxu0 %v645
  %v647 = vand.u32 %v20, 4294901760
  %648 = vmatprep.mubr.f32.mxu0 %v647
  %v649 = vand.u32 %v19, 4294901760
  %650 = vmatmul.mubr.f32.gmra.mrb[0].mxu0 %v649
  %v651 = vpop.f32.mrb[0].mxu0
  %v652 = vadd.f32 %v259, %v651
  %v653 = vpop.f32.mrb[0].mxu0
  %v654 = vadd.f32 %v261, %v653
  %655 = vdwg.mxu0
  %v656 = vand.u32 %v23, 4294901760
  %v657 = vsub.f32 %v23, %v656
  %658 = vmatprep.subr.mxu0 %v657
  %v659 = vand.u32 %v22, 4294901760
  %v660 = vsub.f32 %v22, %v659
  %661 = vmatpush1.msra.mxu0 %v660
  %v662 = vand.u32 %v25, 4294901760
  %v663 = vsub.f32 %v25, %v662
  %664 = vmatprep.subr.mxu0 %v663
  %v665 = vand.u32 %v24, 4294901760
  %v666 = vsub.f32 %v24, %v665
  %667 = vmatpush1.msra.mxu0 %v666
  %v668 = vand.u32 %v27, 4294901760
  %v669 = vsub.f32 %v27, %v668
  %670 = vmatprep.subr.mxu0 %v669
  %v671 = vand.u32 %v26, 4294901760
  %v672 = vsub.f32 %v26, %v671
  %673 = vmatpush1.msra.mxu0 %v672
  %v674 = vand.u32 %v29, 4294901760
  %v675 = vsub.f32 %v29, %v674
  %676 = vmatprep.subr.mxu0 %v675
  %v677 = vand.u32 %v28, 4294901760
  %v678 = vsub.f32 %v28, %v677
  %679 = vmatpush1.msra.mxu0 %v678
  %v680 = vand.u32 %v31, 4294901760
  %v681 = vsub.f32 %v31, %v680
  %682 = vmatprep.subr.mxu0 %v681
  %v683 = vand.u32 %v30, 4294901760
  %v684 = vsub.f32 %v30, %v683
  %685 = vmatpush1.msra.mxu0 %v684
  %v686 = vand.u32 %v33, 4294901760
  %v687 = vsub.f32 %v33, %v686
  %688 = vmatprep.subr.mxu0 %v687
  %v689 = vand.u32 %v32, 4294901760
  %v690 = vsub.f32 %v32, %v689
  %691 = vmatpush1.msra.mxu0 %v690
  %v692 = vand.u32 %v35, 4294901760
  %v693 = vsub.f32 %v35, %v692
  %694 = vmatprep.subr.mxu0 %v693
  %v695 = vand.u32 %v34, 4294901760
  %v696 = vsub.f32 %v34, %v695
  %697 = vmatpush1.msra.mxu0 %v696
  %v698 = vand.u32 %v37, 4294901760
  %v699 = vsub.f32 %v37, %v698
  %700 = vmatprep.subr.mxu0 %v699
  %v701 = vand.u32 %v36, 4294901760
  %v702 = vsub.f32 %v36, %v701
  %703 = vmatpush1.msra.mxu0 %v702
  %v704 = vand.u32 %v39, 4294901760
  %v705 = vsub.f32 %v39, %v704
  %706 = vmatprep.subr.mxu0 %v705
  %v707 = vand.u32 %v38, 4294901760
  %v708 = vsub.f32 %v38, %v707
  %709 = vmatpush1.msra.mxu0 %v708
  %v710 = vand.u32 %v41, 4294901760
  %v711 = vsub.f32 %v41, %v710
  %712 = vmatprep.subr.mxu0 %v711
  %v713 = vand.u32 %v40, 4294901760
  %v714 = vsub.f32 %v40, %v713
  %715 = vmatpush1.msra.mxu0 %v714
  %v716 = vand.u32 %v43, 4294901760
  %v717 = vsub.f32 %v43, %v716
  %718 = vmatprep.subr.mxu0 %v717
  %v719 = vand.u32 %v42, 4294901760
  %v720 = vsub.f32 %v42, %v719
  %721 = vmatpush1.msra.mxu0 %v720
  %v722 = vand.u32 %v45, 4294901760
  %v723 = vsub.f32 %v45, %v722
  %724 = vmatprep.subr.mxu0 %v723
  %v725 = vand.u32 %v44, 4294901760
  %v726 = vsub.f32 %v44, %v725
  %727 = vmatpush1.msra.mxu0 %v726
  %v728 = vand.u32 %v47, 4294901760
  %v729 = vsub.f32 %v47, %v728
  %730 = vmatprep.subr.mxu0 %v729
  %v731 = vand.u32 %v46, 4294901760
  %v732 = vsub.f32 %v46, %v731
  %733 = vmatpush1.msra.mxu0 %v732
  %v734 = vand.u32 %v49, 4294901760
  %v735 = vsub.f32 %v49, %v734
  %736 = vmatprep.subr.mxu0 %v735
  %v737 = vand.u32 %v48, 4294901760
  %v738 = vsub.f32 %v48, %v737
  %739 = vmatpush1.msra.mxu0 %v738
  %v740 = vand.u32 %v51, 4294901760
  %v741 = vsub.f32 %v51, %v740
  %742 = vmatprep.subr.mxu0 %v741
  %v743 = vand.u32 %v50, 4294901760
  %v744 = vsub.f32 %v50, %v743
  %745 = vmatpush1.msra.mxu0 %v744
  %v746 = vand.u32 %v53, 4294901760
  %v747 = vsub.f32 %v53, %v746
  %748 = vmatprep.subr.mxu0 %v747
  %v749 = vand.u32 %v52, 4294901760
  %v750 = vsub.f32 %v52, %v749
  %751 = vmatpush1.msra.mxu0 %v750
  %v752 = vand.u32 %v55, 4294901760
  %v753 = vsub.f32 %v55, %v752
  %754 = vmatprep.subr.mxu0 %v753
  %v755 = vand.u32 %v54, 4294901760
  %v756 = vsub.f32 %v54, %v755
  %757 = vmatpush1.msra.mxu0 %v756
  %v758 = vand.u32 %v57, 4294901760
  %v759 = vsub.f32 %v57, %v758
  %760 = vmatprep.subr.mxu0 %v759
  %v761 = vand.u32 %v56, 4294901760
  %v762 = vsub.f32 %v56, %v761
  %763 = vmatpush1.msra.mxu0 %v762
  %v764 = vand.u32 %v59, 4294901760
  %v765 = vsub.f32 %v59, %v764
  %766 = vmatprep.subr.mxu0 %v765
  %v767 = vand.u32 %v58, 4294901760
  %v768 = vsub.f32 %v58, %v767
  %769 = vmatpush1.msra.mxu0 %v768
  %v770 = vand.u32 %v61, 4294901760
  %v771 = vsub.f32 %v61, %v770
  %772 = vmatprep.subr.mxu0 %v771
  %v773 = vand.u32 %v60, 4294901760
  %v774 = vsub.f32 %v60, %v773
  %775 = vmatpush1.msra.mxu0 %v774
  %v776 = vand.u32 %v63, 4294901760
  %v777 = vsub.f32 %v63, %v776
  %778 = vmatprep.subr.mxu0 %v777
  %v779 = vand.u32 %v62, 4294901760
  %v780 = vsub.f32 %v62, %v779
  %781 = vmatpush1.msra.mxu0 %v780
  %v782 = vand.u32 %v65, 4294901760
  %v783 = vsub.f32 %v65, %v782
  %784 = vmatprep.subr.mxu0 %v783
  %v785 = vand.u32 %v64, 4294901760
  %v786 = vsub.f32 %v64, %v785
  %787 = vmatpush1.msra.mxu0 %v786
  %v788 = vand.u32 %v67, 4294901760
  %v789 = vsub.f32 %v67, %v788
  %790 = vmatprep.subr.mxu0 %v789
  %v791 = vand.u32 %v66, 4294901760
  %v792 = vsub.f32 %v66, %v791
  %793 = vmatpush1.msra.mxu0 %v792
  %v794 = vand.u32 %v69, 4294901760
  %v795 = vsub.f32 %v69, %v794
  %796 = vmatprep.subr.mxu0 %v795
  %v797 = vand.u32 %v68, 4294901760
  %v798 = vsub.f32 %v68, %v797
  %799 = vmatpush1.msra.mxu0 %v798
  %v800 = vand.u32 %v71, 4294901760
  %v801 = vsub.f32 %v71, %v800
  %802 = vmatprep.subr.mxu0 %v801
  %v803 = vand.u32 %v70, 4294901760
  %v804 = vsub.f32 %v70, %v803
  %805 = vmatpush1.msra.mxu0 %v804
  %v806 = vand.u32 %v73, 4294901760
  %v807 = vsub.f32 %v73, %v806
  %808 = vmatprep.subr.mxu0 %v807
  %v809 = vand.u32 %v72, 4294901760
  %v810 = vsub.f32 %v72, %v809
  %811 = vmatpush1.msra.mxu0 %v810
  %v812 = vand.u32 %v75, 4294901760
  %v813 = vsub.f32 %v75, %v812
  %814 = vmatprep.subr.mxu0 %v813
  %v815 = vand.u32 %v74, 4294901760
  %v816 = vsub.f32 %v74, %v815
  %817 = vmatpush1.msra.mxu0 %v816
  %v818 = vand.u32 %v77, 4294901760
  %v819 = vsub.f32 %v77, %v818
  %820 = vmatprep.subr.mxu0 %v819
  %v821 = vand.u32 %v76, 4294901760
  %v822 = vsub.f32 %v76, %v821
  %823 = vmatpush1.msra.mxu0 %v822
  %v824 = vand.u32 %v79, 4294901760
  %v825 = vsub.f32 %v79, %v824
  %826 = vmatprep.subr.mxu0 %v825
  %v827 = vand.u32 %v78, 4294901760
  %v828 = vsub.f32 %v78, %v827
  %829 = vmatpush1.msra.mxu0 %v828
  %v830 = vand.u32 %v81, 4294901760
  %v831 = vsub.f32 %v81, %v830
  %832 = vmatprep.subr.mxu0 %v831
  %v833 = vand.u32 %v80, 4294901760
  %v834 = vsub.f32 %v80, %v833
  %835 = vmatpush1.msra.mxu0 %v834
  %v836 = vand.u32 %v83, 4294901760
  %v837 = vsub.f32 %v83, %v836
  %838 = vmatprep.subr.mxu0 %v837
  %v839 = vand.u32 %v82, 4294901760
  %v840 = vsub.f32 %v82, %v839
  %841 = vmatpush1.msra.mxu0 %v840
  %v842 = vand.u32 %v85, 4294901760
  %v843 = vsub.f32 %v85, %v842
  %844 = vmatprep.subr.mxu0 %v843
  %v845 = vand.u32 %v84, 4294901760
  %v846 = vsub.f32 %v84, %v845
  %847 = vmatpush1.msra.mxu0 %v846
  %v848 = vand.u32 %v20, 4294901760
  %v849 = vsub.f32 %v20, %v848
  %850 = vmatprep.mubr.f32.mxu0 %v849
  %v851 = vand.u32 %v19, 4294901760
  %v852 = vsub.f32 %v19, %v851
  %853 = vmatmul.mubr.f32.gmra.mrb[0].mxu0 %v852
  %v854 = vpop.f32.mrb[0].mxu0
  %v855 = vadd.f32 %v652, %v854
  %v856 = vpop.f32.mrb[0].mxu0
  %v857 = vadd.f32 %v654, %v856
  %858 = vdwg.mxu0
  %v859 = vand.u32 %v23, 4294901760
  %860 = vmatprep.subr.mxu0 %v859
  %v861 = vand.u32 %v22, 4294901760
  %862 = vmatpush1.msra.mxu0 %v861
  %v863 = vand.u32 %v25, 4294901760
  %864 = vmatprep.subr.mxu0 %v863
  %v865 = vand.u32 %v24, 4294901760
  %866 = vmatpush1.msra.mxu0 %v865
  %v867 = vand.u32 %v27, 4294901760
  %868 = vmatprep.subr.mxu0 %v867
  %v869 = vand.u32 %v26, 4294901760
  %870 = vmatpush1.msra.mxu0 %v869
  %v871 = vand.u32 %v29, 4294901760
  %872 = vmatprep.subr.mxu0 %v871
  %v873 = vand.u32 %v28, 4294901760
  %874 = vmatpush1.msra.mxu0 %v873
  %v875 = vand.u32 %v31, 4294901760
  %876 = vmatprep.subr.mxu0 %v875
  %v877 = vand.u32 %v30, 4294901760
  %878 = vmatpush1.msra.mxu0 %v877
  %v879 = vand.u32 %v33, 4294901760
  %880 = vmatprep.subr.mxu0 %v879
  %v881 = vand.u32 %v32, 4294901760
  %882 = vmatpush1.msra.mxu0 %v881
  %v883 = vand.u32 %v35, 4294901760
  %884 = vmatprep.subr.mxu0 %v883
  %v885 = vand.u32 %v34, 4294901760
  %886 = vmatpush1.msra.mxu0 %v885
  %v887 = vand.u32 %v37, 4294901760
  %888 = vmatprep.subr.mxu0 %v887
  %v889 = vand.u32 %v36, 4294901760
  %890 = vmatpush1.msra.mxu0 %v889
  %v891 = vand.u32 %v39, 4294901760
  %892 = vmatprep.subr.mxu0 %v891
  %v893 = vand.u32 %v38, 4294901760
  %894 = vmatpush1.msra.mxu0 %v893
  %v895 = vand.u32 %v41, 4294901760
  %896 = vmatprep.subr.mxu0 %v895
  %v897 = vand.u32 %v40, 4294901760
  %898 = vmatpush1.msra.mxu0 %v897
  %v899 = vand.u32 %v43, 4294901760
  %900 = vmatprep.subr.mxu0 %v899
  %v901 = vand.u32 %v42, 4294901760
  %902 = vmatpush1.msra.mxu0 %v901
  %v903 = vand.u32 %v45, 4294901760
  %904 = vmatprep.subr.mxu0 %v903
  %v905 = vand.u32 %v44, 4294901760
  %906 = vmatpush1.msra.mxu0 %v905
  %v907 = vand.u32 %v47, 4294901760
  %908 = vmatprep.subr.mxu0 %v907
  %v909 = vand.u32 %v46, 4294901760
  %910 = vmatpush1.msra.mxu0 %v909
  %v911 = vand.u32 %v49, 4294901760
  %912 = vmatprep.subr.mxu0 %v911
  %v913 = vand.u32 %v48, 4294901760
  %914 = vmatpush1.msra.mxu0 %v913
  %v915 = vand.u32 %v51, 4294901760
  %916 = vmatprep.subr.mxu0 %v915
  %v917 = vand.u32 %v50, 4294901760
  %918 = vmatpush1.msra.mxu0 %v917
  %v919 = vand.u32 %v53, 4294901760
  %920 = vmatprep.subr.mxu0 %v919
  %v921 = vand.u32 %v52, 4294901760
  %922 = vmatpush1.msra.mxu0 %v921
  %v923 = vand.u32 %v55, 4294901760
  %924 = vmatprep.subr.mxu0 %v923
  %v925 = vand.u32 %v54, 4294901760
  %926 = vmatpush1.msra.mxu0 %v925
  %v927 = vand.u32 %v57, 4294901760
  %928 = vmatprep.subr.mxu0 %v927
  %v929 = vand.u32 %v56, 4294901760
  %930 = vmatpush1.msra.mxu0 %v929
  %v931 = vand.u32 %v59, 4294901760
  %932 = vmatprep.subr.mxu0 %v931
  %v933 = vand.u32 %v58, 4294901760
  %934 = vmatpush1.msra.mxu0 %v933
  %v935 = vand.u32 %v61, 4294901760
  %936 = vmatprep.subr.mxu0 %v935
  %v937 = vand.u32 %v60, 4294901760
  %938 = vmatpush1.msra.mxu0 %v937
  %v939 = vand.u32 %v63, 4294901760
  %940 = vmatprep.subr.mxu0 %v939
  %v941 = vand.u32 %v62, 4294901760
  %942 = vmatpush1.msra.mxu0 %v941
  %v943 = vand.u32 %v65, 4294901760
  %944 = vmatprep.subr.mxu0 %v943
  %v945 = vand.u32 %v64, 4294901760
  %946 = vmatpush1.msra.mxu0 %v945
  %v947 = vand.u32 %v67, 4294901760
  %948 = vmatprep.subr.mxu0 %v947
  %v949 = vand.u32 %v66, 4294901760
  %950 = vmatpush1.msra.mxu0 %v949
  %v951 = vand.u32 %v69, 4294901760
  %952 = vmatprep.subr.mxu0 %v951
  %v953 = vand.u32 %v68, 4294901760
  %954 = vmatpush1.msra.mxu0 %v953
  %v955 = vand.u32 %v71, 4294901760
  %956 = vmatprep.subr.mxu0 %v955
  %v957 = vand.u32 %v70, 4294901760
  %958 = vmatpush1.msra.mxu0 %v957
  %v959 = vand.u32 %v73, 4294901760
  %960 = vmatprep.subr.mxu0 %v959
  %v961 = vand.u32 %v72, 4294901760
  %962 = vmatpush1.msra.mxu0 %v961
  %v963 = vand.u32 %v75, 4294901760
  %964 = vmatprep.subr.mxu0 %v963
  %v965 = vand.u32 %v74, 4294901760
  %966 = vmatpush1.msra.mxu0 %v965
  %v967 = vand.u32 %v77, 4294901760
  %968 = vmatprep.subr.mxu0 %v967
  %v969 = vand.u32 %v76, 4294901760
  %970 = vmatpush1.msra.mxu0 %v969
  %v971 = vand.u32 %v79, 4294901760
  %972 = vmatprep.subr.mxu0 %v971
  %v973 = vand.u32 %v78, 4294901760
  %974 = vmatpush1.msra.mxu0 %v973
  %v975 = vand.u32 %v81, 4294901760
  %976 = vmatprep.subr.mxu0 %v975
  %v977 = vand.u32 %v80, 4294901760
  %978 = vmatpush1.msra.mxu0 %v977
  %v979 = vand.u32 %v83, 4294901760
  %980 = vmatprep.subr.mxu0 %v979
  %v981 = vand.u32 %v82, 4294901760
  %982 = vmatpush1.msra.mxu0 %v981
  %v983 = vand.u32 %v85, 4294901760
  %984 = vmatprep.subr.mxu0 %v983
  %v985 = vand.u32 %v84, 4294901760
  %986 = vmatpush1.msra.mxu0 %v985
  %v987 = vand.u32 %v20, 4294901760
  %v988 = vsub.f32 %v20, %v987
  %v989 = vand.u32 %v988, 4294901760
  %990 = vmatprep.mubr.f32.mxu0 %v989
  %v991 = vand.u32 %v19, 4294901760
  %v992 = vsub.f32 %v19, %v991
  %v993 = vand.u32 %v992, 4294901760
  %994 = vmatmul.mubr.f32.gmra.mrb[0].mxu0 %v993
  %v995 = vpop.f32.mrb[0].mxu0
  %v996 = vadd.f32 %v855, %v995
  %v997 = vpop.f32.mrb[0].mxu0
  %v998 = vadd.f32 %v857, %v997
  %999 = vdwg.mxu0
  %v1000 = vand.u32 %v23, 4294901760
  %v1001 = vsub.f32 %v23, %v1000
  %v1002 = vand.u32 %v1001, 4294901760
  %1003 = vmatprep.subr.mxu0 %v1002
  %v1004 = vand.u32 %v22, 4294901760
  %v1005 = vsub.f32 %v22, %v1004
  %v1006 = vand.u32 %v1005, 4294901760
  %1007 = vmatpush1.msra.mxu0 %v1006
  %v1008 = vand.u32 %v25, 4294901760
  %v1009 = vsub.f32 %v25, %v1008
  %v1010 = vand.u32 %v1009, 4294901760
  %1011 = vmatprep.subr.mxu0 %v1010
  %v1012 = vand.u32 %v24, 4294901760
  %v1013 = vsub.f32 %v24, %v1012
  %v1014 = vand.u32 %v1013, 4294901760
  %1015 = vmatpush1.msra.mxu0 %v1014
  %v1016 = vand.u32 %v27, 4294901760
  %v1017 = vsub.f32 %v27, %v1016
  %v1018 = vand.u32 %v1017, 4294901760
  %1019 = vmatprep.subr.mxu0 %v1018
  %v1020 = vand.u32 %v26, 4294901760
  %v1021 = vsub.f32 %v26, %v1020
  %v1022 = vand.u32 %v1021, 4294901760
  %1023 = vmatpush1.msra.mxu0 %v1022
  %v1024 = vand.u32 %v29, 4294901760
  %v1025 = vsub.f32 %v29, %v1024
  %v1026 = vand.u32 %v1025, 4294901760
  %1027 = vmatprep.subr.mxu0 %v1026
  %v1028 = vand.u32 %v28, 4294901760
  %v1029 = vsub.f32 %v28, %v1028
  %v1030 = vand.u32 %v1029, 4294901760
  %1031 = vmatpush1.msra.mxu0 %v1030
  %v1032 = vand.u32 %v31, 4294901760
  %v1033 = vsub.f32 %v31, %v1032
  %v1034 = vand.u32 %v1033, 4294901760
  %1035 = vmatprep.subr.mxu0 %v1034
  %v1036 = vand.u32 %v30, 4294901760
  %v1037 = vsub.f32 %v30, %v1036
  %v1038 = vand.u32 %v1037, 4294901760
  %1039 = vmatpush1.msra.mxu0 %v1038
  %v1040 = vand.u32 %v33, 4294901760
  %v1041 = vsub.f32 %v33, %v1040
  %v1042 = vand.u32 %v1041, 4294901760
  %1043 = vmatprep.subr.mxu0 %v1042
  %v1044 = vand.u32 %v32, 4294901760
  %v1045 = vsub.f32 %v32, %v1044
  %v1046 = vand.u32 %v1045, 4294901760
  %1047 = vmatpush1.msra.mxu0 %v1046
  %v1048 = vand.u32 %v35, 4294901760
  %v1049 = vsub.f32 %v35, %v1048
  %v1050 = vand.u32 %v1049, 4294901760
  %1051 = vmatprep.subr.mxu0 %v1050
  %v1052 = vand.u32 %v34, 4294901760
  %v1053 = vsub.f32 %v34, %v1052
  %v1054 = vand.u32 %v1053, 4294901760
  %1055 = vmatpush1.msra.mxu0 %v1054
  %v1056 = vand.u32 %v37, 4294901760
  %v1057 = vsub.f32 %v37, %v1056
  %v1058 = vand.u32 %v1057, 4294901760
  %1059 = vmatprep.subr.mxu0 %v1058
  %v1060 = vand.u32 %v36, 4294901760
  %v1061 = vsub.f32 %v36, %v1060
  %v1062 = vand.u32 %v1061, 4294901760
  %1063 = vmatpush1.msra.mxu0 %v1062
  %v1064 = vand.u32 %v39, 4294901760
  %v1065 = vsub.f32 %v39, %v1064
  %v1066 = vand.u32 %v1065, 4294901760
  %1067 = vmatprep.subr.mxu0 %v1066
  %v1068 = vand.u32 %v38, 4294901760
  %v1069 = vsub.f32 %v38, %v1068
  %v1070 = vand.u32 %v1069, 4294901760
  %1071 = vmatpush1.msra.mxu0 %v1070
  %v1072 = vand.u32 %v41, 4294901760
  %v1073 = vsub.f32 %v41, %v1072
  %v1074 = vand.u32 %v1073, 4294901760
  %1075 = vmatprep.subr.mxu0 %v1074
  %v1076 = vand.u32 %v40, 4294901760
  %v1077 = vsub.f32 %v40, %v1076
  %v1078 = vand.u32 %v1077, 4294901760
  %1079 = vmatpush1.msra.mxu0 %v1078
  %v1080 = vand.u32 %v43, 4294901760
  %v1081 = vsub.f32 %v43, %v1080
  %v1082 = vand.u32 %v1081, 4294901760
  %1083 = vmatprep.subr.mxu0 %v1082
  %v1084 = vand.u32 %v42, 4294901760
  %v1085 = vsub.f32 %v42, %v1084
  %v1086 = vand.u32 %v1085, 4294901760
  %1087 = vmatpush1.msra.mxu0 %v1086
  %v1088 = vand.u32 %v45, 4294901760
  %v1089 = vsub.f32 %v45, %v1088
  %v1090 = vand.u32 %v1089, 4294901760
  %1091 = vmatprep.subr.mxu0 %v1090
  %v1092 = vand.u32 %v44, 4294901760
  %v1093 = vsub.f32 %v44, %v1092
  %v1094 = vand.u32 %v1093, 4294901760
  %1095 = vmatpush1.msra.mxu0 %v1094
  %v1096 = vand.u32 %v47, 4294901760
  %v1097 = vsub.f32 %v47, %v1096
  %v1098 = vand.u32 %v1097, 4294901760
  %1099 = vmatprep.subr.mxu0 %v1098
  %v1100 = vand.u32 %v46, 4294901760
  %v1101 = vsub.f32 %v46, %v1100
  %v1102 = vand.u32 %v1101, 4294901760
  %1103 = vmatpush1.msra.mxu0 %v1102
  %v1104 = vand.u32 %v49, 4294901760
  %v1105 = vsub.f32 %v49, %v1104
  %v1106 = vand.u32 %v1105, 4294901760
  %1107 = vmatprep.subr.mxu0 %v1106
  %v1108 = vand.u32 %v48, 4294901760
  %v1109 = vsub.f32 %v48, %v1108
  %v1110 = vand.u32 %v1109, 4294901760
  %1111 = vmatpush1.msra.mxu0 %v1110
  %v1112 = vand.u32 %v51, 4294901760
  %v1113 = vsub.f32 %v51, %v1112
  %v1114 = vand.u32 %v1113, 4294901760
  %1115 = vmatprep.subr.mxu0 %v1114
  %v1116 = vand.u32 %v50, 4294901760
  %v1117 = vsub.f32 %v50, %v1116
  %v1118 = vand.u32 %v1117, 4294901760
  %1119 = vmatpush1.msra.mxu0 %v1118
  %v1120 = vand.u32 %v53, 4294901760
  %v1121 = vsub.f32 %v53, %v1120
  %v1122 = vand.u32 %v1121, 4294901760
  %1123 = vmatprep.subr.mxu0 %v1122
  %v1124 = vand.u32 %v52, 4294901760
  %v1125 = vsub.f32 %v52, %v1124
  %v1126 = vand.u32 %v1125, 4294901760
  %1127 = vmatpush1.msra.mxu0 %v1126
  %v1128 = vand.u32 %v55, 4294901760
  %v1129 = vsub.f32 %v55, %v1128
  %v1130 = vand.u32 %v1129, 4294901760
  %1131 = vmatprep.subr.mxu0 %v1130
  %v1132 = vand.u32 %v54, 4294901760
  %v1133 = vsub.f32 %v54, %v1132
  %v1134 = vand.u32 %v1133, 4294901760
  %1135 = vmatpush1.msra.mxu0 %v1134
  %v1136 = vand.u32 %v57, 4294901760
  %v1137 = vsub.f32 %v57, %v1136
  %v1138 = vand.u32 %v1137, 4294901760
  %1139 = vmatprep.subr.mxu0 %v1138
  %v1140 = vand.u32 %v56, 4294901760
  %v1141 = vsub.f32 %v56, %v1140
  %v1142 = vand.u32 %v1141, 4294901760
  %1143 = vmatpush1.msra.mxu0 %v1142
  %v1144 = vand.u32 %v59, 4294901760
  %v1145 = vsub.f32 %v59, %v1144
  %v1146 = vand.u32 %v1145, 4294901760
  %1147 = vmatprep.subr.mxu0 %v1146
  %v1148 = vand.u32 %v58, 4294901760
  %v1149 = vsub.f32 %v58, %v1148
  %v1150 = vand.u32 %v1149, 4294901760
  %1151 = vmatpush1.msra.mxu0 %v1150
  %v1152 = vand.u32 %v61, 4294901760
  %v1153 = vsub.f32 %v61, %v1152
  %v1154 = vand.u32 %v1153, 4294901760
  %1155 = vmatprep.subr.mxu0 %v1154
  %v1156 = vand.u32 %v60, 4294901760
  %v1157 = vsub.f32 %v60, %v1156
  %v1158 = vand.u32 %v1157, 4294901760
  %1159 = vmatpush1.msra.mxu0 %v1158
  %v1160 = vand.u32 %v63, 4294901760
  %v1161 = vsub.f32 %v63, %v1160
  %v1162 = vand.u32 %v1161, 4294901760
  %1163 = vmatprep.subr.mxu0 %v1162
  %v1164 = vand.u32 %v62, 4294901760
  %v1165 = vsub.f32 %v62, %v1164
  %v1166 = vand.u32 %v1165, 4294901760
  %1167 = vmatpush1.msra.mxu0 %v1166
  %v1168 = vand.u32 %v65, 4294901760
  %v1169 = vsub.f32 %v65, %v1168
  %v1170 = vand.u32 %v1169, 4294901760
  %1171 = vmatprep.subr.mxu0 %v1170
  %v1172 = vand.u32 %v64, 4294901760
  %v1173 = vsub.f32 %v64, %v1172
  %v1174 = vand.u32 %v1173, 4294901760
  %1175 = vmatpush1.msra.mxu0 %v1174
  %v1176 = vand.u32 %v67, 4294901760
  %v1177 = vsub.f32 %v67, %v1176
  %v1178 = vand.u32 %v1177, 4294901760
  %1179 = vmatprep.subr.mxu0 %v1178
  %v1180 = vand.u32 %v66, 4294901760
  %v1181 = vsub.f32 %v66, %v1180
  %v1182 = vand.u32 %v1181, 4294901760
  %1183 = vmatpush1.msra.mxu0 %v1182
  %v1184 = vand.u32 %v69, 4294901760
  %v1185 = vsub.f32 %v69, %v1184
  %v1186 = vand.u32 %v1185, 4294901760
  %1187 = vmatprep.subr.mxu0 %v1186
  %v1188 = vand.u32 %v68, 4294901760
  %v1189 = vsub.f32 %v68, %v1188
  %v1190 = vand.u32 %v1189, 4294901760
  %1191 = vmatpush1.msra.mxu0 %v1190
  %v1192 = vand.u32 %v71, 4294901760
  %v1193 = vsub.f32 %v71, %v1192
  %v1194 = vand.u32 %v1193, 4294901760
  %1195 = vmatprep.subr.mxu0 %v1194
  %v1196 = vand.u32 %v70, 4294901760
  %v1197 = vsub.f32 %v70, %v1196
  %v1198 = vand.u32 %v1197, 4294901760
  %1199 = vmatpush1.msra.mxu0 %v1198
  %v1200 = vand.u32 %v73, 4294901760
  %v1201 = vsub.f32 %v73, %v1200
  %v1202 = vand.u32 %v1201, 4294901760
  %1203 = vmatprep.subr.mxu0 %v1202
  %v1204 = vand.u32 %v72, 4294901760
  %v1205 = vsub.f32 %v72, %v1204
  %v1206 = vand.u32 %v1205, 4294901760
  %1207 = vmatpush1.msra.mxu0 %v1206
  %v1208 = vand.u32 %v75, 4294901760
  %v1209 = vsub.f32 %v75, %v1208
  %v1210 = vand.u32 %v1209, 4294901760
  %1211 = vmatprep.subr.mxu0 %v1210
  %v1212 = vand.u32 %v74, 4294901760
  %v1213 = vsub.f32 %v74, %v1212
  %v1214 = vand.u32 %v1213, 4294901760
  %1215 = vmatpush1.msra.mxu0 %v1214
  %v1216 = vand.u32 %v77, 4294901760
  %v1217 = vsub.f32 %v77, %v1216
  %v1218 = vand.u32 %v1217, 4294901760
  %1219 = vmatprep.subr.mxu0 %v1218
  %v1220 = vand.u32 %v76, 4294901760
  %v1221 = vsub.f32 %v76, %v1220
  %v1222 = vand.u32 %v1221, 4294901760
  %1223 = vmatpush1.msra.mxu0 %v1222
  %v1224 = vand.u32 %v79, 4294901760
  %v1225 = vsub.f32 %v79, %v1224
  %v1226 = vand.u32 %v1225, 4294901760
  %1227 = vmatprep.subr.mxu0 %v1226
  %v1228 = vand.u32 %v78, 4294901760
  %v1229 = vsub.f32 %v78, %v1228
  %v1230 = vand.u32 %v1229, 4294901760
  %1231 = vmatpush1.msra.mxu0 %v1230
  %v1232 = vand.u32 %v81, 4294901760
  %v1233 = vsub.f32 %v81, %v1232
  %v1234 = vand.u32 %v1233, 4294901760
  %1235 = vmatprep.subr.mxu0 %v1234
  %v1236 = vand.u32 %v80, 4294901760
  %v1237 = vsub.f32 %v80, %v1236
  %v1238 = vand.u32 %v1237, 4294901760
  %1239 = vmatpush1.msra.mxu0 %v1238
  %v1240 = vand.u32 %v83, 4294901760
  %v1241 = vsub.f32 %v83, %v1240
  %v1242 = vand.u32 %v1241, 4294901760
  %1243 = vmatprep.subr.mxu0 %v1242
  %v1244 = vand.u32 %v82, 4294901760
  %v1245 = vsub.f32 %v82, %v1244
  %v1246 = vand.u32 %v1245, 4294901760
  %1247 = vmatpush1.msra.mxu0 %v1246
  %v1248 = vand.u32 %v85, 4294901760
  %v1249 = vsub.f32 %v85, %v1248
  %v1250 = vand.u32 %v1249, 4294901760
  %1251 = vmatprep.subr.mxu0 %v1250
  %v1252 = vand.u32 %v84, 4294901760
  %v1253 = vsub.f32 %v84, %v1252
  %v1254 = vand.u32 %v1253, 4294901760
  %1255 = vmatpush1.msra.mxu0 %v1254
  %v1256 = vand.u32 %v20, 4294901760
  %1257 = vmatprep.mubr.f32.mxu0 %v1256
  %v1258 = vand.u32 %v19, 4294901760
  %1259 = vmatmul.mubr.f32.gmra.mrb[0].mxu0 %v1258
  %v1260 = vpop.f32.mrb[0].mxu0
  %v1261 = vadd.f32 %v996, %v1260
  %v1262 = vpop.f32.mrb[0].mxu0
  %v1263 = vadd.f32 %v998, %v1262
  %1264 = vdwg.mxu0
  %v1265 = vand.u32 %v23, 4294901760
  %1266 = vmatprep.subr.mxu0 %v1265
  %v1267 = vand.u32 %v22, 4294901760
  %1268 = vmatpush1.msra.mxu0 %v1267
  %v1269 = vand.u32 %v25, 4294901760
  %1270 = vmatprep.subr.mxu0 %v1269
  %v1271 = vand.u32 %v24, 4294901760
  %1272 = vmatpush1.msra.mxu0 %v1271
  %v1273 = vand.u32 %v27, 4294901760
  %1274 = vmatprep.subr.mxu0 %v1273
  %v1275 = vand.u32 %v26, 4294901760
  %1276 = vmatpush1.msra.mxu0 %v1275
  %v1277 = vand.u32 %v29, 4294901760
  %1278 = vmatprep.subr.mxu0 %v1277
  %v1279 = vand.u32 %v28, 4294901760
  %1280 = vmatpush1.msra.mxu0 %v1279
  %v1281 = vand.u32 %v31, 4294901760
  %1282 = vmatprep.subr.mxu0 %v1281
  %v1283 = vand.u32 %v30, 4294901760
  %1284 = vmatpush1.msra.mxu0 %v1283
  %v1285 = vand.u32 %v33, 4294901760
  %1286 = vmatprep.subr.mxu0 %v1285
  %v1287 = vand.u32 %v32, 4294901760
  %1288 = vmatpush1.msra.mxu0 %v1287
  %v1289 = vand.u32 %v35, 4294901760
  %1290 = vmatprep.subr.mxu0 %v1289
  %v1291 = vand.u32 %v34, 4294901760
  %1292 = vmatpush1.msra.mxu0 %v1291
  %v1293 = vand.u32 %v37, 4294901760
  %1294 = vmatprep.subr.mxu0 %v1293
  %v1295 = vand.u32 %v36, 4294901760
  %1296 = vmatpush1.msra.mxu0 %v1295
  %v1297 = vand.u32 %v39, 4294901760
  %1298 = vmatprep.subr.mxu0 %v1297
  %v1299 = vand.u32 %v38, 4294901760
  %1300 = vmatpush1.msra.mxu0 %v1299
  %v1301 = vand.u32 %v41, 4294901760
  %1302 = vmatprep.subr.mxu0 %v1301
  %v1303 = vand.u32 %v40, 4294901760
  %1304 = vmatpush1.msra.mxu0 %v1303
  %v1305 = vand.u32 %v43, 4294901760
  %1306 = vmatprep.subr.mxu0 %v1305
  %v1307 = vand.u32 %v42, 4294901760
  %1308 = vmatpush1.msra.mxu0 %v1307
  %v1309 = vand.u32 %v45, 4294901760
  %1310 = vmatprep.subr.mxu0 %v1309
  %v1311 = vand.u32 %v44, 4294901760
  %1312 = vmatpush1.msra.mxu0 %v1311
  %v1313 = vand.u32 %v47, 4294901760
  %1314 = vmatprep.subr.mxu0 %v1313
  %v1315 = vand.u32 %v46, 4294901760
  %1316 = vmatpush1.msra.mxu0 %v1315
  %v1317 = vand.u32 %v49, 4294901760
  %1318 = vmatprep.subr.mxu0 %v1317
  %v1319 = vand.u32 %v48, 4294901760
  %1320 = vmatpush1.msra.mxu0 %v1319
  %v1321 = vand.u32 %v51, 4294901760
  %1322 = vmatprep.subr.mxu0 %v1321
  %v1323 = vand.u32 %v50, 4294901760
  %1324 = vmatpush1.msra.mxu0 %v1323
  %v1325 = vand.u32 %v53, 4294901760
  %1326 = vmatprep.subr.mxu0 %v1325
  %v1327 = vand.u32 %v52, 4294901760
  %1328 = vmatpush1.msra.mxu0 %v1327
  %v1329 = vand.u32 %v55, 4294901760
  %1330 = vmatprep.subr.mxu0 %v1329
  %v1331 = vand.u32 %v54, 4294901760
  %1332 = vmatpush1.msra.mxu0 %v1331
  %v1333 = vand.u32 %v57, 4294901760
  %1334 = vmatprep.subr.mxu0 %v1333
  %v1335 = vand.u32 %v56, 4294901760
  %1336 = vmatpush1.msra.mxu0 %v1335
  %v1337 = vand.u32 %v59, 4294901760
  %1338 = vmatprep.subr.mxu0 %v1337
  %v1339 = vand.u32 %v58, 4294901760
  %1340 = vmatpush1.msra.mxu0 %v1339
  %v1341 = vand.u32 %v61, 4294901760
  %1342 = vmatprep.subr.mxu0 %v1341
  %v1343 = vand.u32 %v60, 4294901760
  %1344 = vmatpush1.msra.mxu0 %v1343
  %v1345 = vand.u32 %v63, 4294901760
  %1346 = vmatprep.subr.mxu0 %v1345
  %v1347 = vand.u32 %v62, 4294901760
  %1348 = vmatpush1.msra.mxu0 %v1347
  %v1349 = vand.u32 %v65, 4294901760
  %1350 = vmatprep.subr.mxu0 %v1349
  %v1351 = vand.u32 %v64, 4294901760
  %1352 = vmatpush1.msra.mxu0 %v1351
  %v1353 = vand.u32 %v67, 4294901760
  %1354 = vmatprep.subr.mxu0 %v1353
  %v1355 = vand.u32 %v66, 4294901760
  %1356 = vmatpush1.msra.mxu0 %v1355
  %v1357 = vand.u32 %v69, 4294901760
  %1358 = vmatprep.subr.mxu0 %v1357
  %v1359 = vand.u32 %v68, 4294901760
  %1360 = vmatpush1.msra.mxu0 %v1359
  %v1361 = vand.u32 %v71, 4294901760
  %1362 = vmatprep.subr.mxu0 %v1361
  %v1363 = vand.u32 %v70, 4294901760
  %1364 = vmatpush1.msra.mxu0 %v1363
  %v1365 = vand.u32 %v73, 4294901760
  %1366 = vmatprep.subr.mxu0 %v1365
  %v1367 = vand.u32 %v72, 4294901760
  %1368 = vmatpush1.msra.mxu0 %v1367
  %v1369 = vand.u32 %v75, 4294901760
  %1370 = vmatprep.subr.mxu0 %v1369
  %v1371 = vand.u32 %v74, 4294901760
  %1372 = vmatpush1.msra.mxu0 %v1371
  %v1373 = vand.u32 %v77, 4294901760
  %1374 = vmatprep.subr.mxu0 %v1373
  %v1375 = vand.u32 %v76, 4294901760
  %1376 = vmatpush1.msra.mxu0 %v1375
  %v1377 = vand.u32 %v79, 4294901760
  %1378 = vmatprep.subr.mxu0 %v1377
  %v1379 = vand.u32 %v78, 4294901760
  %1380 = vmatpush1.msra.mxu0 %v1379
  %v1381 = vand.u32 %v81, 4294901760
  %1382 = vmatprep.subr.mxu0 %v1381
  %v1383 = vand.u32 %v80, 4294901760
  %1384 = vmatpush1.msra.mxu0 %v1383
  %v1385 = vand.u32 %v83, 4294901760
  %1386 = vmatprep.subr.mxu0 %v1385
  %v1387 = vand.u32 %v82, 4294901760
  %1388 = vmatpush1.msra.mxu0 %v1387
  %v1389 = vand.u32 %v85, 4294901760
  %1390 = vmatprep.subr.mxu0 %v1389
  %v1391 = vand.u32 %v84, 4294901760
  %1392 = vmatpush1.msra.mxu0 %v1391
  %v1393 = vand.u32 %v20, 4294901760
  %1394 = vmatprep.mubr.f32.mxu0 %v1393
  %v1395 = vand.u32 %v19, 4294901760
  %1396 = vmatmul.mubr.f32.gmra.mrb[0].mxu0 %v1395
  %v1397 = vpop.f32.mrb[0].mxu0
  %v1398 = vadd.f32 %v1261, %v1397
  %v1399 = vpop.f32.mrb[0].mxu0
  %v1400 = vadd.f32 %v1263, %v1399
  %1401 = vdwg.mxu0
  %v1402 = vand.u32 %v87, 4294901760
  %1403 = vmatprep.subr.mxu0 %v1402
  %v1404 = vand.u32 %v86, 4294901760
  %1405 = vmatpush1.msra.mxu0 %v1404
  %v1406 = vand.u32 %v89, 4294901760
  %1407 = vmatprep.subr.mxu0 %v1406
  %v1408 = vand.u32 %v88, 4294901760
  %1409 = vmatpush1.msra.mxu0 %v1408
  %v1410 = vand.u32 %v91, 4294901760
  %1411 = vmatprep.subr.mxu0 %v1410
  %v1412 = vand.u32 %v90, 4294901760
  %1413 = vmatpush1.msra.mxu0 %v1412
  %v1414 = vand.u32 %v93, 4294901760
  %1415 = vmatprep.subr.mxu0 %v1414
  %v1416 = vand.u32 %v92, 4294901760
  %1417 = vmatpush1.msra.mxu0 %v1416
  %v1418 = vand.u32 %v95, 4294901760
  %1419 = vmatprep.subr.mxu0 %v1418
  %v1420 = vand.u32 %v94, 4294901760
  %1421 = vmatpush1.msra.mxu0 %v1420
  %v1422 = vand.u32 %v97, 4294901760
  %1423 = vmatprep.subr.mxu0 %v1422
  %v1424 = vand.u32 %v96, 4294901760
  %1425 = vmatpush1.msra.mxu0 %v1424
  %v1426 = vand.u32 %v99, 4294901760
  %1427 = vmatprep.subr.mxu0 %v1426
  %v1428 = vand.u32 %v98, 4294901760
  %1429 = vmatpush1.msra.mxu0 %v1428
  %v1430 = vand.u32 %v101, 4294901760
  %1431 = vmatprep.subr.mxu0 %v1430
  %v1432 = vand.u32 %v100, 4294901760
  %1433 = vmatpush1.msra.mxu0 %v1432
  %v1434 = vand.u32 %v103, 4294901760
  %1435 = vmatprep.subr.mxu0 %v1434
  %v1436 = vand.u32 %v102, 4294901760
  %1437 = vmatpush1.msra.mxu0 %v1436
  %v1438 = vand.u32 %v105, 4294901760
  %1439 = vmatprep.subr.mxu0 %v1438
  %v1440 = vand.u32 %v104, 4294901760
  %1441 = vmatpush1.msra.mxu0 %v1440
  %v1442 = vand.u32 %v107, 4294901760
  %1443 = vmatprep.subr.mxu0 %v1442
  %v1444 = vand.u32 %v106, 4294901760
  %1445 = vmatpush1.msra.mxu0 %v1444
  %v1446 = vand.u32 %v109, 4294901760
  %1447 = vmatprep.subr.mxu0 %v1446
  %v1448 = vand.u32 %v108, 4294901760
  %1449 = vmatpush1.msra.mxu0 %v1448
  %v1450 = vand.u32 %v111, 4294901760
  %1451 = vmatprep.subr.mxu0 %v1450
  %v1452 = vand.u32 %v110, 4294901760
  %1453 = vmatpush1.msra.mxu0 %v1452
  %v1454 = vand.u32 %v113, 4294901760
  %1455 = vmatprep.subr.mxu0 %v1454
  %v1456 = vand.u32 %v112, 4294901760
  %1457 = vmatpush1.msra.mxu0 %v1456
  %v1458 = vand.u32 %v115, 4294901760
  %1459 = vmatprep.subr.mxu0 %v1458
  %v1460 = vand.u32 %v114, 4294901760
  %1461 = vmatpush1.msra.mxu0 %v1460
  %v1462 = vand.u32 %v117, 4294901760
  %1463 = vmatprep.subr.mxu0 %v1462
  %v1464 = vand.u32 %v116, 4294901760
  %1465 = vmatpush1.msra.mxu0 %v1464
  %1466 = vmatprep.subr.mxu0 0.0
  %1467 = vmatpush1.msra.mxu0 0.0
  %1468 = vmatprep.subr.mxu0 0.0
  %1469 = vmatpush1.msra.mxu0 0.0
  %1470 = vmatprep.subr.mxu0 0.0
  %1471 = vmatpush1.msra.mxu0 0.0
  %1472 = vmatprep.subr.mxu0 0.0
  %1473 = vmatpush1.msra.mxu0 0.0
  %1474 = vmatprep.subr.mxu0 0.0
  %1475 = vmatpush1.msra.mxu0 0.0
  %1476 = vmatprep.subr.mxu0 0.0
  %1477 = vmatpush1.msra.mxu0 0.0
  %1478 = vmatprep.subr.mxu0 0.0
  %1479 = vmatpush1.msra.mxu0 0.0
  %1480 = vmatprep.subr.mxu0 0.0
  %1481 = vmatpush1.msra.mxu0 0.0
  %1482 = vmatprep.subr.mxu0 0.0
  %1483 = vmatpush1.msra.mxu0 0.0
  %1484 = vmatprep.subr.mxu0 0.0
  %1485 = vmatpush1.msra.mxu0 0.0
  %1486 = vmatprep.subr.mxu0 0.0
  %1487 = vmatpush1.msra.mxu0 0.0
  %1488 = vmatprep.subr.mxu0 0.0
  %1489 = vmatpush1.msra.mxu0 0.0
  %1490 = vmatprep.subr.mxu0 0.0
  %1491 = vmatpush1.msra.mxu0 0.0
  %1492 = vmatprep.subr.mxu0 0.0
  %1493 = vmatpush1.msra.mxu0 0.0
  %1494 = vmatprep.subr.mxu0 0.0
  %1495 = vmatpush1.msra.mxu0 0.0
  %1496 = vmatprep.subr.mxu0 0.0
  %1497 = vmatpush1.msra.mxu0 0.0
  %1498 = vmatprep.mubr.f32.mxu0 0.0
  %v1499 = vand.u32 %v21, 4294901760
  %v1500 = vsub.f32 %v21, %v1499
  %v1501 = vand.u32 %v1500, 4294901760
  %v1502 = vsub.f32 %v1500, %v1501
  %v1503 = vand.u32 %v1502, 4294901760
  %1504 = vmatmul.mubr.f32.gmra.mrb[0].mxu0 %v1503
  %v1505 = vpop.f32.mrb[0].mxu0
  %v1506 = vadd.f32 %v1398, %v1505
  %v1507 = vpop.f32.mrb[0].mxu0
  %v1508 = vadd.f32 %v1400, %v1507
  %1509 = vdwg.mxu0
  %v1510 = vand.u32 %v87, 4294901760
  %v1511 = vsub.f32 %v87, %v1510
  %v1512 = vand.u32 %v1511, 4294901760
  %v1513 = vsub.f32 %v1511, %v1512
  %v1514 = vand.u32 %v1513, 4294901760
  %1515 = vmatprep.subr.mxu0 %v1514
  %v1516 = vand.u32 %v86, 4294901760
  %v1517 = vsub.f32 %v86, %v1516
  %v1518 = vand.u32 %v1517, 4294901760
  %v1519 = vsub.f32 %v1517, %v1518
  %v1520 = vand.u32 %v1519, 4294901760
  %1521 = vmatpush1.msra.mxu0 %v1520
  %v1522 = vand.u32 %v89, 4294901760
  %v1523 = vsub.f32 %v89, %v1522
  %v1524 = vand.u32 %v1523, 4294901760
  %v1525 = vsub.f32 %v1523, %v1524
  %v1526 = vand.u32 %v1525, 4294901760
  %1527 = vmatprep.subr.mxu0 %v1526
  %v1528 = vand.u32 %v88, 4294901760
  %v1529 = vsub.f32 %v88, %v1528
  %v1530 = vand.u32 %v1529, 4294901760
  %v1531 = vsub.f32 %v1529, %v1530
  %v1532 = vand.u32 %v1531, 4294901760
  %1533 = vmatpush1.msra.mxu0 %v1532
  %v1534 = vand.u32 %v91, 4294901760
  %v1535 = vsub.f32 %v91, %v1534
  %v1536 = vand.u32 %v1535, 4294901760
  %v1537 = vsub.f32 %v1535, %v1536
  %v1538 = vand.u32 %v1537, 4294901760
  %1539 = vmatprep.subr.mxu0 %v1538
  %v1540 = vand.u32 %v90, 4294901760
  %v1541 = vsub.f32 %v90, %v1540
  %v1542 = vand.u32 %v1541, 4294901760
  %v1543 = vsub.f32 %v1541, %v1542
  %v1544 = vand.u32 %v1543, 4294901760
  %1545 = vmatpush1.msra.mxu0 %v1544
  %v1546 = vand.u32 %v93, 4294901760
  %v1547 = vsub.f32 %v93, %v1546
  %v1548 = vand.u32 %v1547, 4294901760
  %v1549 = vsub.f32 %v1547, %v1548
  %v1550 = vand.u32 %v1549, 4294901760
  %1551 = vmatprep.subr.mxu0 %v1550
  %v1552 = vand.u32 %v92, 4294901760
  %v1553 = vsub.f32 %v92, %v1552
  %v1554 = vand.u32 %v1553, 4294901760
  %v1555 = vsub.f32 %v1553, %v1554
  %v1556 = vand.u32 %v1555, 4294901760
  %1557 = vmatpush1.msra.mxu0 %v1556
  %v1558 = vand.u32 %v95, 4294901760
  %v1559 = vsub.f32 %v95, %v1558
  %v1560 = vand.u32 %v1559, 4294901760
  %v1561 = vsub.f32 %v1559, %v1560
  %v1562 = vand.u32 %v1561, 4294901760
  %1563 = vmatprep.subr.mxu0 %v1562
  %v1564 = vand.u32 %v94, 4294901760
  %v1565 = vsub.f32 %v94, %v1564
  %v1566 = vand.u32 %v1565, 4294901760
  %v1567 = vsub.f32 %v1565, %v1566
  %v1568 = vand.u32 %v1567, 4294901760
  %1569 = vmatpush1.msra.mxu0 %v1568
  %v1570 = vand.u32 %v97, 4294901760
  %v1571 = vsub.f32 %v97, %v1570
  %v1572 = vand.u32 %v1571, 4294901760
  %v1573 = vsub.f32 %v1571, %v1572
  %v1574 = vand.u32 %v1573, 4294901760
  %1575 = vmatprep.subr.mxu0 %v1574
  %v1576 = vand.u32 %v96, 4294901760
  %v1577 = vsub.f32 %v96, %v1576
  %v1578 = vand.u32 %v1577, 4294901760
  %v1579 = vsub.f32 %v1577, %v1578
  %v1580 = vand.u32 %v1579, 4294901760
  %1581 = vmatpush1.msra.mxu0 %v1580
  %v1582 = vand.u32 %v99, 4294901760
  %v1583 = vsub.f32 %v99, %v1582
  %v1584 = vand.u32 %v1583, 4294901760
  %v1585 = vsub.f32 %v1583, %v1584
  %v1586 = vand.u32 %v1585, 4294901760
  %1587 = vmatprep.subr.mxu0 %v1586
  %v1588 = vand.u32 %v98, 4294901760
  %v1589 = vsub.f32 %v98, %v1588
  %v1590 = vand.u32 %v1589, 4294901760
  %v1591 = vsub.f32 %v1589, %v1590
  %v1592 = vand.u32 %v1591, 4294901760
  %1593 = vmatpush1.msra.mxu0 %v1592
  %v1594 = vand.u32 %v101, 4294901760
  %v1595 = vsub.f32 %v101, %v1594
  %v1596 = vand.u32 %v1595, 4294901760
  %v1597 = vsub.f32 %v1595, %v1596
  %v1598 = vand.u32 %v1597, 4294901760
  %1599 = vmatprep.subr.mxu0 %v1598
  %v1600 = vand.u32 %v100, 4294901760
  %v1601 = vsub.f32 %v100, %v1600
  %v1602 = vand.u32 %v1601, 4294901760
  %v1603 = vsub.f32 %v1601, %v1602
  %v1604 = vand.u32 %v1603, 4294901760
  %1605 = vmatpush1.msra.mxu0 %v1604
  %v1606 = vand.u32 %v103, 4294901760
  %v1607 = vsub.f32 %v103, %v1606
  %v1608 = vand.u32 %v1607, 4294901760
  %v1609 = vsub.f32 %v1607, %v1608
  %v1610 = vand.u32 %v1609, 4294901760
  %1611 = vmatprep.subr.mxu0 %v1610
  %v1612 = vand.u32 %v102, 4294901760
  %v1613 = vsub.f32 %v102, %v1612
  %v1614 = vand.u32 %v1613, 4294901760
  %v1615 = vsub.f32 %v1613, %v1614
  %v1616 = vand.u32 %v1615, 4294901760
  %1617 = vmatpush1.msra.mxu0 %v1616
  %v1618 = vand.u32 %v105, 4294901760
  %v1619 = vsub.f32 %v105, %v1618
  %v1620 = vand.u32 %v1619, 4294901760
  %v1621 = vsub.f32 %v1619, %v1620
  %v1622 = vand.u32 %v1621, 4294901760
  %1623 = vmatprep.subr.mxu0 %v1622
  %v1624 = vand.u32 %v104, 4294901760
  %v1625 = vsub.f32 %v104, %v1624
  %v1626 = vand.u32 %v1625, 4294901760
  %v1627 = vsub.f32 %v1625, %v1626
  %v1628 = vand.u32 %v1627, 4294901760
  %1629 = vmatpush1.msra.mxu0 %v1628
  %v1630 = vand.u32 %v107, 4294901760
  %v1631 = vsub.f32 %v107, %v1630
  %v1632 = vand.u32 %v1631, 4294901760
  %v1633 = vsub.f32 %v1631, %v1632
  %v1634 = vand.u32 %v1633, 4294901760
  %1635 = vmatprep.subr.mxu0 %v1634
  %v1636 = vand.u32 %v106, 4294901760
  %v1637 = vsub.f32 %v106, %v1636
  %v1638 = vand.u32 %v1637, 4294901760
  %v1639 = vsub.f32 %v1637, %v1638
  %v1640 = vand.u32 %v1639, 4294901760
  %1641 = vmatpush1.msra.mxu0 %v1640
  %v1642 = vand.u32 %v109, 4294901760
  %v1643 = vsub.f32 %v109, %v1642
  %v1644 = vand.u32 %v1643, 4294901760
  %v1645 = vsub.f32 %v1643, %v1644
  %v1646 = vand.u32 %v1645, 4294901760
  %1647 = vmatprep.subr.mxu0 %v1646
  %v1648 = vand.u32 %v108, 4294901760
  %v1649 = vsub.f32 %v108, %v1648
  %v1650 = vand.u32 %v1649, 4294901760
  %v1651 = vsub.f32 %v1649, %v1650
  %v1652 = vand.u32 %v1651, 4294901760
  %1653 = vmatpush1.msra.mxu0 %v1652
  %v1654 = vand.u32 %v111, 4294901760
  %v1655 = vsub.f32 %v111, %v1654
  %v1656 = vand.u32 %v1655, 4294901760
  %v1657 = vsub.f32 %v1655, %v1656
  %v1658 = vand.u32 %v1657, 4294901760
  %1659 = vmatprep.subr.mxu0 %v1658
  %v1660 = vand.u32 %v110, 4294901760
  %v1661 = vsub.f32 %v110, %v1660
  %v1662 = vand.u32 %v1661, 4294901760
  %v1663 = vsub.f32 %v1661, %v1662
  %v1664 = vand.u32 %v1663, 4294901760
  %1665 = vmatpush1.msra.mxu0 %v1664
  %v1666 = vand.u32 %v113, 4294901760
  %v1667 = vsub.f32 %v113, %v1666
  %v1668 = vand.u32 %v1667, 4294901760
  %v1669 = vsub.f32 %v1667, %v1668
  %v1670 = vand.u32 %v1669, 4294901760
  %1671 = vmatprep.subr.mxu0 %v1670
  %v1672 = vand.u32 %v112, 4294901760
  %v1673 = vsub.f32 %v112, %v1672
  %v1674 = vand.u32 %v1673, 4294901760
  %v1675 = vsub.f32 %v1673, %v1674
  %v1676 = vand.u32 %v1675, 4294901760
  %1677 = vmatpush1.msra.mxu0 %v1676
  %v1678 = vand.u32 %v115, 4294901760
  %v1679 = vsub.f32 %v115, %v1678
  %v1680 = vand.u32 %v1679, 4294901760
  %v1681 = vsub.f32 %v1679, %v1680
  %v1682 = vand.u32 %v1681, 4294901760
  %1683 = vmatprep.subr.mxu0 %v1682
  %v1684 = vand.u32 %v114, 4294901760
  %v1685 = vsub.f32 %v114, %v1684
  %v1686 = vand.u32 %v1685, 4294901760
  %v1687 = vsub.f32 %v1685, %v1686
  %v1688 = vand.u32 %v1687, 4294901760
  %1689 = vmatpush1.msra.mxu0 %v1688
  %v1690 = vand.u32 %v117, 4294901760
  %v1691 = vsub.f32 %v117, %v1690
  %v1692 = vand.u32 %v1691, 4294901760
  %v1693 = vsub.f32 %v1691, %v1692
  %v1694 = vand.u32 %v1693, 4294901760
  %1695 = vmatprep.subr.mxu0 %v1694
  %v1696 = vand.u32 %v116, 4294901760
  %v1697 = vsub.f32 %v116, %v1696
  %v1698 = vand.u32 %v1697, 4294901760
  %v1699 = vsub.f32 %v1697, %v1698
  %v1700 = vand.u32 %v1699, 4294901760
  %1701 = vmatpush1.msra.mxu0 %v1700
  %1702 = vmatprep.subr.mxu0 0.0
  %1703 = vmatpush1.msra.mxu0 0.0
  %1704 = vmatprep.subr.mxu0 0.0
  %1705 = vmatpush1.msra.mxu0 0.0
  %1706 = vmatprep.subr.mxu0 0.0
  %1707 = vmatpush1.msra.mxu0 0.0
  %1708 = vmatprep.subr.mxu0 0.0
  %1709 = vmatpush1.msra.mxu0 0.0
  %1710 = vmatprep.subr.mxu0 0.0
  %1711 = vmatpush1.msra.mxu0 0.0
  %1712 = vmatprep.subr.mxu0 0.0
  %1713 = vmatpush1.msra.mxu0 0.0
  %1714 = vmatprep.subr.mxu0 0.0
  %1715 = vmatpush1.msra.mxu0 0.0
  %1716 = vmatprep.subr.mxu0 0.0
  %1717 = vmatpush1.msra.mxu0 0.0
  %1718 = vmatprep.subr.mxu0 0.0
  %1719 = vmatpush1.msra.mxu0 0.0
  %1720 = vmatprep.subr.mxu0 0.0
  %1721 = vmatpush1.msra.mxu0 0.0
  %1722 = vmatprep.subr.mxu0 0.0
  %1723 = vmatpush1.msra.mxu0 0.0
  %1724 = vmatprep.subr.mxu0 0.0
  %1725 = vmatpush1.msra.mxu0 0.0
  %1726 = vmatprep.subr.mxu0 0.0
  %1727 = vmatpush1.msra.mxu0 0.0
  %1728 = vmatprep.subr.mxu0 0.0
  %1729 = vmatpush1.msra.mxu0 0.0
  %1730 = vmatprep.subr.mxu0 0.0
  %1731 = vmatpush1.msra.mxu0 0.0
  %1732 = vmatprep.subr.mxu0 0.0
  %1733 = vmatpush1.msra.mxu0 0.0
  %1734 = vmatprep.mubr.f32.mxu0 0.0
  %v1735 = vand.u32 %v21, 4294901760
  %1736 = vmatmul.mubr.f32.gmra.mrb[0].mxu0 %v1735
  %v1737 = vpop.f32.mrb[0].mxu0
  %v1738 = vadd.f32 %v1506, %v1737
  %v1739 = vpop.f32.mrb[0].mxu0
  %v1740 = vadd.f32 %v1508, %v1739
  %1741 = vdwg.mxu0
  %v1742 = vand.u32 %v87, 4294901760
  %v1743 = vsub.f32 %v87, %v1742
  %1744 = vmatprep.subr.mxu0 %v1743
  %v1745 = vand.u32 %v86, 4294901760
  %v1746 = vsub.f32 %v86, %v1745
  %1747 = vmatpush1.msra.mxu0 %v1746
  %v1748 = vand.u32 %v89, 4294901760
  %v1749 = vsub.f32 %v89, %v1748
  %1750 = vmatprep.subr.mxu0 %v1749
  %v1751 = vand.u32 %v88, 4294901760
  %v1752 = vsub.f32 %v88, %v1751
  %1753 = vmatpush1.msra.mxu0 %v1752
  %v1754 = vand.u32 %v91, 4294901760
  %v1755 = vsub.f32 %v91, %v1754
  %1756 = vmatprep.subr.mxu0 %v1755
  %v1757 = vand.u32 %v90, 4294901760
  %v1758 = vsub.f32 %v90, %v1757
  %1759 = vmatpush1.msra.mxu0 %v1758
  %v1760 = vand.u32 %v93, 4294901760
  %v1761 = vsub.f32 %v93, %v1760
  %1762 = vmatprep.subr.mxu0 %v1761
  %v1763 = vand.u32 %v92, 4294901760
  %v1764 = vsub.f32 %v92, %v1763
  %1765 = vmatpush1.msra.mxu0 %v1764
  %v1766 = vand.u32 %v95, 4294901760
  %v1767 = vsub.f32 %v95, %v1766
  %1768 = vmatprep.subr.mxu0 %v1767
  %v1769 = vand.u32 %v94, 4294901760
  %v1770 = vsub.f32 %v94, %v1769
  %1771 = vmatpush1.msra.mxu0 %v1770
  %v1772 = vand.u32 %v97, 4294901760
  %v1773 = vsub.f32 %v97, %v1772
  %1774 = vmatprep.subr.mxu0 %v1773
  %v1775 = vand.u32 %v96, 4294901760
  %v1776 = vsub.f32 %v96, %v1775
  %1777 = vmatpush1.msra.mxu0 %v1776
  %v1778 = vand.u32 %v99, 4294901760
  %v1779 = vsub.f32 %v99, %v1778
  %1780 = vmatprep.subr.mxu0 %v1779
  %v1781 = vand.u32 %v98, 4294901760
  %v1782 = vsub.f32 %v98, %v1781
  %1783 = vmatpush1.msra.mxu0 %v1782
  %v1784 = vand.u32 %v101, 4294901760
  %v1785 = vsub.f32 %v101, %v1784
  %1786 = vmatprep.subr.mxu0 %v1785
  %v1787 = vand.u32 %v100, 4294901760
  %v1788 = vsub.f32 %v100, %v1787
  %1789 = vmatpush1.msra.mxu0 %v1788
  %v1790 = vand.u32 %v103, 4294901760
  %v1791 = vsub.f32 %v103, %v1790
  %1792 = vmatprep.subr.mxu0 %v1791
  %v1793 = vand.u32 %v102, 4294901760
  %v1794 = vsub.f32 %v102, %v1793
  %1795 = vmatpush1.msra.mxu0 %v1794
  %v1796 = vand.u32 %v105, 4294901760
  %v1797 = vsub.f32 %v105, %v1796
  %1798 = vmatprep.subr.mxu0 %v1797
  %v1799 = vand.u32 %v104, 4294901760
  %v1800 = vsub.f32 %v104, %v1799
  %1801 = vmatpush1.msra.mxu0 %v1800
  %v1802 = vand.u32 %v107, 4294901760
  %v1803 = vsub.f32 %v107, %v1802
  %1804 = vmatprep.subr.mxu0 %v1803
  %v1805 = vand.u32 %v106, 4294901760
  %v1806 = vsub.f32 %v106, %v1805
  %1807 = vmatpush1.msra.mxu0 %v1806
  %v1808 = vand.u32 %v109, 4294901760
  %v1809 = vsub.f32 %v109, %v1808
  %1810 = vmatprep.subr.mxu0 %v1809
  %v1811 = vand.u32 %v108, 4294901760
  %v1812 = vsub.f32 %v108, %v1811
  %1813 = vmatpush1.msra.mxu0 %v1812
  %v1814 = vand.u32 %v111, 4294901760
  %v1815 = vsub.f32 %v111, %v1814
  %1816 = vmatprep.subr.mxu0 %v1815
  %v1817 = vand.u32 %v110, 4294901760
  %v1818 = vsub.f32 %v110, %v1817
  %1819 = vmatpush1.msra.mxu0 %v1818
  %v1820 = vand.u32 %v113, 4294901760
  %v1821 = vsub.f32 %v113, %v1820
  %1822 = vmatprep.subr.mxu0 %v1821
  %v1823 = vand.u32 %v112, 4294901760
  %v1824 = vsub.f32 %v112, %v1823
  %1825 = vmatpush1.msra.mxu0 %v1824
  %v1826 = vand.u32 %v115, 4294901760
  %v1827 = vsub.f32 %v115, %v1826
  %1828 = vmatprep.subr.mxu0 %v1827
  %v1829 = vand.u32 %v114, 4294901760
  %v1830 = vsub.f32 %v114, %v1829
  %1831 = vmatpush1.msra.mxu0 %v1830
  %v1832 = vand.u32 %v117, 4294901760
  %v1833 = vsub.f32 %v117, %v1832
  %1834 = vmatprep.subr.mxu0 %v1833
  %v1835 = vand.u32 %v116, 4294901760
  %v1836 = vsub.f32 %v116, %v1835
  %1837 = vmatpush1.msra.mxu0 %v1836
  %1838 = vmatprep.subr.mxu0 0.0
  %1839 = vmatpush1.msra.mxu0 0.0
  %1840 = vmatprep.subr.mxu0 0.0
  %1841 = vmatpush1.msra.mxu0 0.0
  %1842 = vmatprep.subr.mxu0 0.0
  %1843 = vmatpush1.msra.mxu0 0.0
  %1844 = vmatprep.subr.mxu0 0.0
  %1845 = vmatpush1.msra.mxu0 0.0
  %1846 = vmatprep.subr.mxu0 0.0
  %1847 = vmatpush1.msra.mxu0 0.0
  %1848 = vmatprep.subr.mxu0 0.0
  %1849 = vmatpush1.msra.mxu0 0.0
  %1850 = vmatprep.subr.mxu0 0.0
  %1851 = vmatpush1.msra.mxu0 0.0
  %1852 = vmatprep.subr.mxu0 0.0
  %1853 = vmatpush1.msra.mxu0 0.0
  %1854 = vmatprep.subr.mxu0 0.0
  %1855 = vmatpush1.msra.mxu0 0.0
  %1856 = vmatprep.subr.mxu0 0.0
  %1857 = vmatpush1.msra.mxu0 0.0
  %1858 = vmatprep.subr.mxu0 0.0
  %1859 = vmatpush1.msra.mxu0 0.0
  %1860 = vmatprep.subr.mxu0 0.0
  %1861 = vmatpush1.msra.mxu0 0.0
  %1862 = vmatprep.subr.mxu0 0.0
  %1863 = vmatpush1.msra.mxu0 0.0
  %1864 = vmatprep.subr.mxu0 0.0
  %1865 = vmatpush1.msra.mxu0 0.0
  %1866 = vmatprep.subr.mxu0 0.0
  %1867 = vmatpush1.msra.mxu0 0.0
  %1868 = vmatprep.subr.mxu0 0.0
  %1869 = vmatpush1.msra.mxu0 0.0
  %1870 = vmatprep.mubr.f32.mxu0 0.0
  %v1871 = vand.u32 %v21, 4294901760
  %v1872 = vsub.f32 %v21, %v1871
  %1873 = vmatmul.mubr.f32.gmra.mrb[0].mxu0 %v1872
  %v1874 = vpop.f32.mrb[0].mxu0
  %v1875 = vadd.f32 %v1738, %v1874
  %v1876 = vpop.f32.mrb[0].mxu0
  %v1877 = vadd.f32 %v1740, %v1876
  %1878 = vdwg.mxu0
  %v1879 = vand.u32 %v87, 4294901760
  %1880 = vmatprep.subr.mxu0 %v1879
  %v1881 = vand.u32 %v86, 4294901760
  %1882 = vmatpush1.msra.mxu0 %v1881
  %v1883 = vand.u32 %v89, 4294901760
  %1884 = vmatprep.subr.mxu0 %v1883
  %v1885 = vand.u32 %v88, 4294901760
  %1886 = vmatpush1.msra.mxu0 %v1885
  %v1887 = vand.u32 %v91, 4294901760
  %1888 = vmatprep.subr.mxu0 %v1887
  %v1889 = vand.u32 %v90, 4294901760
  %1890 = vmatpush1.msra.mxu0 %v1889
  %v1891 = vand.u32 %v93, 4294901760
  %1892 = vmatprep.subr.mxu0 %v1891
  %v1893 = vand.u32 %v92, 4294901760
  %1894 = vmatpush1.msra.mxu0 %v1893
  %v1895 = vand.u32 %v95, 4294901760
  %1896 = vmatprep.subr.mxu0 %v1895
  %v1897 = vand.u32 %v94, 4294901760
  %1898 = vmatpush1.msra.mxu0 %v1897
  %v1899 = vand.u32 %v97, 4294901760
  %1900 = vmatprep.subr.mxu0 %v1899
  %v1901 = vand.u32 %v96, 4294901760
  %1902 = vmatpush1.msra.mxu0 %v1901
  %v1903 = vand.u32 %v99, 4294901760
  %1904 = vmatprep.subr.mxu0 %v1903
  %v1905 = vand.u32 %v98, 4294901760
  %1906 = vmatpush1.msra.mxu0 %v1905
  %v1907 = vand.u32 %v101, 4294901760
  %1908 = vmatprep.subr.mxu0 %v1907
  %v1909 = vand.u32 %v100, 4294901760
  %1910 = vmatpush1.msra.mxu0 %v1909
  %v1911 = vand.u32 %v103, 4294901760
  %1912 = vmatprep.subr.mxu0 %v1911
  %v1913 = vand.u32 %v102, 4294901760
  %1914 = vmatpush1.msra.mxu0 %v1913
  %v1915 = vand.u32 %v105, 4294901760
  %1916 = vmatprep.subr.mxu0 %v1915
  %v1917 = vand.u32 %v104, 4294901760
  %1918 = vmatpush1.msra.mxu0 %v1917
  %v1919 = vand.u32 %v107, 4294901760
  %1920 = vmatprep.subr.mxu0 %v1919
  %v1921 = vand.u32 %v106, 4294901760
  %1922 = vmatpush1.msra.mxu0 %v1921
  %v1923 = vand.u32 %v109, 4294901760
  %1924 = vmatprep.subr.mxu0 %v1923
  %v1925 = vand.u32 %v108, 4294901760
  %1926 = vmatpush1.msra.mxu0 %v1925
  %v1927 = vand.u32 %v111, 4294901760
  %1928 = vmatprep.subr.mxu0 %v1927
  %v1929 = vand.u32 %v110, 4294901760
  %1930 = vmatpush1.msra.mxu0 %v1929
  %v1931 = vand.u32 %v113, 4294901760
  %1932 = vmatprep.subr.mxu0 %v1931
  %v1933 = vand.u32 %v112, 4294901760
  %1934 = vmatpush1.msra.mxu0 %v1933
  %v1935 = vand.u32 %v115, 4294901760
  %1936 = vmatprep.subr.mxu0 %v1935
  %v1937 = vand.u32 %v114, 4294901760
  %1938 = vmatpush1.msra.mxu0 %v1937
  %v1939 = vand.u32 %v117, 4294901760
  %1940 = vmatprep.subr.mxu0 %v1939
  %v1941 = vand.u32 %v116, 4294901760
  %1942 = vmatpush1.msra.mxu0 %v1941
  %1943 = vmatprep.subr.mxu0 0.0
  %1944 = vmatpush1.msra.mxu0 0.0
  %1945 = vmatprep.subr.mxu0 0.0
  %1946 = vmatpush1.msra.mxu0 0.0
  %1947 = vmatprep.subr.mxu0 0.0
  %1948 = vmatpush1.msra.mxu0 0.0
  %1949 = vmatprep.subr.mxu0 0.0
  %1950 = vmatpush1.msra.mxu0 0.0
  %1951 = vmatprep.subr.mxu0 0.0
  %1952 = vmatpush1.msra.mxu0 0.0
  %1953 = vmatprep.subr.mxu0 0.0
  %1954 = vmatpush1.msra.mxu0 0.0
  %1955 = vmatprep.subr.mxu0 0.0
  %1956 = vmatpush1.msra.mxu0 0.0
  %1957 = vmatprep.subr.mxu0 0.0
  %1958 = vmatpush1.msra.mxu0 0.0
  %1959 = vmatprep.subr.mxu0 0.0
  %1960 = vmatpush1.msra.mxu0 0.0
  %1961 = vmatprep.subr.mxu0 0.0
  %1962 = vmatpush1.msra.mxu0 0.0
  %1963 = vmatprep.subr.mxu0 0.0
  %1964 = vmatpush1.msra.mxu0 0.0
  %1965 = vmatprep.subr.mxu0 0.0
  %1966 = vmatpush1.msra.mxu0 0.0
  %1967 = vmatprep.subr.mxu0 0.0
  %1968 = vmatpush1.msra.mxu0 0.0
  %1969 = vmatprep.subr.mxu0 0.0
  %1970 = vmatpush1.msra.mxu0 0.0
  %1971 = vmatprep.subr.mxu0 0.0
  %1972 = vmatpush1.msra.mxu0 0.0
  %1973 = vmatprep.subr.mxu0 0.0
  %1974 = vmatpush1.msra.mxu0 0.0
  %1975 = vmatprep.mubr.f32.mxu0 0.0
  %v1976 = vand.u32 %v21, 4294901760
  %v1977 = vsub.f32 %v21, %v1976
  %v1978 = vand.u32 %v1977, 4294901760
  %1979 = vmatmul.mubr.f32.gmra.mrb[0].mxu0 %v1978
  %v1980 = vpop.f32.mrb[0].mxu0
  %v1981 = vadd.f32 %v1875, %v1980
  %v1982 = vpop.f32.mrb[0].mxu0
  %v1983 = vadd.f32 %v1877, %v1982
  %1984 = vdwg.mxu0
  %v1985 = vand.u32 %v87, 4294901760
  %v1986 = vsub.f32 %v87, %v1985
  %v1987 = vand.u32 %v1986, 4294901760
  %1988 = vmatprep.subr.mxu0 %v1987
  %v1989 = vand.u32 %v86, 4294901760
  %v1990 = vsub.f32 %v86, %v1989
  %v1991 = vand.u32 %v1990, 4294901760
  %1992 = vmatpush1.msra.mxu0 %v1991
  %v1993 = vand.u32 %v89, 4294901760
  %v1994 = vsub.f32 %v89, %v1993
  %v1995 = vand.u32 %v1994, 4294901760
  %1996 = vmatprep.subr.mxu0 %v1995
  %v1997 = vand.u32 %v88, 4294901760
  %v1998 = vsub.f32 %v88, %v1997
  %v1999 = vand.u32 %v1998, 4294901760
  %2000 = vmatpush1.msra.mxu0 %v1999
  %v2001 = vand.u32 %v91, 4294901760
  %v2002 = vsub.f32 %v91, %v2001
  %v2003 = vand.u32 %v2002, 4294901760
  %2004 = vmatprep.subr.mxu0 %v2003
  %v2005 = vand.u32 %v90, 4294901760
  %v2006 = vsub.f32 %v90, %v2005
  %v2007 = vand.u32 %v2006, 4294901760
  %2008 = vmatpush1.msra.mxu0 %v2007
  %v2009 = vand.u32 %v93, 4294901760
  %v2010 = vsub.f32 %v93, %v2009
  %v2011 = vand.u32 %v2010, 4294901760
  %2012 = vmatprep.subr.mxu0 %v2011
  %v2013 = vand.u32 %v92, 4294901760
  %v2014 = vsub.f32 %v92, %v2013
  %v2015 = vand.u32 %v2014, 4294901760
  %2016 = vmatpush1.msra.mxu0 %v2015
  %v2017 = vand.u32 %v95, 4294901760
  %v2018 = vsub.f32 %v95, %v2017
  %v2019 = vand.u32 %v2018, 4294901760
  %2020 = vmatprep.subr.mxu0 %v2019
  %v2021 = vand.u32 %v94, 4294901760
  %v2022 = vsub.f32 %v94, %v2021
  %v2023 = vand.u32 %v2022, 4294901760
  %2024 = vmatpush1.msra.mxu0 %v2023
  %v2025 = vand.u32 %v97, 4294901760
  %v2026 = vsub.f32 %v97, %v2025
  %v2027 = vand.u32 %v2026, 4294901760
  %2028 = vmatprep.subr.mxu0 %v2027
  %v2029 = vand.u32 %v96, 4294901760
  %v2030 = vsub.f32 %v96, %v2029
  %v2031 = vand.u32 %v2030, 4294901760
  %2032 = vmatpush1.msra.mxu0 %v2031
  %v2033 = vand.u32 %v99, 4294901760
  %v2034 = vsub.f32 %v99, %v2033
  %v2035 = vand.u32 %v2034, 4294901760
  %2036 = vmatprep.subr.mxu0 %v2035
  %v2037 = vand.u32 %v98, 4294901760
  %v2038 = vsub.f32 %v98, %v2037
  %v2039 = vand.u32 %v2038, 4294901760
  %2040 = vmatpush1.msra.mxu0 %v2039
  %v2041 = vand.u32 %v101, 4294901760
  %v2042 = vsub.f32 %v101, %v2041
  %v2043 = vand.u32 %v2042, 4294901760
  %2044 = vmatprep.subr.mxu0 %v2043
  %v2045 = vand.u32 %v100, 4294901760
  %v2046 = vsub.f32 %v100, %v2045
  %v2047 = vand.u32 %v2046, 4294901760
  %2048 = vmatpush1.msra.mxu0 %v2047
  %v2049 = vand.u32 %v103, 4294901760
  %v2050 = vsub.f32 %v103, %v2049
  %v2051 = vand.u32 %v2050, 4294901760
  %2052 = vmatprep.subr.mxu0 %v2051
  %v2053 = vand.u32 %v102, 4294901760
  %v2054 = vsub.f32 %v102, %v2053
  %v2055 = vand.u32 %v2054, 4294901760
  %2056 = vmatpush1.msra.mxu0 %v2055
  %v2057 = vand.u32 %v105, 4294901760
  %v2058 = vsub.f32 %v105, %v2057
  %v2059 = vand.u32 %v2058, 4294901760
  %2060 = vmatprep.subr.mxu0 %v2059
  %v2061 = vand.u32 %v104, 4294901760
  %v2062 = vsub.f32 %v104, %v2061
  %v2063 = vand.u32 %v2062, 4294901760
  %2064 = vmatpush1.msra.mxu0 %v2063
  %v2065 = vand.u32 %v107, 4294901760
  %v2066 = vsub.f32 %v107, %v2065
  %v2067 = vand.u32 %v2066, 4294901760
  %2068 = vmatprep.subr.mxu0 %v2067
  %v2069 = vand.u32 %v106, 4294901760
  %v2070 = vsub.f32 %v106, %v2069
  %v2071 = vand.u32 %v2070, 4294901760
  %2072 = vmatpush1.msra.mxu0 %v2071
  %v2073 = vand.u32 %v109, 4294901760
  %v2074 = vsub.f32 %v109, %v2073
  %v2075 = vand.u32 %v2074, 4294901760
  %2076 = vmatprep.subr.mxu0 %v2075
  %v2077 = vand.u32 %v108, 4294901760
  %v2078 = vsub.f32 %v108, %v2077
  %v2079 = vand.u32 %v2078, 4294901760
  %2080 = vmatpush1.msra.mxu0 %v2079
  %v2081 = vand.u32 %v111, 4294901760
  %v2082 = vsub.f32 %v111, %v2081
  %v2083 = vand.u32 %v2082, 4294901760
  %2084 = vmatprep.subr.mxu0 %v2083
  %v2085 = vand.u32 %v110, 4294901760
  %v2086 = vsub.f32 %v110, %v2085
  %v2087 = vand.u32 %v2086, 4294901760
  %2088 = vmatpush1.msra.mxu0 %v2087
  %v2089 = vand.u32 %v113, 4294901760
  %v2090 = vsub.f32 %v113, %v2089
  %v2091 = vand.u32 %v2090, 4294901760
  %2092 = vmatprep.subr.mxu0 %v2091
  %v2093 = vand.u32 %v112, 4294901760
  %v2094 = vsub.f32 %v112, %v2093
  %v2095 = vand.u32 %v2094, 4294901760
  %2096 = vmatpush1.msra.mxu0 %v2095
  %v2097 = vand.u32 %v115, 4294901760
  %v2098 = vsub.f32 %v115, %v2097
  %v2099 = vand.u32 %v2098, 4294901760
  %2100 = vmatprep.subr.mxu0 %v2099
  %v2101 = vand.u32 %v114, 4294901760
  %v2102 = vsub.f32 %v114, %v2101
  %v2103 = vand.u32 %v2102, 4294901760
  %2104 = vmatpush1.msra.mxu0 %v2103
  %v2105 = vand.u32 %v117, 4294901760
  %v2106 = vsub.f32 %v117, %v2105
  %v2107 = vand.u32 %v2106, 4294901760
  %2108 = vmatprep.subr.mxu0 %v2107
  %v2109 = vand.u32 %v116, 4294901760
  %v2110 = vsub.f32 %v116, %v2109
  %v2111 = vand.u32 %v2110, 4294901760
  %2112 = vmatpush1.msra.mxu0 %v2111
  %2113 = vmatprep.subr.mxu0 0.0
  %2114 = vmatpush1.msra.mxu0 0.0
  %2115 = vmatprep.subr.mxu0 0.0
  %2116 = vmatpush1.msra.mxu0 0.0
  %2117 = vmatprep.subr.mxu0 0.0
  %2118 = vmatpush1.msra.mxu0 0.0
  %2119 = vmatprep.subr.mxu0 0.0
  %2120 = vmatpush1.msra.mxu0 0.0
  %2121 = vmatprep.subr.mxu0 0.0
  %2122 = vmatpush1.msra.mxu0 0.0
  %2123 = vmatprep.subr.mxu0 0.0
  %2124 = vmatpush1.msra.mxu0 0.0
  %2125 = vmatprep.subr.mxu0 0.0
  %2126 = vmatpush1.msra.mxu0 0.0
  %2127 = vmatprep.subr.mxu0 0.0
  %2128 = vmatpush1.msra.mxu0 0.0
  %2129 = vmatprep.subr.mxu0 0.0
  %2130 = vmatpush1.msra.mxu0 0.0
  %2131 = vmatprep.subr.mxu0 0.0
  %2132 = vmatpush1.msra.mxu0 0.0
  %2133 = vmatprep.subr.mxu0 0.0
  %2134 = vmatpush1.msra.mxu0 0.0
  %2135 = vmatprep.subr.mxu0 0.0
  %2136 = vmatpush1.msra.mxu0 0.0
  %2137 = vmatprep.subr.mxu0 0.0
  %2138 = vmatpush1.msra.mxu0 0.0
  %2139 = vmatprep.subr.mxu0 0.0
  %2140 = vmatpush1.msra.mxu0 0.0
  %2141 = vmatprep.subr.mxu0 0.0
  %2142 = vmatpush1.msra.mxu0 0.0
  %2143 = vmatprep.subr.mxu0 0.0
  %2144 = vmatpush1.msra.mxu0 0.0
  %2145 = vmatprep.mubr.f32.mxu0 0.0
  %v2146 = vand.u32 %v21, 4294901760
  %2147 = vmatmul.mubr.f32.gmra.mrb[0].mxu0 %v2146
  %v2148 = vpop.f32.mrb[0].mxu0
  %v2149 = vadd.f32 %v1981, %v2148
  %v2150 = vpop.f32.mrb[0].mxu0
  %v2151 = vadd.f32 %v1983, %v2150
  %2152 = vdwg.mxu0
  %v2153 = vand.u32 %v87, 4294901760
  %2154 = vmatprep.subr.mxu0 %v2153
  %v2155 = vand.u32 %v86, 4294901760
  %2156 = vmatpush1.msra.mxu0 %v2155
  %v2157 = vand.u32 %v89, 4294901760
  %2158 = vmatprep.subr.mxu0 %v2157
  %v2159 = vand.u32 %v88, 4294901760
  %2160 = vmatpush1.msra.mxu0 %v2159
  %v2161 = vand.u32 %v91, 4294901760
  %2162 = vmatprep.subr.mxu0 %v2161
  %v2163 = vand.u32 %v90, 4294901760
  %2164 = vmatpush1.msra.mxu0 %v2163
  %v2165 = vand.u32 %v93, 4294901760
  %2166 = vmatprep.subr.mxu0 %v2165
  %v2167 = vand.u32 %v92, 4294901760
  %2168 = vmatpush1.msra.mxu0 %v2167
  %v2169 = vand.u32 %v95, 4294901760
  %2170 = vmatprep.subr.mxu0 %v2169
  %v2171 = vand.u32 %v94, 4294901760
  %2172 = vmatpush1.msra.mxu0 %v2171
  %v2173 = vand.u32 %v97, 4294901760
  %2174 = vmatprep.subr.mxu0 %v2173
  %v2175 = vand.u32 %v96, 4294901760
  %2176 = vmatpush1.msra.mxu0 %v2175
  %v2177 = vand.u32 %v99, 4294901760
  %2178 = vmatprep.subr.mxu0 %v2177
  %v2179 = vand.u32 %v98, 4294901760
  %2180 = vmatpush1.msra.mxu0 %v2179
  %v2181 = vand.u32 %v101, 4294901760
  %2182 = vmatprep.subr.mxu0 %v2181
  %v2183 = vand.u32 %v100, 4294901760
  %2184 = vmatpush1.msra.mxu0 %v2183
  %v2185 = vand.u32 %v103, 4294901760
  %2186 = vmatprep.subr.mxu0 %v2185
  %v2187 = vand.u32 %v102, 4294901760
  %2188 = vmatpush1.msra.mxu0 %v2187
  %v2189 = vand.u32 %v105, 4294901760
  %2190 = vmatprep.subr.mxu0 %v2189
  %v2191 = vand.u32 %v104, 4294901760
  %2192 = vmatpush1.msra.mxu0 %v2191
  %v2193 = vand.u32 %v107, 4294901760
  %2194 = vmatprep.subr.mxu0 %v2193
  %v2195 = vand.u32 %v106, 4294901760
  %2196 = vmatpush1.msra.mxu0 %v2195
  %v2197 = vand.u32 %v109, 4294901760
  %2198 = vmatprep.subr.mxu0 %v2197
  %v2199 = vand.u32 %v108, 4294901760
  %2200 = vmatpush1.msra.mxu0 %v2199
  %v2201 = vand.u32 %v111, 4294901760
  %2202 = vmatprep.subr.mxu0 %v2201
  %v2203 = vand.u32 %v110, 4294901760
  %2204 = vmatpush1.msra.mxu0 %v2203
  %v2205 = vand.u32 %v113, 4294901760
  %2206 = vmatprep.subr.mxu0 %v2205
  %v2207 = vand.u32 %v112, 4294901760
  %2208 = vmatpush1.msra.mxu0 %v2207
  %v2209 = vand.u32 %v115, 4294901760
  %2210 = vmatprep.subr.mxu0 %v2209
  %v2211 = vand.u32 %v114, 4294901760
  %2212 = vmatpush1.msra.mxu0 %v2211
  %v2213 = vand.u32 %v117, 4294901760
  %2214 = vmatprep.subr.mxu0 %v2213
  %v2215 = vand.u32 %v116, 4294901760
  %2216 = vmatpush1.msra.mxu0 %v2215
  %2217 = vmatprep.subr.mxu0 0.0
  %2218 = vmatpush1.msra.mxu0 0.0
  %2219 = vmatprep.subr.mxu0 0.0
  %2220 = vmatpush1.msra.mxu0 0.0
  %2221 = vmatprep.subr.mxu0 0.0
  %2222 = vmatpush1.msra.mxu0 0.0
  %2223 = vmatprep.subr.mxu0 0.0
  %2224 = vmatpush1.msra.mxu0 0.0
  %2225 = vmatprep.subr.mxu0 0.0
  %2226 = vmatpush1.msra.mxu0 0.0
  %2227 = vmatprep.subr.mxu0 0.0
  %2228 = vmatpush1.msra.mxu0 0.0
  %2229 = vmatprep.subr.mxu0 0.0
  %2230 = vmatpush1.msra.mxu0 0.0
  %2231 = vmatprep.subr.mxu0 0.0
  %2232 = vmatpush1.msra.mxu0 0.0
  %2233 = vmatprep.subr.mxu0 0.0
  %2234 = vmatpush1.msra.mxu0 0.0
  %2235 = vmatprep.subr.mxu0 0.0
  %2236 = vmatpush1.msra.mxu0 0.0
  %2237 = vmatprep.subr.mxu0 0.0
  %2238 = vmatpush1.msra.mxu0 0.0
  %2239 = vmatprep.subr.mxu0 0.0
  %2240 = vmatpush1.msra.mxu0 0.0
  %2241 = vmatprep.subr.mxu0 0.0
  %2242 = vmatpush1.msra.mxu0 0.0
  %2243 = vmatprep.subr.mxu0 0.0
  %2244 = vmatpush1.msra.mxu0 0.0
  %2245 = vmatprep.subr.mxu0 0.0
  %2246 = vmatpush1.msra.mxu0 0.0
  %2247 = vmatprep.subr.mxu0 0.0
  %2248 = vmatpush1.msra.mxu0 0.0
  %2249 = vmatprep.mubr.f32.mxu0 0.0
  %v2250 = vand.u32 %v21, 4294901760
  %2251 = vmatmul.mubr.f32.gmra.mrb[0].mxu0 %v2250
  %v2252 = vpop.f32.mrb[0].mxu0
  %v2253 = vadd.f32 %v2149, %v2252
  %v2254 = vpop.f32.mrb[0].mxu0
  %v2255 = vadd.f32 %v2151, %v2254
  %2256 = vdwg.mxu0
  %v2257 = vld [vmem:[%s2] sm:$0x1]
  %v2258 = vlaneseq
  %v2259 = vshrl.u32 %v2258, 7
  %v2260 = vsub.s32 0, %v2259
  %v2261 = vrot.slane %v2257, %v2260
  %v2262 = vadd.f32 %v2253, %v2261
  %v2263 = vld [vmem:[%s2 + $0x3] sm:$0x1]
  %v2264 = vlaneseq
  %v2265 = vshrl.u32 %v2264, 7
  %v2266 = vsub.s32 0, %v2265
  %v2267 = vrot.slane %v2263, %v2266
  %v2268 = vadd.f32 %v2255, %v2267
  %v2269 = vlaneseq
  %v2270 = vshrl.u32 %v2269, 7
  %s2271 = smul.u32 0, 8
  %v2272 = vstv %s2271
  %v2273 = vadd.s32 %v2270, %v2272
  %vm2274 = vcmp.lt.s32.totalorder %v2273, 2
  %v2275 = vsel %vm2274, 1, 0
  %v2276 = vcvt.s32.f32 %v2275
  %v2277 = vmul.f32 %v2262, %v2276
  %v2278 = vmul.f32 %v2268, %v2276
  %v2279 = vld [vmem:[%s3] sm:$0x1]
  %vm2280 = vcmask 506880
  %v2281 = vsel %vm2280, %v2277, 0.0
  %v2282 = vrot.slane %v2281, 4
  %v2283 = vadd.f32 %v2281, %v2282
  %v2284 = vrot.slane %v2283, 2
  %v2285 = vadd.f32 %v2283, %v2284
  %v2286 = vrot.slane %v2285, 1
  %v2287 = vadd.f32 %v2285, %v2286
  %v2288 = vadd.f32 %v2279, %v2287
  %vm2289 = vcmask 499712
  %2290 = vst.msk [vmem:[%s3] sm:$0x1] %vm2289, %v2288
  %v2291 = vld [vmem:[%s3 + $0x1] sm:$0x1]
  %v2292 = vmul.f32 %v2277, %v2262
  %v2293 = vsel %vm2280, %v2292, 0.0
  %v2294 = vrot.slane %v2293, 4
  %v2295 = vadd.f32 %v2293, %v2294
  %v2296 = vrot.slane %v2295, 2
  %v2297 = vadd.f32 %v2295, %v2296
  %v2298 = vrot.slane %v2297, 1
  %v2299 = vadd.f32 %v2297, %v2298
  %v2300 = vadd.f32 %v2291, %v2299
  %2301 = vst.msk [vmem:[%s3 + $0x1] sm:$0x1] %vm2289, %v2300
  %v2302 = vld [vmem:[%s3 + $0x2] sm:$0x1]
  %vm2303 = vcmask 39936
  %v2304 = vsel %vm2303, %v2278, 0.0
  %v2305 = vrot.slane %v2304, 4
  %v2306 = vadd.f32 %v2304, %v2305
  %v2307 = vrot.slane %v2306, 2
  %v2308 = vadd.f32 %v2306, %v2307
  %v2309 = vrot.slane %v2308, 1
  %v2310 = vadd.f32 %v2308, %v2309
  %v2311 = vadd.f32 %v2302, %v2310
  %vm2312 = vcmask 32768
  %2313 = vst.msk [vmem:[%s3 + $0x2] sm:$0x1] %vm2312, %v2311
  %v2314 = vld [vmem:[%s3 + $0x3] sm:$0x1]
  %v2315 = vmul.f32 %v2278, %v2268
  %v2316 = vsel %vm2303, %v2315, 0.0
  %v2317 = vrot.slane %v2316, 4
  %v2318 = vadd.f32 %v2316, %v2317
  %v2319 = vrot.slane %v2318, 2
  %v2320 = vadd.f32 %v2318, %v2319
  %v2321 = vrot.slane %v2320, 1
  %v2322 = vadd.f32 %v2320, %v2321
  %v2323 = vadd.f32 %v2314, %v2322
  %2324 = vst.msk [vmem:[%s3 + $0x3] sm:$0x1] %vm2312, %v2323
  // Predicated region
  $region18: #{attention_forward.2} parent=0 // pred_check
    _
  $region19: #{attention_forward.2} parent=0 // pred_check_branch
    %2326 = sbr.rel (0) target = $region21
  $region20: #{attention_forward.2} parent=0 // pred_region
    _
  $region21: #{attention_forward.2} parent=0 // pred_fallthru
    _
  // Predicated region
  $region22: #{attention_forward.2} parent=0 // pred_check
    _
  $region23: #{attention_forward.2} parent=0 // pred_check_branch
    %2328 = sbr.rel (0) target = $region25
  $region24: #{attention_forward.2} parent=0 // pred_region
    _
  $region25: #{attention_forward.2} parent=0 // pred_fallthru
    _

// kernel: attention_forward.3
$region0: #{attention_forward.3}
  #allocation0 [shape = 'u32[]', space=smem, size = 0x4, offset = 0x4, fixed_abs, tag = 'smem constant byte address 0x4 - core index']
  #allocation1 [shape = 'u32[144,128]{1,0:T(1,128)}', space=vmem, size = 0x12000, scoped, tag = 'internal scratch']
  %s0 = inlined_call_operand.vmem [shape: f32[8,384], index: 0, kind: input, shape index: {}]
  %s1 = inlined_call_operand.vmem [shape: f32[384,133], index: 1, kind: input, shape index: {}]
  %s2 = inlined_call_operand.vmem [shape: f32[8,128], index: 2, kind: input, shape index: {}]
  %s3 = inlined_call_operand.vmem [shape: f32[5,384], index: 3, kind: input, shape index: {}]
  %s4 = inlined_call_operand.vmem [shape: f32[8,128], index: 4, kind: input, shape index: {}]
  %s5 = inlined_call_operand.vmem [shape: f32[8,384], index: 5, kind: output, shape index: {}]
  %s6 = sld [smem:[#allocation0]]
  $region30: #{attention_forward.3} parent=0
    _
  %s8 = ssub.s32 1, %s6
  %s9 = scalar_select 0, %s8, %s6
  // Predicated region
  $region2: #{attention_forward.3} parent=0 // pred_check
    _
  $region3: #{attention_forward.3} parent=0 // pred_check_branch
    %11 = sbr.rel (0) target = $region5
  $region4: #{attention_forward.3} parent=0 // pred_region
    _
  $region5: #{attention_forward.3} parent=0 // pred_fallthru
    _
  // Predicated region
  $region6: #{attention_forward.3} parent=0 // pred_check
    _
  $region7: #{attention_forward.3} parent=0 // pred_check_branch
    %13 = sbr.rel (0) target = $region9
  $region8: #{attention_forward.3} parent=0 // pred_region
    _
  $region9: #{attention_forward.3} parent=0 // pred_fallthru
    _
  // Predicated region
  $region10: #{attention_forward.3} parent=0 // pred_check
    _
  $region11: #{attention_forward.3} parent=0 // pred_check_branch
    %15 = sbr.rel (0) target = $region13
  $region12: #{attention_forward.3} parent=0 // pred_region
    _
  $region13: #{attention_forward.3} parent=0 // pred_fallthru
    _
  // Predicated region
  $region14: #{attention_forward.3} parent=0 // pred_check
    _
  $region15: #{attention_forward.3} parent=0 // pred_check_branch
    %17 = sbr.rel (0) target = $region17
  $region16: #{attention_forward.3} parent=0 // pred_region
    _
  $region17: #{attention_forward.3} parent=0 // pred_fallthru
    _
  // Predicated region
  $region18: #{attention_forward.3} parent=0 // pred_check
    _
  $region19: #{attention_forward.3} parent=0 // pred_check_branch
    %19 = sbr.rel (0) target = $region21
  $region20: #{attention_forward.3} parent=0 // pred_region
    _
  $region21: #{attention_forward.3} parent=0 // pred_fallthru
    _
  %v20 = vld [vmem:[%s0] sm:$0xff]
  %v21 = vld [vmem:[%s0 + $0x8] sm:$0xff]
  %v22 = vld [vmem:[%s0 + $0x10] sm:$0xff]
  %v23 = vld [vmem:[%s1] sm:$0xff]
  %v24 = vld [vmem:[%s1 + $0x8] sm:$0xff]
  %v25 = vld [vmem:[%s1 + $0x10] sm:$0xff]
  %v26 = vld [vmem:[%s1 + $0x18] sm:$0xff]
  %v27 = vld [vmem:[%s1 + $0x20] sm:$0xff]
  %v28 = vld [vmem:[%s1 + $0x28] sm:$0xff]
  %v29 = vld [vmem:[%s1 + $0x30] sm:$0xff]
  %v30 = vld [vmem:[%s1 + $0x38] sm:$0xff]
  %v31 = vld [vmem:[%s1 + $0x40] sm:$0xff]
  %v32 = vld [vmem:[%s1 + $0x48] sm:$0xff]
  %v33 = vld [vmem:[%s1 + $0x50] sm:$0xff]
  %v34 = vld [vmem:[%s1 + $0x58] sm:$0xff]
  %v35 = vld [vmem:[%s1 + $0x60] sm:$0xff]
  %v36 = vld [vmem:[%s1 + $0x68] sm:$0xff]
  %v37 = vld [vmem:[%s1 + $0x70] sm:$0xff]
  %v38 = vld [vmem:[%s1 + $0x78] sm:$0xff]
  %v39 = vld [vmem:[%s1 + $0x80] sm:$0xff]
  %v40 = vld [vmem:[%s1 + $0x88] sm:$0xff]
  %v41 = vld [vmem:[%s1 + $0x90] sm:$0xff]
  %v42 = vld [vmem:[%s1 + $0x98] sm:$0xff]
  %v43 = vld [vmem:[%s1 + $0xa0] sm:$0xff]
  %v44 = vld [vmem:[%s1 + $0xa8] sm:$0xff]
  %v45 = vld [vmem:[%s1 + $0xb0] sm:$0xff]
  %v46 = vld [vmem:[%s1 + $0xb8] sm:$0xff]
  %v47 = vld [vmem:[%s1 + $0xc0] sm:$0xff]
  %v48 = vld [vmem:[%s1 + $0xc8] sm:$0xff]
  %v49 = vld [vmem:[%s1 + $0xd0] sm:$0xff]
  %v50 = vld [vmem:[%s1 + $0xd8] sm:$0xff]
  %v51 = vld [vmem:[%s1 + $0xe0] sm:$0xff]
  %v52 = vld [vmem:[%s1 + $0xe8] sm:$0xff]
  %v53 = vld [vmem:[%s1 + $0xf0] sm:$0xff]
  %v54 = vld [vmem:[%s1 + $0xf8] sm:$0xff]
  %v55 = vld [vmem:[%s1 + $0x100] sm:$0xff]
  %v56 = vld [vmem:[%s1 + $0x108] sm:$0xff]
  %v57 = vld [vmem:[%s1 + $0x110] sm:$0xff]
  %v58 = vld [vmem:[%s1 + $0x118] sm:$0xff]
  %v59 = vld [vmem:[%s1 + $0x120] sm:$0xff]
  %v60 = vld [vmem:[%s1 + $0x128] sm:$0xff]
  %v61 = vld [vmem:[%s1 + $0x130] sm:$0xff]
  %v62 = vld [vmem:[%s1 + $0x138] sm:$0xff]
  %v63 = vld [vmem:[%s1 + $0x140] sm:$0xff]
  %v64 = vld [vmem:[%s1 + $0x148] sm:$0xff]
  %v65 = vld [vmem:[%s1 + $0x150] sm:$0xff]
  %v66 = vld [vmem:[%s1 + $0x158] sm:$0xff]
  %v67 = vld [vmem:[%s1 + $0x160] sm:$0xff]
  %v68 = vld [vmem:[%s1 + $0x168] sm:$0xff]
  %v69 = vld [vmem:[%s1 + $0x170] sm:$0xff]
  %v70 = vld [vmem:[%s1 + $0x178] sm:$0xff]
  %v71 = vld [vmem:[%s1 + $0x180] sm:$0xff]
  %v72 = vld [vmem:[%s1 + $0x188] sm:$0xff]
  %v73 = vld [vmem:[%s1 + $0x190] sm:$0xff]
  %v74 = vld [vmem:[%s1 + $0x198] sm:$0xff]
  %v75 = vld [vmem:[%s1 + $0x1a0] sm:$0xff]
  %v76 = vld [vmem:[%s1 + $0x1a8] sm:$0xff]
  %v77 = vld [vmem:[%s1 + $0x1b0] sm:$0xff]
  %v78 = vld [vmem:[%s1 + $0x1b8] sm:$0xff]
  %v79 = vld [vmem:[%s1 + $0x1c0] sm:$0xff]
  %v80 = vld [vmem:[%s1 + $0x1c8] sm:$0xff]
  %v81 = vld [vmem:[%s1 + $0x1d0] sm:$0xff]
  %v82 = vld [vmem:[%s1 + $0x1d8] sm:$0xff]
  %v83 = vld [vmem:[%s1 + $0x1e0] sm:$0xff]
  %v84 = vld [vmem:[%s1 + $0x1e8] sm:$0xff]
  %v85 = vld [vmem:[%s1 + $0x1f0] sm:$0xff]
  %v86 = vld [vmem:[%s1 + $0x1f8] sm:$0xff]
  %v87 = vld [vmem:[%s1 + $0x200] sm:$0xff]
  %v88 = vld [vmem:[%s1 + $0x208] sm:$0xff]
  %v89 = vld [vmem:[%s1 + $0x210] sm:$0xff]
  %v90 = vld [vmem:[%s1 + $0x218] sm:$0xff]
  %v91 = vld [vmem:[%s1 + $0x220] sm:$0xff]
  %v92 = vld [vmem:[%s1 + $0x228] sm:$0xff]
  %v93 = vld [vmem:[%s1 + $0x230] sm:$0xff]
  %v94 = vld [vmem:[%s1 + $0x238] sm:$0xff]
  %v95 = vld [vmem:[%s1 + $0x240] sm:$0xff]
  %v96 = vld [vmem:[%s1 + $0x248] sm:$0xff]
  %v97 = vld [vmem:[%s1 + $0x250] sm:$0xff]
  %v98 = vld [vmem:[%s1 + $0x258] sm:$0xff]
  %v99 = vld [vmem:[%s1 + $0x260] sm:$0xff]
  %v100 = vld [vmem:[%s1 + $0x268] sm:$0xff]
  %v101 = vld [vmem:[%s1 + $0x270] sm:$0xff]
  %v102 = vld [vmem:[%s1 + $0x278] sm:$0xff]
  %v103 = vld [vmem:[%s1 + $0x280] sm:$0xff]
  %v104 = vld [vmem:[%s1 + $0x288] sm:$0xff]
  %v105 = vld [vmem:[%s1 + $0x290] sm:$0xff]
  %v106 = vld [vmem:[%s1 + $0x298] sm:$0xff]
  %v107 = vld [vmem:[%s1 + $0x2a0] sm:$0xff]
  %v108 = vld [vmem:[%s1 + $0x2a8] sm:$0xff]
  %v109 = vld [vmem:[%s1 + $0x2b0] sm:$0xff]
  %v110 = vld [vmem:[%s1 + $0x2b8] sm:$0xff]
  %v111 = vld [vmem:[%s1 + $0x2c0] sm:$0xff]
  %v112 = vld [vmem:[%s1 + $0x2c8] sm:$0xff]
  %v113 = vld [vmem:[%s1 + $0x2d0] sm:$0xff]
  %v114 = vld [vmem:[%s1 + $0x2d8] sm:$0xff]
  %v115 = vld [vmem:[%s1 + $0x2e0] sm:$0xff]
  %v116 = vld [vmem:[%s1 + $0x2e8] sm:$0xff]
  %v117 = vld [vmem:[%s1 + $0x2f0] sm:$0xff]
  %v118 = vld [vmem:[%s1 + $0x2f8] sm:$0xff]
  %v119 = vand.u32 %v24, 4294901760
  %120 = vmatprep.subr.mxu0 %v119
  %v121 = vand.u32 %v23, 4294901760
  %122 = vmatpush1.msra.mxu0 %v121
  %v123 = vand.u32 %v26, 4294901760
  %124 = vmatprep.subr.mxu0 %v123
  %v125 = vand.u32 %v25, 4294901760
  %126 = vmatpush1.msra.mxu0 %v125
  %v127 = vand.u32 %v28, 4294901760
  %128 = vmatprep.subr.mxu0 %v127
  %v129 = vand.u32 %v27, 4294901760
  %130 = vmatpush1.msra.mxu0 %v129
  %v131 = vand.u32 %v30, 4294901760
  %132 = vmatprep.subr.mxu0 %v131
  %v133 = vand.u32 %v29, 4294901760
  %134 = vmatpush1.msra.mxu0 %v133
  %v135 = vand.u32 %v32, 4294901760
  %136 = vmatprep.subr.mxu0 %v135
  %v137 = vand.u32 %v31, 4294901760
  %138 = vmatpush1.msra.mxu0 %v137
  %v139 = vand.u32 %v34, 4294901760
  %140 = vmatprep.subr.mxu0 %v139
  %v141 = vand.u32 %v33, 4294901760
  %142 = vmatpush1.msra.mxu0 %v141
  %v143 = vand.u32 %v36, 4294901760
  %144 = vmatprep.subr.mxu0 %v143
  %v145 = vand.u32 %v35, 4294901760
  %146 = vmatpush1.msra.mxu0 %v145
  %v147 = vand.u32 %v38, 4294901760
  %148 = vmatprep.subr.mxu0 %v147
  %v149 = vand.u32 %v37, 4294901760
  %150 = vmatpush1.msra.mxu0 %v149
  %v151 = vand.u32 %v40, 4294901760
  %152 = vmatprep.subr.mxu0 %v151
  %v153 = vand.u32 %v39, 4294901760
  %154 = vmatpush1.msra.mxu0 %v153
  %v155 = vand.u32 %v42, 4294901760
  %156 = vmatprep.subr.mxu0 %v155
  %v157 = vand.u32 %v41, 4294901760
  %158 = vmatpush1.msra.mxu0 %v157
  %v159 = vand.u32 %v44, 4294901760
  %160 = vmatprep.subr.mxu0 %v159
  %v161 = vand.u32 %v43, 4294901760
  %162 = vmatpush1.msra.mxu0 %v161
  %v163 = vand.u32 %v46, 4294901760
  %164 = vmatprep.subr.mxu0 %v163
  %v165 = vand.u32 %v45, 4294901760
  %166 = vmatpush1.msra.mxu0 %v165
  %v167 = vand.u32 %v48, 4294901760
  %168 = vmatprep.subr.mxu0 %v167
  %v169 = vand.u32 %v47, 4294901760
  %170 = vmatpush1.msra.mxu0 %v169
  %v171 = vand.u32 %v50, 4294901760
  %172 = vmatprep.subr.mxu0 %v171
  %v173 = vand.u32 %v49, 4294901760
  %174 = vmatpush1.msra.mxu0 %v173
  %v175 = vand.u32 %v52, 4294901760
  %176 = vmatprep.subr.mxu0 %v175
  %v177 = vand.u32 %v51, 4294901760
  %178 = vmatpush1.msra.mxu0 %v177
  %v179 = vand.u32 %v54, 4294901760
  %180 = vmatprep.subr.mxu0 %v179
  %v181 = vand.u32 %v53, 4294901760
  %182 = vmatpush1.msra.mxu0 %v181
  %v183 = vand.u32 %v56, 4294901760
  %184 = vmatprep.subr.mxu0 %v183
  %v185 = vand.u32 %v55, 4294901760
  %186 = vmatpush1.msra.mxu0 %v185
  %v187 = vand.u32 %v58, 4294901760
  %188 = vmatprep.subr.mxu0 %v187
  %v189 = vand.u32 %v57, 4294901760
  %190 = vmatpush1.msra.mxu0 %v189
  %v191 = vand.u32 %v60, 4294901760
  %192 = vmatprep.subr.mxu0 %v191
  %v193 = vand.u32 %v59, 4294901760
  %194 = vmatpush1.msra.mxu0 %v193
  %v195 = vand.u32 %v62, 4294901760
  %196 = vmatprep.subr.mxu0 %v195
  %v197 = vand.u32 %v61, 4294901760
  %198 = vmatpush1.msra.mxu0 %v197
  %v199 = vand.u32 %v64, 4294901760
  %200 = vmatprep.subr.mxu0 %v199
  %v201 = vand.u32 %v63, 4294901760
  %202 = vmatpush1.msra.mxu0 %v201
  %v203 = vand.u32 %v66, 4294901760
  %204 = vmatprep.subr.mxu0 %v203
  %v205 = vand.u32 %v65, 4294901760
  %206 = vmatpush1.msra.mxu0 %v205
  %v207 = vand.u32 %v68, 4294901760
  %208 = vmatprep.subr.mxu0 %v207
  %v209 = vand.u32 %v67, 4294901760
  %210 = vmatpush1.msra.mxu0 %v209
  %v211 = vand.u32 %v70, 4294901760
  %212 = vmatprep.subr.mxu0 %v211
  %v213 = vand.u32 %v69, 4294901760
  %214 = vmatpush1.msra.mxu0 %v213
  %v215 = vand.u32 %v72, 4294901760
  %216 = vmatprep.subr.mxu0 %v215
  %v217 = vand.u32 %v71, 4294901760
  %218 = vmatpush1.msra.mxu0 %v217
  %v219 = vand.u32 %v74, 4294901760
  %220 = vmatprep.subr.mxu0 %v219
  %v221 = vand.u32 %v73, 4294901760
  %222 = vmatpush1.msra.mxu0 %v221
  %v223 = vand.u32 %v76, 4294901760
  %224 = vmatprep.subr.mxu0 %v223
  %v225 = vand.u32 %v75, 4294901760
  %226 = vmatpush1.msra.mxu0 %v225
  %v227 = vand.u32 %v78, 4294901760
  %228 = vmatprep.subr.mxu0 %v227
  %v229 = vand.u32 %v77, 4294901760
  %230 = vmatpush1.msra.mxu0 %v229
  %v231 = vand.u32 %v80, 4294901760
  %232 = vmatprep.subr.mxu0 %v231
  %v233 = vand.u32 %v79, 4294901760
  %234 = vmatpush1.msra.mxu0 %v233
  %v235 = vand.u32 %v82, 4294901760
  %236 = vmatprep.subr.mxu0 %v235
  %v237 = vand.u32 %v81, 4294901760
  %238 = vmatpush1.msra.mxu0 %v237
  %v239 = vand.u32 %v84, 4294901760
  %240 = vmatprep.subr.mxu0 %v239
  %v241 = vand.u32 %v83, 4294901760
  %242 = vmatpush1.msra.mxu0 %v241
  %v243 = vand.u32 %v86, 4294901760
  %244 = vmatprep.subr.mxu0 %v243
  %v245 = vand.u32 %v85, 4294901760
  %246 = vmatpush1.msra.mxu0 %v245
  %v247 = vand.u32 %v21, 4294901760
  %v248 = vsub.f32 %v21, %v247
  %v249 = vand.u32 %v248, 4294901760
  %v250 = vsub.f32 %v248, %v249
  %v251 = vand.u32 %v250, 4294901760
  %252 = vmatprep.mubr.f32.mxu0 %v251
  %v253 = vand.u32 %v20, 4294901760
  %v254 = vsub.f32 %v20, %v253
  %v255 = vand.u32 %v254, 4294901760
  %v256 = vsub.f32 %v254, %v255
  %v257 = vand.u32 %v256, 4294901760
  %258 = vmatmul.mubr.f32.gmra.mrb[0].mxu0 %v257
  %v259 = vpop.f32.mrb[0].mxu0
  %v260 = vadd.f32 0.0, %v259
  %v261 = vpop.f32.mrb[0].mxu0
  %v262 = vadd.f32 0.0, %v261
  %263 = vdwg.mxu0
  %v264 = vand.u32 %v24, 4294901760
  %v265 = vsub.f32 %v24, %v264
  %v266 = vand.u32 %v265, 4294901760
  %v267 = vsub.f32 %v265, %v266
  %v268 = vand.u32 %v267, 4294901760
  %269 = vmatprep.subr.mxu0 %v268
  %v270 = vand.u32 %v23, 4294901760
  %v271 = vsub.f32 %v23, %v270
  %v272 = vand.u32 %v271, 4294901760
  %v273 = vsub.f32 %v271, %v272
  %v274 = vand.u32 %v273, 4294901760
  %275 = vmatpush1.msra.mxu0 %v274
  %v276 = vand.u32 %v26, 4294901760
  %v277 = vsub.f32 %v26, %v276
  %v278 = vand.u32 %v277, 4294901760
  %v279 = vsub.f32 %v277, %v278
  %v280 = vand.u32 %v279, 4294901760
  %281 = vmatprep.subr.mxu0 %v280
  %v282 = vand.u32 %v25, 4294901760
  %v283 = vsub.f32 %v25, %v282
  %v284 = vand.u32 %v283, 4294901760
  %v285 = vsub.f32 %v283, %v284
  %v286 = vand.u32 %v285, 4294901760
  %287 = vmatpush1.msra.mxu0 %v286
  %v288 = vand.u32 %v28, 4294901760
  %v289 = vsub.f32 %v28, %v288
  %v290 = vand.u32 %v289, 4294901760
  %v291 = vsub.f32 %v289, %v290
  %v292 = vand.u32 %v291, 4294901760
  %293 = vmatprep.subr.mxu0 %v292
  %v294 = vand.u32 %v27, 4294901760
  %v295 = vsub.f32 %v27, %v294
  %v296 = vand.u32 %v295, 4294901760
  %v297 = vsub.f32 %v295, %v296
  %v298 = vand.u32 %v297, 4294901760
  %299 = vmatpush1.msra.mxu0 %v298
  %v300 = vand.u32 %v30, 4294901760
  %v301 = vsub.f32 %v30, %v300
  %v302 = vand.u32 %v301, 4294901760
  %v303 = vsub.f32 %v301, %v302
  %v304 = vand.u32 %v303, 4294901760
  %305 = vmatprep.subr.mxu0 %v304
  %v306 = vand.u32 %v29, 4294901760
  %v307 = vsub.f32 %v29, %v306
  %v308 = vand.u32 %v307, 4294901760
  %v309 = vsub.f32 %v307, %v308
  %v310 = vand.u32 %v309, 4294901760
  %311 = vmatpush1.msra.mxu0 %v310
  %v312 = vand.u32 %v32, 4294901760
  %v313 = vsub.f32 %v32, %v312
  %v314 = vand.u32 %v313, 4294901760
  %v315 = vsub.f32 %v313, %v314
  %v316 = vand.u32 %v315, 4294901760
  %317 = vmatprep.subr.mxu0 %v316
  %v318 = vand.u32 %v31, 4294901760
  %v319 = vsub.f32 %v31, %v318
  %v320 = vand.u32 %v319, 4294901760
  %v321 = vsub.f32 %v319, %v320
  %v322 = vand.u32 %v321, 4294901760
  %323 = vmatpush1.msra.mxu0 %v322
  %v324 = vand.u32 %v34, 4294901760
  %v325 = vsub.f32 %v34, %v324
  %v326 = vand.u32 %v325, 4294901760
  %v327 = vsub.f32 %v325, %v326
  %v328 = vand.u32 %v327, 4294901760
  %329 = vmatprep.subr.mxu0 %v328
  %v330 = vand.u32 %v33, 4294901760
  %v331 = vsub.f32 %v33, %v330
  %v332 = vand.u32 %v331, 4294901760
  %v333 = vsub.f32 %v331, %v332
  %v334 = vand.u32 %v333, 4294901760
  %335 = vmatpush1.msra.mxu0 %v334
  %v336 = vand.u32 %v36, 4294901760
  %v337 = vsub.f32 %v36, %v336
  %v338 = vand.u32 %v337, 4294901760
  %v339 = vsub.f32 %v337, %v338
  %v340 = vand.u32 %v339, 4294901760
  %341 = vmatprep.subr.mxu0 %v340
  %v342 = vand.u32 %v35, 4294901760
  %v343 = vsub.f32 %v35, %v342
  %v344 = vand.u32 %v343, 4294901760
  %v345 = vsub.f32 %v343, %v344
  %v346 = vand.u32 %v345, 4294901760
  %347 = vmatpush1.msra.mxu0 %v346
  %v348 = vand.u32 %v38, 4294901760
  %v349 = vsub.f32 %v38, %v348
  %v350 = vand.u32 %v349, 4294901760
  %v351 = vsub.f32 %v349, %v350
  %v352 = vand.u32 %v351, 4294901760
  %353 = vmatprep.subr.mxu0 %v352
  %v354 = vand.u32 %v37, 4294901760
  %v355 = vsub.f32 %v37, %v354
  %v356 = vand.u32 %v355, 4294901760
  %v357 = vsub.f32 %v355, %v356
  %v358 = vand.u32 %v357, 4294901760
  %359 = vmatpush1.msra.mxu0 %v358
  %v360 = vand.u32 %v40, 4294901760
  %v361 = vsub.f32 %v40, %v360
  %v362 = vand.u32 %v361, 4294901760
  %v363 = vsub.f32 %v361, %v362
  %v364 = vand.u32 %v363, 4294901760
  %365 = vmatprep.subr.mxu0 %v364
  %v366 = vand.u32 %v39, 4294901760
  %v367 = vsub.f32 %v39, %v366
  %v368 = vand.u32 %v367, 4294901760
  %v369 = vsub.f32 %v367, %v368
  %v370 = vand.u32 %v369, 4294901760
  %371 = vmatpush1.msra.mxu0 %v370
  %v372 = vand.u32 %v42, 4294901760
  %v373 = vsub.f32 %v42, %v372
  %v374 = vand.u32 %v373, 4294901760
  %v375 = vsub.f32 %v373, %v374
  %v376 = vand.u32 %v375, 4294901760
  %377 = vmatprep.subr.mxu0 %v376
  %v378 = vand.u32 %v41, 4294901760
  %v379 = vsub.f32 %v41, %v378
  %v380 = vand.u32 %v379, 4294901760
  %v381 = vsub.f32 %v379, %v380
  %v382 = vand.u32 %v381, 4294901760
  %383 = vmatpush1.msra.mxu0 %v382
  %v384 = vand.u32 %v44, 4294901760
  %v385 = vsub.f32 %v44, %v384
  %v386 = vand.u32 %v385, 4294901760
  %v387 = vsub.f32 %v385, %v386
  %v388 = vand.u32 %v387, 4294901760
  %389 = vmatprep.subr.mxu0 %v388
  %v390 = vand.u32 %v43, 4294901760
  %v391 = vsub.f32 %v43, %v390
  %v392 = vand.u32 %v391, 4294901760
  %v393 = vsub.f32 %v391, %v392
  %v394 = vand.u32 %v393, 4294901760
  %395 = vmatpush1.msra.mxu0 %v394
  %v396 = vand.u32 %v46, 4294901760
  %v397 = vsub.f32 %v46, %v396
  %v398 = vand.u32 %v397, 4294901760
  %v399 = vsub.f32 %v397, %v398
  %v400 = vand.u32 %v399, 4294901760
  %401 = vmatprep.subr.mxu0 %v400
  %v402 = vand.u32 %v45, 4294901760
  %v403 = vsub.f32 %v45, %v402
  %v404 = vand.u32 %v403, 4294901760
  %v405 = vsub.f32 %v403, %v404
  %v406 = vand.u32 %v405, 4294901760
  %407 = vmatpush1.msra.mxu0 %v406
  %v408 = vand.u32 %v48, 4294901760
  %v409 = vsub.f32 %v48, %v408
  %v410 = vand.u32 %v409, 4294901760
  %v411 = vsub.f32 %v409, %v410
  %v412 = vand.u32 %v411, 4294901760
  %413 = vmatprep.subr.mxu0 %v412
  %v414 = vand.u32 %v47, 4294901760
  %v415 = vsub.f32 %v47, %v414
  %v416 = vand.u32 %v415, 4294901760
  %v417 = vsub.f32 %v415, %v416
  %v418 = vand.u32 %v417, 4294901760
  %419 = vmatpush1.msra.mxu0 %v418
  %v420 = vand.u32 %v50, 4294901760
  %v421 = vsub.f32 %v50, %v420
  %v422 = vand.u32 %v421, 4294901760
  %v423 = vsub.f32 %v421, %v422
  %v424 = vand.u32 %v423, 4294901760
  %425 = vmatprep.subr.mxu0 %v424
  %v426 = vand.u32 %v49, 4294901760
  %v427 = vsub.f32 %v49, %v426
  %v428 = vand.u32 %v427, 4294901760
  %v429 = vsub.f32 %v427, %v428
  %v430 = vand.u32 %v429, 4294901760
  %431 = vmatpush1.msra.mxu0 %v430
  %v432 = vand.u32 %v52, 4294901760
  %v433 = vsub.f32 %v52, %v432
  %v434 = vand.u32 %v433, 4294901760
  %v435 = vsub.f32 %v433, %v434
  %v436 = vand.u32 %v435, 4294901760
  %437 = vmatprep.subr.mxu0 %v436
  %v438 = vand.u32 %v51, 4294901760
  %v439 = vsub.f32 %v51, %v438
  %v440 = vand.u32 %v439, 4294901760
  %v441 = vsub.f32 %v439, %v440
  %v442 = vand.u32 %v441, 4294901760
  %443 = vmatpush1.msra.mxu0 %v442
  %v444 = vand.u32 %v54, 4294901760
  %v445 = vsub.f32 %v54, %v444
  %v446 = vand.u32 %v445, 4294901760
  %v447 = vsub.f32 %v445, %v446
  %v448 = vand.u32 %v447, 4294901760
  %449 = vmatprep.subr.mxu0 %v448
  %v450 = vand.u32 %v53, 4294901760
  %v451 = vsub.f32 %v53, %v450
  %v452 = vand.u32 %v451, 4294901760
  %v453 = vsub.f32 %v451, %v452
  %v454 = vand.u32 %v453, 4294901760
  %455 = vmatpush1.msra.mxu0 %v454
  %v456 = vand.u32 %v56, 4294901760
  %v457 = vsub.f32 %v56, %v456
  %v458 = vand.u32 %v457, 4294901760
  %v459 = vsub.f32 %v457, %v458
  %v460 = vand.u32 %v459, 4294901760
  %461 = vmatprep.subr.mxu0 %v460
  %v462 = vand.u32 %v55, 4294901760
  %v463 = vsub.f32 %v55, %v462
  %v464 = vand.u32 %v463, 4294901760
  %v465 = vsub.f32 %v463, %v464
  %v466 = vand.u32 %v465, 4294901760
  %467 = vmatpush1.msra.mxu0 %v466
  %v468 = vand.u32 %v58, 4294901760
  %v469 = vsub.f32 %v58, %v468
  %v470 = vand.u32 %v469, 4294901760
  %v471 = vsub.f32 %v469, %v470
  %v472 = vand.u32 %v471, 4294901760
  %473 = vmatprep.subr.mxu0 %v472
  %v474 = vand.u32 %v57, 4294901760
  %v475 = vsub.f32 %v57, %v474
  %v476 = vand.u32 %v475, 4294901760
  %v477 = vsub.f32 %v475, %v476
  %v478 = vand.u32 %v477, 4294901760
  %479 = vmatpush1.msra.mxu0 %v478
  %v480 = vand.u32 %v60, 4294901760
  %v481 = vsub.f32 %v60, %v480
  %v482 = vand.u32 %v481, 4294901760
  %v483 = vsub.f32 %v481, %v482
  %v484 = vand.u32 %v483, 4294901760
  %485 = vmatprep.subr.mxu0 %v484
  %v486 = vand.u32 %v59, 4294901760
  %v487 = vsub.f32 %v59, %v486
  %v488 = vand.u32 %v487, 4294901760
  %v489 = vsub.f32 %v487, %v488
  %v490 = vand.u32 %v489, 4294901760
  %491 = vmatpush1.msra.mxu0 %v490
  %v492 = vand.u32 %v62, 4294901760
  %v493 = vsub.f32 %v62, %v492
  %v494 = vand.u32 %v493, 4294901760
  %v495 = vsub.f32 %v493, %v494
  %v496 = vand.u32 %v495, 4294901760
  %497 = vmatprep.subr.mxu0 %v496
  %v498 = vand.u32 %v61, 4294901760
  %v499 = vsub.f32 %v61, %v498
  %v500 = vand.u32 %v499, 4294901760
  %v501 = vsub.f32 %v499, %v500
  %v502 = vand.u32 %v501, 4294901760
  %503 = vmatpush1.msra.mxu0 %v502
  %v504 = vand.u32 %v64, 4294901760
  %v505 = vsub.f32 %v64, %v504
  %v506 = vand.u32 %v505, 4294901760
  %v507 = vsub.f32 %v505, %v506
  %v508 = vand.u32 %v507, 4294901760
  %509 = vmatprep.subr.mxu0 %v508
  %v510 = vand.u32 %v63, 4294901760
  %v511 = vsub.f32 %v63, %v510
  %v512 = vand.u32 %v511, 4294901760
  %v513 = vsub.f32 %v511, %v512
  %v514 = vand.u32 %v513, 4294901760
  %515 = vmatpush1.msra.mxu0 %v514
  %v516 = vand.u32 %v66, 4294901760
  %v517 = vsub.f32 %v66, %v516
  %v518 = vand.u32 %v517, 4294901760
  %v519 = vsub.f32 %v517, %v518
  %v520 = vand.u32 %v519, 4294901760
  %521 = vmatprep.subr.mxu0 %v520
  %v522 = vand.u32 %v65, 4294901760
  %v523 = vsub.f32 %v65, %v522
  %v524 = vand.u32 %v523, 4294901760
  %v525 = vsub.f32 %v523, %v524
  %v526 = vand.u32 %v525, 4294901760
  %527 = vmatpush1.msra.mxu0 %v526
  %v528 = vand.u32 %v68, 4294901760
  %v529 = vsub.f32 %v68, %v528
  %v530 = vand.u32 %v529, 4294901760
  %v531 = vsub.f32 %v529, %v530
  %v532 = vand.u32 %v531, 4294901760
  %533 = vmatprep.subr.mxu0 %v532
  %v534 = vand.u32 %v67, 4294901760
  %v535 = vsub.f32 %v67, %v534
  %v536 = vand.u32 %v535, 4294901760
  %v537 = vsub.f32 %v535, %v536
  %v538 = vand.u32 %v537, 4294901760
  %539 = vmatpush1.msra.mxu0 %v538
  %v540 = vand.u32 %v70, 4294901760
  %v541 = vsub.f32 %v70, %v540
  %v542 = vand.u32 %v541, 4294901760
  %v543 = vsub.f32 %v541, %v542
  %v544 = vand.u32 %v543, 4294901760
  %545 = vmatprep.subr.mxu0 %v544
  %v546 = vand.u32 %v69, 4294901760
  %v547 = vsub.f32 %v69, %v546
  %v548 = vand.u32 %v547, 4294901760
  %v549 = vsub.f32 %v547, %v548
  %v550 = vand.u32 %v549, 4294901760
  %551 = vmatpush1.msra.mxu0 %v550
  %v552 = vand.u32 %v72, 4294901760
  %v553 = vsub.f32 %v72, %v552
  %v554 = vand.u32 %v553, 4294901760
  %v555 = vsub.f32 %v553, %v554
  %v556 = vand.u32 %v555, 4294901760
  %557 = vmatprep.subr.mxu0 %v556
  %v558 = vand.u32 %v71, 4294901760
  %v559 = vsub.f32 %v71, %v558
  %v560 = vand.u32 %v559, 4294901760
  %v561 = vsub.f32 %v559, %v560
  %v562 = vand.u32 %v561, 4294901760
  %563 = vmatpush1.msra.mxu0 %v562
  %v564 = vand.u32 %v74, 4294901760
  %v565 = vsub.f32 %v74, %v564
  %v566 = vand.u32 %v565, 4294901760
  %v567 = vsub.f32 %v565, %v566
  %v568 = vand.u32 %v567, 4294901760
  %569 = vmatprep.subr.mxu0 %v568
  %v570 = vand.u32 %v73, 4294901760
  %v571 = vsub.f32 %v73, %v570
  %v572 = vand.u32 %v571, 4294901760
  %v573 = vsub.f32 %v571, %v572
  %v574 = vand.u32 %v573, 4294901760
  %575 = vmatpush1.msra.mxu0 %v574
  %v576 = vand.u32 %v76, 4294901760
  %v577 = vsub.f32 %v76, %v576
  %v578 = vand.u32 %v577, 4294901760
  %v579 = vsub.f32 %v577, %v578
  %v580 = vand.u32 %v579, 4294901760
  %581 = vmatprep.subr.mxu0 %v580
  %v582 = vand.u32 %v75, 4294901760
  %v583 = vsub.f32 %v75, %v582
  %v584 = vand.u32 %v583, 4294901760
  %v585 = vsub.f32 %v583, %v584
  %v586 = vand.u32 %v585, 4294901760
  %587 = vmatpush1.msra.mxu0 %v586
  %v588 = vand.u32 %v78, 4294901760
  %v589 = vsub.f32 %v78, %v588
  %v590 = vand.u32 %v589, 4294901760
  %v591 = vsub.f32 %v589, %v590
  %v592 = vand.u32 %v591, 4294901760
  %593 = vmatprep.subr.mxu0 %v592
  %v594 = vand.u32 %v77, 4294901760
  %v595 = vsub.f32 %v77, %v594
  %v596 = vand.u32 %v595, 4294901760
  %v597 = vsub.f32 %v595, %v596
  %v598 = vand.u32 %v597, 4294901760
  %599 = vmatpush1.msra.mxu0 %v598
  %v600 = vand.u32 %v80, 4294901760
  %v601 = vsub.f32 %v80, %v600
  %v602 = vand.u32 %v601, 4294901760
  %v603 = vsub.f32 %v601, %v602
  %v604 = vand.u32 %v603, 4294901760
  %605 = vmatprep.subr.mxu0 %v604
  %v606 = vand.u32 %v79, 4294901760
  %v607 = vsub.f32 %v79, %v606
  %v608 = vand.u32 %v607, 4294901760
  %v609 = vsub.f32 %v607, %v608
  %v610 = vand.u32 %v609, 4294901760
  %611 = vmatpush1.msra.mxu0 %v610
  %v612 = vand.u32 %v82, 4294901760
  %v613 = vsub.f32 %v82, %v612
  %v614 = vand.u32 %v613, 4294901760
  %v615 = vsub.f32 %v613, %v614
  %v616 = vand.u32 %v615, 4294901760
  %617 = vmatprep.subr.mxu0 %v616
  %v618 = vand.u32 %v81, 4294901760
  %v619 = vsub.f32 %v81, %v618
  %v620 = vand.u32 %v619, 4294901760
  %v621 = vsub.f32 %v619, %v620
  %v622 = vand.u32 %v621, 4294901760
  %623 = vmatpush1.msra.mxu0 %v622
  %v624 = vand.u32 %v84, 4294901760
  %v625 = vsub.f32 %v84, %v624
  %v626 = vand.u32 %v625, 4294901760
  %v627 = vsub.f32 %v625, %v626
  %v628 = vand.u32 %v627, 4294901760
  %629 = vmatprep.subr.mxu0 %v628
  %v630 = vand.u32 %v83, 4294901760
  %v631 = vsub.f32 %v83, %v630
  %v632 = vand.u32 %v631, 4294901760
  %v633 = vsub.f32 %v631, %v632
  %v634 = vand.u32 %v633, 4294901760
  %635 = vmatpush1.msra.mxu0 %v634
  %v636 = vand.u32 %v86, 4294901760
  %v637 = vsub.f32 %v86, %v636
  %v638 = vand.u32 %v637, 4294901760
  %v639 = vsub.f32 %v637, %v638
  %v640 = vand.u32 %v639, 4294901760
  %641 = vmatprep.subr.mxu0 %v640
  %v642 = vand.u32 %v85, 4294901760
  %v643 = vsub.f32 %v85, %v642
  %v644 = vand.u32 %v643, 4294901760
  %v645 = vsub.f32 %v643, %v644
  %v646 = vand.u32 %v645, 4294901760
  %647 = vmatpush1.msra.mxu0 %v646
  %v648 = vand.u32 %v21, 4294901760
  %649 = vmatprep.mubr.f32.mxu0 %v648
  %v650 = vand.u32 %v20, 4294901760
  %651 = vmatmul.mubr.f32.gmra.mrb[0].mxu0 %v650
  %v652 = vpop.f32.mrb[0].mxu0
  %v653 = vadd.f32 %v260, %v652
  %v654 = vpop.f32.mrb[0].mxu0
  %v655 = vadd.f32 %v262, %v654
  %656 = vdwg.mxu0
  %v657 = vand.u32 %v24, 4294901760
  %v658 = vsub.f32 %v24, %v657
  %659 = vmatprep.subr.mxu0 %v658
  %v660 = vand.u32 %v23, 4294901760
  %v661 = vsub.f32 %v23, %v660
  %662 = vmatpush1.msra.mxu0 %v661
  %v663 = vand.u32 %v26, 4294901760
  %v664 = vsub.f32 %v26, %v663
  %665 = vmatprep.subr.mxu0 %v664
  %v666 = vand.u32 %v25, 4294901760
  %v667 = vsub.f32 %v25, %v666
  %668 = vmatpush1.msra.mxu0 %v667
  %v669 = vand.u32 %v28, 4294901760
  %v670 = vsub.f32 %v28, %v669
  %671 = vmatprep.subr.mxu0 %v670
  %v672 = vand.u32 %v27, 4294901760
  %v673 = vsub.f32 %v27, %v672
  %674 = vmatpush1.msra.mxu0 %v673
  %v675 = vand.u32 %v30, 4294901760
  %v676 = vsub.f32 %v30, %v675
  %677 = vmatprep.subr.mxu0 %v676
  %v678 = vand.u32 %v29, 4294901760
  %v679 = vsub.f32 %v29, %v678
  %680 = vmatpush1.msra.mxu0 %v679
  %v681 = vand.u32 %v32, 4294901760
  %v682 = vsub.f32 %v32, %v681
  %683 = vmatprep.subr.mxu0 %v682
  %v684 = vand.u32 %v31, 4294901760
  %v685 = vsub.f32 %v31, %v684
  %686 = vmatpush1.msra.mxu0 %v685
  %v687 = vand.u32 %v34, 4294901760
  %v688 = vsub.f32 %v34, %v687
  %689 = vmatprep.subr.mxu0 %v688
  %v690 = vand.u32 %v33, 4294901760
  %v691 = vsub.f32 %v33, %v690
  %692 = vmatpush1.msra.mxu0 %v691
  %v693 = vand.u32 %v36, 4294901760
  %v694 = vsub.f32 %v36, %v693
  %695 = vmatprep.subr.mxu0 %v694
  %v696 = vand.u32 %v35, 4294901760
  %v697 = vsub.f32 %v35, %v696
  %698 = vmatpush1.msra.mxu0 %v697
  %v699 = vand.u32 %v38, 4294901760
  %v700 = vsub.f32 %v38, %v699
  %701 = vmatprep.subr.mxu0 %v700
  %v702 = vand.u32 %v37, 4294901760
  %v703 = vsub.f32 %v37, %v702
  %704 = vmatpush1.msra.mxu0 %v703
  %v705 = vand.u32 %v40, 4294901760
  %v706 = vsub.f32 %v40, %v705
  %707 = vmatprep.subr.mxu0 %v706
  %v708 = vand.u32 %v39, 4294901760
  %v709 = vsub.f32 %v39, %v708
  %710 = vmatpush1.msra.mxu0 %v709
  %v711 = vand.u32 %v42, 4294901760
  %v712 = vsub.f32 %v42, %v711
  %713 = vmatprep.subr.mxu0 %v712
  %v714 = vand.u32 %v41, 4294901760
  %v715 = vsub.f32 %v41, %v714
  %716 = vmatpush1.msra.mxu0 %v715
  %v717 = vand.u32 %v44, 4294901760
  %v718 = vsub.f32 %v44, %v717
  %719 = vmatprep.subr.mxu0 %v718
  %v720 = vand.u32 %v43, 4294901760
  %v721 = vsub.f32 %v43, %v720
  %722 = vmatpush1.msra.mxu0 %v721
  %v723 = vand.u32 %v46, 4294901760
  %v724 = vsub.f32 %v46, %v723
  %725 = vmatprep.subr.mxu0 %v724
  %v726 = vand.u32 %v45, 4294901760
  %v727 = vsub.f32 %v45, %v726
  %728 = vmatpush1.msra.mxu0 %v727
  %v729 = vand.u32 %v48, 4294901760
  %v730 = vsub.f32 %v48, %v729
  %731 = vmatprep.subr.mxu0 %v730
  %v732 = vand.u32 %v47, 4294901760
  %v733 = vsub.f32 %v47, %v732
  %734 = vmatpush1.msra.mxu0 %v733
  %v735 = vand.u32 %v50, 4294901760
  %v736 = vsub.f32 %v50, %v735
  %737 = vmatprep.subr.mxu0 %v736
  %v738 = vand.u32 %v49, 4294901760
  %v739 = vsub.f32 %v49, %v738
  %740 = vmatpush1.msra.mxu0 %v739
  %v741 = vand.u32 %v52, 4294901760
  %v742 = vsub.f32 %v52, %v741
  %743 = vmatprep.subr.mxu0 %v742
  %v744 = vand.u32 %v51, 4294901760
  %v745 = vsub.f32 %v51, %v744
  %746 = vmatpush1.msra.mxu0 %v745
  %v747 = vand.u32 %v54, 4294901760
  %v748 = vsub.f32 %v54, %v747
  %749 = vmatprep.subr.mxu0 %v748
  %v750 = vand.u32 %v53, 4294901760
  %v751 = vsub.f32 %v53, %v750
  %752 = vmatpush1.msra.mxu0 %v751
  %v753 = vand.u32 %v56, 4294901760
  %v754 = vsub.f32 %v56, %v753
  %755 = vmatprep.subr.mxu0 %v754
  %v756 = vand.u32 %v55, 4294901760
  %v757 = vsub.f32 %v55, %v756
  %758 = vmatpush1.msra.mxu0 %v757
  %v759 = vand.u32 %v58, 4294901760
  %v760 = vsub.f32 %v58, %v759
  %761 = vmatprep.subr.mxu0 %v760
  %v762 = vand.u32 %v57, 4294901760
  %v763 = vsub.f32 %v57, %v762
  %764 = vmatpush1.msra.mxu0 %v763
  %v765 = vand.u32 %v60, 4294901760
  %v766 = vsub.f32 %v60, %v765
  %767 = vmatprep.subr.mxu0 %v766
  %v768 = vand.u32 %v59, 4294901760
  %v769 = vsub.f32 %v59, %v768
  %770 = vmatpush1.msra.mxu0 %v769
  %v771 = vand.u32 %v62, 4294901760
  %v772 = vsub.f32 %v62, %v771
  %773 = vmatprep.subr.mxu0 %v772
  %v774 = vand.u32 %v61, 4294901760
  %v775 = vsub.f32 %v61, %v774
  %776 = vmatpush1.msra.mxu0 %v775
  %v777 = vand.u32 %v64, 4294901760
  %v778 = vsub.f32 %v64, %v777
  %779 = vmatprep.subr.mxu0 %v778
  %v780 = vand.u32 %v63, 4294901760
  %v781 = vsub.f32 %v63, %v780
  %782 = vmatpush1.msra.mxu0 %v781
  %v783 = vand.u32 %v66, 4294901760
  %v784 = vsub.f32 %v66, %v783
  %785 = vmatprep.subr.mxu0 %v784
  %v786 = vand.u32 %v65, 4294901760
  %v787 = vsub.f32 %v65, %v786
  %788 = vmatpush1.msra.mxu0 %v787
  %v789 = vand.u32 %v68, 4294901760
  %v790 = vsub.f32 %v68, %v789
  %791 = vmatprep.subr.mxu0 %v790
  %v792 = vand.u32 %v67, 4294901760
  %v793 = vsub.f32 %v67, %v792
  %794 = vmatpush1.msra.mxu0 %v793
  %v795 = vand.u32 %v70, 4294901760
  %v796 = vsub.f32 %v70, %v795
  %797 = vmatprep.subr.mxu0 %v796
  %v798 = vand.u32 %v69, 4294901760
  %v799 = vsub.f32 %v69, %v798
  %800 = vmatpush1.msra.mxu0 %v799
  %v801 = vand.u32 %v72, 4294901760
  %v802 = vsub.f32 %v72, %v801
  %803 = vmatprep.subr.mxu0 %v802
  %v804 = vand.u32 %v71, 4294901760
  %v805 = vsub.f32 %v71, %v804
  %806 = vmatpush1.msra.mxu0 %v805
  %v807 = vand.u32 %v74, 4294901760
  %v808 = vsub.f32 %v74, %v807
  %809 = vmatprep.subr.mxu0 %v808
  %v810 = vand.u32 %v73, 4294901760
  %v811 = vsub.f32 %v73, %v810
  %812 = vmatpush1.msra.mxu0 %v811
  %v813 = vand.u32 %v76, 4294901760
  %v814 = vsub.f32 %v76, %v813
  %815 = vmatprep.subr.mxu0 %v814
  %v816 = vand.u32 %v75, 4294901760
  %v817 = vsub.f32 %v75, %v816
  %818 = vmatpush1.msra.mxu0 %v817
  %v819 = vand.u32 %v78, 4294901760
  %v820 = vsub.f32 %v78, %v819
  %821 = vmatprep.subr.mxu0 %v820
  %v822 = vand.u32 %v77, 4294901760
  %v823 = vsub.f32 %v77, %v822
  %824 = vmatpush1.msra.mxu0 %v823
  %v825 = vand.u32 %v80, 4294901760
  %v826 = vsub.f32 %v80, %v825
  %827 = vmatprep.subr.mxu0 %v826
  %v828 = vand.u32 %v79, 4294901760
  %v829 = vsub.f32 %v79, %v828
  %830 = vmatpush1.msra.mxu0 %v829
  %v831 = vand.u32 %v82, 4294901760
  %v832 = vsub.f32 %v82, %v831
  %833 = vmatprep.subr.mxu0 %v832
  %v834 = vand.u32 %v81, 4294901760
  %v835 = vsub.f32 %v81, %v834
  %836 = vmatpush1.msra.mxu0 %v835
  %v837 = vand.u32 %v84, 4294901760
  %v838 = vsub.f32 %v84, %v837
  %839 = vmatprep.subr.mxu0 %v838
  %v840 = vand.u32 %v83, 4294901760
  %v841 = vsub.f32 %v83, %v840
  %842 = vmatpush1.msra.mxu0 %v841
  %v843 = vand.u32 %v86, 4294901760
  %v844 = vsub.f32 %v86, %v843
  %845 = vmatprep.subr.mxu0 %v844
  %v846 = vand.u32 %v85, 4294901760
  %v847 = vsub.f32 %v85, %v846
  %848 = vmatpush1.msra.mxu0 %v847
  %v849 = vand.u32 %v21, 4294901760
  %v850 = vsub.f32 %v21, %v849
  %851 = vmatprep.mubr.f32.mxu0 %v850
  %v852 = vand.u32 %v20, 4294901760
  %v853 = vsub.f32 %v20, %v852
  %854 = vmatmul.mubr.f32.gmra.mrb[0].mxu0 %v853
  %v855 = vpop.f32.mrb[0].mxu0
  %v856 = vadd.f32 %v653, %v855
  %v857 = vpop.f32.mrb[0].mxu0
  %v858 = vadd.f32 %v655, %v857
  %859 = vdwg.mxu0
  %v860 = vand.u32 %v24, 4294901760
  %861 = vmatprep.subr.mxu0 %v860
  %v862 = vand.u32 %v23, 4294901760
  %863 = vmatpush1.msra.mxu0 %v862
  %v864 = vand.u32 %v26, 4294901760
  %865 = vmatprep.subr.mxu0 %v864
  %v866 = vand.u32 %v25, 4294901760
  %867 = vmatpush1.msra.mxu0 %v866
  %v868 = vand.u32 %v28, 4294901760
  %869 = vmatprep.subr.mxu0 %v868
  %v870 = vand.u32 %v27, 4294901760
  %871 = vmatpush1.msra.mxu0 %v870
  %v872 = vand.u32 %v30, 4294901760
  %873 = vmatprep.subr.mxu0 %v872
  %v874 = vand.u32 %v29, 4294901760
  %875 = vmatpush1.msra.mxu0 %v874
  %v876 = vand.u32 %v32, 4294901760
  %877 = vmatprep.subr.mxu0 %v876
  %v878 = vand.u32 %v31, 4294901760
  %879 = vmatpush1.msra.mxu0 %v878
  %v880 = vand.u32 %v34, 4294901760
  %881 = vmatprep.subr.mxu0 %v880
  %v882 = vand.u32 %v33, 4294901760
  %883 = vmatpush1.msra.mxu0 %v882
  %v884 = vand.u32 %v36, 4294901760
  %885 = vmatprep.subr.mxu0 %v884
  %v886 = vand.u32 %v35, 4294901760
  %887 = vmatpush1.msra.mxu0 %v886
  %v888 = vand.u32 %v38, 4294901760
  %889 = vmatprep.subr.mxu0 %v888
  %v890 = vand.u32 %v37, 4294901760
  %891 = vmatpush1.msra.mxu0 %v890
  %v892 = vand.u32 %v40, 4294901760
  %893 = vmatprep.subr.mxu0 %v892
  %v894 = vand.u32 %v39, 4294901760
  %895 = vmatpush1.msra.mxu0 %v894
  %v896 = vand.u32 %v42, 4294901760
  %897 = vmatprep.subr.mxu0 %v896
  %v898 = vand.u32 %v41, 4294901760
  %899 = vmatpush1.msra.mxu0 %v898
  %v900 = vand.u32 %v44, 4294901760
  %901 = vmatprep.subr.mxu0 %v900
  %v902 = vand.u32 %v43, 4294901760
  %903 = vmatpush1.msra.mxu0 %v902
  %v904 = vand.u32 %v46, 4294901760
  %905 = vmatprep.subr.mxu0 %v904
  %v906 = vand.u32 %v45, 4294901760
  %907 = vmatpush1.msra.mxu0 %v906
  %v908 = vand.u32 %v48, 4294901760
  %909 = vmatprep.subr.mxu0 %v908
  %v910 = vand.u32 %v47, 4294901760
  %911 = vmatpush1.msra.mxu0 %v910
  %v912 = vand.u32 %v50, 4294901760
  %913 = vmatprep.subr.mxu0 %v912
  %v914 = vand.u32 %v49, 4294901760
  %915 = vmatpush1.msra.mxu0 %v914
  %v916 = vand.u32 %v52, 4294901760
  %917 = vmatprep.subr.mxu0 %v916
  %v918 = vand.u32 %v51, 4294901760
  %919 = vmatpush1.msra.mxu0 %v918
  %v920 = vand.u32 %v54, 4294901760
  %921 = vmatprep.subr.mxu0 %v920
  %v922 = vand.u32 %v53, 4294901760
  %923 = vmatpush1.msra.mxu0 %v922
  %v924 = vand.u32 %v56, 4294901760
  %925 = vmatprep.subr.mxu0 %v924
  %v926 = vand.u32 %v55, 4294901760
  %927 = vmatpush1.msra.mxu0 %v926
  %v928 = vand.u32 %v58, 4294901760
  %929 = vmatprep.subr.mxu0 %v928
  %v930 = vand.u32 %v57, 4294901760
  %931 = vmatpush1.msra.mxu0 %v930
  %v932 = vand.u32 %v60, 4294901760
  %933 = vmatprep.subr.mxu0 %v932
  %v934 = vand.u32 %v59, 4294901760
  %935 = vmatpush1.msra.mxu0 %v934
  %v936 = vand.u32 %v62, 4294901760
  %937 = vmatprep.subr.mxu0 %v936
  %v938 = vand.u32 %v61, 4294901760
  %939 = vmatpush1.msra.mxu0 %v938
  %v940 = vand.u32 %v64, 4294901760
  %941 = vmatprep.subr.mxu0 %v940
  %v942 = vand.u32 %v63, 4294901760
  %943 = vmatpush1.msra.mxu0 %v942
  %v944 = vand.u32 %v66, 4294901760
  %945 = vmatprep.subr.mxu0 %v944
  %v946 = vand.u32 %v65, 4294901760
  %947 = vmatpush1.msra.mxu0 %v946
  %v948 = vand.u32 %v68, 4294901760
  %949 = vmatprep.subr.mxu0 %v948
  %v950 = vand.u32 %v67, 4294901760
  %951 = vmatpush1.msra.mxu0 %v950
  %v952 = vand.u32 %v70, 4294901760
  %953 = vmatprep.subr.mxu0 %v952
  %v954 = vand.u32 %v69, 4294901760
  %955 = vmatpush1.msra.mxu0 %v954
  %v956 = vand.u32 %v72, 4294901760
  %957 = vmatprep.subr.mxu0 %v956
  %v958 = vand.u32 %v71, 4294901760
  %959 = vmatpush1.msra.mxu0 %v958
  %v960 = vand.u32 %v74, 4294901760
  %961 = vmatprep.subr.mxu0 %v960
  %v962 = vand.u32 %v73, 4294901760
  %963 = vmatpush1.msra.mxu0 %v962
  %v964 = vand.u32 %v76, 4294901760
  %965 = vmatprep.subr.mxu0 %v964
  %v966 = vand.u32 %v75, 4294901760
  %967 = vmatpush1.msra.mxu0 %v966
  %v968 = vand.u32 %v78, 4294901760
  %969 = vmatprep.subr.mxu0 %v968
  %v970 = vand.u32 %v77, 4294901760
  %971 = vmatpush1.msra.mxu0 %v970
  %v972 = vand.u32 %v80, 4294901760
  %973 = vmatprep.subr.mxu0 %v972
  %v974 = vand.u32 %v79, 4294901760
  %975 = vmatpush1.msra.mxu0 %v974
  %v976 = vand.u32 %v82, 4294901760
  %977 = vmatprep.subr.mxu0 %v976
  %v978 = vand.u32 %v81, 4294901760
  %979 = vmatpush1.msra.mxu0 %v978
  %v980 = vand.u32 %v84, 4294901760
  %981 = vmatprep.subr.mxu0 %v980
  %v982 = vand.u32 %v83, 4294901760
  %983 = vmatpush1.msra.mxu0 %v982
  %v984 = vand.u32 %v86, 4294901760
  %985 = vmatprep.subr.mxu0 %v984
  %v986 = vand.u32 %v85, 4294901760
  %987 = vmatpush1.msra.mxu0 %v986
  %v988 = vand.u32 %v21, 4294901760
  %v989 = vsub.f32 %v21, %v988
  %v990 = vand.u32 %v989, 4294901760
  %991 = vmatprep.mubr.f32.mxu0 %v990
  %v992 = vand.u32 %v20, 4294901760
  %v993 = vsub.f32 %v20, %v992
  %v994 = vand.u32 %v993, 4294901760
  %995 = vmatmul.mubr.f32.gmra.mrb[0].mxu0 %v994
  %v996 = vpop.f32.mrb[0].mxu0
  %v997 = vadd.f32 %v856, %v996
  %v998 = vpop.f32.mrb[0].mxu0
  %v999 = vadd.f32 %v858, %v998
  %1000 = vdwg.mxu0
  %v1001 = vand.u32 %v24, 4294901760
  %v1002 = vsub.f32 %v24, %v1001
  %v1003 = vand.u32 %v1002, 4294901760
  %1004 = vmatprep.subr.mxu0 %v1003
  %v1005 = vand.u32 %v23, 4294901760
  %v1006 = vsub.f32 %v23, %v1005
  %v1007 = vand.u32 %v1006, 4294901760
  %1008 = vmatpush1.msra.mxu0 %v1007
  %v1009 = vand.u32 %v26, 4294901760
  %v1010 = vsub.f32 %v26, %v1009
  %v1011 = vand.u32 %v1010, 4294901760
  %1012 = vmatprep.subr.mxu0 %v1011
  %v1013 = vand.u32 %v25, 4294901760
  %v1014 = vsub.f32 %v25, %v1013
  %v1015 = vand.u32 %v1014, 4294901760
  %1016 = vmatpush1.msra.mxu0 %v1015
  %v1017 = vand.u32 %v28, 4294901760
  %v1018 = vsub.f32 %v28, %v1017
  %v1019 = vand.u32 %v1018, 4294901760
  %1020 = vmatprep.subr.mxu0 %v1019
  %v1021 = vand.u32 %v27, 4294901760
  %v1022 = vsub.f32 %v27, %v1021
  %v1023 = vand.u32 %v1022, 4294901760
  %1024 = vmatpush1.msra.mxu0 %v1023
  %v1025 = vand.u32 %v30, 4294901760
  %v1026 = vsub.f32 %v30, %v1025
  %v1027 = vand.u32 %v1026, 4294901760
  %1028 = vmatprep.subr.mxu0 %v1027
  %v1029 = vand.u32 %v29, 4294901760
  %v1030 = vsub.f32 %v29, %v1029
  %v1031 = vand.u32 %v1030, 4294901760
  %1032 = vmatpush1.msra.mxu0 %v1031
  %v1033 = vand.u32 %v32, 4294901760
  %v1034 = vsub.f32 %v32, %v1033
  %v1035 = vand.u32 %v1034, 4294901760
  %1036 = vmatprep.subr.mxu0 %v1035
  %v1037 = vand.u32 %v31, 4294901760
  %v1038 = vsub.f32 %v31, %v1037
  %v1039 = vand.u32 %v1038, 4294901760
  %1040 = vmatpush1.msra.mxu0 %v1039
  %v1041 = vand.u32 %v34, 4294901760
  %v1042 = vsub.f32 %v34, %v1041
  %v1043 = vand.u32 %v1042, 4294901760
  %1044 = vmatprep.subr.mxu0 %v1043
  %v1045 = vand.u32 %v33, 4294901760
  %v1046 = vsub.f32 %v33, %v1045
  %v1047 = vand.u32 %v1046, 4294901760
  %1048 = vmatpush1.msra.mxu0 %v1047
  %v1049 = vand.u32 %v36, 4294901760
  %v1050 = vsub.f32 %v36, %v1049
  %v1051 = vand.u32 %v1050, 4294901760
  %1052 = vmatprep.subr.mxu0 %v1051
  %v1053 = vand.u32 %v35, 4294901760
  %v1054 = vsub.f32 %v35, %v1053
  %v1055 = vand.u32 %v1054, 4294901760
  %1056 = vmatpush1.msra.mxu0 %v1055
  %v1057 = vand.u32 %v38, 4294901760
  %v1058 = vsub.f32 %v38, %v1057
  %v1059 = vand.u32 %v1058, 4294901760
  %1060 = vmatprep.subr.mxu0 %v1059
  %v1061 = vand.u32 %v37, 4294901760
  %v1062 = vsub.f32 %v37, %v1061
  %v1063 = vand.u32 %v1062, 4294901760
  %1064 = vmatpush1.msra.mxu0 %v1063
  %v1065 = vand.u32 %v40, 4294901760
  %v1066 = vsub.f32 %v40, %v1065
  %v1067 = vand.u32 %v1066, 4294901760
  %1068 = vmatprep.subr.mxu0 %v1067
  %v1069 = vand.u32 %v39, 4294901760
  %v1070 = vsub.f32 %v39, %v1069
  %v1071 = vand.u32 %v1070, 4294901760
  %1072 = vmatpush1.msra.mxu0 %v1071
  %v1073 = vand.u32 %v42, 4294901760
  %v1074 = vsub.f32 %v42, %v1073
  %v1075 = vand.u32 %v1074, 4294901760
  %1076 = vmatprep.subr.mxu0 %v1075
  %v1077 = vand.u32 %v41, 4294901760
  %v1078 = vsub.f32 %v41, %v1077
  %v1079 = vand.u32 %v1078, 4294901760
  %1080 = vmatpush1.msra.mxu0 %v1079
  %v1081 = vand.u32 %v44, 4294901760
  %v1082 = vsub.f32 %v44, %v1081
  %v1083 = vand.u32 %v1082, 4294901760
  %1084 = vmatprep.subr.mxu0 %v1083
  %v1085 = vand.u32 %v43, 4294901760
  %v1086 = vsub.f32 %v43, %v1085
  %v1087 = vand.u32 %v1086, 4294901760
  %1088 = vmatpush1.msra.mxu0 %v1087
  %v1089 = vand.u32 %v46, 4294901760
  %v1090 = vsub.f32 %v46, %v1089
  %v1091 = vand.u32 %v1090, 4294901760
  %1092 = vmatprep.subr.mxu0 %v1091
  %v1093 = vand.u32 %v45, 4294901760
  %v1094 = vsub.f32 %v45, %v1093
  %v1095 = vand.u32 %v1094, 4294901760
  %1096 = vmatpush1.msra.mxu0 %v1095
  %v1097 = vand.u32 %v48, 4294901760
  %v1098 = vsub.f32 %v48, %v1097
  %v1099 = vand.u32 %v1098, 4294901760
  %1100 = vmatprep.subr.mxu0 %v1099
  %v1101 = vand.u32 %v47, 4294901760
  %v1102 = vsub.f32 %v47, %v1101
  %v1103 = vand.u32 %v1102, 4294901760
  %1104 = vmatpush1.msra.mxu0 %v1103
  %v1105 = vand.u32 %v50, 4294901760
  %v1106 = vsub.f32 %v50, %v1105
  %v1107 = vand.u32 %v1106, 4294901760
  %1108 = vmatprep.subr.mxu0 %v1107
  %v1109 = vand.u32 %v49, 4294901760
  %v1110 = vsub.f32 %v49, %v1109
  %v1111 = vand.u32 %v1110, 4294901760
  %1112 = vmatpush1.msra.mxu0 %v1111
  %v1113 = vand.u32 %v52, 4294901760
  %v1114 = vsub.f32 %v52, %v1113
  %v1115 = vand.u32 %v1114, 4294901760
  %1116 = vmatprep.subr.mxu0 %v1115
  %v1117 = vand.u32 %v51, 4294901760
  %v1118 = vsub.f32 %v51, %v1117
  %v1119 = vand.u32 %v1118, 4294901760
  %1120 = vmatpush1.msra.mxu0 %v1119
  %v1121 = vand.u32 %v54, 4294901760
  %v1122 = vsub.f32 %v54, %v1121
  %v1123 = vand.u32 %v1122, 4294901760
  %1124 = vmatprep.subr.mxu0 %v1123
  %v1125 = vand.u32 %v53, 4294901760
  %v1126 = vsub.f32 %v53, %v1125
  %v1127 = vand.u32 %v1126, 4294901760
  %1128 = vmatpush1.msra.mxu0 %v1127
  %v1129 = vand.u32 %v56, 4294901760
  %v1130 = vsub.f32 %v56, %v1129
  %v1131 = vand.u32 %v1130, 4294901760
  %1132 = vmatprep.subr.mxu0 %v1131
  %v1133 = vand.u32 %v55, 4294901760
  %v1134 = vsub.f32 %v55, %v1133
  %v1135 = vand.u32 %v1134, 4294901760
  %1136 = vmatpush1.msra.mxu0 %v1135
  %v1137 = vand.u32 %v58, 4294901760
  %v1138 = vsub.f32 %v58, %v1137
  %v1139 = vand.u32 %v1138, 4294901760
  %1140 = vmatprep.subr.mxu0 %v1139
  %v1141 = vand.u32 %v57, 4294901760
  %v1142 = vsub.f32 %v57, %v1141
  %v1143 = vand.u32 %v1142, 4294901760
  %1144 = vmatpush1.msra.mxu0 %v1143
  %v1145 = vand.u32 %v60, 4294901760
  %v1146 = vsub.f32 %v60, %v1145
  %v1147 = vand.u32 %v1146, 4294901760
  %1148 = vmatprep.subr.mxu0 %v1147
  %v1149 = vand.u32 %v59, 4294901760
  %v1150 = vsub.f32 %v59, %v1149
  %v1151 = vand.u32 %v1150, 4294901760
  %1152 = vmatpush1.msra.mxu0 %v1151
  %v1153 = vand.u32 %v62, 4294901760
  %v1154 = vsub.f32 %v62, %v1153
  %v1155 = vand.u32 %v1154, 4294901760
  %1156 = vmatprep.subr.mxu0 %v1155
  %v1157 = vand.u32 %v61, 4294901760
  %v1158 = vsub.f32 %v61, %v1157
  %v1159 = vand.u32 %v1158, 4294901760
  %1160 = vmatpush1.msra.mxu0 %v1159
  %v1161 = vand.u32 %v64, 4294901760
  %v1162 = vsub.f32 %v64, %v1161
  %v1163 = vand.u32 %v1162, 4294901760
  %1164 = vmatprep.subr.mxu0 %v1163
  %v1165 = vand.u32 %v63, 4294901760
  %v1166 = vsub.f32 %v63, %v1165
  %v1167 = vand.u32 %v1166, 4294901760
  %1168 = vmatpush1.msra.mxu0 %v1167
  %v1169 = vand.u32 %v66, 4294901760
  %v1170 = vsub.f32 %v66, %v1169
  %v1171 = vand.u32 %v1170, 4294901760
  %1172 = vmatprep.subr.mxu0 %v1171
  %v1173 = vand.u32 %v65, 4294901760
  %v1174 = vsub.f32 %v65, %v1173
  %v1175 = vand.u32 %v1174, 4294901760
  %1176 = vmatpush1.msra.mxu0 %v1175
  %v1177 = vand.u32 %v68, 4294901760
  %v1178 = vsub.f32 %v68, %v1177
  %v1179 = vand.u32 %v1178, 4294901760
  %1180 = vmatprep.subr.mxu0 %v1179
  %v1181 = vand.u32 %v67, 4294901760
  %v1182 = vsub.f32 %v67, %v1181
  %v1183 = vand.u32 %v1182, 4294901760
  %1184 = vmatpush1.msra.mxu0 %v1183
  %v1185 = vand.u32 %v70, 4294901760
  %v1186 = vsub.f32 %v70, %v1185
  %v1187 = vand.u32 %v1186, 4294901760
  %1188 = vmatprep.subr.mxu0 %v1187
  %v1189 = vand.u32 %v69, 4294901760
  %v1190 = vsub.f32 %v69, %v1189
  %v1191 = vand.u32 %v1190, 4294901760
  %1192 = vmatpush1.msra.mxu0 %v1191
  %v1193 = vand.u32 %v72, 4294901760
  %v1194 = vsub.f32 %v72, %v1193
  %v1195 = vand.u32 %v1194, 4294901760
  %1196 = vmatprep.subr.mxu0 %v1195
  %v1197 = vand.u32 %v71, 4294901760
  %v1198 = vsub.f32 %v71, %v1197
  %v1199 = vand.u32 %v1198, 4294901760
  %1200 = vmatpush1.msra.mxu0 %v1199
  %v1201 = vand.u32 %v74, 4294901760
  %v1202 = vsub.f32 %v74, %v1201
  %v1203 = vand.u32 %v1202, 4294901760
  %1204 = vmatprep.subr.mxu0 %v1203
  %v1205 = vand.u32 %v73, 4294901760
  %v1206 = vsub.f32 %v73, %v1205
  %v1207 = vand.u32 %v1206, 4294901760
  %1208 = vmatpush1.msra.mxu0 %v1207
  %v1209 = vand.u32 %v76, 4294901760
  %v1210 = vsub.f32 %v76, %v1209
  %v1211 = vand.u32 %v1210, 4294901760
  %1212 = vmatprep.subr.mxu0 %v1211
  %v1213 = vand.u32 %v75, 4294901760
  %v1214 = vsub.f32 %v75, %v1213
  %v1215 = vand.u32 %v1214, 4294901760
  %1216 = vmatpush1.msra.mxu0 %v1215
  %v1217 = vand.u32 %v78, 4294901760
  %v1218 = vsub.f32 %v78, %v1217
  %v1219 = vand.u32 %v1218, 4294901760
  %1220 = vmatprep.subr.mxu0 %v1219
  %v1221 = vand.u32 %v77, 4294901760
  %v1222 = vsub.f32 %v77, %v1221
  %v1223 = vand.u32 %v1222, 4294901760
  %1224 = vmatpush1.msra.mxu0 %v1223
  %v1225 = vand.u32 %v80, 4294901760
  %v1226 = vsub.f32 %v80, %v1225
  %v1227 = vand.u32 %v1226, 4294901760
  %1228 = vmatprep.subr.mxu0 %v1227
  %v1229 = vand.u32 %v79, 4294901760
  %v1230 = vsub.f32 %v79, %v1229
  %v1231 = vand.u32 %v1230, 4294901760
  %1232 = vmatpush1.msra.mxu0 %v1231
  %v1233 = vand.u32 %v82, 4294901760
  %v1234 = vsub.f32 %v82, %v1233
  %v1235 = vand.u32 %v1234, 4294901760
  %1236 = vmatprep.subr.mxu0 %v1235
  %v1237 = vand.u32 %v81, 4294901760
  %v1238 = vsub.f32 %v81, %v1237
  %v1239 = vand.u32 %v1238, 4294901760
  %1240 = vmatpush1.msra.mxu0 %v1239
  %v1241 = vand.u32 %v84, 4294901760
  %v1242 = vsub.f32 %v84, %v1241
  %v1243 = vand.u32 %v1242, 4294901760
  %1244 = vmatprep.subr.mxu0 %v1243
  %v1245 = vand.u32 %v83, 4294901760
  %v1246 = vsub.f32 %v83, %v1245
  %v1247 = vand.u32 %v1246, 4294901760
  %1248 = vmatpush1.msra.mxu0 %v1247
  %v1249 = vand.u32 %v86, 4294901760
  %v1250 = vsub.f32 %v86, %v1249
  %v1251 = vand.u32 %v1250, 4294901760
  %1252 = vmatprep.subr.mxu0 %v1251
  %v1253 = vand.u32 %v85, 4294901760
  %v1254 = vsub.f32 %v85, %v1253
  %v1255 = vand.u32 %v1254, 4294901760
  %1256 = vmatpush1.msra.mxu0 %v1255
  %v1257 = vand.u32 %v21, 4294901760
  %1258 = vmatprep.mubr.f32.mxu0 %v1257
  %v1259 = vand.u32 %v20, 4294901760
  %1260 = vmatmul.mubr.f32.gmra.mrb[0].mxu0 %v1259
  %v1261 = vpop.f32.mrb[0].mxu0
  %v1262 = vadd.f32 %v997, %v1261
  %v1263 = vpop.f32.mrb[0].mxu0
  %v1264 = vadd.f32 %v999, %v1263
  %1265 = vdwg.mxu0
  %v1266 = vand.u32 %v24, 4294901760
  %1267 = vmatprep.subr.mxu0 %v1266
  %v1268 = vand.u32 %v23, 4294901760
  %1269 = vmatpush1.msra.mxu0 %v1268
  %v1270 = vand.u32 %v26, 4294901760
  %1271 = vmatprep.subr.mxu0 %v1270
  %v1272 = vand.u32 %v25, 4294901760
  %1273 = vmatpush1.msra.mxu0 %v1272
  %v1274 = vand.u32 %v28, 4294901760
  %1275 = vmatprep.subr.mxu0 %v1274
  %v1276 = vand.u32 %v27, 4294901760
  %1277 = vmatpush1.msra.mxu0 %v1276
  %v1278 = vand.u32 %v30, 4294901760
  %1279 = vmatprep.subr.mxu0 %v1278
  %v1280 = vand.u32 %v29, 4294901760
  %1281 = vmatpush1.msra.mxu0 %v1280
  %v1282 = vand.u32 %v32, 4294901760
  %1283 = vmatprep.subr.mxu0 %v1282
  %v1284 = vand.u32 %v31, 4294901760
  %1285 = vmatpush1.msra.mxu0 %v1284
  %v1286 = vand.u32 %v34, 4294901760
  %1287 = vmatprep.subr.mxu0 %v1286
  %v1288 = vand.u32 %v33, 4294901760
  %1289 = vmatpush1.msra.mxu0 %v1288
  %v1290 = vand.u32 %v36, 4294901760
  %1291 = vmatprep.subr.mxu0 %v1290
  %v1292 = vand.u32 %v35, 4294901760
  %1293 = vmatpush1.msra.mxu0 %v1292
  %v1294 = vand.u32 %v38, 4294901760
  %1295 = vmatprep.subr.mxu0 %v1294
  %v1296 = vand.u32 %v37, 4294901760
  %1297 = vmatpush1.msra.mxu0 %v1296
  %v1298 = vand.u32 %v40, 4294901760
  %1299 = vmatprep.subr.mxu0 %v1298
  %v1300 = vand.u32 %v39, 4294901760
  %1301 = vmatpush1.msra.mxu0 %v1300
  %v1302 = vand.u32 %v42, 4294901760
  %1303 = vmatprep.subr.mxu0 %v1302
  %v1304 = vand.u32 %v41, 4294901760
  %1305 = vmatpush1.msra.mxu0 %v1304
  %v1306 = vand.u32 %v44, 4294901760
  %1307 = vmatprep.subr.mxu0 %v1306
  %v1308 = vand.u32 %v43, 4294901760
  %1309 = vmatpush1.msra.mxu0 %v1308
  %v1310 = vand.u32 %v46, 4294901760
  %1311 = vmatprep.subr.mxu0 %v1310
  %v1312 = vand.u32 %v45, 4294901760
  %1313 = vmatpush1.msra.mxu0 %v1312
  %v1314 = vand.u32 %v48, 4294901760
  %1315 = vmatprep.subr.mxu0 %v1314
  %v1316 = vand.u32 %v47, 4294901760
  %1317 = vmatpush1.msra.mxu0 %v1316
  %v1318 = vand.u32 %v50, 4294901760
  %1319 = vmatprep.subr.mxu0 %v1318
  %v1320 = vand.u32 %v49, 4294901760
  %1321 = vmatpush1.msra.mxu0 %v1320
  %v1322 = vand.u32 %v52, 4294901760
  %1323 = vmatprep.subr.mxu0 %v1322
  %v1324 = vand.u32 %v51, 4294901760
  %1325 = vmatpush1.msra.mxu0 %v1324
  %v1326 = vand.u32 %v54, 4294901760
  %1327 = vmatprep.subr.mxu0 %v1326
  %v1328 = vand.u32 %v53, 4294901760
  %1329 = vmatpush1.msra.mxu0 %v1328
  %v1330 = vand.u32 %v56, 4294901760
  %1331 = vmatprep.subr.mxu0 %v1330
  %v1332 = vand.u32 %v55, 4294901760
  %1333 = vmatpush1.msra.mxu0 %v1332
  %v1334 = vand.u32 %v58, 4294901760
  %1335 = vmatprep.subr.mxu0 %v1334
  %v1336 = vand.u32 %v57, 4294901760
  %1337 = vmatpush1.msra.mxu0 %v1336
  %v1338 = vand.u32 %v60, 4294901760
  %1339 = vmatprep.subr.mxu0 %v1338
  %v1340 = vand.u32 %v59, 4294901760
  %1341 = vmatpush1.msra.mxu0 %v1340
  %v1342 = vand.u32 %v62, 4294901760
  %1343 = vmatprep.subr.mxu0 %v1342
  %v1344 = vand.u32 %v61, 4294901760
  %1345 = vmatpush1.msra.mxu0 %v1344
  %v1346 = vand.u32 %v64, 4294901760
  %1347 = vmatprep.subr.mxu0 %v1346
  %v1348 = vand.u32 %v63, 4294901760
  %1349 = vmatpush1.msra.mxu0 %v1348
  %v1350 = vand.u32 %v66, 4294901760
  %1351 = vmatprep.subr.mxu0 %v1350
  %v1352 = vand.u32 %v65, 4294901760
  %1353 = vmatpush1.msra.mxu0 %v1352
  %v1354 = vand.u32 %v68, 4294901760
  %1355 = vmatprep.subr.mxu0 %v1354
  %v1356 = vand.u32 %v67, 4294901760
  %1357 = vmatpush1.msra.mxu0 %v1356
  %v1358 = vand.u32 %v70, 4294901760
  %1359 = vmatprep.subr.mxu0 %v1358
  %v1360 = vand.u32 %v69, 4294901760
  %1361 = vmatpush1.msra.mxu0 %v1360
  %v1362 = vand.u32 %v72, 4294901760
  %1363 = vmatprep.subr.mxu0 %v1362
  %v1364 = vand.u32 %v71, 4294901760
  %1365 = vmatpush1.msra.mxu0 %v1364
  %v1366 = vand.u32 %v74, 4294901760
  %1367 = vmatprep.subr.mxu0 %v1366
  %v1368 = vand.u32 %v73, 4294901760
  %1369 = vmatpush1.msra.mxu0 %v1368
  %v1370 = vand.u32 %v76, 4294901760
  %1371 = vmatprep.subr.mxu0 %v1370
  %v1372 = vand.u32 %v75, 4294901760
  %1373 = vmatpush1.msra.mxu0 %v1372
  %v1374 = vand.u32 %v78, 4294901760
  %1375 = vmatprep.subr.mxu0 %v1374
  %v1376 = vand.u32 %v77, 4294901760
  %1377 = vmatpush1.msra.mxu0 %v1376
  %v1378 = vand.u32 %v80, 4294901760
  %1379 = vmatprep.subr.mxu0 %v1378
  %v1380 = vand.u32 %v79, 4294901760
  %1381 = vmatpush1.msra.mxu0 %v1380
  %v1382 = vand.u32 %v82, 4294901760
  %1383 = vmatprep.subr.mxu0 %v1382
  %v1384 = vand.u32 %v81, 4294901760
  %1385 = vmatpush1.msra.mxu0 %v1384
  %v1386 = vand.u32 %v84, 4294901760
  %1387 = vmatprep.subr.mxu0 %v1386
  %v1388 = vand.u32 %v83, 4294901760
  %1389 = vmatpush1.msra.mxu0 %v1388
  %v1390 = vand.u32 %v86, 4294901760
  %1391 = vmatprep.subr.mxu0 %v1390
  %v1392 = vand.u32 %v85, 4294901760
  %1393 = vmatpush1.msra.mxu0 %v1392
  %v1394 = vand.u32 %v21, 4294901760
  %1395 = vmatprep.mubr.f32.mxu0 %v1394
  %v1396 = vand.u32 %v20, 4294901760
  %1397 = vmatmul.mubr.f32.gmra.mrb[0].mxu0 %v1396
  %v1398 = vpop.f32.mrb[0].mxu0
  %v1399 = vadd.f32 %v1262, %v1398
  %v1400 = vpop.f32.mrb[0].mxu0
  %v1401 = vadd.f32 %v1264, %v1400
  %1402 = vdwg.mxu0
  %v1403 = vand.u32 %v88, 4294901760
  %1404 = vmatprep.subr.mxu0 %v1403
  %v1405 = vand.u32 %v87, 4294901760
  %1406 = vmatpush1.msra.mxu0 %v1405
  %v1407 = vand.u32 %v90, 4294901760
  %1408 = vmatprep.subr.mxu0 %v1407
  %v1409 = vand.u32 %v89, 4294901760
  %1410 = vmatpush1.msra.mxu0 %v1409
  %v1411 = vand.u32 %v92, 4294901760
  %1412 = vmatprep.subr.mxu0 %v1411
  %v1413 = vand.u32 %v91, 4294901760
  %1414 = vmatpush1.msra.mxu0 %v1413
  %v1415 = vand.u32 %v94, 4294901760
  %1416 = vmatprep.subr.mxu0 %v1415
  %v1417 = vand.u32 %v93, 4294901760
  %1418 = vmatpush1.msra.mxu0 %v1417
  %v1419 = vand.u32 %v96, 4294901760
  %1420 = vmatprep.subr.mxu0 %v1419
  %v1421 = vand.u32 %v95, 4294901760
  %1422 = vmatpush1.msra.mxu0 %v1421
  %v1423 = vand.u32 %v98, 4294901760
  %1424 = vmatprep.subr.mxu0 %v1423
  %v1425 = vand.u32 %v97, 4294901760
  %1426 = vmatpush1.msra.mxu0 %v1425
  %v1427 = vand.u32 %v100, 4294901760
  %1428 = vmatprep.subr.mxu0 %v1427
  %v1429 = vand.u32 %v99, 4294901760
  %1430 = vmatpush1.msra.mxu0 %v1429
  %v1431 = vand.u32 %v102, 4294901760
  %1432 = vmatprep.subr.mxu0 %v1431
  %v1433 = vand.u32 %v101, 4294901760
  %1434 = vmatpush1.msra.mxu0 %v1433
  %v1435 = vand.u32 %v104, 4294901760
  %1436 = vmatprep.subr.mxu0 %v1435
  %v1437 = vand.u32 %v103, 4294901760
  %1438 = vmatpush1.msra.mxu0 %v1437
  %v1439 = vand.u32 %v106, 4294901760
  %1440 = vmatprep.subr.mxu0 %v1439
  %v1441 = vand.u32 %v105, 4294901760
  %1442 = vmatpush1.msra.mxu0 %v1441
  %v1443 = vand.u32 %v108, 4294901760
  %1444 = vmatprep.subr.mxu0 %v1443
  %v1445 = vand.u32 %v107, 4294901760
  %1446 = vmatpush1.msra.mxu0 %v1445
  %v1447 = vand.u32 %v110, 4294901760
  %1448 = vmatprep.subr.mxu0 %v1447
  %v1449 = vand.u32 %v109, 4294901760
  %1450 = vmatpush1.msra.mxu0 %v1449
  %v1451 = vand.u32 %v112, 4294901760
  %1452 = vmatprep.subr.mxu0 %v1451
  %v1453 = vand.u32 %v111, 4294901760
  %1454 = vmatpush1.msra.mxu0 %v1453
  %v1455 = vand.u32 %v114, 4294901760
  %1456 = vmatprep.subr.mxu0 %v1455
  %v1457 = vand.u32 %v113, 4294901760
  %1458 = vmatpush1.msra.mxu0 %v1457
  %v1459 = vand.u32 %v116, 4294901760
  %1460 = vmatprep.subr.mxu0 %v1459
  %v1461 = vand.u32 %v115, 4294901760
  %1462 = vmatpush1.msra.mxu0 %v1461
  %v1463 = vand.u32 %v118, 4294901760
  %1464 = vmatprep.subr.mxu0 %v1463
  %v1465 = vand.u32 %v117, 4294901760
  %1466 = vmatpush1.msra.mxu0 %v1465
  %1467 = vmatprep.subr.mxu0 0.0
  %1468 = vmatpush1.msra.mxu0 0.0
  %1469 = vmatprep.subr.mxu0 0.0
  %1470 = vmatpush1.msra.mxu0 0.0
  %1471 = vmatprep.subr.mxu0 0.0
  %1472 = vmatpush1.msra.mxu0 0.0
  %1473 = vmatprep.subr.mxu0 0.0
  %1474 = vmatpush1.msra.mxu0 0.0
  %1475 = vmatprep.subr.mxu0 0.0
  %1476 = vmatpush1.msra.mxu0 0.0
  %1477 = vmatprep.subr.mxu0 0.0
  %1478 = vmatpush1.msra.mxu0 0.0
  %1479 = vmatprep.subr.mxu0 0.0
  %1480 = vmatpush1.msra.mxu0 0.0
  %1481 = vmatprep.subr.mxu0 0.0
  %1482 = vmatpush1.msra.mxu0 0.0
  %1483 = vmatprep.subr.mxu0 0.0
  %1484 = vmatpush1.msra.mxu0 0.0
  %1485 = vmatprep.subr.mxu0 0.0
  %1486 = vmatpush1.msra.mxu0 0.0
  %1487 = vmatprep.subr.mxu0 0.0
  %1488 = vmatpush1.msra.mxu0 0.0
  %1489 = vmatprep.subr.mxu0 0.0
  %1490 = vmatpush1.msra.mxu0 0.0
  %1491 = vmatprep.subr.mxu0 0.0
  %1492 = vmatpush1.msra.mxu0 0.0
  %1493 = vmatprep.subr.mxu0 0.0
  %1494 = vmatpush1.msra.mxu0 0.0
  %1495 = vmatprep.subr.mxu0 0.0
  %1496 = vmatpush1.msra.mxu0 0.0
  %1497 = vmatprep.subr.mxu0 0.0
  %1498 = vmatpush1.msra.mxu0 0.0
  %1499 = vmatprep.mubr.f32.mxu0 0.0
  %v1500 = vand.u32 %v22, 4294901760
  %v1501 = vsub.f32 %v22, %v1500
  %v1502 = vand.u32 %v1501, 4294901760
  %v1503 = vsub.f32 %v1501, %v1502
  %v1504 = vand.u32 %v1503, 4294901760
  %1505 = vmatmul.mubr.f32.gmra.mrb[0].mxu0 %v1504
  %v1506 = vpop.f32.mrb[0].mxu0
  %v1507 = vadd.f32 %v1399, %v1506
  %v1508 = vpop.f32.mrb[0].mxu0
  %v1509 = vadd.f32 %v1401, %v1508
  %1510 = vdwg.mxu0
  %v1511 = vand.u32 %v88, 4294901760
  %v1512 = vsub.f32 %v88, %v1511
  %v1513 = vand.u32 %v1512, 4294901760
  %v1514 = vsub.f32 %v1512, %v1513
  %v1515 = vand.u32 %v1514, 4294901760
  %1516 = vmatprep.subr.mxu0 %v1515
  %v1517 = vand.u32 %v87, 4294901760
  %v1518 = vsub.f32 %v87, %v1517
  %v1519 = vand.u32 %v1518, 4294901760
  %v1520 = vsub.f32 %v1518, %v1519
  %v1521 = vand.u32 %v1520, 4294901760
  %1522 = vmatpush1.msra.mxu0 %v1521
  %v1523 = vand.u32 %v90, 4294901760
  %v1524 = vsub.f32 %v90, %v1523
  %v1525 = vand.u32 %v1524, 4294901760
  %v1526 = vsub.f32 %v1524, %v1525
  %v1527 = vand.u32 %v1526, 4294901760
  %1528 = vmatprep.subr.mxu0 %v1527
  %v1529 = vand.u32 %v89, 4294901760
  %v1530 = vsub.f32 %v89, %v1529
  %v1531 = vand.u32 %v1530, 4294901760
  %v1532 = vsub.f32 %v1530, %v1531
  %v1533 = vand.u32 %v1532, 4294901760
  %1534 = vmatpush1.msra.mxu0 %v1533
  %v1535 = vand.u32 %v92, 4294901760
  %v1536 = vsub.f32 %v92, %v1535
  %v1537 = vand.u32 %v1536, 4294901760
  %v1538 = vsub.f32 %v1536, %v1537
  %v1539 = vand.u32 %v1538, 4294901760
  %1540 = vmatprep.subr.mxu0 %v1539
  %v1541 = vand.u32 %v91, 4294901760
  %v1542 = vsub.f32 %v91, %v1541
  %v1543 = vand.u32 %v1542, 4294901760
  %v1544 = vsub.f32 %v1542, %v1543
  %v1545 = vand.u32 %v1544, 4294901760
  %1546 = vmatpush1.msra.mxu0 %v1545
  %v1547 = vand.u32 %v94, 4294901760
  %v1548 = vsub.f32 %v94, %v1547
  %v1549 = vand.u32 %v1548, 4294901760
  %v1550 = vsub.f32 %v1548, %v1549
  %v1551 = vand.u32 %v1550, 4294901760
  %1552 = vmatprep.subr.mxu0 %v1551
  %v1553 = vand.u32 %v93, 4294901760
  %v1554 = vsub.f32 %v93, %v1553
  %v1555 = vand.u32 %v1554, 4294901760
  %v1556 = vsub.f32 %v1554, %v1555
  %v1557 = vand.u32 %v1556, 4294901760
  %1558 = vmatpush1.msra.mxu0 %v1557
  %v1559 = vand.u32 %v96, 4294901760
  %v1560 = vsub.f32 %v96, %v1559
  %v1561 = vand.u32 %v1560, 4294901760
  %v1562 = vsub.f32 %v1560, %v1561
  %v1563 = vand.u32 %v1562, 4294901760
  %1564 = vmatprep.subr.mxu0 %v1563
  %v1565 = vand.u32 %v95, 4294901760
  %v1566 = vsub.f32 %v95, %v1565
  %v1567 = vand.u32 %v1566, 4294901760
  %v1568 = vsub.f32 %v1566, %v1567
  %v1569 = vand.u32 %v1568, 4294901760
  %1570 = vmatpush1.msra.mxu0 %v1569
  %v1571 = vand.u32 %v98, 4294901760
  %v1572 = vsub.f32 %v98, %v1571
  %v1573 = vand.u32 %v1572, 4294901760
  %v1574 = vsub.f32 %v1572, %v1573
  %v1575 = vand.u32 %v1574, 4294901760
  %1576 = vmatprep.subr.mxu0 %v1575
  %v1577 = vand.u32 %v97, 4294901760
  %v1578 = vsub.f32 %v97, %v1577
  %v1579 = vand.u32 %v1578, 4294901760
  %v1580 = vsub.f32 %v1578, %v1579
  %v1581 = vand.u32 %v1580, 4294901760
  %1582 = vmatpush1.msra.mxu0 %v1581
  %v1583 = vand.u32 %v100, 4294901760
  %v1584 = vsub.f32 %v100, %v1583
  %v1585 = vand.u32 %v1584, 4294901760
  %v1586 = vsub.f32 %v1584, %v1585
  %v1587 = vand.u32 %v1586, 4294901760
  %1588 = vmatprep.subr.mxu0 %v1587
  %v1589 = vand.u32 %v99, 4294901760
  %v1590 = vsub.f32 %v99, %v1589
  %v1591 = vand.u32 %v1590, 4294901760
  %v1592 = vsub.f32 %v1590, %v1591
  %v1593 = vand.u32 %v1592, 4294901760
  %1594 = vmatpush1.msra.mxu0 %v1593
  %v1595 = vand.u32 %v102, 4294901760
  %v1596 = vsub.f32 %v102, %v1595
  %v1597 = vand.u32 %v1596, 4294901760
  %v1598 = vsub.f32 %v1596, %v1597
  %v1599 = vand.u32 %v1598, 4294901760
  %1600 = vmatprep.subr.mxu0 %v1599
  %v1601 = vand.u32 %v101, 4294901760
  %v1602 = vsub.f32 %v101, %v1601
  %v1603 = vand.u32 %v1602, 4294901760
  %v1604 = vsub.f32 %v1602, %v1603
  %v1605 = vand.u32 %v1604, 4294901760
  %1606 = vmatpush1.msra.mxu0 %v1605
  %v1607 = vand.u32 %v104, 4294901760
  %v1608 = vsub.f32 %v104, %v1607
  %v1609 = vand.u32 %v1608, 4294901760
  %v1610 = vsub.f32 %v1608, %v1609
  %v1611 = vand.u32 %v1610, 4294901760
  %1612 = vmatprep.subr.mxu0 %v1611
  %v1613 = vand.u32 %v103, 4294901760
  %v1614 = vsub.f32 %v103, %v1613
  %v1615 = vand.u32 %v1614, 4294901760
  %v1616 = vsub.f32 %v1614, %v1615
  %v1617 = vand.u32 %v1616, 4294901760
  %1618 = vmatpush1.msra.mxu0 %v1617
  %v1619 = vand.u32 %v106, 4294901760
  %v1620 = vsub.f32 %v106, %v1619
  %v1621 = vand.u32 %v1620, 4294901760
  %v1622 = vsub.f32 %v1620, %v1621
  %v1623 = vand.u32 %v1622, 4294901760
  %1624 = vmatprep.subr.mxu0 %v1623
  %v1625 = vand.u32 %v105, 4294901760
  %v1626 = vsub.f32 %v105, %v1625
  %v1627 = vand.u32 %v1626, 4294901760
  %v1628 = vsub.f32 %v1626, %v1627
  %v1629 = vand.u32 %v1628, 4294901760
  %1630 = vmatpush1.msra.mxu0 %v1629
  %v1631 = vand.u32 %v108, 4294901760
  %v1632 = vsub.f32 %v108, %v1631
  %v1633 = vand.u32 %v1632, 4294901760
  %v1634 = vsub.f32 %v1632, %v1633
  %v1635 = vand.u32 %v1634, 4294901760
  %1636 = vmatprep.subr.mxu0 %v1635
  %v1637 = vand.u32 %v107, 4294901760
  %v1638 = vsub.f32 %v107, %v1637
  %v1639 = vand.u32 %v1638, 4294901760
  %v1640 = vsub.f32 %v1638, %v1639
  %v1641 = vand.u32 %v1640, 4294901760
  %1642 = vmatpush1.msra.mxu0 %v1641
  %v1643 = vand.u32 %v110, 4294901760
  %v1644 = vsub.f32 %v110, %v1643
  %v1645 = vand.u32 %v1644, 4294901760
  %v1646 = vsub.f32 %v1644, %v1645
  %v1647 = vand.u32 %v1646, 4294901760
  %1648 = vmatprep.subr.mxu0 %v1647
  %v1649 = vand.u32 %v109, 4294901760
  %v1650 = vsub.f32 %v109, %v1649
  %v1651 = vand.u32 %v1650, 4294901760
  %v1652 = vsub.f32 %v1650, %v1651
  %v1653 = vand.u32 %v1652, 4294901760
  %1654 = vmatpush1.msra.mxu0 %v1653
  %v1655 = vand.u32 %v112, 4294901760
  %v1656 = vsub.f32 %v112, %v1655
  %v1657 = vand.u32 %v1656, 4294901760
  %v1658 = vsub.f32 %v1656, %v1657
  %v1659 = vand.u32 %v1658, 4294901760
  %1660 = vmatprep.subr.mxu0 %v1659
  %v1661 = vand.u32 %v111, 4294901760
  %v1662 = vsub.f32 %v111, %v1661
  %v1663 = vand.u32 %v1662, 4294901760
  %v1664 = vsub.f32 %v1662, %v1663
  %v1665 = vand.u32 %v1664, 4294901760
  %1666 = vmatpush1.msra.mxu0 %v1665
  %v1667 = vand.u32 %v114, 4294901760
  %v1668 = vsub.f32 %v114, %v1667
  %v1669 = vand.u32 %v1668, 4294901760
  %v1670 = vsub.f32 %v1668, %v1669
  %v1671 = vand.u32 %v1670, 4294901760
  %1672 = vmatprep.subr.mxu0 %v1671
  %v1673 = vand.u32 %v113, 4294901760
  %v1674 = vsub.f32 %v113, %v1673
  %v1675 = vand.u32 %v1674, 4294901760
  %v1676 = vsub.f32 %v1674, %v1675
  %v1677 = vand.u32 %v1676, 4294901760
  %1678 = vmatpush1.msra.mxu0 %v1677
  %v1679 = vand.u32 %v116, 4294901760
  %v1680 = vsub.f32 %v116, %v1679
  %v1681 = vand.u32 %v1680, 4294901760
  %v1682 = vsub.f32 %v1680, %v1681
  %v1683 = vand.u32 %v1682, 4294901760
  %1684 = vmatprep.subr.mxu0 %v1683
  %v1685 = vand.u32 %v115, 4294901760
  %v1686 = vsub.f32 %v115, %v1685
  %v1687 = vand.u32 %v1686, 4294901760
  %v1688 = vsub.f32 %v1686, %v1687
  %v1689 = vand.u32 %v1688, 4294901760
  %1690 = vmatpush1.msra.mxu0 %v1689
  %v1691 = vand.u32 %v118, 4294901760
  %v1692 = vsub.f32 %v118, %v1691
  %v1693 = vand.u32 %v1692, 4294901760
  %v1694 = vsub.f32 %v1692, %v1693
  %v1695 = vand.u32 %v1694, 4294901760
  %1696 = vmatprep.subr.mxu0 %v1695
  %v1697 = vand.u32 %v117, 4294901760
  %v1698 = vsub.f32 %v117, %v1697
  %v1699 = vand.u32 %v1698, 4294901760
  %v1700 = vsub.f32 %v1698, %v1699
  %v1701 = vand.u32 %v1700, 4294901760
  %1702 = vmatpush1.msra.mxu0 %v1701
  %1703 = vmatprep.subr.mxu0 0.0
  %1704 = vmatpush1.msra.mxu0 0.0
  %1705 = vmatprep.subr.mxu0 0.0
  %1706 = vmatpush1.msra.mxu0 0.0
  %1707 = vmatprep.subr.mxu0 0.0
  %1708 = vmatpush1.msra.mxu0 0.0
  %1709 = vmatprep.subr.mxu0 0.0
  %1710 = vmatpush1.msra.mxu0 0.0
  %1711 = vmatprep.subr.mxu0 0.0
  %1712 = vmatpush1.msra.mxu0 0.0
  %1713 = vmatprep.subr.mxu0 0.0
  %1714 = vmatpush1.msra.mxu0 0.0
  %1715 = vmatprep.subr.mxu0 0.0
  %1716 = vmatpush1.msra.mxu0 0.0
  %1717 = vmatprep.subr.mxu0 0.0
  %1718 = vmatpush1.msra.mxu0 0.0
  %1719 = vmatprep.subr.mxu0 0.0
  %1720 = vmatpush1.msra.mxu0 0.0
  %1721 = vmatprep.subr.mxu0 0.0
  %1722 = vmatpush1.msra.mxu0 0.0
  %1723 = vmatprep.subr.mxu0 0.0
  %1724 = vmatpush1.msra.mxu0 0.0
  %1725 = vmatprep.subr.mxu0 0.0
  %1726 = vmatpush1.msra.mxu0 0.0
  %1727 = vmatprep.subr.mxu0 0.0
  %1728 = vmatpush1.msra.mxu0 0.0
  %1729 = vmatprep.subr.mxu0 0.0
  %1730 = vmatpush1.msra.mxu0 0.0
  %1731 = vmatprep.subr.mxu0 0.0
  %1732 = vmatpush1.msra.mxu0 0.0
  %1733 = vmatprep.subr.mxu0 0.0
  %1734 = vmatpush1.msra.mxu0 0.0
  %1735 = vmatprep.mubr.f32.mxu0 0.0
  %v1736 = vand.u32 %v22, 4294901760
  %1737 = vmatmul.mubr.f32.gmra.mrb[0].mxu0 %v1736
  %v1738 = vpop.f32.mrb[0].mxu0
  %v1739 = vadd.f32 %v1507, %v1738
  %v1740 = vpop.f32.mrb[0].mxu0
  %v1741 = vadd.f32 %v1509, %v1740
  %1742 = vdwg.mxu0
  %v1743 = vand.u32 %v88, 4294901760
  %v1744 = vsub.f32 %v88, %v1743
  %1745 = vmatprep.subr.mxu0 %v1744
  %v1746 = vand.u32 %v87, 4294901760
  %v1747 = vsub.f32 %v87, %v1746
  %1748 = vmatpush1.msra.mxu0 %v1747
  %v1749 = vand.u32 %v90, 4294901760
  %v1750 = vsub.f32 %v90, %v1749
  %1751 = vmatprep.subr.mxu0 %v1750
  %v1752 = vand.u32 %v89, 4294901760
  %v1753 = vsub.f32 %v89, %v1752
  %1754 = vmatpush1.msra.mxu0 %v1753
  %v1755 = vand.u32 %v92, 4294901760
  %v1756 = vsub.f32 %v92, %v1755
  %1757 = vmatprep.subr.mxu0 %v1756
  %v1758 = vand.u32 %v91, 4294901760
  %v1759 = vsub.f32 %v91, %v1758
  %1760 = vmatpush1.msra.mxu0 %v1759
  %v1761 = vand.u32 %v94, 4294901760
  %v1762 = vsub.f32 %v94, %v1761
  %1763 = vmatprep.subr.mxu0 %v1762
  %v1764 = vand.u32 %v93, 4294901760
  %v1765 = vsub.f32 %v93, %v1764
  %1766 = vmatpush1.msra.mxu0 %v1765
  %v1767 = vand.u32 %v96, 4294901760
  %v1768 = vsub.f32 %v96, %v1767
  %1769 = vmatprep.subr.mxu0 %v1768
  %v1770 = vand.u32 %v95, 4294901760
  %v1771 = vsub.f32 %v95, %v1770
  %1772 = vmatpush1.msra.mxu0 %v1771
  %v1773 = vand.u32 %v98, 4294901760
  %v1774 = vsub.f32 %v98, %v1773
  %1775 = vmatprep.subr.mxu0 %v1774
  %v1776 = vand.u32 %v97, 4294901760
  %v1777 = vsub.f32 %v97, %v1776
  %1778 = vmatpush1.msra.mxu0 %v1777
  %v1779 = vand.u32 %v100, 4294901760
  %v1780 = vsub.f32 %v100, %v1779
  %1781 = vmatprep.subr.mxu0 %v1780
  %v1782 = vand.u32 %v99, 4294901760
  %v1783 = vsub.f32 %v99, %v1782
  %1784 = vmatpush1.msra.mxu0 %v1783
  %v1785 = vand.u32 %v102, 4294901760
  %v1786 = vsub.f32 %v102, %v1785
  %1787 = vmatprep.subr.mxu0 %v1786
  %v1788 = vand.u32 %v101, 4294901760
  %v1789 = vsub.f32 %v101, %v1788
  %1790 = vmatpush1.msra.mxu0 %v1789
  %v1791 = vand.u32 %v104, 4294901760
  %v1792 = vsub.f32 %v104, %v1791
  %1793 = vmatprep.subr.mxu0 %v1792
  %v1794 = vand.u32 %v103, 4294901760
  %v1795 = vsub.f32 %v103, %v1794
  %1796 = vmatpush1.msra.mxu0 %v1795
  %v1797 = vand.u32 %v106, 4294901760
  %v1798 = vsub.f32 %v106, %v1797
  %1799 = vmatprep.subr.mxu0 %v1798
  %v1800 = vand.u32 %v105, 4294901760
  %v1801 = vsub.f32 %v105, %v1800
  %1802 = vmatpush1.msra.mxu0 %v1801
  %v1803 = vand.u32 %v108, 4294901760
  %v1804 = vsub.f32 %v108, %v1803
  %1805 = vmatprep.subr.mxu0 %v1804
  %v1806 = vand.u32 %v107, 4294901760
  %v1807 = vsub.f32 %v107, %v1806
  %1808 = vmatpush1.msra.mxu0 %v1807
  %v1809 = vand.u32 %v110, 4294901760
  %v1810 = vsub.f32 %v110, %v1809
  %1811 = vmatprep.subr.mxu0 %v1810
  %v1812 = vand.u32 %v109, 4294901760
  %v1813 = vsub.f32 %v109, %v1812
  %1814 = vmatpush1.msra.mxu0 %v1813
  %v1815 = vand.u32 %v112, 4294901760
  %v1816 = vsub.f32 %v112, %v1815
  %1817 = vmatprep.subr.mxu0 %v1816
  %v1818 = vand.u32 %v111, 4294901760
  %v1819 = vsub.f32 %v111, %v1818
  %1820 = vmatpush1.msra.mxu0 %v1819
  %v1821 = vand.u32 %v114, 4294901760
  %v1822 = vsub.f32 %v114, %v1821
  %1823 = vmatprep.subr.mxu0 %v1822
  %v1824 = vand.u32 %v113, 4294901760
  %v1825 = vsub.f32 %v113, %v1824
  %1826 = vmatpush1.msra.mxu0 %v1825
  %v1827 = vand.u32 %v116, 4294901760
  %v1828 = vsub.f32 %v116, %v1827
  %1829 = vmatprep.subr.mxu0 %v1828
  %v1830 = vand.u32 %v115, 4294901760
  %v1831 = vsub.f32 %v115, %v1830
  %1832 = vmatpush1.msra.mxu0 %v1831
  %v1833 = vand.u32 %v118, 4294901760
  %v1834 = vsub.f32 %v118, %v1833
  %1835 = vmatprep.subr.mxu0 %v1834
  %v1836 = vand.u32 %v117, 4294901760
  %v1837 = vsub.f32 %v117, %v1836
  %1838 = vmatpush1.msra.mxu0 %v1837
  %1839 = vmatprep.subr.mxu0 0.0
  %1840 = vmatpush1.msra.mxu0 0.0
  %1841 = vmatprep.subr.mxu0 0.0
  %1842 = vmatpush1.msra.mxu0 0.0
  %1843 = vmatprep.subr.mxu0 0.0
  %1844 = vmatpush1.msra.mxu0 0.0
  %1845 = vmatprep.subr.mxu0 0.0
  %1846 = vmatpush1.msra.mxu0 0.0
  %1847 = vmatprep.subr.mxu0 0.0
  %1848 = vmatpush1.msra.mxu0 0.0
  %1849 = vmatprep.subr.mxu0 0.0
  %1850 = vmatpush1.msra.mxu0 0.0
  %1851 = vmatprep.subr.mxu0 0.0
  %1852 = vmatpush1.msra.mxu0 0.0
  %1853 = vmatprep.subr.mxu0 0.0
  %1854 = vmatpush1.msra.mxu0 0.0
  %1855 = vmatprep.subr.mxu0 0.0
  %1856 = vmatpush1.msra.mxu0 0.0
  %1857 = vmatprep.subr.mxu0 0.0
  %1858 = vmatpush1.msra.mxu0 0.0
  %1859 = vmatprep.subr.mxu0 0.0
  %1860 = vmatpush1.msra.mxu0 0.0
  %1861 = vmatprep.subr.mxu0 0.0
  %1862 = vmatpush1.msra.mxu0 0.0
  %1863 = vmatprep.subr.mxu0 0.0
  %1864 = vmatpush1.msra.mxu0 0.0
  %1865 = vmatprep.subr.mxu0 0.0
  %1866 = vmatpush1.msra.mxu0 0.0
  %1867 = vmatprep.subr.mxu0 0.0
  %1868 = vmatpush1.msra.mxu0 0.0
  %1869 = vmatprep.subr.mxu0 0.0
  %1870 = vmatpush1.msra.mxu0 0.0
  %1871 = vmatprep.mubr.f32.mxu0 0.0
  %v1872 = vand.u32 %v22, 4294901760
  %v1873 = vsub.f32 %v22, %v1872
  %1874 = vmatmul.mubr.f32.gmra.mrb[0].mxu0 %v1873
  %v1875 = vpop.f32.mrb[0].mxu0
  %v1876 = vadd.f32 %v1739, %v1875
  %v1877 = vpop.f32.mrb[0].mxu0
  %v1878 = vadd.f32 %v1741, %v1877
  %1879 = vdwg.mxu0
  %v1880 = vand.u32 %v88, 4294901760
  %1881 = vmatprep.subr.mxu0 %v1880
  %v1882 = vand.u32 %v87, 4294901760
  %1883 = vmatpush1.msra.mxu0 %v1882
  %v1884 = vand.u32 %v90, 4294901760
  %1885 = vmatprep.subr.mxu0 %v1884
  %v1886 = vand.u32 %v89, 4294901760
  %1887 = vmatpush1.msra.mxu0 %v1886
  %v1888 = vand.u32 %v92, 4294901760
  %1889 = vmatprep.subr.mxu0 %v1888
  %v1890 = vand.u32 %v91, 4294901760
  %1891 = vmatpush1.msra.mxu0 %v1890
  %v1892 = vand.u32 %v94, 4294901760
  %1893 = vmatprep.subr.mxu0 %v1892
  %v1894 = vand.u32 %v93, 4294901760
  %1895 = vmatpush1.msra.mxu0 %v1894
  %v1896 = vand.u32 %v96, 4294901760
  %1897 = vmatprep.subr.mxu0 %v1896
  %v1898 = vand.u32 %v95, 4294901760
  %1899 = vmatpush1.msra.mxu0 %v1898
  %v1900 = vand.u32 %v98, 4294901760
  %1901 = vmatprep.subr.mxu0 %v1900
  %v1902 = vand.u32 %v97, 4294901760
  %1903 = vmatpush1.msra.mxu0 %v1902
  %v1904 = vand.u32 %v100, 4294901760
  %1905 = vmatprep.subr.mxu0 %v1904
  %v1906 = vand.u32 %v99, 4294901760
  %1907 = vmatpush1.msra.mxu0 %v1906
  %v1908 = vand.u32 %v102, 4294901760
  %1909 = vmatprep.subr.mxu0 %v1908
  %v1910 = vand.u32 %v101, 4294901760
  %1911 = vmatpush1.msra.mxu0 %v1910
  %v1912 = vand.u32 %v104, 4294901760
  %1913 = vmatprep.subr.mxu0 %v1912
  %v1914 = vand.u32 %v103, 4294901760
  %1915 = vmatpush1.msra.mxu0 %v1914
  %v1916 = vand.u32 %v106, 4294901760
  %1917 = vmatprep.subr.mxu0 %v1916
  %v1918 = vand.u32 %v105, 4294901760
  %1919 = vmatpush1.msra.mxu0 %v1918
  %v1920 = vand.u32 %v108, 4294901760
  %1921 = vmatprep.subr.mxu0 %v1920
  %v1922 = vand.u32 %v107, 4294901760
  %1923 = vmatpush1.msra.mxu0 %v1922
  %v1924 = vand.u32 %v110, 4294901760
  %1925 = vmatprep.subr.mxu0 %v1924
  %v1926 = vand.u32 %v109, 4294901760
  %1927 = vmatpush1.msra.mxu0 %v1926
  %v1928 = vand.u32 %v112, 4294901760
  %1929 = vmatprep.subr.mxu0 %v1928
  %v1930 = vand.u32 %v111, 4294901760
  %1931 = vmatpush1.msra.mxu0 %v1930
  %v1932 = vand.u32 %v114, 4294901760
  %1933 = vmatprep.subr.mxu0 %v1932
  %v1934 = vand.u32 %v113, 4294901760
  %1935 = vmatpush1.msra.mxu0 %v1934
  %v1936 = vand.u32 %v116, 4294901760
  %1937 = vmatprep.subr.mxu0 %v1936
  %v1938 = vand.u32 %v115, 4294901760
  %1939 = vmatpush1.msra.mxu0 %v1938
  %v1940 = vand.u32 %v118, 4294901760
  %1941 = vmatprep.subr.mxu0 %v1940
  %v1942 = vand.u32 %v117, 4294901760
  %1943 = vmatpush1.msra.mxu0 %v1942
  %1944 = vmatprep.subr.mxu0 0.0
  %1945 = vmatpush1.msra.mxu0 0.0
  %1946 = vmatprep.subr.mxu0 0.0
  %1947 = vmatpush1.msra.mxu0 0.0
  %1948 = vmatprep.subr.mxu0 0.0
  %1949 = vmatpush1.msra.mxu0 0.0
  %1950 = vmatprep.subr.mxu0 0.0
  %1951 = vmatpush1.msra.mxu0 0.0
  %1952 = vmatprep.subr.mxu0 0.0
  %1953 = vmatpush1.msra.mxu0 0.0
  %1954 = vmatprep.subr.mxu0 0.0
  %1955 = vmatpush1.msra.mxu0 0.0
  %1956 = vmatprep.subr.mxu0 0.0
  %1957 = vmatpush1.msra.mxu0 0.0
  %1958 = vmatprep.subr.mxu0 0.0
  %1959 = vmatpush1.msra.mxu0 0.0
  %1960 = vmatprep.subr.mxu0 0.0
  %1961 = vmatpush1.msra.mxu0 0.0
  %1962 = vmatprep.subr.mxu0 0.0
  %1963 = vmatpush1.msra.mxu0 0.0
  %1964 = vmatprep.subr.mxu0 0.0
  %1965 = vmatpush1.msra.mxu0 0.0
  %1966 = vmatprep.subr.mxu0 0.0
  %1967 = vmatpush1.msra.mxu0 0.0
  %1968 = vmatprep.subr.mxu0 0.0
  %1969 = vmatpush1.msra.mxu0 0.0
  %1970 = vmatprep.subr.mxu0 0.0
  %1971 = vmatpush1.msra.mxu0 0.0
  %1972 = vmatprep.subr.mxu0 0.0
  %1973 = vmatpush1.msra.mxu0 0.0
  %1974 = vmatprep.subr.mxu0 0.0
  %1975 = vmatpush1.msra.mxu0 0.0
  %1976 = vmatprep.mubr.f32.mxu0 0.0
  %v1977 = vand.u32 %v22, 4294901760
  %v1978 = vsub.f32 %v22, %v1977
  %v1979 = vand.u32 %v1978, 4294901760
  %1980 = vmatmul.mubr.f32.gmra.mrb[0].mxu0 %v1979
  %v1981 = vpop.f32.mrb[0].mxu0
  %v1982 = vadd.f32 %v1876, %v1981
  %v1983 = vpop.f32.mrb[0].mxu0
  %v1984 = vadd.f32 %v1878, %v1983
  %1985 = vdwg.mxu0
  %v1986 = vand.u32 %v88, 4294901760
  %v1987 = vsub.f32 %v88, %v1986
  %v1988 = vand.u32 %v1987, 4294901760
  %1989 = vmatprep.subr.mxu0 %v1988
  %v1990 = vand.u32 %v87, 4294901760
  %v1991 = vsub.f32 %v87, %v1990
  %v1992 = vand.u32 %v1991, 4294901760
  %1993 = vmatpush1.msra.mxu0 %v1992
  %v1994 = vand.u32 %v90, 4294901760
  %v1995 = vsub.f32 %v90, %v1994
  %v1996 = vand.u32 %v1995, 4294901760
  %1997 = vmatprep.subr.mxu0 %v1996
  %v1998 = vand.u32 %v89, 4294901760
  %v1999 = vsub.f32 %v89, %v1998
  %v2000 = vand.u32 %v1999, 4294901760
  %2001 = vmatpush1.msra.mxu0 %v2000
  %v2002 = vand.u32 %v92, 4294901760
  %v2003 = vsub.f32 %v92, %v2002
  %v2004 = vand.u32 %v2003, 4294901760
  %2005 = vmatprep.subr.mxu0 %v2004
  %v2006 = vand.u32 %v91, 4294901760
  %v2007 = vsub.f32 %v91, %v2006
  %v2008 = vand.u32 %v2007, 4294901760
  %2009 = vmatpush1.msra.mxu0 %v2008
  %v2010 = vand.u32 %v94, 4294901760
  %v2011 = vsub.f32 %v94, %v2010
  %v2012 = vand.u32 %v2011, 4294901760
  %2013 = vmatprep.subr.mxu0 %v2012
  %v2014 = vand.u32 %v93, 4294901760
  %v2015 = vsub.f32 %v93, %v2014
  %v2016 = vand.u32 %v2015, 4294901760
  %2017 = vmatpush1.msra.mxu0 %v2016
  %v2018 = vand.u32 %v96, 4294901760
  %v2019 = vsub.f32 %v96, %v2018
  %v2020 = vand.u32 %v2019, 4294901760
  %2021 = vmatprep.subr.mxu0 %v2020
  %v2022 = vand.u32 %v95, 4294901760
  %v2023 = vsub.f32 %v95, %v2022
  %v2024 = vand.u32 %v2023, 4294901760
  %2025 = vmatpush1.msra.mxu0 %v2024
  %v2026 = vand.u32 %v98, 4294901760
  %v2027 = vsub.f32 %v98, %v2026
  %v2028 = vand.u32 %v2027, 4294901760
  %2029 = vmatprep.subr.mxu0 %v2028
  %v2030 = vand.u32 %v97, 4294901760
  %v2031 = vsub.f32 %v97, %v2030
  %v2032 = vand.u32 %v2031, 4294901760
  %2033 = vmatpush1.msra.mxu0 %v2032
  %v2034 = vand.u32 %v100, 4294901760
  %v2035 = vsub.f32 %v100, %v2034
  %v2036 = vand.u32 %v2035, 4294901760
  %2037 = vmatprep.subr.mxu0 %v2036
  %v2038 = vand.u32 %v99, 4294901760
  %v2039 = vsub.f32 %v99, %v2038
  %v2040 = vand.u32 %v2039, 4294901760
  %2041 = vmatpush1.msra.mxu0 %v2040
  %v2042 = vand.u32 %v102, 4294901760
  %v2043 = vsub.f32 %v102, %v2042
  %v2044 = vand.u32 %v2043, 4294901760
  %2045 = vmatprep.subr.mxu0 %v2044
  %v2046 = vand.u32 %v101, 4294901760
  %v2047 = vsub.f32 %v101, %v2046
  %v2048 = vand.u32 %v2047, 4294901760
  %2049 = vmatpush1.msra.mxu0 %v2048
  %v2050 = vand.u32 %v104, 4294901760
  %v2051 = vsub.f32 %v104, %v2050
  %v2052 = vand.u32 %v2051, 4294901760
  %2053 = vmatprep.subr.mxu0 %v2052
  %v2054 = vand.u32 %v103, 4294901760
  %v2055 = vsub.f32 %v103, %v2054
  %v2056 = vand.u32 %v2055, 4294901760
  %2057 = vmatpush1.msra.mxu0 %v2056
  %v2058 = vand.u32 %v106, 4294901760
  %v2059 = vsub.f32 %v106, %v2058
  %v2060 = vand.u32 %v2059, 4294901760
  %2061 = vmatprep.subr.mxu0 %v2060
  %v2062 = vand.u32 %v105, 4294901760
  %v2063 = vsub.f32 %v105, %v2062
  %v2064 = vand.u32 %v2063, 4294901760
  %2065 = vmatpush1.msra.mxu0 %v2064
  %v2066 = vand.u32 %v108, 4294901760
  %v2067 = vsub.f32 %v108, %v2066
  %v2068 = vand.u32 %v2067, 4294901760
  %2069 = vmatprep.subr.mxu0 %v2068
  %v2070 = vand.u32 %v107, 4294901760
  %v2071 = vsub.f32 %v107, %v2070
  %v2072 = vand.u32 %v2071, 4294901760
  %2073 = vmatpush1.msra.mxu0 %v2072
  %v2074 = vand.u32 %v110, 4294901760
  %v2075 = vsub.f32 %v110, %v2074
  %v2076 = vand.u32 %v2075, 4294901760
  %2077 = vmatprep.subr.mxu0 %v2076
  %v2078 = vand.u32 %v109, 4294901760
  %v2079 = vsub.f32 %v109, %v2078
  %v2080 = vand.u32 %v2079, 4294901760
  %2081 = vmatpush1.msra.mxu0 %v2080
  %v2082 = vand.u32 %v112, 4294901760
  %v2083 = vsub.f32 %v112, %v2082
  %v2084 = vand.u32 %v2083, 4294901760
  %2085 = vmatprep.subr.mxu0 %v2084
  %v2086 = vand.u32 %v111, 4294901760
  %v2087 = vsub.f32 %v111, %v2086
  %v2088 = vand.u32 %v2087, 4294901760
  %2089 = vmatpush1.msra.mxu0 %v2088
  %v2090 = vand.u32 %v114, 4294901760
  %v2091 = vsub.f32 %v114, %v2090
  %v2092 = vand.u32 %v2091, 4294901760
  %2093 = vmatprep.subr.mxu0 %v2092
  %v2094 = vand.u32 %v113, 4294901760
  %v2095 = vsub.f32 %v113, %v2094
  %v2096 = vand.u32 %v2095, 4294901760
  %2097 = vmatpush1.msra.mxu0 %v2096
  %v2098 = vand.u32 %v116, 4294901760
  %v2099 = vsub.f32 %v116, %v2098
  %v2100 = vand.u32 %v2099, 4294901760
  %2101 = vmatprep.subr.mxu0 %v2100
  %v2102 = vand.u32 %v115, 4294901760
  %v2103 = vsub.f32 %v115, %v2102
  %v2104 = vand.u32 %v2103, 4294901760
  %2105 = vmatpush1.msra.mxu0 %v2104
  %v2106 = vand.u32 %v118, 4294901760
  %v2107 = vsub.f32 %v118, %v2106
  %v2108 = vand.u32 %v2107, 4294901760
  %2109 = vmatprep.subr.mxu0 %v2108
  %v2110 = vand.u32 %v117, 4294901760
  %v2111 = vsub.f32 %v117, %v2110
  %v2112 = vand.u32 %v2111, 4294901760
  %2113 = vmatpush1.msra.mxu0 %v2112
  %2114 = vmatprep.subr.mxu0 0.0
  %2115 = vmatpush1.msra.mxu0 0.0
  %2116 = vmatprep.subr.mxu0 0.0
  %2117 = vmatpush1.msra.mxu0 0.0
  %2118 = vmatprep.subr.mxu0 0.0
  %2119 = vmatpush1.msra.mxu0 0.0
  %2120 = vmatprep.subr.mxu0 0.0
  %2121 = vmatpush1.msra.mxu0 0.0
  %2122 = vmatprep.subr.mxu0 0.0
  %2123 = vmatpush1.msra.mxu0 0.0
  %2124 = vmatprep.subr.mxu0 0.0
  %2125 = vmatpush1.msra.mxu0 0.0
  %2126 = vmatprep.subr.mxu0 0.0
  %2127 = vmatpush1.msra.mxu0 0.0
  %2128 = vmatprep.subr.mxu0 0.0
  %2129 = vmatpush1.msra.mxu0 0.0
  %2130 = vmatprep.subr.mxu0 0.0
  %2131 = vmatpush1.msra.mxu0 0.0
  %2132 = vmatprep.subr.mxu0 0.0
  %2133 = vmatpush1.msra.mxu0 0.0
  %2134 = vmatprep.subr.mxu0 0.0
  %2135 = vmatpush1.msra.mxu0 0.0
  %2136 = vmatprep.subr.mxu0 0.0
  %2137 = vmatpush1.msra.mxu0 0.0
  %2138 = vmatprep.subr.mxu0 0.0
  %2139 = vmatpush1.msra.mxu0 0.0
  %2140 = vmatprep.subr.mxu0 0.0
  %2141 = vmatpush1.msra.mxu0 0.0
  %2142 = vmatprep.subr.mxu0 0.0
  %2143 = vmatpush1.msra.mxu0 0.0
  %2144 = vmatprep.subr.mxu0 0.0
  %2145 = vmatpush1.msra.mxu0 0.0
  %2146 = vmatprep.mubr.f32.mxu0 0.0
  %v2147 = vand.u32 %v22, 4294901760
  %2148 = vmatmul.mubr.f32.gmra.mrb[0].mxu0 %v2147
  %v2149 = vpop.f32.mrb[0].mxu0
  %v2150 = vadd.f32 %v1982, %v2149
  %v2151 = vpop.f32.mrb[0].mxu0
  %v2152 = vadd.f32 %v1984, %v2151
  %2153 = vdwg.mxu0
  %v2154 = vand.u32 %v88, 4294901760
  %2155 = vmatprep.subr.mxu0 %v2154
  %v2156 = vand.u32 %v87, 4294901760
  %2157 = vmatpush1.msra.mxu0 %v2156
  %v2158 = vand.u32 %v90, 4294901760
  %2159 = vmatprep.subr.mxu0 %v2158
  %v2160 = vand.u32 %v89, 4294901760
  %2161 = vmatpush1.msra.mxu0 %v2160
  %v2162 = vand.u32 %v92, 4294901760
  %2163 = vmatprep.subr.mxu0 %v2162
  %v2164 = vand.u32 %v91, 4294901760
  %2165 = vmatpush1.msra.mxu0 %v2164
  %v2166 = vand.u32 %v94, 4294901760
  %2167 = vmatprep.subr.mxu0 %v2166
  %v2168 = vand.u32 %v93, 4294901760
  %2169 = vmatpush1.msra.mxu0 %v2168
  %v2170 = vand.u32 %v96, 4294901760
  %2171 = vmatprep.subr.mxu0 %v2170
  %v2172 = vand.u32 %v95, 4294901760
  %2173 = vmatpush1.msra.mxu0 %v2172
  %v2174 = vand.u32 %v98, 4294901760
  %2175 = vmatprep.subr.mxu0 %v2174
  %v2176 = vand.u32 %v97, 4294901760
  %2177 = vmatpush1.msra.mxu0 %v2176
  %v2178 = vand.u32 %v100, 4294901760
  %2179 = vmatprep.subr.mxu0 %v2178
  %v2180 = vand.u32 %v99, 4294901760
  %2181 = vmatpush1.msra.mxu0 %v2180
  %v2182 = vand.u32 %v102, 4294901760
  %2183 = vmatprep.subr.mxu0 %v2182
  %v2184 = vand.u32 %v101, 4294901760
  %2185 = vmatpush1.msra.mxu0 %v2184
  %v2186 = vand.u32 %v104, 4294901760
  %2187 = vmatprep.subr.mxu0 %v2186
  %v2188 = vand.u32 %v103, 4294901760
  %2189 = vmatpush1.msra.mxu0 %v2188
  %v2190 = vand.u32 %v106, 4294901760
  %2191 = vmatprep.subr.mxu0 %v2190
  %v2192 = vand.u32 %v105, 4294901760
  %2193 = vmatpush1.msra.mxu0 %v2192
  %v2194 = vand.u32 %v108, 4294901760
  %2195 = vmatprep.subr.mxu0 %v2194
  %v2196 = vand.u32 %v107, 4294901760
  %2197 = vmatpush1.msra.mxu0 %v2196
  %v2198 = vand.u32 %v110, 4294901760
  %2199 = vmatprep.subr.mxu0 %v2198
  %v2200 = vand.u32 %v109, 4294901760
  %2201 = vmatpush1.msra.mxu0 %v2200
  %v2202 = vand.u32 %v112, 4294901760
  %2203 = vmatprep.subr.mxu0 %v2202
  %v2204 = vand.u32 %v111, 4294901760
  %2205 = vmatpush1.msra.mxu0 %v2204
  %v2206 = vand.u32 %v114, 4294901760
  %2207 = vmatprep.subr.mxu0 %v2206
  %v2208 = vand.u32 %v113, 4294901760
  %2209 = vmatpush1.msra.mxu0 %v2208
  %v2210 = vand.u32 %v116, 4294901760
  %2211 = vmatprep.subr.mxu0 %v2210
  %v2212 = vand.u32 %v115, 4294901760
  %2213 = vmatpush1.msra.mxu0 %v2212
  %v2214 = vand.u32 %v118, 4294901760
  %2215 = vmatprep.subr.mxu0 %v2214
  %v2216 = vand.u32 %v117, 4294901760
  %2217 = vmatpush1.msra.mxu0 %v2216
  %2218 = vmatprep.subr.mxu0 0.0
  %2219 = vmatpush1.msra.mxu0 0.0
  %2220 = vmatprep.subr.mxu0 0.0
  %2221 = vmatpush1.msra.mxu0 0.0
  %2222 = vmatprep.subr.mxu0 0.0
  %2223 = vmatpush1.msra.mxu0 0.0
  %2224 = vmatprep.subr.mxu0 0.0
  %2225 = vmatpush1.msra.mxu0 0.0
  %2226 = vmatprep.subr.mxu0 0.0
  %2227 = vmatpush1.msra.mxu0 0.0
  %2228 = vmatprep.subr.mxu0 0.0
  %2229 = vmatpush1.msra.mxu0 0.0
  %2230 = vmatprep.subr.mxu0 0.0
  %2231 = vmatpush1.msra.mxu0 0.0
  %2232 = vmatprep.subr.mxu0 0.0
  %2233 = vmatpush1.msra.mxu0 0.0
  %2234 = vmatprep.subr.mxu0 0.0
  %2235 = vmatpush1.msra.mxu0 0.0
  %2236 = vmatprep.subr.mxu0 0.0
  %2237 = vmatpush1.msra.mxu0 0.0
  %2238 = vmatprep.subr.mxu0 0.0
  %2239 = vmatpush1.msra.mxu0 0.0
  %2240 = vmatprep.subr.mxu0 0.0
  %2241 = vmatpush1.msra.mxu0 0.0
  %2242 = vmatprep.subr.mxu0 0.0
  %2243 = vmatpush1.msra.mxu0 0.0
  %2244 = vmatprep.subr.mxu0 0.0
  %2245 = vmatpush1.msra.mxu0 0.0
  %2246 = vmatprep.subr.mxu0 0.0
  %2247 = vmatpush1.msra.mxu0 0.0
  %2248 = vmatprep.subr.mxu0 0.0
  %2249 = vmatpush1.msra.mxu0 0.0
  %2250 = vmatprep.mubr.f32.mxu0 0.0
  %v2251 = vand.u32 %v22, 4294901760
  %2252 = vmatmul.mubr.f32.gmra.mrb[0].mxu0 %v2251
  %v2253 = vpop.f32.mrb[0].mxu0
  %v2254 = vadd.f32 %v2150, %v2253
  %v2255 = vpop.f32.mrb[0].mxu0
  %v2256 = vadd.f32 %v2152, %v2255
  %2257 = vdwg.mxu0
  %v2258 = vld [vmem:[%s2] sm:$0x1]
  %v2259 = vlaneseq
  %v2260 = vshrl.u32 %v2259, 7
  %v2261 = vsub.s32 0, %v2260
  %v2262 = vrot.slane %v2258, %v2261
  %v2263 = vadd.f32 %v2254, %v2262
  %v2264 = vld [vmem:[%s2 + $0x3] sm:$0x1]
  %v2265 = vlaneseq
  %v2266 = vshrl.u32 %v2265, 7
  %v2267 = vsub.s32 0, %v2266
  %v2268 = vrot.slane %v2264, %v2267
  %v2269 = vadd.f32 %v2256, %v2268
  %v2270 = vld [vmem:[%s4] sm:$0x1]
  %v2271 = vmul.f32 %v2270, 0.5
  %v2272 = vld [vmem:[%s4 + $0x1] sm:$0x1]
  %v2273 = vmul.f32 %v2272, 0.5
  %v2274 = vmul.f32 %v2271, %v2271
  %v2275 = vsub.f32 %v2273, %v2274
  %v2276 = vmax.f32 %v2275, 0.0
  %v2277 = vld [vmem:[%s2 + $0x1] sm:$0x1]
  %v2278 = vadd.f32 %v2276, 1e-05
  %v2279 = vrsqrt.pop %v2278
  %v2280 = vmul.f32 %v2277, %v2279
  %v2281 = vld [vmem:[%s2 + $0x2] sm:$0x1]
  %v2282 = vmul.f32 %v2271, %v2280
  %v2283 = vsub.f32 %v2281, %v2282
  %v2284 = vlaneseq
  %v2285 = vshrl.u32 %v2284, 7
  %v2286 = vsub.s32 0, %v2285
  %v2287 = vrot.slane %v2280, %v2286
  %v2288 = vmul.f32 %v2263, %v2287
  %v2289 = vlaneseq
  %v2290 = vshrl.u32 %v2289, 7
  %v2291 = vsub.s32 0, %v2290
  %v2292 = vrot.slane %v2283, %v2291
  %v2293 = vadd.f32 %v2288, %v2292
  %v2294 = vmax.f32 %v2293, 0.0
  %v2295 = vld [vmem:[%s4 + $0x2] sm:$0x1]
  %vm2296 = vcmask 32768
  %v2297 = vsel %vm2296, %v2295, 0.0
  %2298 = vadd.xlane.f32.xlu0 %v2297
  %v2299 = vpop.xlane.xlu0 %2298
  %v2300 = vld [vmem:[%s4 + $0x3] sm:$0x1]
  %v2301 = vsel %vm2296, %v2300, 0.0
  %2302 = vadd.xlane.f32.xlu0 %v2301
  %v2303 = vpop.xlane.xlu0 %2302
  %v2304 = vmul.f32 %v2299, 0.1
  %v2305 = vmul.f32 %v2303, 0.1
  %v2306 = vmul.f32 %v2304, %v2304
  %v2307 = vsub.f32 %v2305, %v2306
  %v2308 = vmax.f32 %v2307, 0.0
  %v2309 = vld [vmem:[%s2 + $0x4] sm:$0x1]
  %v2310 = vadd.f32 %v2308, 1e-05
  %v2311 = vrsqrt.pop %v2310
  %v2312 = vmul.f32 %v2309, %v2311
  %v2313 = vld [vmem:[%s2 + $0x5] sm:$0x1]
  %v2314 = vmul.f32 %v2304, %v2312
  %v2315 = vsub.f32 %v2313, %v2314
  %v2316 = vlaneseq
  %v2317 = vshrl.u32 %v2316, 7
  %v2318 = vsub.s32 0, %v2317
  %v2319 = vrot.slane %v2312, %v2318
  %v2320 = vmul.f32 %v2269, %v2319
  %v2321 = vlaneseq
  %v2322 = vshrl.u32 %v2321, 7
  %v2323 = vsub.s32 0, %v2322
  %v2324 = vrot.slane %v2315, %v2323
  %v2325 = vadd.f32 %v2320, %v2324
  %v2326 = vmax.f32 %v2325, 0.0
  %v2327 = vlaneseq
  %v2328 = vand.u32 %v2327, 127
  %v2329 = vadd.s32 %v2328, 128
  %v2330 = vadd.s32 %v2328, 256
  %v2331 = vlaneseq
  %v2332 = vshrl.u32 %v2331, 7
  %v2333 = vadd.s32 %v2332, 8
  %v2334 = vadd.s32 %v2332, 16
  %v2335 = vadd.s32 %v2332, 24
  %v2336 = vadd.s32 %v2332, 32
  %v2337 = vadd.s32 %v2332, 40
  %v2338 = vadd.s32 %v2332, 48
  %v2339 = vadd.s32 %v2332, 56
  %v2340 = vmul.u32 %v2332, 5
  %v2341 = vmul.u32 %v2333, 5
  %v2342 = vmul.u32 %v2334, 5
  %v2343 = vmul.u32 %v2335, 5
  %v2344 = vmul.u32 %v2336, 5
  %v2345 = vmul.u32 %v2337, 5
  %v2346 = vmul.u32 %v2338, 5
  %v2347 = vmul.u32 %v2339, 5
  %vm2348 = vcmp.ge.s32.totalorder %v2328, %v2340
  %vm2349 = vcmp.ge.s32.totalorder %v2329, %v2340
  %vm2350 = vcmp.ge.s32.totalorder %v2330, %v2340
  %vm2351 = vcmp.ge.s32.totalorder %v2328, %v2341
  %vm2352 = vcmp.ge.s32.totalorder %v2329, %v2341
  %vm2353 = vcmp.ge.s32.totalorder %v2330, %v2341
  %vm2354 = vcmp.ge.s32.totalorder %v2328, %v2342
  %vm2355 = vcmp.ge.s32.totalorder %v2329, %v2342
  %vm2356 = vcmp.ge.s32.totalorder %v2330, %v2342
  %vm2357 = vcmp.ge.s32.totalorder %v2328, %v2343
  %vm2358 = vcmp.ge.s32.totalorder %v2329, %v2343
  %vm2359 = vcmp.ge.s32.totalorder %v2330, %v2343
  %vm2360 = vcmp.ge.s32.totalorder %v2328, %v2344
  %vm2361 = vcmp.ge.s32.totalorder %v2329, %v2344
  %vm2362 = vcmp.ge.s32.totalorder %v2330, %v2344
  %vm2363 = vcmp.ge.s32.totalorder %v2328, %v2345
  %vm2364 = vcmp.ge.s32.totalorder %v2329, %v2345
  %vm2365 = vcmp.ge.s32.totalorder %v2330, %v2345
  %vm2366 = vcmp.ge.s32.totalorder %v2328, %v2346
  %vm2367 = vcmp.ge.s32.totalorder %v2329, %v2346
  %vm2368 = vcmp.ge.s32.totalorder %v2330, %v2346
  %vm2369 = vcmp.ge.s32.totalorder %v2328, %v2347
  %vm2370 = vcmp.ge.s32.totalorder %v2329, %v2347
  %vm2371 = vcmp.ge.s32.totalorder %v2330, %v2347
  %v2372 = vadd.s32 %v2340, 5
  %v2373 = vadd.s32 %v2341, 5
  %v2374 = vadd.s32 %v2342, 5
  %v2375 = vadd.s32 %v2343, 5
  %v2376 = vadd.s32 %v2344, 5
  %v2377 = vadd.s32 %v2345, 5
  %v2378 = vadd.s32 %v2346, 5
  %v2379 = vadd.s32 %v2347, 5
  %vm2380 = vcmp.lt.s32.totalorder %v2328, %v2372
  %vm2381 = vcmp.lt.s32.totalorder %v2329, %v2372
  %vm2382 = vcmp.lt.s32.totalorder %v2330, %v2372
  %vm2383 = vcmp.lt.s32.totalorder %v2328, %v2373
  %vm2384 = vcmp.lt.s32.totalorder %v2329, %v2373
  %vm2385 = vcmp.lt.s32.totalorder %v2330, %v2373
  %vm2386 = vcmp.lt.s32.totalorder %v2328, %v2374
  %vm2387 = vcmp.lt.s32.totalorder %v2329, %v2374
  %vm2388 = vcmp.lt.s32.totalorder %v2330, %v2374
  %vm2389 = vcmp.lt.s32.totalorder %v2328, %v2375
  %vm2390 = vcmp.lt.s32.totalorder %v2329, %v2375
  %vm2391 = vcmp.lt.s32.totalorder %v2330, %v2375
  %vm2392 = vcmp.lt.s32.totalorder %v2328, %v2376
  %vm2393 = vcmp.lt.s32.totalorder %v2329, %v2376
  %vm2394 = vcmp.lt.s32.totalorder %v2330, %v2376
  %vm2395 = vcmp.lt.s32.totalorder %v2328, %v2377
  %vm2396 = vcmp.lt.s32.totalorder %v2329, %v2377
  %vm2397 = vcmp.lt.s32.totalorder %v2330, %v2377
  %vm2398 = vcmp.lt.s32.totalorder %v2328, %v2378
  %vm2399 = vcmp.lt.s32.totalorder %v2329, %v2378
  %vm2400 = vcmp.lt.s32.totalorder %v2330, %v2378
  %vm2401 = vcmp.lt.s32.totalorder %v2328, %v2379
  %vm2402 = vcmp.lt.s32.totalorder %v2329, %v2379
  %vm2403 = vcmp.lt.s32.totalorder %v2330, %v2379
  %vm2404 = vmand %vm2348, %vm2380
  %vm2405 = vmand %vm2349, %vm2381
  %vm2406 = vmand %vm2350, %vm2382
  %vm2407 = vmand %vm2351, %vm2383
  %vm2408 = vmand %vm2352, %vm2384
  %vm2409 = vmand %vm2353, %vm2385
  %vm2410 = vmand %vm2354, %vm2386
  %vm2411 = vmand %vm2355, %vm2387
  %vm2412 = vmand %vm2356, %vm2388
  %vm2413 = vmand %vm2357, %vm2389
  %vm2414 = vmand %vm2358, %vm2390
  %vm2415 = vmand %vm2359, %vm2391
  %vm2416 = vmand %vm2360, %vm2392
  %vm2417 = vmand %vm2361, %vm2393
  %vm2418 = vmand %vm2362, %vm2394
  %vm2419 = vmand %vm2363, %vm2395
  %vm2420 = vmand %vm2364, %vm2396
  %vm2421 = vmand %vm2365, %vm2397
  %vm2422 = vmand %vm2366, %vm2398
  %vm2423 = vmand %vm2367, %vm2399
  %vm2424 = vmand %vm2368, %vm2400
  %vm2425 = vmand %vm2369, %vm2401
  %vm2426 = vmand %vm2370, %vm2402
  %vm2427 = vmand %vm2371, %vm2403
  %v2428 = vsel %vm2404, 1, 0
  %v2429 = vsel %vm2405, 1, 0
  %v2430 = vsel %vm2406, 1, 0
  %v2431 = vsel %vm2407, 1, 0
  %v2432 = vsel %vm2408, 1, 0
  %v2433 = vsel %vm2409, 1, 0
  %v2434 = vsel %vm2410, 1, 0
  %v2435 = vsel %vm2411, 1, 0
  %v2436 = vsel %vm2412, 1, 0
  %v2437 = vsel %vm2413, 1, 0
  %v2438 = vsel %vm2414, 1, 0
  %v2439 = vsel %vm2415, 1, 0
  %v2440 = vsel %vm2416, 1, 0
  %v2441 = vsel %vm2417, 1, 0
  %v2442 = vsel %vm2418, 1, 0
  %v2443 = vsel %vm2419, 1, 0
  %v2444 = vsel %vm2420, 1, 0
  %v2445 = vsel %vm2421, 1, 0
  %v2446 = vsel %vm2422, 1, 0
  %v2447 = vsel %vm2423, 1, 0
  %v2448 = vsel %vm2424, 1, 0
  %v2449 = vsel %vm2425, 1, 0
  %v2450 = vsel %vm2426, 1, 0
  %v2451 = vsel %vm2427, 1, 0
  %v2452 = vcvt.s32.f32 %v2428
  %v2453 = vcvt.s32.f32 %v2429
  %v2454 = vcvt.s32.f32 %v2430
  %v2455 = vcvt.s32.f32 %v2431
  %v2456 = vcvt.s32.f32 %v2432
  %v2457 = vcvt.s32.f32 %v2433
  %v2458 = vcvt.s32.f32 %v2434
  %v2459 = vcvt.s32.f32 %v2435
  %v2460 = vcvt.s32.f32 %v2436
  %v2461 = vcvt.s32.f32 %v2437
  %v2462 = vcvt.s32.f32 %v2438
  %v2463 = vcvt.s32.f32 %v2439
  %v2464 = vcvt.s32.f32 %v2440
  %v2465 = vcvt.s32.f32 %v2441
  %v2466 = vcvt.s32.f32 %v2442
  %v2467 = vcvt.s32.f32 %v2443
  %v2468 = vcvt.s32.f32 %v2444
  %v2469 = vcvt.s32.f32 %v2445
  %v2470 = vcvt.s32.f32 %v2446
  %v2471 = vcvt.s32.f32 %v2447
  %v2472 = vcvt.s32.f32 %v2448
  %v2473 = vcvt.s32.f32 %v2449
  %v2474 = vcvt.s32.f32 %v2450
  %v2475 = vcvt.s32.f32 %v2451
  %vm2476 = vcmask 506880
  %v2478 = vsel %vm2476, %v2294, 0
  %vm2480 = vcmask 1045504
  %v2482 = vsel %vm2480, %v2473, 0
  %v2485 = vsel %vm2480, %v2474, 0
  %v2488 = vsel %vm2480, %v2475, 0
  %v2490 = vand.u32 %v2453, 4294901760
  %2491 = vmatprep.subr.mxu0 %v2490
  %v2492 = vand.u32 %v2452, 4294901760
  %2493 = vmatpush1.msra.mxu0 %v2492
  %v2494 = vand.u32 %v2456, 4294901760
  %2495 = vmatprep.subr.mxu0 %v2494
  %v2496 = vand.u32 %v2455, 4294901760
  %2497 = vmatpush1.msra.mxu0 %v2496
  %v2498 = vand.u32 %v2459, 4294901760
  %2499 = vmatprep.subr.mxu0 %v2498
  %v2500 = vand.u32 %v2458, 4294901760
  %2501 = vmatpush1.msra.mxu0 %v2500
  %v2502 = vand.u32 %v2462, 4294901760
  %2503 = vmatprep.subr.mxu0 %v2502
  %v2504 = vand.u32 %v2461, 4294901760
  %2505 = vmatpush1.msra.mxu0 %v2504
  %v2506 = vand.u32 %v2465, 4294901760
  %2507 = vmatprep.subr.mxu0 %v2506
  %v2508 = vand.u32 %v2464, 4294901760
  %2509 = vmatpush1.msra.mxu0 %v2508
  %v2510 = vand.u32 %v2468, 4294901760
  %2511 = vmatprep.subr.mxu0 %v2510
  %v2512 = vand.u32 %v2467, 4294901760
  %2513 = vmatpush1.msra.mxu0 %v2512
  %v2514 = vand.u32 %v2471, 4294901760
  %2515 = vmatprep.subr.mxu0 %v2514
  %v2516 = vand.u32 %v2470, 4294901760
  %2517 = vmatpush1.msra.mxu0 %v2516
  %v2518 = vand.u32 %v2485, 4294901760
  %2519 = vmatprep.subr.mxu0 %v2518
  %v2520 = vand.u32 %v2482, 4294901760
  %2521 = vmatpush1.msra.mxu0 %v2520
  %2522 = vmatprep.subr.mxu0 0.0
  %2523 = vmatpush1.msra.mxu0 0.0
  %2524 = vmatprep.subr.mxu0 0.0
  %2525 = vmatpush1.msra.mxu0 0.0
  %2526 = vmatprep.subr.mxu0 0.0
  %2527 = vmatpush1.msra.mxu0 0.0
  %2528 = vmatprep.subr.mxu0 0.0
  %2529 = vmatpush1.msra.mxu0 0.0
  %2530 = vmatprep.subr.mxu0 0.0
  %2531 = vmatpush1.msra.mxu0 0.0
  %2532 = vmatprep.subr.mxu0 0.0
  %2533 = vmatpush1.msra.mxu0 0.0
  %2534 = vmatprep.subr.mxu0 0.0
  %2535 = vmatpush1.msra.mxu0 0.0
  %2536 = vmatprep.subr.mxu0 0.0
  %2537 = vmatpush1.msra.mxu0 0.0
  %2538 = vmatprep.subr.mxu0 0.0
  %2539 = vmatpush1.msra.mxu0 0.0
  %2540 = vmatprep.subr.mxu0 0.0
  %2541 = vmatpush1.msra.mxu0 0.0
  %2542 = vmatprep.subr.mxu0 0.0
  %2543 = vmatpush1.msra.mxu0 0.0
  %2544 = vmatprep.subr.mxu0 0.0
  %2545 = vmatpush1.msra.mxu0 0.0
  %2546 = vmatprep.subr.mxu0 0.0
  %2547 = vmatpush1.msra.mxu0 0.0
  %2548 = vmatprep.subr.mxu0 0.0
  %2549 = vmatpush1.msra.mxu0 0.0
  %2550 = vmatprep.subr.mxu0 0.0
  %2551 = vmatpush1.msra.mxu0 0.0
  %2552 = vmatprep.subr.mxu0 0.0
  %2553 = vmatpush1.msra.mxu0 0.0
  %2554 = vmatprep.subr.mxu0 0.0
  %2555 = vmatpush1.msra.mxu0 0.0
  %2556 = vmatprep.subr.mxu0 0.0
  %2557 = vmatpush1.msra.mxu0 0.0
  %2558 = vmatprep.subr.mxu0 0.0
  %2559 = vmatpush1.msra.mxu0 0.0
  %2560 = vmatprep.subr.mxu0 0.0
  %2561 = vmatpush1.msra.mxu0 0.0
  %2562 = vmatprep.subr.mxu0 0.0
  %2563 = vmatpush1.msra.mxu0 0.0
  %2564 = vmatprep.subr.mxu0 0.0
  %2565 = vmatpush1.msra.mxu0 0.0
  %2566 = vmatprep.subr.mxu0 0.0
  %2567 = vmatpush1.msra.mxu0 0.0
  %2568 = vmatprep.subr.mxu0 0.0
  %2569 = vmatpush1.msra.mxu0 0.0
  %2570 = vmatprep.mubr.f32.mxu0 0.0
  %v2571 = vand.u32 %v2478, 4294901760
  %v2572 = vsub.f32 %v2478, %v2571
  %v2573 = vand.u32 %v2572, 4294901760
  %v2574 = vsub.f32 %v2572, %v2573
  %v2575 = vand.u32 %v2574, 4294901760
  %2576 = vmatmul.mubr.f32.gmra.mrb[0].mxu0 %v2575
  %v2577 = vpop.f32.mrb[0].mxu0
  %v2578 = vadd.f32 0.0, %v2577
  %v2579 = vpop.f32.mrb[0].mxu0
  %v2580 = vadd.f32 0.0, %v2579
  %2581 = vdwg.mxu0
  %v2582 = vand.u32 %v2453, 4294901760
  %v2583 = vsub.f32 %v2453, %v2582
  %v2584 = vand.u32 %v2583, 4294901760
  %v2585 = vsub.f32 %v2583, %v2584
  %v2586 = vand.u32 %v2585, 4294901760
  %2587 = vmatprep.subr.mxu0 %v2586
  %v2588 = vand.u32 %v2452, 4294901760
  %v2589 = vsub.f32 %v2452, %v2588
  %v2590 = vand.u32 %v2589, 4294901760
  %v2591 = vsub.f32 %v2589, %v2590
  %v2592 = vand.u32 %v2591, 4294901760
  %2593 = vmatpush1.msra.mxu0 %v2592
  %v2594 = vand.u32 %v2456, 4294901760
  %v2595 = vsub.f32 %v2456, %v2594
  %v2596 = vand.u32 %v2595, 4294901760
  %v2597 = vsub.f32 %v2595, %v2596
  %v2598 = vand.u32 %v2597, 4294901760
  %2599 = vmatprep.subr.mxu0 %v2598
  %v2600 = vand.u32 %v2455, 4294901760
  %v2601 = vsub.f32 %v2455, %v2600
  %v2602 = vand.u32 %v2601, 4294901760
  %v2603 = vsub.f32 %v2601, %v2602
  %v2604 = vand.u32 %v2603, 4294901760
  %2605 = vmatpush1.msra.mxu0 %v2604
  %v2606 = vand.u32 %v2459, 4294901760
  %v2607 = vsub.f32 %v2459, %v2606
  %v2608 = vand.u32 %v2607, 4294901760
  %v2609 = vsub.f32 %v2607, %v2608
  %v2610 = vand.u32 %v2609, 4294901760
  %2611 = vmatprep.subr.mxu0 %v2610
  %v2612 = vand.u32 %v2458, 4294901760
  %v2613 = vsub.f32 %v2458, %v2612
  %v2614 = vand.u32 %v2613, 4294901760
  %v2615 = vsub.f32 %v2613, %v2614
  %v2616 = vand.u32 %v2615, 4294901760
  %2617 = vmatpush1.msra.mxu0 %v2616
  %v2618 = vand.u32 %v2462, 4294901760
  %v2619 = vsub.f32 %v2462, %v2618
  %v2620 = vand.u32 %v2619, 4294901760
  %v2621 = vsub.f32 %v2619, %v2620
  %v2622 = vand.u32 %v2621, 4294901760
  %2623 = vmatprep.subr.mxu0 %v2622
  %v2624 = vand.u32 %v2461, 4294901760
  %v2625 = vsub.f32 %v2461, %v2624
  %v2626 = vand.u32 %v2625, 4294901760
  %v2627 = vsub.f32 %v2625, %v2626
  %v2628 = vand.u32 %v2627, 4294901760
  %2629 = vmatpush1.msra.mxu0 %v2628
  %v2630 = vand.u32 %v2465, 4294901760
  %v2631 = vsub.f32 %v2465, %v2630
  %v2632 = vand.u32 %v2631, 4294901760
  %v2633 = vsub.f32 %v2631, %v2632
  %v2634 = vand.u32 %v2633, 4294901760
  %2635 = vmatprep.subr.mxu0 %v2634
  %v2636 = vand.u32 %v2464, 4294901760
  %v2637 = vsub.f32 %v2464, %v2636
  %v2638 = vand.u32 %v2637, 4294901760
  %v2639 = vsub.f32 %v2637, %v2638
  %v2640 = vand.u32 %v2639, 4294901760
  %2641 = vmatpush1.msra.mxu0 %v2640
  %v2642 = vand.u32 %v2468, 4294901760
  %v2643 = vsub.f32 %v2468, %v2642
  %v2644 = vand.u32 %v2643, 4294901760
  %v2645 = vsub.f32 %v2643, %v2644
  %v2646 = vand.u32 %v2645, 4294901760
  %2647 = vmatprep.subr.mxu0 %v2646
  %v2648 = vand.u32 %v2467, 4294901760
  %v2649 = vsub.f32 %v2467, %v2648
  %v2650 = vand.u32 %v2649, 4294901760
  %v2651 = vsub.f32 %v2649, %v2650
  %v2652 = vand.u32 %v2651, 4294901760
  %2653 = vmatpush1.msra.mxu0 %v2652
  %v2654 = vand.u32 %v2471, 4294901760
  %v2655 = vsub.f32 %v2471, %v2654
  %v2656 = vand.u32 %v2655, 4294901760
  %v2657 = vsub.f32 %v2655, %v2656
  %v2658 = vand.u32 %v2657, 4294901760
  %2659 = vmatprep.subr.mxu0 %v2658
  %v2660 = vand.u32 %v2470, 4294901760
  %v2661 = vsub.f32 %v2470, %v2660
  %v2662 = vand.u32 %v2661, 4294901760
  %v2663 = vsub.f32 %v2661, %v2662
  %v2664 = vand.u32 %v2663, 4294901760
  %2665 = vmatpush1.msra.mxu0 %v2664
  %v2666 = vand.u32 %v2485, 4294901760
  %v2667 = vsub.f32 %v2485, %v2666
  %v2668 = vand.u32 %v2667, 4294901760
  %v2669 = vsub.f32 %v2667, %v2668
  %v2670 = vand.u32 %v2669, 4294901760
  %2671 = vmatprep.subr.mxu0 %v2670
  %v2672 = vand.u32 %v2482, 4294901760
  %v2673 = vsub.f32 %v2482, %v2672
  %v2674 = vand.u32 %v2673, 4294901760
  %v2675 = vsub.f32 %v2673, %v2674
  %v2676 = vand.u32 %v2675, 4294901760
  %2677 = vmatpush1.msra.mxu0 %v2676
  %2678 = vmatprep.subr.mxu0 0.0
  %2679 = vmatpush1.msra.mxu0 0.0
  %2680 = vmatprep.subr.mxu0 0.0
  %2681 = vmatpush1.msra.mxu0 0.0
  %2682 = vmatprep.subr.mxu0 0.0
  %2683 = vmatpush1.msra.mxu0 0.0
  %2684 = vmatprep.subr.mxu0 0.0
  %2685 = vmatpush1.msra.mxu0 0.0
  %2686 = vmatprep.subr.mxu0 0.0
  %2687 = vmatpush1.msra.mxu0 0.0
  %2688 = vmatprep.subr.mxu0 0.0
  %2689 = vmatpush1.msra.mxu0 0.0
  %2690 = vmatprep.subr.mxu0 0.0
  %2691 = vmatpush1.msra.mxu0 0.0
  %2692 = vmatprep.subr.mxu0 0.0
  %2693 = vmatpush1.msra.mxu0 0.0
  %2694 = vmatprep.subr.mxu0 0.0
  %2695 = vmatpush1.msra.mxu0 0.0
  %2696 = vmatprep.subr.mxu0 0.0
  %2697 = vmatpush1.msra.mxu0 0.0
  %2698 = vmatprep.subr.mxu0 0.0
  %2699 = vmatpush1.msra.mxu0 0.0
  %2700 = vmatprep.subr.mxu0 0.0
  %2701 = vmatpush1.msra.mxu0 0.0
  %2702 = vmatprep.subr.mxu0 0.0
  %2703 = vmatpush1.msra.mxu0 0.0
  %2704 = vmatprep.subr.mxu0 0.0
  %2705 = vmatpush1.msra.mxu0 0.0
  %2706 = vmatprep.subr.mxu0 0.0
  %2707 = vmatpush1.msra.mxu0 0.0
  %2708 = vmatprep.subr.mxu0 0.0
  %2709 = vmatpush1.msra.mxu0 0.0
  %2710 = vmatprep.subr.mxu0 0.0
  %2711 = vmatpush1.msra.mxu0 0.0
  %2712 = vmatprep.subr.mxu0 0.0
  %2713 = vmatpush1.msra.mxu0 0.0
  %2714 = vmatprep.subr.mxu0 0.0
  %2715 = vmatpush1.msra.mxu0 0.0
  %2716 = vmatprep.subr.mxu0 0.0
  %2717 = vmatpush1.msra.mxu0 0.0
  %2718 = vmatprep.subr.mxu0 0.0
  %2719 = vmatpush1.msra.mxu0 0.0
  %2720 = vmatprep.subr.mxu0 0.0
  %2721 = vmatpush1.msra.mxu0 0.0
  %2722 = vmatprep.subr.mxu0 0.0
  %2723 = vmatpush1.msra.mxu0 0.0
  %2724 = vmatprep.subr.mxu0 0.0
  %2725 = vmatpush1.msra.mxu0 0.0
  %2726 = vmatprep.mubr.f32.mxu0 0.0
  %v2727 = vand.u32 %v2478, 4294901760
  %2728 = vmatmul.mubr.f32.gmra.mrb[0].mxu0 %v2727
  %v2729 = vpop.f32.mrb[0].mxu0
  %v2730 = vadd.f32 %v2578, %v2729
  %v2731 = vpop.f32.mrb[0].mxu0
  %v2732 = vadd.f32 %v2580, %v2731
  %2733 = vdwg.mxu0
  %v2734 = vand.u32 %v2453, 4294901760
  %v2735 = vsub.f32 %v2453, %v2734
  %2736 = vmatprep.subr.mxu0 %v2735
  %v2737 = vand.u32 %v2452, 4294901760
  %v2738 = vsub.f32 %v2452, %v2737
  %2739 = vmatpush1.msra.mxu0 %v2738
  %v2740 = vand.u32 %v2456, 4294901760
  %v2741 = vsub.f32 %v2456, %v2740
  %2742 = vmatprep.subr.mxu0 %v2741
  %v2743 = vand.u32 %v2455, 4294901760
  %v2744 = vsub.f32 %v2455, %v2743
  %2745 = vmatpush1.msra.mxu0 %v2744
  %v2746 = vand.u32 %v2459, 4294901760
  %v2747 = vsub.f32 %v2459, %v2746
  %2748 = vmatprep.subr.mxu0 %v2747
  %v2749 = vand.u32 %v2458, 4294901760
  %v2750 = vsub.f32 %v2458, %v2749
  %2751 = vmatpush1.msra.mxu0 %v2750
  %v2752 = vand.u32 %v2462, 4294901760
  %v2753 = vsub.f32 %v2462, %v2752
  %2754 = vmatprep.subr.mxu0 %v2753
  %v2755 = vand.u32 %v2461, 4294901760
  %v2756 = vsub.f32 %v2461, %v2755
  %2757 = vmatpush1.msra.mxu0 %v2756
  %v2758 = vand.u32 %v2465, 4294901760
  %v2759 = vsub.f32 %v2465, %v2758
  %2760 = vmatprep.subr.mxu0 %v2759
  %v2761 = vand.u32 %v2464, 4294901760
  %v2762 = vsub.f32 %v2464, %v2761
  %2763 = vmatpush1.msra.mxu0 %v2762
  %v2764 = vand.u32 %v2468, 4294901760
  %v2765 = vsub.f32 %v2468, %v2764
  %2766 = vmatprep.subr.mxu0 %v2765
  %v2767 = vand.u32 %v2467, 4294901760
  %v2768 = vsub.f32 %v2467, %v2767
  %2769 = vmatpush1.msra.mxu0 %v2768
  %v2770 = vand.u32 %v2471, 4294901760
  %v2771 = vsub.f32 %v2471, %v2770
  %2772 = vmatprep.subr.mxu0 %v2771
  %v2773 = vand.u32 %v2470, 4294901760
  %v2774 = vsub.f32 %v2470, %v2773
  %2775 = vmatpush1.msra.mxu0 %v2774
  %v2776 = vand.u32 %v2485, 4294901760
  %v2777 = vsub.f32 %v2485, %v2776
  %2778 = vmatprep.subr.mxu0 %v2777
  %v2779 = vand.u32 %v2482, 4294901760
  %v2780 = vsub.f32 %v2482, %v2779
  %2781 = vmatpush1.msra.mxu0 %v2780
  %2782 = vmatprep.subr.mxu0 0.0
  %2783 = vmatpush1.msra.mxu0 0.0
  %2784 = vmatprep.subr.mxu0 0.0
  %2785 = vmatpush1.msra.mxu0 0.0
  %2786 = vmatprep.subr.mxu0 0.0
  %2787 = vmatpush1.msra.mxu0 0.0
  %2788 = vmatprep.subr.mxu0 0.0
  %2789 = vmatpush1.msra.mxu0 0.0
  %2790 = vmatprep.subr.mxu0 0.0
  %2791 = vmatpush1.msra.mxu0 0.0
  %2792 = vmatprep.subr.mxu0 0.0
  %2793 = vmatpush1.msra.mxu0 0.0
  %2794 = vmatprep.subr.mxu0 0.0
  %2795 = vmatpush1.msra.mxu0 0.0
  %2796 = vmatprep.subr.mxu0 0.0
  %2797 = vmatpush1.msra.mxu0 0.0
  %2798 = vmatprep.subr.mxu0 0.0
  %2799 = vmatpush1.msra.mxu0 0.0
  %2800 = vmatprep.subr.mxu0 0.0
  %2801 = vmatpush1.msra.mxu0 0.0
  %2802 = vmatprep.subr.mxu0 0.0
  %2803 = vmatpush1.msra.mxu0 0.0
  %2804 = vmatprep.subr.mxu0 0.0
  %2805 = vmatpush1.msra.mxu0 0.0
  %2806 = vmatprep.subr.mxu0 0.0
  %2807 = vmatpush1.msra.mxu0 0.0
  %2808 = vmatprep.subr.mxu0 0.0
  %2809 = vmatpush1.msra.mxu0 0.0
  %2810 = vmatprep.subr.mxu0 0.0
  %2811 = vmatpush1.msra.mxu0 0.0
  %2812 = vmatprep.subr.mxu0 0.0
  %2813 = vmatpush1.msra.mxu0 0.0
  %2814 = vmatprep.subr.mxu0 0.0
  %2815 = vmatpush1.msra.mxu0 0.0
  %2816 = vmatprep.subr.mxu0 0.0
  %2817 = vmatpush1.msra.mxu0 0.0
  %2818 = vmatprep.subr.mxu0 0.0
  %2819 = vmatpush1.msra.mxu0 0.0
  %2820 = vmatprep.subr.mxu0 0.0
  %2821 = vmatpush1.msra.mxu0 0.0
  %2822 = vmatprep.subr.mxu0 0.0
  %2823 = vmatpush1.msra.mxu0 0.0
  %2824 = vmatprep.subr.mxu0 0.0
  %2825 = vmatpush1.msra.mxu0 0.0
  %2826 = vmatprep.subr.mxu0 0.0
  %2827 = vmatpush1.msra.mxu0 0.0
  %2828 = vmatprep.subr.mxu0 0.0
  %2829 = vmatpush1.msra.mxu0 0.0
  %2830 = vmatprep.mubr.f32.mxu0 0.0
  %v2831 = vand.u32 %v2478, 4294901760
  %v2832 = vsub.f32 %v2478, %v2831
  %2833 = vmatmul.mubr.f32.gmra.mrb[0].mxu0 %v2832
  %v2834 = vpop.f32.mrb[0].mxu0
  %v2835 = vadd.f32 %v2730, %v2834
  %v2836 = vpop.f32.mrb[0].mxu0
  %v2837 = vadd.f32 %v2732, %v2836
  %2838 = vdwg.mxu0
  %v2839 = vand.u32 %v2453, 4294901760
  %2840 = vmatprep.subr.mxu0 %v2839
  %v2841 = vand.u32 %v2452, 4294901760
  %2842 = vmatpush1.msra.mxu0 %v2841
  %v2843 = vand.u32 %v2456, 4294901760
  %2844 = vmatprep.subr.mxu0 %v2843
  %v2845 = vand.u32 %v2455, 4294901760
  %2846 = vmatpush1.msra.mxu0 %v2845
  %v2847 = vand.u32 %v2459, 4294901760
  %2848 = vmatprep.subr.mxu0 %v2847
  %v2849 = vand.u32 %v2458, 4294901760
  %2850 = vmatpush1.msra.mxu0 %v2849
  %v2851 = vand.u32 %v2462, 4294901760
  %2852 = vmatprep.subr.mxu0 %v2851
  %v2853 = vand.u32 %v2461, 4294901760
  %2854 = vmatpush1.msra.mxu0 %v2853
  %v2855 = vand.u32 %v2465, 4294901760
  %2856 = vmatprep.subr.mxu0 %v2855
  %v2857 = vand.u32 %v2464, 4294901760
  %2858 = vmatpush1.msra.mxu0 %v2857
  %v2859 = vand.u32 %v2468, 4294901760
  %2860 = vmatprep.subr.mxu0 %v2859
  %v2861 = vand.u32 %v2467, 4294901760
  %2862 = vmatpush1.msra.mxu0 %v2861
  %v2863 = vand.u32 %v2471, 4294901760
  %2864 = vmatprep.subr.mxu0 %v2863
  %v2865 = vand.u32 %v2470, 4294901760
  %2866 = vmatpush1.msra.mxu0 %v2865
  %v2867 = vand.u32 %v2485, 4294901760
  %2868 = vmatprep.subr.mxu0 %v2867
  %v2869 = vand.u32 %v2482, 4294901760
  %2870 = vmatpush1.msra.mxu0 %v2869
  %2871 = vmatprep.subr.mxu0 0.0
  %2872 = vmatpush1.msra.mxu0 0.0
  %2873 = vmatprep.subr.mxu0 0.0
  %2874 = vmatpush1.msra.mxu0 0.0
  %2875 = vmatprep.subr.mxu0 0.0
  %2876 = vmatpush1.msra.mxu0 0.0
  %2877 = vmatprep.subr.mxu0 0.0
  %2878 = vmatpush1.msra.mxu0 0.0
  %2879 = vmatprep.subr.mxu0 0.0
  %2880 = vmatpush1.msra.mxu0 0.0
  %2881 = vmatprep.subr.mxu0 0.0
  %2882 = vmatpush1.msra.mxu0 0.0
  %2883 = vmatprep.subr.mxu0 0.0
  %2884 = vmatpush1.msra.mxu0 0.0
  %2885 = vmatprep.subr.mxu0 0.0
  %2886 = vmatpush1.msra.mxu0 0.0
  %2887 = vmatprep.subr.mxu0 0.0
  %2888 = vmatpush1.msra.mxu0 0.0
  %2889 = vmatprep.subr.mxu0 0.0
  %2890 = vmatpush1.msra.mxu0 0.0
  %2891 = vmatprep.subr.mxu0 0.0
  %2892 = vmatpush1.msra.mxu0 0.0
  %2893 = vmatprep.subr.mxu0 0.0
  %2894 = vmatpush1.msra.mxu0 0.0
  %2895 = vmatprep.subr.mxu0 0.0
  %2896 = vmatpush1.msra.mxu0 0.0
  %2897 = vmatprep.subr.mxu0 0.0
  %2898 = vmatpush1.msra.mxu0 0.0
  %2899 = vmatprep.subr.mxu0 0.0
  %2900 = vmatpush1.msra.mxu0 0.0
  %2901 = vmatprep.subr.mxu0 0.0
  %2902 = vmatpush1.msra.mxu0 0.0
  %2903 = vmatprep.subr.mxu0 0.0
  %2904 = vmatpush1.msra.mxu0 0.0
  %2905 = vmatprep.subr.mxu0 0.0
  %2906 = vmatpush1.msra.mxu0 0.0
  %2907 = vmatprep.subr.mxu0 0.0
  %2908 = vmatpush1.msra.mxu0 0.0
  %2909 = vmatprep.subr.mxu0 0.0
  %2910 = vmatpush1.msra.mxu0 0.0
  %2911 = vmatprep.subr.mxu0 0.0
  %2912 = vmatpush1.msra.mxu0 0.0
  %2913 = vmatprep.subr.mxu0 0.0
  %2914 = vmatpush1.msra.mxu0 0.0
  %2915 = vmatprep.subr.mxu0 0.0
  %2916 = vmatpush1.msra.mxu0 0.0
  %2917 = vmatprep.subr.mxu0 0.0
  %2918 = vmatpush1.msra.mxu0 0.0
  %2919 = vmatprep.mubr.f32.mxu0 0.0
  %v2920 = vand.u32 %v2478, 4294901760
  %v2921 = vsub.f32 %v2478, %v2920
  %v2922 = vand.u32 %v2921, 4294901760
  %2923 = vmatmul.mubr.f32.gmra.mrb[0].mxu0 %v2922
  %v2924 = vpop.f32.mrb[0].mxu0
  %v2925 = vadd.f32 %v2835, %v2924
  %v2926 = vpop.f32.mrb[0].mxu0
  %v2927 = vadd.f32 %v2837, %v2926
  %2928 = vdwg.mxu0
  %v2929 = vand.u32 %v2453, 4294901760
  %v2930 = vsub.f32 %v2453, %v2929
  %v2931 = vand.u32 %v2930, 4294901760
  %2932 = vmatprep.subr.mxu0 %v2931
  %v2933 = vand.u32 %v2452, 4294901760
  %v2934 = vsub.f32 %v2452, %v2933
  %v2935 = vand.u32 %v2934, 4294901760
  %2936 = vmatpush1.msra.mxu0 %v2935
  %v2937 = vand.u32 %v2456, 4294901760
  %v2938 = vsub.f32 %v2456, %v2937
  %v2939 = vand.u32 %v2938, 4294901760
  %2940 = vmatprep.subr.mxu0 %v2939
  %v2941 = vand.u32 %v2455, 4294901760
  %v2942 = vsub.f32 %v2455, %v2941
  %v2943 = vand.u32 %v2942, 4294901760
  %2944 = vmatpush1.msra.mxu0 %v2943
  %v2945 = vand.u32 %v2459, 4294901760
  %v2946 = vsub.f32 %v2459, %v2945
  %v2947 = vand.u32 %v2946, 4294901760
  %2948 = vmatprep.subr.mxu0 %v2947
  %v2949 = vand.u32 %v2458, 4294901760
  %v2950 = vsub.f32 %v2458, %v2949
  %v2951 = vand.u32 %v2950, 4294901760
  %2952 = vmatpush1.msra.mxu0 %v2951
  %v2953 = vand.u32 %v2462, 4294901760
  %v2954 = vsub.f32 %v2462, %v2953
  %v2955 = vand.u32 %v2954, 4294901760
  %2956 = vmatprep.subr.mxu0 %v2955
  %v2957 = vand.u32 %v2461, 4294901760
  %v2958 = vsub.f32 %v2461, %v2957
  %v2959 = vand.u32 %v2958, 4294901760
  %2960 = vmatpush1.msra.mxu0 %v2959
  %v2961 = vand.u32 %v2465, 4294901760
  %v2962 = vsub.f32 %v2465, %v2961
  %v2963 = vand.u32 %v2962, 4294901760
  %2964 = vmatprep.subr.mxu0 %v2963
  %v2965 = vand.u32 %v2464, 4294901760
  %v2966 = vsub.f32 %v2464, %v2965
  %v2967 = vand.u32 %v2966, 4294901760
  %2968 = vmatpush1.msra.mxu0 %v2967
  %v2969 = vand.u32 %v2468, 4294901760
  %v2970 = vsub.f32 %v2468, %v2969
  %v2971 = vand.u32 %v2970, 4294901760
  %2972 = vmatprep.subr.mxu0 %v2971
  %v2973 = vand.u32 %v2467, 4294901760
  %v2974 = vsub.f32 %v2467, %v2973
  %v2975 = vand.u32 %v2974, 4294901760
  %2976 = vmatpush1.msra.mxu0 %v2975
  %v2977 = vand.u32 %v2471, 4294901760
  %v2978 = vsub.f32 %v2471, %v2977
  %v2979 = vand.u32 %v2978, 4294901760
  %2980 = vmatprep.subr.mxu0 %v2979
  %v2981 = vand.u32 %v2470, 4294901760
  %v2982 = vsub.f32 %v2470, %v2981
  %v2983 = vand.u32 %v2982, 4294901760
  %2984 = vmatpush1.msra.mxu0 %v2983
  %v2985 = vand.u32 %v2485, 4294901760
  %v2986 = vsub.f32 %v2485, %v2985
  %v2987 = vand.u32 %v2986, 4294901760
  %2988 = vmatprep.subr.mxu0 %v2987
  %v2989 = vand.u32 %v2482, 4294901760
  %v2990 = vsub.f32 %v2482, %v2989
  %v2991 = vand.u32 %v2990, 4294901760
  %2992 = vmatpush1.msra.mxu0 %v2991
  %2993 = vmatprep.subr.mxu0 0.0
  %2994 = vmatpush1.msra.mxu0 0.0
  %2995 = vmatprep.subr.mxu0 0.0
  %2996 = vmatpush1.msra.mxu0 0.0
  %2997 = vmatprep.subr.mxu0 0.0
  %2998 = vmatpush1.msra.mxu0 0.0
  %2999 = vmatprep.subr.mxu0 0.0
  %3000 = vmatpush1.msra.mxu0 0.0
  %3001 = vmatprep.subr.mxu0 0.0
  %3002 = vmatpush1.msra.mxu0 0.0
  %3003 = vmatprep.subr.mxu0 0.0
  %3004 = vmatpush1.msra.mxu0 0.0
  %3005 = vmatprep.subr.mxu0 0.0
  %3006 = vmatpush1.msra.mxu0 0.0
  %3007 = vmatprep.subr.mxu0 0.0
  %3008 = vmatpush1.msra.mxu0 0.0
  %3009 = vmatprep.subr.mxu0 0.0
  %3010 = vmatpush1.msra.mxu0 0.0
  %3011 = vmatprep.subr.mxu0 0.0
  %3012 = vmatpush1.msra.mxu0 0.0
  %3013 = vmatprep.subr.mxu0 0.0
  %3014 = vmatpush1.msra.mxu0 0.0
  %3015 = vmatprep.subr.mxu0 0.0
  %3016 = vmatpush1.msra.mxu0 0.0
  %3017 = vmatprep.subr.mxu0 0.0
  %3018 = vmatpush1.msra.mxu0 0.0
  %3019 = vmatprep.subr.mxu0 0.0
  %3020 = vmatpush1.msra.mxu0 0.0
  %3021 = vmatprep.subr.mxu0 0.0
  %3022 = vmatpush1.msra.mxu0 0.0
  %3023 = vmatprep.subr.mxu0 0.0
  %3024 = vmatpush1.msra.mxu0 0.0
  %3025 = vmatprep.subr.mxu0 0.0
  %3026 = vmatpush1.msra.mxu0 0.0
  %3027 = vmatprep.subr.mxu0 0.0
  %3028 = vmatpush1.msra.mxu0 0.0
  %3029 = vmatprep.subr.mxu0 0.0
  %3030 = vmatpush1.msra.mxu0 0.0
  %3031 = vmatprep.subr.mxu0 0.0
  %3032 = vmatpush1.msra.mxu0 0.0
  %3033 = vmatprep.subr.mxu0 0.0
  %3034 = vmatpush1.msra.mxu0 0.0
  %3035 = vmatprep.subr.mxu0 0.0
  %3036 = vmatpush1.msra.mxu0 0.0
  %3037 = vmatprep.subr.mxu0 0.0
  %3038 = vmatpush1.msra.mxu0 0.0
  %3039 = vmatprep.subr.mxu0 0.0
  %3040 = vmatpush1.msra.mxu0 0.0
  %3041 = vmatprep.mubr.f32.mxu0 0.0
  %v3042 = vand.u32 %v2478, 4294901760
  %3043 = vmatmul.mubr.f32.gmra.mrb[0].mxu0 %v3042
  %v3044 = vpop.f32.mrb[0].mxu0
  %v3045 = vadd.f32 %v2925, %v3044
  %v3046 = vpop.f32.mrb[0].mxu0
  %v3047 = vadd.f32 %v2927, %v3046
  %3048 = vdwg.mxu0
  %v3049 = vand.u32 %v2453, 4294901760
  %3050 = vmatprep.subr.mxu0 %v3049
  %v3051 = vand.u32 %v2452, 4294901760
  %3052 = vmatpush1.msra.mxu0 %v3051
  %v3053 = vand.u32 %v2456, 4294901760
  %3054 = vmatprep.subr.mxu0 %v3053
  %v3055 = vand.u32 %v2455, 4294901760
  %3056 = vmatpush1.msra.mxu0 %v3055
  %v3057 = vand.u32 %v2459, 4294901760
  %3058 = vmatprep.subr.mxu0 %v3057
  %v3059 = vand.u32 %v2458, 4294901760
  %3060 = vmatpush1.msra.mxu0 %v3059
  %v3061 = vand.u32 %v2462, 4294901760
  %3062 = vmatprep.subr.mxu0 %v3061
  %v3063 = vand.u32 %v2461, 4294901760
  %3064 = vmatpush1.msra.mxu0 %v3063
  %v3065 = vand.u32 %v2465, 4294901760
  %3066 = vmatprep.subr.mxu0 %v3065
  %v3067 = vand.u32 %v2464, 4294901760
  %3068 = vmatpush1.msra.mxu0 %v3067
  %v3069 = vand.u32 %v2468, 4294901760
  %3070 = vmatprep.subr.mxu0 %v3069
  %v3071 = vand.u32 %v2467, 4294901760
  %3072 = vmatpush1.msra.mxu0 %v3071
  %v3073 = vand.u32 %v2471, 4294901760
  %3074 = vmatprep.subr.mxu0 %v3073
  %v3075 = vand.u32 %v2470, 4294901760
  %3076 = vmatpush1.msra.mxu0 %v3075
  %v3077 = vand.u32 %v2485, 4294901760
  %3078 = vmatprep.subr.mxu0 %v3077
  %v3079 = vand.u32 %v2482, 4294901760
  %3080 = vmatpush1.msra.mxu0 %v3079
  %3081 = vmatprep.subr.mxu0 0.0
  %3082 = vmatpush1.msra.mxu0 0.0
  %3083 = vmatprep.subr.mxu0 0.0
  %3084 = vmatpush1.msra.mxu0 0.0
  %3085 = vmatprep.subr.mxu0 0.0
  %3086 = vmatpush1.msra.mxu0 0.0
  %3087 = vmatprep.subr.mxu0 0.0
  %3088 = vmatpush1.msra.mxu0 0.0
  %3089 = vmatprep.subr.mxu0 0.0
  %3090 = vmatpush1.msra.mxu0 0.0
  %3091 = vmatprep.subr.mxu0 0.0
  %3092 = vmatpush1.msra.mxu0 0.0
  %3093 = vmatprep.subr.mxu0 0.0
  %3094 = vmatpush1.msra.mxu0 0.0
  %3095 = vmatprep.subr.mxu0 0.0
  %3096 = vmatpush1.msra.mxu0 0.0
  %3097 = vmatprep.subr.mxu0 0.0
  %3098 = vmatpush1.msra.mxu0 0.0
  %3099 = vmatprep.subr.mxu0 0.0
  %3100 = vmatpush1.msra.mxu0 0.0
  %3101 = vmatprep.subr.mxu0 0.0
  %3102 = vmatpush1.msra.mxu0 0.0
  %3103 = vmatprep.subr.mxu0 0.0
  %3104 = vmatpush1.msra.mxu0 0.0
  %3105 = vmatprep.subr.mxu0 0.0
  %3106 = vmatpush1.msra.mxu0 0.0
  %3107 = vmatprep.subr.mxu0 0.0
  %3108 = vmatpush1.msra.mxu0 0.0
  %3109 = vmatprep.subr.mxu0 0.0
  %3110 = vmatpush1.msra.mxu0 0.0
  %3111 = vmatprep.subr.mxu0 0.0
  %3112 = vmatpush1.msra.mxu0 0.0
  %3113 = vmatprep.subr.mxu0 0.0
  %3114 = vmatpush1.msra.mxu0 0.0
  %3115 = vmatprep.subr.mxu0 0.0
  %3116 = vmatpush1.msra.mxu0 0.0
  %3117 = vmatprep.subr.mxu0 0.0
  %3118 = vmatpush1.msra.mxu0 0.0
  %3119 = vmatprep.subr.mxu0 0.0
  %3120 = vmatpush1.msra.mxu0 0.0
  %3121 = vmatprep.subr.mxu0 0.0
  %3122 = vmatpush1.msra.mxu0 0.0
  %3123 = vmatprep.subr.mxu0 0.0
  %3124 = vmatpush1.msra.mxu0 0.0
  %3125 = vmatprep.subr.mxu0 0.0
  %3126 = vmatpush1.msra.mxu0 0.0
  %3127 = vmatprep.subr.mxu0 0.0
  %3128 = vmatpush1.msra.mxu0 0.0
  %3129 = vmatprep.mubr.f32.mxu0 0.0
  %v3130 = vand.u32 %v2478, 4294901760
  %3131 = vmatmul.mubr.f32.gmra.mrb[0].mxu0 %v3130
  %v3132 = vpop.f32.mrb[0].mxu0
  %v3133 = vadd.f32 %v3045, %v3132
  %v3134 = vpop.f32.mrb[0].mxu0
  %v3135 = vadd.f32 %v3047, %v3134
  %3136 = vdwg.mxu0
  %3137 = vmatprep.subr.mxu0 0.0
  %v3138 = vand.u32 %v2454, 4294901760
  %3139 = vmatpush1.msra.mxu0 %v3138
  %3140 = vmatprep.subr.mxu0 0.0
  %v3141 = vand.u32 %v2457, 4294901760
  %3142 = vmatpush1.msra.mxu0 %v3141
  %3143 = vmatprep.subr.mxu0 0.0
  %v3144 = vand.u32 %v2460, 4294901760
  %3145 = vmatpush1.msra.mxu0 %v3144
  %3146 = vmatprep.subr.mxu0 0.0
  %v3147 = vand.u32 %v2463, 4294901760
  %3148 = vmatpush1.msra.mxu0 %v3147
  %3149 = vmatprep.subr.mxu0 0.0
  %v3150 = vand.u32 %v2466, 4294901760
  %3151 = vmatpush1.msra.mxu0 %v3150
  %3152 = vmatprep.subr.mxu0 0.0
  %v3153 = vand.u32 %v2469, 4294901760
  %3154 = vmatpush1.msra.mxu0 %v3153
  %3155 = vmatprep.subr.mxu0 0.0
  %v3156 = vand.u32 %v2472, 4294901760
  %3157 = vmatpush1.msra.mxu0 %v3156
  %3158 = vmatprep.subr.mxu0 0.0
  %v3159 = vand.u32 %v2488, 4294901760
  %3160 = vmatpush1.msra.mxu0 %v3159
  %3161 = vmatprep.subr.mxu0 0.0
  %3162 = vmatpush1.msra.mxu0 0.0
  %3163 = vmatprep.subr.mxu0 0.0
  %3164 = vmatpush1.msra.mxu0 0.0
  %3165 = vmatprep.subr.mxu0 0.0
  %3166 = vmatpush1.msra.mxu0 0.0
  %3167 = vmatprep.subr.mxu0 0.0
  %3168 = vmatpush1.msra.mxu0 0.0
  %3169 = vmatprep.subr.mxu0 0.0
  %3170 = vmatpush1.msra.mxu0 0.0
  %3171 = vmatprep.subr.mxu0 0.0
  %3172 = vmatpush1.msra.mxu0 0.0
  %3173 = vmatprep.subr.mxu0 0.0
  %3174 = vmatpush1.msra.mxu0 0.0
  %3175 = vmatprep.subr.mxu0 0.0
  %3176 = vmatpush1.msra.mxu0 0.0
  %3177 = vmatprep.subr.mxu0 0.0
  %3178 = vmatpush1.msra.mxu0 0.0
  %3179 = vmatprep.subr.mxu0 0.0
  %3180 = vmatpush1.msra.mxu0 0.0
  %3181 = vmatprep.subr.mxu0 0.0
  %3182 = vmatpush1.msra.mxu0 0.0
  %3183 = vmatprep.subr.mxu0 0.0
  %3184 = vmatpush1.msra.mxu0 0.0
  %3185 = vmatprep.subr.mxu0 0.0
  %3186 = vmatpush1.msra.mxu0 0.0
  %3187 = vmatprep.subr.mxu0 0.0
  %3188 = vmatpush1.msra.mxu0 0.0
  %3189 = vmatprep.subr.mxu0 0.0
  %3190 = vmatpush1.msra.mxu0 0.0
  %3191 = vmatprep.subr.mxu0 0.0
  %3192 = vmatpush1.msra.mxu0 0.0
  %3193 = vmatprep.subr.mxu0 0.0
  %3194 = vmatpush1.msra.mxu0 0.0
  %3195 = vmatprep.subr.mxu0 0.0
  %3196 = vmatpush1.msra.mxu0 0.0
  %3197 = vmatprep.subr.mxu0 0.0
  %3198 = vmatpush1.msra.mxu0 0.0
  %3199 = vmatprep.subr.mxu0 0.0
  %3200 = vmatpush1.msra.mxu0 0.0
  %3201 = vmatprep.subr.mxu0 0.0
  %3202 = vmatpush1.msra.mxu0 0.0
  %3203 = vmatprep.subr.mxu0 0.0
  %3204 = vmatpush1.msra.mxu0 0.0
  %3205 = vmatprep.subr.mxu0 0.0
  %3206 = vmatpush1.msra.mxu0 0.0
  %3207 = vmatprep.subr.mxu0 0.0
  %3208 = vmatpush1.msra.mxu0 0.0
  %3209 = vmatprep.mubr.f32.mxu0 0.0
  %v3210 = vand.u32 %v2478, 4294901760
  %v3211 = vsub.f32 %v2478, %v3210
  %v3212 = vand.u32 %v3211, 4294901760
  %v3213 = vsub.f32 %v3211, %v3212
  %v3214 = vand.u32 %v3213, 4294901760
  %3215 = vmatmul.mubr.f32.gmra.mrb[0].mxu0 %v3214
  %v3216 = vpop.f32.mrb[0].mxu0
  %v3217 = vadd.f32 0.0, %v3216
  %v3218 = vpop.f32.mrb[0].mxu0
  %3219 = vdwg.mxu0
  %3220 = vmatprep.subr.mxu0 0.0
  %v3221 = vand.u32 %v2454, 4294901760
  %v3222 = vsub.f32 %v2454, %v3221
  %v3223 = vand.u32 %v3222, 4294901760
  %v3224 = vsub.f32 %v3222, %v3223
  %v3225 = vand.u32 %v3224, 4294901760
  %3226 = vmatpush1.msra.mxu0 %v3225
  %3227 = vmatprep.subr.mxu0 0.0
  %v3228 = vand.u32 %v2457, 4294901760
  %v3229 = vsub.f32 %v2457, %v3228
  %v3230 = vand.u32 %v3229, 4294901760
  %v3231 = vsub.f32 %v3229, %v3230
  %v3232 = vand.u32 %v3231, 4294901760
  %3233 = vmatpush1.msra.mxu0 %v3232
  %3234 = vmatprep.subr.mxu0 0.0
  %v3235 = vand.u32 %v2460, 4294901760
  %v3236 = vsub.f32 %v2460, %v3235
  %v3237 = vand.u32 %v3236, 4294901760
  %v3238 = vsub.f32 %v3236, %v3237
  %v3239 = vand.u32 %v3238, 4294901760
  %3240 = vmatpush1.msra.mxu0 %v3239
  %3241 = vmatprep.subr.mxu0 0.0
  %v3242 = vand.u32 %v2463, 4294901760
  %v3243 = vsub.f32 %v2463, %v3242
  %v3244 = vand.u32 %v3243, 4294901760
  %v3245 = vsub.f32 %v3243, %v3244
  %v3246 = vand.u32 %v3245, 4294901760
  %3247 = vmatpush1.msra.mxu0 %v3246
  %3248 = vmatprep.subr.mxu0 0.0
  %v3249 = vand.u32 %v2466, 4294901760
  %v3250 = vsub.f32 %v2466, %v3249
  %v3251 = vand.u32 %v3250, 4294901760
  %v3252 = vsub.f32 %v3250, %v3251
  %v3253 = vand.u32 %v3252, 4294901760
  %3254 = vmatpush1.msra.mxu0 %v3253
  %3255 = vmatprep.subr.mxu0 0.0
  %v3256 = vand.u32 %v2469, 4294901760
  %v3257 = vsub.f32 %v2469, %v3256
  %v3258 = vand.u32 %v3257, 4294901760
  %v3259 = vsub.f32 %v3257, %v3258
  %v3260 = vand.u32 %v3259, 4294901760
  %3261 = vmatpush1.msra.mxu0 %v3260
  %3262 = vmatprep.subr.mxu0 0.0
  %v3263 = vand.u32 %v2472, 4294901760
  %v3264 = vsub.f32 %v2472, %v3263
  %v3265 = vand.u32 %v3264, 4294901760
  %v3266 = vsub.f32 %v3264, %v3265
  %v3267 = vand.u32 %v3266, 4294901760
  %3268 = vmatpush1.msra.mxu0 %v3267
  %3269 = vmatprep.subr.mxu0 0.0
  %v3270 = vand.u32 %v2488, 4294901760
  %v3271 = vsub.f32 %v2488, %v3270
  %v3272 = vand.u32 %v3271, 4294901760
  %v3273 = vsub.f32 %v3271, %v3272
  %v3274 = vand.u32 %v3273, 4294901760
  %3275 = vmatpush1.msra.mxu0 %v3274
  %3276 = vmatprep.subr.mxu0 0.0
  %3277 = vmatpush1.msra.mxu0 0.0
  %3278 = vmatprep.subr.mxu0 0.0
  %3279 = vmatpush1.msra.mxu0 0.0
  %3280 = vmatprep.subr.mxu0 0.0
  %3281 = vmatpush1.msra.mxu0 0.0
  %3282 = vmatprep.subr.mxu0 0.0
  %3283 = vmatpush1.msra.mxu0 0.0
  %3284 = vmatprep.subr.mxu0 0.0
  %3285 = vmatpush1.msra.mxu0 0.0
  %3286 = vmatprep.subr.mxu0 0.0
  %3287 = vmatpush1.msra.mxu0 0.0
  %3288 = vmatprep.subr.mxu0 0.0
  %3289 = vmatpush1.msra.mxu0 0.0
  %3290 = vmatprep.subr.mxu0 0.0
  %3291 = vmatpush1.msra.mxu0 0.0
  %3292 = vmatprep.subr.mxu0 0.0
  %3293 = vmatpush1.msra.mxu0 0.0
  %3294 = vmatprep.subr.mxu0 0.0
  %3295 = vmatpush1.msra.mxu0 0.0
  %3296 = vmatprep.subr.mxu0 0.0
  %3297 = vmatpush1.msra.mxu0 0.0
  %3298 = vmatprep.subr.mxu0 0.0
  %3299 = vmatpush1.msra.mxu0 0.0
  %3300 = vmatprep.subr.mxu0 0.0
  %3301 = vmatpush1.msra.mxu0 0.0
  %3302 = vmatprep.subr.mxu0 0.0
  %3303 = vmatpush1.msra.mxu0 0.0
  %3304 = vmatprep.subr.mxu0 0.0
  %3305 = vmatpush1.msra.mxu0 0.0
  %3306 = vmatprep.subr.mxu0 0.0
  %3307 = vmatpush1.msra.mxu0 0.0
  %3308 = vmatprep.subr.mxu0 0.0
  %3309 = vmatpush1.msra.mxu0 0.0
  %3310 = vmatprep.subr.mxu0 0.0
  %3311 = vmatpush1.msra.mxu0 0.0
  %3312 = vmatprep.subr.mxu0 0.0
  %3313 = vmatpush1.msra.mxu0 0.0
  %3314 = vmatprep.subr.mxu0 0.0
  %3315 = vmatpush1.msra.mxu0 0.0
  %3316 = vmatprep.subr.mxu0 0.0
  %3317 = vmatpush1.msra.mxu0 0.0
  %3318 = vmatprep.subr.mxu0 0.0
  %3319 = vmatpush1.msra.mxu0 0.0
  %3320 = vmatprep.subr.mxu0 0.0
  %3321 = vmatpush1.msra.mxu0 0.0
  %3322 = vmatprep.subr.mxu0 0.0
  %3323 = vmatpush1.msra.mxu0 0.0
  %3324 = vmatprep.mubr.f32.mxu0 0.0
  %v3325 = vand.u32 %v2478, 4294901760
  %3326 = vmatmul.mubr.f32.gmra.mrb[0].mxu0 %v3325
  %v3327 = vpop.f32.mrb[0].mxu0
  %v3328 = vadd.f32 %v3217, %v3327
  %v3329 = vpop.f32.mrb[0].mxu0
  %3330 = vdwg.mxu0
  %3331 = vmatprep.subr.mxu0 0.0
  %v3332 = vand.u32 %v2454, 4294901760
  %v3333 = vsub.f32 %v2454, %v3332
  %3334 = vmatpush1.msra.mxu0 %v3333
  %3335 = vmatprep.subr.mxu0 0.0
  %v3336 = vand.u32 %v2457, 4294901760
  %v3337 = vsub.f32 %v2457, %v3336
  %3338 = vmatpush1.msra.mxu0 %v3337
  %3339 = vmatprep.subr.mxu0 0.0
  %v3340 = vand.u32 %v2460, 4294901760
  %v3341 = vsub.f32 %v2460, %v3340
  %3342 = vmatpush1.msra.mxu0 %v3341
  %3343 = vmatprep.subr.mxu0 0.0
  %v3344 = vand.u32 %v2463, 4294901760
  %v3345 = vsub.f32 %v2463, %v3344
  %3346 = vmatpush1.msra.mxu0 %v3345
  %3347 = vmatprep.subr.mxu0 0.0
  %v3348 = vand.u32 %v2466, 4294901760
  %v3349 = vsub.f32 %v2466, %v3348
  %3350 = vmatpush1.msra.mxu0 %v3349
  %3351 = vmatprep.subr.mxu0 0.0
  %v3352 = vand.u32 %v2469, 4294901760
  %v3353 = vsub.f32 %v2469, %v3352
  %3354 = vmatpush1.msra.mxu0 %v3353
  %3355 = vmatprep.subr.mxu0 0.0
  %v3356 = vand.u32 %v2472, 4294901760
  %v3357 = vsub.f32 %v2472, %v3356
  %3358 = vmatpush1.msra.mxu0 %v3357
  %3359 = vmatprep.subr.mxu0 0.0
  %v3360 = vand.u32 %v2488, 4294901760
  %v3361 = vsub.f32 %v2488, %v3360
  %3362 = vmatpush1.msra.mxu0 %v3361
  %3363 = vmatprep.subr.mxu0 0.0
  %3364 = vmatpush1.msra.mxu0 0.0
  %3365 = vmatprep.subr.mxu0 0.0
  %3366 = vmatpush1.msra.mxu0 0.0
  %3367 = vmatprep.subr.mxu0 0.0
  %3368 = vmatpush1.msra.mxu0 0.0
  %3369 = vmatprep.subr.mxu0 0.0
  %3370 = vmatpush1.msra.mxu0 0.0
  %3371 = vmatprep.subr.mxu0 0.0
  %3372 = vmatpush1.msra.mxu0 0.0
  %3373 = vmatprep.subr.mxu0 0.0
  %3374 = vmatpush1.msra.mxu0 0.0
  %3375 = vmatprep.subr.mxu0 0.0
  %3376 = vmatpush1.msra.mxu0 0.0
  %3377 = vmatprep.subr.mxu0 0.0
  %3378 = vmatpush1.msra.mxu0 0.0
  %3379 = vmatprep.subr.mxu0 0.0
  %3380 = vmatpush1.msra.mxu0 0.0
  %3381 = vmatprep.subr.mxu0 0.0
  %3382 = vmatpush1.msra.mxu0 0.0
  %3383 = vmatprep.subr.mxu0 0.0
  %3384 = vmatpush1.msra.mxu0 0.0
  %3385 = vmatprep.subr.mxu0 0.0
  %3386 = vmatpush1.msra.mxu0 0.0
  %3387 = vmatprep.subr.mxu0 0.0
  %3388 = vmatpush1.msra.mxu0 0.0
  %3389 = vmatprep.subr.mxu0 0.0
  %3390 = vmatpush1.msra.mxu0 0.0
  %3391 = vmatprep.subr.mxu0 0.0
  %3392 = vmatpush1.msra.mxu0 0.0
  %3393 = vmatprep.subr.mxu0 0.0
  %3394 = vmatpush1.msra.mxu0 0.0
  %3395 = vmatprep.subr.mxu0 0.0
  %3396 = vmatpush1.msra.mxu0 0.0
  %3397 = vmatprep.subr.mxu0 0.0
  %3398 = vmatpush1.msra.mxu0 0.0
  %3399 = vmatprep.subr.mxu0 0.0
  %3400 = vmatpush1.msra.mxu0 0.0
  %3401 = vmatprep.subr.mxu0 0.0
  %3402 = vmatpush1.msra.mxu0 0.0
  %3403 = vmatprep.subr.mxu0 0.0
  %3404 = vmatpush1.msra.mxu0 0.0
  %3405 = vmatprep.subr.mxu0 0.0
  %3406 = vmatpush1.msra.mxu0 0.0
  %3407 = vmatprep.subr.mxu0 0.0
  %3408 = vmatpush1.msra.mxu0 0.0
  %3409 = vmatprep.subr.mxu0 0.0
  %3410 = vmatpush1.msra.mxu0 0.0
  %3411 = vmatprep.mubr.f32.mxu0 0.0
  %v3412 = vand.u32 %v2478, 4294901760
  %v3413 = vsub.f32 %v2478, %v3412
  %3414 = vmatmul.mubr.f32.gmra.mrb[0].mxu0 %v3413
  %v3415 = vpop.f32.mrb[0].mxu0
  %v3416 = vadd.f32 %v3328, %v3415
  %v3417 = vpop.f32.mrb[0].mxu0
  %3418 = vdwg.mxu0
  %3419 = vmatprep.subr.mxu0 0.0
  %v3420 = vand.u32 %v2454, 4294901760
  %3421 = vmatpush1.msra.mxu0 %v3420
  %3422 = vmatprep.subr.mxu0 0.0
  %v3423 = vand.u32 %v2457, 4294901760
  %3424 = vmatpush1.msra.mxu0 %v3423
  %3425 = vmatprep.subr.mxu0 0.0
  %v3426 = vand.u32 %v2460, 4294901760
  %3427 = vmatpush1.msra.mxu0 %v3426
  %3428 = vmatprep.subr.mxu0 0.0
  %v3429 = vand.u32 %v2463, 4294901760
  %3430 = vmatpush1.msra.mxu0 %v3429
  %3431 = vmatprep.subr.mxu0 0.0
  %v3432 = vand.u32 %v2466, 4294901760
  %3433 = vmatpush1.msra.mxu0 %v3432
  %3434 = vmatprep.subr.mxu0 0.0
  %v3435 = vand.u32 %v2469, 4294901760
  %3436 = vmatpush1.msra.mxu0 %v3435
  %3437 = vmatprep.subr.mxu0 0.0
  %v3438 = vand.u32 %v2472, 4294901760
  %3439 = vmatpush1.msra.mxu0 %v3438
  %3440 = vmatprep.subr.mxu0 0.0
  %v3441 = vand.u32 %v2488, 4294901760
  %3442 = vmatpush1.msra.mxu0 %v3441
  %3443 = vmatprep.subr.mxu0 0.0
  %3444 = vmatpush1.msra.mxu0 0.0
  %3445 = vmatprep.subr.mxu0 0.0
  %3446 = vmatpush1.msra.mxu0 0.0
  %3447 = vmatprep.subr.mxu0 0.0
  %3448 = vmatpush1.msra.mxu0 0.0
  %3449 = vmatprep.subr.mxu0 0.0
  %3450 = vmatpush1.msra.mxu0 0.0
  %3451 = vmatprep.subr.mxu0 0.0
  %3452 = vmatpush1.msra.mxu0 0.0
  %3453 = vmatprep.subr.mxu0 0.0
  %3454 = vmatpush1.msra.mxu0 0.0
  %3455 = vmatprep.subr.mxu0 0.0
  %3456 = vmatpush1.msra.mxu0 0.0
  %3457 = vmatprep.subr.mxu0 0.0
  %3458 = vmatpush1.msra.mxu0 0.0
  %3459 = vmatprep.subr.mxu0 0.0
  %3460 = vmatpush1.msra.mxu0 0.0
  %3461 = vmatprep.subr.mxu0 0.0
  %3462 = vmatpush1.msra.mxu0 0.0
  %3463 = vmatprep.subr.mxu0 0.0
  %3464 = vmatpush1.msra.mxu0 0.0
  %3465 = vmatprep.subr.mxu0 0.0
  %3466 = vmatpush1.msra.mxu0 0.0
  %3467 = vmatprep.subr.mxu0 0.0
  %3468 = vmatpush1.msra.mxu0 0.0
  %3469 = vmatprep.subr.mxu0 0.0
  %3470 = vmatpush1.msra.mxu0 0.0
  %3471 = vmatprep.subr.mxu0 0.0
  %3472 = vmatpush1.msra.mxu0 0.0
  %3473 = vmatprep.subr.mxu0 0.0
  %3474 = vmatpush1.msra.mxu0 0.0
  %3475 = vmatprep.subr.mxu0 0.0
  %3476 = vmatpush1.msra.mxu0 0.0
  %3477 = vmatprep.subr.mxu0 0.0
  %3478 = vmatpush1.msra.mxu0 0.0
  %3479 = vmatprep.subr.mxu0 0.0
  %3480 = vmatpush1.msra.mxu0 0.0
  %3481 = vmatprep.subr.mxu0 0.0
  %3482 = vmatpush1.msra.mxu0 0.0
  %3483 = vmatprep.subr.mxu0 0.0
  %3484 = vmatpush1.msra.mxu0 0.0
  %3485 = vmatprep.subr.mxu0 0.0
  %3486 = vmatpush1.msra.mxu0 0.0
  %3487 = vmatprep.subr.mxu0 0.0
  %3488 = vmatpush1.msra.mxu0 0.0
  %3489 = vmatprep.subr.mxu0 0.0
  %3490 = vmatpush1.msra.mxu0 0.0
  %3491 = vmatprep.mubr.f32.mxu0 0.0
  %v3492 = vand.u32 %v2478, 4294901760
  %v3493 = vsub.f32 %v2478, %v3492
  %v3494 = vand.u32 %v3493, 4294901760
  %3495 = vmatmul.mubr.f32.gmra.mrb[0].mxu0 %v3494
  %v3496 = vpop.f32.mrb[0].mxu0
  %v3497 = vadd.f32 %v3416, %v3496
  %v3498 = vpop.f32.mrb[0].mxu0
  %3499 = vdwg.mxu0
  %3500 = vmatprep.subr.mxu0 0.0
  %v3501 = vand.u32 %v2454, 4294901760
  %v3502 = vsub.f32 %v2454, %v3501
  %v3503 = vand.u32 %v3502, 4294901760
  %3504 = vmatpush1.msra.mxu0 %v3503
  %3505 = vmatprep.subr.mxu0 0.0
  %v3506 = vand.u32 %v2457, 4294901760
  %v3507 = vsub.f32 %v2457, %v3506
  %v3508 = vand.u32 %v3507, 4294901760
  %3509 = vmatpush1.msra.mxu0 %v3508
  %3510 = vmatprep.subr.mxu0 0.0
  %v3511 = vand.u32 %v2460, 4294901760
  %v3512 = vsub.f32 %v2460, %v3511
  %v3513 = vand.u32 %v3512, 4294901760
  %3514 = vmatpush1.msra.mxu0 %v3513
  %3515 = vmatprep.subr.mxu0 0.0
  %v3516 = vand.u32 %v2463, 4294901760
  %v3517 = vsub.f32 %v2463, %v3516
  %v3518 = vand.u32 %v3517, 4294901760
  %3519 = vmatpush1.msra.mxu0 %v3518
  %3520 = vmatprep.subr.mxu0 0.0
  %v3521 = vand.u32 %v2466, 4294901760
  %v3522 = vsub.f32 %v2466, %v3521
  %v3523 = vand.u32 %v3522, 4294901760
  %3524 = vmatpush1.msra.mxu0 %v3523
  %3525 = vmatprep.subr.mxu0 0.0
  %v3526 = vand.u32 %v2469, 4294901760
  %v3527 = vsub.f32 %v2469, %v3526
  %v3528 = vand.u32 %v3527, 4294901760
  %3529 = vmatpush1.msra.mxu0 %v3528
  %3530 = vmatprep.subr.mxu0 0.0
  %v3531 = vand.u32 %v2472, 4294901760
  %v3532 = vsub.f32 %v2472, %v3531
  %v3533 = vand.u32 %v3532, 4294901760
  %3534 = vmatpush1.msra.mxu0 %v3533
  %3535 = vmatprep.subr.mxu0 0.0
  %v3536 = vand.u32 %v2488, 4294901760
  %v3537 = vsub.f32 %v2488, %v3536
  %v3538 = vand.u32 %v3537, 4294901760
  %3539 = vmatpush1.msra.mxu0 %v3538
  %3540 = vmatprep.subr.mxu0 0.0
  %3541 = vmatpush1.msra.mxu0 0.0
  %3542 = vmatprep.subr.mxu0 0.0
  %3543 = vmatpush1.msra.mxu0 0.0
  %3544 = vmatprep.subr.mxu0 0.0
  %3545 = vmatpush1.msra.mxu0 0.0
  %3546 = vmatprep.subr.mxu0 0.0
  %3547 = vmatpush1.msra.mxu0 0.0
  %3548 = vmatprep.subr.mxu0 0.0
  %3549 = vmatpush1.msra.mxu0 0.0
  %3550 = vmatprep.subr.mxu0 0.0
  %3551 = vmatpush1.msra.mxu0 0.0
  %3552 = vmatprep.subr.mxu0 0.0
  %3553 = vmatpush1.msra.mxu0 0.0
  %3554 = vmatprep.subr.mxu0 0.0
  %3555 = vmatpush1.msra.mxu0 0.0
  %3556 = vmatprep.subr.mxu0 0.0
  %3557 = vmatpush1.msra.mxu0 0.0
  %3558 = vmatprep.subr.mxu0 0.0
  %3559 = vmatpush1.msra.mxu0 0.0
  %3560 = vmatprep.subr.mxu0 0.0
  %3561 = vmatpush1.msra.mxu0 0.0
  %3562 = vmatprep.subr.mxu0 0.0
  %3563 = vmatpush1.msra.mxu0 0.0
  %3564 = vmatprep.subr.mxu0 0.0
  %3565 = vmatpush1.msra.mxu0 0.0
  %3566 = vmatprep.subr.mxu0 0.0
  %3567 = vmatpush1.msra.mxu0 0.0
  %3568 = vmatprep.subr.mxu0 0.0
  %3569 = vmatpush1.msra.mxu0 0.0
  %3570 = vmatprep.subr.mxu0 0.0
  %3571 = vmatpush1.msra.mxu0 0.0
  %3572 = vmatprep.subr.mxu0 0.0
  %3573 = vmatpush1.msra.mxu0 0.0
  %3574 = vmatprep.subr.mxu0 0.0
  %3575 = vmatpush1.msra.mxu0 0.0
  %3576 = vmatprep.subr.mxu0 0.0
  %3577 = vmatpush1.msra.mxu0 0.0
  %3578 = vmatprep.subr.mxu0 0.0
  %3579 = vmatpush1.msra.mxu0 0.0
  %3580 = vmatprep.subr.mxu0 0.0
  %3581 = vmatpush1.msra.mxu0 0.0
  %3582 = vmatprep.subr.mxu0 0.0
  %3583 = vmatpush1.msra.mxu0 0.0
  %3584 = vmatprep.subr.mxu0 0.0
  %3585 = vmatpush1.msra.mxu0 0.0
  %3586 = vmatprep.subr.mxu0 0.0
  %3587 = vmatpush1.msra.mxu0 0.0
  %3588 = vmatprep.mubr.f32.mxu0 0.0
  %v3589 = vand.u32 %v2478, 4294901760
  %3590 = vmatmul.mubr.f32.gmra.mrb[0].mxu0 %v3589
  %v3591 = vpop.f32.mrb[0].mxu0
  %v3592 = vadd.f32 %v3497, %v3591
  %v3593 = vpop.f32.mrb[0].mxu0
  %3594 = vdwg.mxu0
  %3595 = vmatprep.subr.mxu0 0.0
  %v3596 = vand.u32 %v2454, 4294901760
  %3597 = vmatpush1.msra.mxu0 %v3596
  %3598 = vmatprep.subr.mxu0 0.0
  %v3599 = vand.u32 %v2457, 4294901760
  %3600 = vmatpush1.msra.mxu0 %v3599
  %3601 = vmatprep.subr.mxu0 0.0
  %v3602 = vand.u32 %v2460, 4294901760
  %3603 = vmatpush1.msra.mxu0 %v3602
  %3604 = vmatprep.subr.mxu0 0.0
  %v3605 = vand.u32 %v2463, 4294901760
  %3606 = vmatpush1.msra.mxu0 %v3605
  %3607 = vmatprep.subr.mxu0 0.0
  %v3608 = vand.u32 %v2466, 4294901760
  %3609 = vmatpush1.msra.mxu0 %v3608
  %3610 = vmatprep.subr.mxu0 0.0
  %v3611 = vand.u32 %v2469, 4294901760
  %3612 = vmatpush1.msra.mxu0 %v3611
  %3613 = vmatprep.subr.mxu0 0.0
  %v3614 = vand.u32 %v2472, 4294901760
  %3615 = vmatpush1.msra.mxu0 %v3614
  %3616 = vmatprep.subr.mxu0 0.0
  %v3617 = vand.u32 %v2488, 4294901760
  %3618 = vmatpush1.msra.mxu0 %v3617
  %3619 = vmatprep.subr.mxu0 0.0
  %3620 = vmatpush1.msra.mxu0 0.0
  %3621 = vmatprep.subr.mxu0 0.0
  %3622 = vmatpush1.msra.mxu0 0.0
  %3623 = vmatprep.subr.mxu0 0.0
  %3624 = vmatpush1.msra.mxu0 0.0
  %3625 = vmatprep.subr.mxu0 0.0
  %3626 = vmatpush1.msra.mxu0 0.0
  %3627 = vmatprep.subr.mxu0 0.0
  %3628 = vmatpush1.msra.mxu0 0.0
  %3629 = vmatprep.subr.mxu0 0.0
  %3630 = vmatpush1.msra.mxu0 0.0
  %3631 = vmatprep.subr.mxu0 0.0
  %3632 = vmatpush1.msra.mxu0 0.0
  %3633 = vmatprep.subr.mxu0 0.0
  %3634 = vmatpush1.msra.mxu0 0.0
  %3635 = vmatprep.subr.mxu0 0.0
  %3636 = vmatpush1.msra.mxu0 0.0
  %3637 = vmatprep.subr.mxu0 0.0
  %3638 = vmatpush1.msra.mxu0 0.0
  %3639 = vmatprep.subr.mxu0 0.0
  %3640 = vmatpush1.msra.mxu0 0.0
  %3641 = vmatprep.subr.mxu0 0.0
  %3642 = vmatpush1.msra.mxu0 0.0
  %3643 = vmatprep.subr.mxu0 0.0
  %3644 = vmatpush1.msra.mxu0 0.0
  %3645 = vmatprep.subr.mxu0 0.0
  %3646 = vmatpush1.msra.mxu0 0.0
  %3647 = vmatprep.subr.mxu0 0.0
  %3648 = vmatpush1.msra.mxu0 0.0
  %3649 = vmatprep.subr.mxu0 0.0
  %3650 = vmatpush1.msra.mxu0 0.0
  %3651 = vmatprep.subr.mxu0 0.0
  %3652 = vmatpush1.msra.mxu0 0.0
  %3653 = vmatprep.subr.mxu0 0.0
  %3654 = vmatpush1.msra.mxu0 0.0
  %3655 = vmatprep.subr.mxu0 0.0
  %3656 = vmatpush1.msra.mxu0 0.0
  %3657 = vmatprep.subr.mxu0 0.0
  %3658 = vmatpush1.msra.mxu0 0.0
  %3659 = vmatprep.subr.mxu0 0.0
  %3660 = vmatpush1.msra.mxu0 0.0
  %3661 = vmatprep.subr.mxu0 0.0
  %3662 = vmatpush1.msra.mxu0 0.0
  %3663 = vmatprep.subr.mxu0 0.0
  %3664 = vmatpush1.msra.mxu0 0.0
  %3665 = vmatprep.subr.mxu0 0.0
  %3666 = vmatpush1.msra.mxu0 0.0
  %3667 = vmatprep.mubr.f32.mxu0 0.0
  %v3668 = vand.u32 %v2478, 4294901760
  %3669 = vmatmul.mubr.f32.gmra.mrb[0].mxu0 %v3668
  %v3670 = vpop.f32.mrb[0].mxu0
  %v3671 = vadd.f32 %v3592, %v3670
  %v3672 = vpop.f32.mrb[0].mxu0
  %3673 = vdwg.mxu0
  %v3674 = vld [vmem:[%s3] sm:$0x1f]
  %v3675 = vld [vmem:[%s3 + $0x8] sm:$0x1f]
  %v3676 = vld [vmem:[%s3 + $0x10] sm:$0x1f]
  %vm3677 = vcmask 39936
  %v3679 = vsel %vm3677, %v2326, 0
  %vm3681 = vcmask 1044480
  %v3683 = vsel %vm3681, %v3674, 0
  %v3686 = vsel %vm3681, %v3675, 0
  %v3689 = vsel %vm3681, %v3676, 0
  %v3691 = vand.u32 %v3686, 4294901760
  %3692 = vmatprep.subr.mxu0 %v3691
  %v3693 = vand.u32 %v3683, 4294901760
  %3694 = vmatpush1.msra.mxu0 %v3693
  %3695 = vmatprep.subr.mxu0 0.0
  %3696 = vmatpush1.msra.mxu0 0.0
  %3697 = vmatprep.subr.mxu0 0.0
  %3698 = vmatpush1.msra.mxu0 0.0
  %3699 = vmatprep.subr.mxu0 0.0
  %3700 = vmatpush1.msra.mxu0 0.0
  %3701 = vmatprep.subr.mxu0 0.0
  %3702 = vmatpush1.msra.mxu0 0.0
  %3703 = vmatprep.subr.mxu0 0.0
  %3704 = vmatpush1.msra.mxu0 0.0
  %3705 = vmatprep.subr.mxu0 0.0
  %3706 = vmatpush1.msra.mxu0 0.0
  %3707 = vmatprep.subr.mxu0 0.0
  %3708 = vmatpush1.msra.mxu0 0.0
  %3709 = vmatprep.subr.mxu0 0.0
  %3710 = vmatpush1.msra.mxu0 0.0
  %3711 = vmatprep.subr.mxu0 0.0
  %3712 = vmatpush1.msra.mxu0 0.0
  %3713 = vmatprep.subr.mxu0 0.0
  %3714 = vmatpush1.msra.mxu0 0.0
  %3715 = vmatprep.subr.mxu0 0.0
  %3716 = vmatpush1.msra.mxu0 0.0
  %3717 = vmatprep.subr.mxu0 0.0
  %3718 = vmatpush1.msra.mxu0 0.0
  %3719 = vmatprep.subr.mxu0 0.0
  %3720 = vmatpush1.msra.mxu0 0.0
  %3721 = vmatprep.subr.mxu0 0.0
  %3722 = vmatpush1.msra.mxu0 0.0
  %3723 = vmatprep.subr.mxu0 0.0
  %3724 = vmatpush1.msra.mxu0 0.0
  %3725 = vmatprep.subr.mxu0 0.0
  %3726 = vmatpush1.msra.mxu0 0.0
  %3727 = vmatprep.subr.mxu0 0.0
  %3728 = vmatpush1.msra.mxu0 0.0
  %3729 = vmatprep.subr.mxu0 0.0
  %3730 = vmatpush1.msra.mxu0 0.0
  %3731 = vmatprep.subr.mxu0 0.0
  %3732 = vmatpush1.msra.mxu0 0.0
  %3733 = vmatprep.subr.mxu0 0.0
  %3734 = vmatpush1.msra.mxu0 0.0
  %3735 = vmatprep.subr.mxu0 0.0
  %3736 = vmatpush1.msra.mxu0 0.0
  %3737 = vmatprep.subr.mxu0 0.0
  %3738 = vmatpush1.msra.mxu0 0.0
  %3739 = vmatprep.subr.mxu0 0.0
  %3740 = vmatpush1.msra.mxu0 0.0
  %3741 = vmatprep.subr.mxu0 0.0
  %3742 = vmatpush1.msra.mxu0 0.0
  %3743 = vmatprep.subr.mxu0 0.0
  %3744 = vmatpush1.msra.mxu0 0.0
  %3745 = vmatprep.subr.mxu0 0.0
  %3746 = vmatpush1.msra.mxu0 0.0
  %3747 = vmatprep.subr.mxu0 0.0
  %3748 = vmatpush1.msra.mxu0 0.0
  %3749 = vmatprep.subr.mxu0 0.0
  %3750 = vmatpush1.msra.mxu0 0.0
  %3751 = vmatprep.subr.mxu0 0.0
  %3752 = vmatpush1.msra.mxu0 0.0
  %3753 = vmatprep.subr.mxu0 0.0
  %3754 = vmatpush1.msra.mxu0 0.0
  %3755 = vmatprep.subr.mxu0 0.0
  %3756 = vmatpush1.msra.mxu0 0.0
  %3757 = vmatprep.mubr.f32.mxu0 0.0
  %v3758 = vand.u32 %v3679, 4294901760
  %v3759 = vsub.f32 %v3679, %v3758
  %v3760 = vand.u32 %v3759, 4294901760
  %v3761 = vsub.f32 %v3759, %v3760
  %v3762 = vand.u32 %v3761, 4294901760
  %3763 = vmatmul.mubr.f32.gmra.mrb[0].mxu0 %v3762
  %v3764 = vpop.f32.mrb[0].mxu0
  %v3765 = vadd.f32 0.0, %v3764
  %v3766 = vpop.f32.mrb[0].mxu0
  %v3767 = vadd.f32 0.0, %v3766
  %3768 = vdwg.mxu0
  %v3769 = vand.u32 %v3686, 4294901760
  %v3770 = vsub.f32 %v3686, %v3769
  %v3771 = vand.u32 %v3770, 4294901760
  %v3772 = vsub.f32 %v3770, %v3771
  %v3773 = vand.u32 %v3772, 4294901760
  %3774 = vmatprep.subr.mxu0 %v3773
  %v3775 = vand.u32 %v3683, 4294901760
  %v3776 = vsub.f32 %v3683, %v3775
  %v3777 = vand.u32 %v3776, 4294901760
  %v3778 = vsub.f32 %v3776, %v3777
  %v3779 = vand.u32 %v3778, 4294901760
  %3780 = vmatpush1.msra.mxu0 %v3779
  %3781 = vmatprep.subr.mxu0 0.0
  %3782 = vmatpush1.msra.mxu0 0.0
  %3783 = vmatprep.subr.mxu0 0.0
  %3784 = vmatpush1.msra.mxu0 0.0
  %3785 = vmatprep.subr.mxu0 0.0
  %3786 = vmatpush1.msra.mxu0 0.0
  %3787 = vmatprep.subr.mxu0 0.0
  %3788 = vmatpush1.msra.mxu0 0.0
  %3789 = vmatprep.subr.mxu0 0.0
  %3790 = vmatpush1.msra.mxu0 0.0
  %3791 = vmatprep.subr.mxu0 0.0
  %3792 = vmatpush1.msra.mxu0 0.0
  %3793 = vmatprep.subr.mxu0 0.0
  %3794 = vmatpush1.msra.mxu0 0.0
  %3795 = vmatprep.subr.mxu0 0.0
  %3796 = vmatpush1.msra.mxu0 0.0
  %3797 = vmatprep.subr.mxu0 0.0
  %3798 = vmatpush1.msra.mxu0 0.0
  %3799 = vmatprep.subr.mxu0 0.0
  %3800 = vmatpush1.msra.mxu0 0.0
  %3801 = vmatprep.subr.mxu0 0.0
  %3802 = vmatpush1.msra.mxu0 0.0
  %3803 = vmatprep.subr.mxu0 0.0
  %3804 = vmatpush1.msra.mxu0 0.0
  %3805 = vmatprep.subr.mxu0 0.0
  %3806 = vmatpush1.msra.mxu0 0.0
  %3807 = vmatprep.subr.mxu0 0.0
  %3808 = vmatpush1.msra.mxu0 0.0
  %3809 = vmatprep.subr.mxu0 0.0
  %3810 = vmatpush1.msra.mxu0 0.0
  %3811 = vmatprep.subr.mxu0 0.0
  %3812 = vmatpush1.msra.mxu0 0.0
  %3813 = vmatprep.subr.mxu0 0.0
  %3814 = vmatpush1.msra.mxu0 0.0
  %3815 = vmatprep.subr.mxu0 0.0
  %3816 = vmatpush1.msra.mxu0 0.0
  %3817 = vmatprep.subr.mxu0 0.0
  %3818 = vmatpush1.msra.mxu0 0.0
  %3819 = vmatprep.subr.mxu0 0.0
  %3820 = vmatpush1.msra.mxu0 0.0
  %3821 = vmatprep.subr.mxu0 0.0
  %3822 = vmatpush1.msra.mxu0 0.0
  %3823 = vmatprep.subr.mxu0 0.0
  %3824 = vmatpush1.msra.mxu0 0.0
  %3825 = vmatprep.subr.mxu0 0.0
  %3826 = vmatpush1.msra.mxu0 0.0
  %3827 = vmatprep.subr.mxu0 0.0
  %3828 = vmatpush1.msra.mxu0 0.0
  %3829 = vmatprep.subr.mxu0 0.0
  %3830 = vmatpush1.msra.mxu0 0.0
  %3831 = vmatprep.subr.mxu0 0.0
  %3832 = vmatpush1.msra.mxu0 0.0
  %3833 = vmatprep.subr.mxu0 0.0
  %3834 = vmatpush1.msra.mxu0 0.0
  %3835 = vmatprep.subr.mxu0 0.0
  %3836 = vmatpush1.msra.mxu0 0.0
  %3837 = vmatprep.subr.mxu0 0.0
  %3838 = vmatpush1.msra.mxu0 0.0
  %3839 = vmatprep.subr.mxu0 0.0
  %3840 = vmatpush1.msra.mxu0 0.0
  %3841 = vmatprep.subr.mxu0 0.0
  %3842 = vmatpush1.msra.mxu0 0.0
  %3843 = vmatprep.mubr.f32.mxu0 0.0
  %v3844 = vand.u32 %v3679, 4294901760
  %3845 = vmatmul.mubr.f32.gmra.mrb[0].mxu0 %v3844
  %v3846 = vpop.f32.mrb[0].mxu0
  %v3847 = vadd.f32 %v3765, %v3846
  %v3848 = vpop.f32.mrb[0].mxu0
  %v3849 = vadd.f32 %v3767, %v3848
  %3850 = vdwg.mxu0
  %v3851 = vand.u32 %v3686, 4294901760
  %v3852 = vsub.f32 %v3686, %v3851
  %3853 = vmatprep.subr.mxu0 %v3852
  %v3854 = vand.u32 %v3683, 4294901760
  %v3855 = vsub.f32 %v3683, %v3854
  %3856 = vmatpush1.msra.mxu0 %v3855
  %3857 = vmatprep.subr.mxu0 0.0
  %3858 = vmatpush1.msra.mxu0 0.0
  %3859 = vmatprep.subr.mxu0 0.0
  %3860 = vmatpush1.msra.mxu0 0.0
  %3861 = vmatprep.subr.mxu0 0.0
  %3862 = vmatpush1.msra.mxu0 0.0
  %3863 = vmatprep.subr.mxu0 0.0
  %3864 = vmatpush1.msra.mxu0 0.0
  %3865 = vmatprep.subr.mxu0 0.0
  %3866 = vmatpush1.msra.mxu0 0.0
  %3867 = vmatprep.subr.mxu0 0.0
  %3868 = vmatpush1.msra.mxu0 0.0
  %3869 = vmatprep.subr.mxu0 0.0
  %3870 = vmatpush1.msra.mxu0 0.0
  %3871 = vmatprep.subr.mxu0 0.0
  %3872 = vmatpush1.msra.mxu0 0.0
  %3873 = vmatprep.subr.mxu0 0.0
  %3874 = vmatpush1.msra.mxu0 0.0
  %3875 = vmatprep.subr.mxu0 0.0
  %3876 = vmatpush1.msra.mxu0 0.0
  %3877 = vmatprep.subr.mxu0 0.0
  %3878 = vmatpush1.msra.mxu0 0.0
  %3879 = vmatprep.subr.mxu0 0.0
  %3880 = vmatpush1.msra.mxu0 0.0
  %3881 = vmatprep.subr.mxu0 0.0
  %3882 = vmatpush1.msra.mxu0 0.0
  %3883 = vmatprep.subr.mxu0 0.0
  %3884 = vmatpush1.msra.mxu0 0.0
  %3885 = vmatprep.subr.mxu0 0.0
  %3886 = vmatpush1.msra.mxu0 0.0
  %3887 = vmatprep.subr.mxu0 0.0
  %3888 = vmatpush1.msra.mxu0 0.0
  %3889 = vmatprep.subr.mxu0 0.0
  %3890 = vmatpush1.msra.mxu0 0.0
  %3891 = vmatprep.subr.mxu0 0.0
  %3892 = vmatpush1.msra.mxu0 0.0
  %3893 = vmatprep.subr.mxu0 0.0
  %3894 = vmatpush1.msra.mxu0 0.0
  %3895 = vmatprep.subr.mxu0 0.0
  %3896 = vmatpush1.msra.mxu0 0.0
  %3897 = vmatprep.subr.mxu0 0.0
  %3898 = vmatpush1.msra.mxu0 0.0
  %3899 = vmatprep.subr.mxu0 0.0
  %3900 = vmatpush1.msra.mxu0 0.0
  %3901 = vmatprep.subr.mxu0 0.0
  %3902 = vmatpush1.msra.mxu0 0.0
  %3903 = vmatprep.subr.mxu0 0.0
  %3904 = vmatpush1.msra.mxu0 0.0
  %3905 = vmatprep.subr.mxu0 0.0
  %3906 = vmatpush1.msra.mxu0 0.0
  %3907 = vmatprep.subr.mxu0 0.0
  %3908 = vmatpush1.msra.mxu0 0.0
  %3909 = vmatprep.subr.mxu0 0.0
  %3910 = vmatpush1.msra.mxu0 0.0
  %3911 = vmatprep.subr.mxu0 0.0
  %3912 = vmatpush1.msra.mxu0 0.0
  %3913 = vmatprep.subr.mxu0 0.0
  %3914 = vmatpush1.msra.mxu0 0.0
  %3915 = vmatprep.subr.mxu0 0.0
  %3916 = vmatpush1.msra.mxu0 0.0
  %3917 = vmatprep.subr.mxu0 0.0
  %3918 = vmatpush1.msra.mxu0 0.0
  %3919 = vmatprep.mubr.f32.mxu0 0.0
  %v3920 = vand.u32 %v3679, 4294901760
  %v3921 = vsub.f32 %v3679, %v3920
  %3922 = vmatmul.mubr.f32.gmra.mrb[0].mxu0 %v3921
  %v3923 = vpop.f32.mrb[0].mxu0
  %v3924 = vadd.f32 %v3847, %v3923
  %v3925 = vpop.f32.mrb[0].mxu0
  %v3926 = vadd.f32 %v3849, %v3925
  %3927 = vdwg.mxu0
  %v3928 = vand.u32 %v3686, 4294901760
  %3929 = vmatprep.subr.mxu0 %v3928
  %v3930 = vand.u32 %v3683, 4294901760
  %3931 = vmatpush1.msra.mxu0 %v3930
  %3932 = vmatprep.subr.mxu0 0.0
  %3933 = vmatpush1.msra.mxu0 0.0
  %3934 = vmatprep.subr.mxu0 0.0
  %3935 = vmatpush1.msra.mxu0 0.0
  %3936 = vmatprep.subr.mxu0 0.0
  %3937 = vmatpush1.msra.mxu0 0.0
  %3938 = vmatprep.subr.mxu0 0.0
  %3939 = vmatpush1.msra.mxu0 0.0
  %3940 = vmatprep.subr.mxu0 0.0
  %3941 = vmatpush1.msra.mxu0 0.0
  %3942 = vmatprep.subr.mxu0 0.0
  %3943 = vmatpush1.msra.mxu0 0.0
  %3944 = vmatprep.subr.mxu0 0.0
  %3945 = vmatpush1.msra.mxu0 0.0
  %3946 = vmatprep.subr.mxu0 0.0
  %3947 = vmatpush1.msra.mxu0 0.0
  %3948 = vmatprep.subr.mxu0 0.0
  %3949 = vmatpush1.msra.mxu0 0.0
  %3950 = vmatprep.subr.mxu0 0.0
  %3951 = vmatpush1.msra.mxu0 0.0
  %3952 = vmatprep.subr.mxu0 0.0
  %3953 = vmatpush1.msra.mxu0 0.0
  %3954 = vmatprep.subr.mxu0 0.0
  %3955 = vmatpush1.msra.mxu0 0.0
  %3956 = vmatprep.subr.mxu0 0.0
  %3957 = vmatpush1.msra.mxu0 0.0
  %3958 = vmatprep.subr.mxu0 0.0
  %3959 = vmatpush1.msra.mxu0 0.0
  %3960 = vmatprep.subr.mxu0 0.0
  %3961 = vmatpush1.msra.mxu0 0.0
  %3962 = vmatprep.subr.mxu0 0.0
  %3963 = vmatpush1.msra.mxu0 0.0
  %3964 = vmatprep.subr.mxu0 0.0
  %3965 = vmatpush1.msra.mxu0 0.0
  %3966 = vmatprep.subr.mxu0 0.0
  %3967 = vmatpush1.msra.mxu0 0.0
  %3968 = vmatprep.subr.mxu0 0.0
  %3969 = vmatpush1.msra.mxu0 0.0
  %3970 = vmatprep.subr.mxu0 0.0
  %3971 = vmatpush1.msra.mxu0 0.0
  %3972 = vmatprep.subr.mxu0 0.0
  %3973 = vmatpush1.msra.mxu0 0.0
  %3974 = vmatprep.subr.mxu0 0.0
  %3975 = vmatpush1.msra.mxu0 0.0
  %3976 = vmatprep.subr.mxu0 0.0
  %3977 = vmatpush1.msra.mxu0 0.0
  %3978 = vmatprep.subr.mxu0 0.0
  %3979 = vmatpush1.msra.mxu0 0.0
  %3980 = vmatprep.subr.mxu0 0.0
  %3981 = vmatpush1.msra.mxu0 0.0
  %3982 = vmatprep.subr.mxu0 0.0
  %3983 = vmatpush1.msra.mxu0 0.0
  %3984 = vmatprep.subr.mxu0 0.0
  %3985 = vmatpush1.msra.mxu0 0.0
  %3986 = vmatprep.subr.mxu0 0.0
  %3987 = vmatpush1.msra.mxu0 0.0
  %3988 = vmatprep.subr.mxu0 0.0
  %3989 = vmatpush1.msra.mxu0 0.0
  %3990 = vmatprep.subr.mxu0 0.0
  %3991 = vmatpush1.msra.mxu0 0.0
  %3992 = vmatprep.subr.mxu0 0.0
  %3993 = vmatpush1.msra.mxu0 0.0
  %3994 = vmatprep.mubr.f32.mxu0 0.0
  %v3995 = vand.u32 %v3679, 4294901760
  %v3996 = vsub.f32 %v3679, %v3995
  %v3997 = vand.u32 %v3996, 4294901760
  %3998 = vmatmul.mubr.f32.gmra.mrb[0].mxu0 %v3997
  %v3999 = vpop.f32.mrb[0].mxu0
  %v4000 = vadd.f32 %v3924, %v3999
  %v4001 = vpop.f32.mrb[0].mxu0
  %v4002 = vadd.f32 %v3926, %v4001
  %4003 = vdwg.mxu0
  %v4004 = vand.u32 %v3686, 4294901760
  %v4005 = vsub.f32 %v3686, %v4004
  %v4006 = vand.u32 %v4005, 4294901760
  %4007 = vmatprep.subr.mxu0 %v4006
  %v4008 = vand.u32 %v3683, 4294901760
  %v4009 = vsub.f32 %v3683, %v4008
  %v4010 = vand.u32 %v4009, 4294901760
  %4011 = vmatpush1.msra.mxu0 %v4010
  %4012 = vmatprep.subr.mxu0 0.0
  %4013 = vmatpush1.msra.mxu0 0.0
  %4014 = vmatprep.subr.mxu0 0.0
  %4015 = vmatpush1.msra.mxu0 0.0
  %4016 = vmatprep.subr.mxu0 0.0
  %4017 = vmatpush1.msra.mxu0 0.0
  %4018 = vmatprep.subr.mxu0 0.0
  %4019 = vmatpush1.msra.mxu0 0.0
  %4020 = vmatprep.subr.mxu0 0.0
  %4021 = vmatpush1.msra.mxu0 0.0
  %4022 = vmatprep.subr.mxu0 0.0
  %4023 = vmatpush1.msra.mxu0 0.0
  %4024 = vmatprep.subr.mxu0 0.0
  %4025 = vmatpush1.msra.mxu0 0.0
  %4026 = vmatprep.subr.mxu0 0.0
  %4027 = vmatpush1.msra.mxu0 0.0
  %4028 = vmatprep.subr.mxu0 0.0
  %4029 = vmatpush1.msra.mxu0 0.0
  %4030 = vmatprep.subr.mxu0 0.0
  %4031 = vmatpush1.msra.mxu0 0.0
  %4032 = vmatprep.subr.mxu0 0.0
  %4033 = vmatpush1.msra.mxu0 0.0
  %4034 = vmatprep.subr.mxu0 0.0
  %4035 = vmatpush1.msra.mxu0 0.0
  %4036 = vmatprep.subr.mxu0 0.0
  %4037 = vmatpush1.msra.mxu0 0.0
  %4038 = vmatprep.subr.mxu0 0.0
  %4039 = vmatpush1.msra.mxu0 0.0
  %4040 = vmatprep.subr.mxu0 0.0
  %4041 = vmatpush1.msra.mxu0 0.0
  %4042 = vmatprep.subr.mxu0 0.0
  %4043 = vmatpush1.msra.mxu0 0.0
  %4044 = vmatprep.subr.mxu0 0.0
  %4045 = vmatpush1.msra.mxu0 0.0
  %4046 = vmatprep.subr.mxu0 0.0
  %4047 = vmatpush1.msra.mxu0 0.0
  %4048 = vmatprep.subr.mxu0 0.0
  %4049 = vmatpush1.msra.mxu0 0.0
  %4050 = vmatprep.subr.mxu0 0.0
  %4051 = vmatpush1.msra.mxu0 0.0
  %4052 = vmatprep.subr.mxu0 0.0
  %4053 = vmatpush1.msra.mxu0 0.0
  %4054 = vmatprep.subr.mxu0 0.0
  %4055 = vmatpush1.msra.mxu0 0.0
  %4056 = vmatprep.subr.mxu0 0.0
  %4057 = vmatpush1.msra.mxu0 0.0
  %4058 = vmatprep.subr.mxu0 0.0
  %4059 = vmatpush1.msra.mxu0 0.0
  %4060 = vmatprep.subr.mxu0 0.0
  %4061 = vmatpush1.msra.mxu0 0.0
  %4062 = vmatprep.subr.mxu0 0.0
  %4063 = vmatpush1.msra.mxu0 0.0
  %4064 = vmatprep.subr.mxu0 0.0
  %4065 = vmatpush1.msra.mxu0 0.0
  %4066 = vmatprep.subr.mxu0 0.0
  %4067 = vmatpush1.msra.mxu0 0.0
  %4068 = vmatprep.subr.mxu0 0.0
  %4069 = vmatpush1.msra.mxu0 0.0
  %4070 = vmatprep.subr.mxu0 0.0
  %4071 = vmatpush1.msra.mxu0 0.0
  %4072 = vmatprep.subr.mxu0 0.0
  %4073 = vmatpush1.msra.mxu0 0.0
  %4074 = vmatprep.mubr.f32.mxu0 0.0
  %v4075 = vand.u32 %v3679, 4294901760
  %4076 = vmatmul.mubr.f32.gmra.mrb[0].mxu0 %v4075
  %v4077 = vpop.f32.mrb[0].mxu0
  %v4078 = vadd.f32 %v4000, %v4077
  %v4079 = vpop.f32.mrb[0].mxu0
  %v4080 = vadd.f32 %v4002, %v4079
  %4081 = vdwg.mxu0
  %v4082 = vand.u32 %v3686, 4294901760
  %4083 = vmatprep.subr.mxu0 %v4082
  %v4084 = vand.u32 %v3683, 4294901760
  %4085 = vmatpush1.msra.mxu0 %v4084
  %4086 = vmatprep.subr.mxu0 0.0
  %4087 = vmatpush1.msra.mxu0 0.0
  %4088 = vmatprep.subr.mxu0 0.0
  %4089 = vmatpush1.msra.mxu0 0.0
  %4090 = vmatprep.subr.mxu0 0.0
  %4091 = vmatpush1.msra.mxu0 0.0
  %4092 = vmatprep.subr.mxu0 0.0
  %4093 = vmatpush1.msra.mxu0 0.0
  %4094 = vmatprep.subr.mxu0 0.0
  %4095 = vmatpush1.msra.mxu0 0.0
  %4096 = vmatprep.subr.mxu0 0.0
  %4097 = vmatpush1.msra.mxu0 0.0
  %4098 = vmatprep.subr.mxu0 0.0
  %4099 = vmatpush1.msra.mxu0 0.0
  %4100 = vmatprep.subr.mxu0 0.0
  %4101 = vmatpush1.msra.mxu0 0.0
  %4102 = vmatprep.subr.mxu0 0.0
  %4103 = vmatpush1.msra.mxu0 0.0
  %4104 = vmatprep.subr.mxu0 0.0
  %4105 = vmatpush1.msra.mxu0 0.0
  %4106 = vmatprep.subr.mxu0 0.0
  %4107 = vmatpush1.msra.mxu0 0.0
  %4108 = vmatprep.subr.mxu0 0.0
  %4109 = vmatpush1.msra.mxu0 0.0
  %4110 = vmatprep.subr.mxu0 0.0
  %4111 = vmatpush1.msra.mxu0 0.0
  %4112 = vmatprep.subr.mxu0 0.0
  %4113 = vmatpush1.msra.mxu0 0.0
  %4114 = vmatprep.subr.mxu0 0.0
  %4115 = vmatpush1.msra.mxu0 0.0
  %4116 = vmatprep.subr.mxu0 0.0
  %4117 = vmatpush1.msra.mxu0 0.0
  %4118 = vmatprep.subr.mxu0 0.0
  %4119 = vmatpush1.msra.mxu0 0.0
  %4120 = vmatprep.subr.mxu0 0.0
  %4121 = vmatpush1.msra.mxu0 0.0
  %4122 = vmatprep.subr.mxu0 0.0
  %4123 = vmatpush1.msra.mxu0 0.0
  %4124 = vmatprep.subr.mxu0 0.0
  %4125 = vmatpush1.msra.mxu0 0.0
  %4126 = vmatprep.subr.mxu0 0.0
  %4127 = vmatpush1.msra.mxu0 0.0
  %4128 = vmatprep.subr.mxu0 0.0
  %4129 = vmatpush1.msra.mxu0 0.0
  %4130 = vmatprep.subr.mxu0 0.0
  %4131 = vmatpush1.msra.mxu0 0.0
  %4132 = vmatprep.subr.mxu0 0.0
  %4133 = vmatpush1.msra.mxu0 0.0
  %4134 = vmatprep.subr.mxu0 0.0
  %4135 = vmatpush1.msra.mxu0 0.0
  %4136 = vmatprep.subr.mxu0 0.0
  %4137 = vmatpush1.msra.mxu0 0.0
  %4138 = vmatprep.subr.mxu0 0.0
  %4139 = vmatpush1.msra.mxu0 0.0
  %4140 = vmatprep.subr.mxu0 0.0
  %4141 = vmatpush1.msra.mxu0 0.0
  %4142 = vmatprep.subr.mxu0 0.0
  %4143 = vmatpush1.msra.mxu0 0.0
  %4144 = vmatprep.subr.mxu0 0.0
  %4145 = vmatpush1.msra.mxu0 0.0
  %4146 = vmatprep.subr.mxu0 0.0
  %4147 = vmatpush1.msra.mxu0 0.0
  %4148 = vmatprep.mubr.f32.mxu0 0.0
  %v4149 = vand.u32 %v3679, 4294901760
  %4150 = vmatmul.mubr.f32.gmra.mrb[0].mxu0 %v4149
  %v4151 = vpop.f32.mrb[0].mxu0
  %v4152 = vadd.f32 %v4078, %v4151
  %v4153 = vpop.f32.mrb[0].mxu0
  %v4154 = vadd.f32 %v4080, %v4153
  %4155 = vdwg.mxu0
  %4156 = vmatprep.subr.mxu0 0.0
  %v4157 = vand.u32 %v3689, 4294901760
  %4158 = vmatpush1.msra.mxu0 %v4157
  %4159 = vmatprep.subr.mxu0 0.0
  %4160 = vmatpush1.msra.mxu0 0.0
  %4161 = vmatprep.subr.mxu0 0.0
  %4162 = vmatpush1.msra.mxu0 0.0
  %4163 = vmatprep.subr.mxu0 0.0
  %4164 = vmatpush1.msra.mxu0 0.0
  %4165 = vmatprep.subr.mxu0 0.0
  %4166 = vmatpush1.msra.mxu0 0.0
  %4167 = vmatprep.subr.mxu0 0.0
  %4168 = vmatpush1.msra.mxu0 0.0
  %4169 = vmatprep.subr.mxu0 0.0
  %4170 = vmatpush1.msra.mxu0 0.0
  %4171 = vmatprep.subr.mxu0 0.0
  %4172 = vmatpush1.msra.mxu0 0.0
  %4173 = vmatprep.subr.mxu0 0.0
  %4174 = vmatpush1.msra.mxu0 0.0
  %4175 = vmatprep.subr.mxu0 0.0
  %4176 = vmatpush1.msra.mxu0 0.0
  %4177 = vmatprep.subr.mxu0 0.0
  %4178 = vmatpush1.msra.mxu0 0.0
  %4179 = vmatprep.subr.mxu0 0.0
  %4180 = vmatpush1.msra.mxu0 0.0
  %4181 = vmatprep.subr.mxu0 0.0
  %4182 = vmatpush1.msra.mxu0 0.0
  %4183 = vmatprep.subr.mxu0 0.0
  %4184 = vmatpush1.msra.mxu0 0.0
  %4185 = vmatprep.subr.mxu0 0.0
  %4186 = vmatpush1.msra.mxu0 0.0
  %4187 = vmatprep.subr.mxu0 0.0
  %4188 = vmatpush1.msra.mxu0 0.0
  %4189 = vmatprep.subr.mxu0 0.0
  %4190 = vmatpush1.msra.mxu0 0.0
  %4191 = vmatprep.subr.mxu0 0.0
  %4192 = vmatpush1.msra.mxu0 0.0
  %4193 = vmatprep.subr.mxu0 0.0
  %4194 = vmatpush1.msra.mxu0 0.0
  %4195 = vmatprep.subr.mxu0 0.0
  %4196 = vmatpush1.msra.mxu0 0.0
  %4197 = vmatprep.subr.mxu0 0.0
  %4198 = vmatpush1.msra.mxu0 0.0
  %4199 = vmatprep.subr.mxu0 0.0
  %4200 = vmatpush1.msra.mxu0 0.0
  %4201 = vmatprep.subr.mxu0 0.0
  %4202 = vmatpush1.msra.mxu0 0.0
  %4203 = vmatprep.subr.mxu0 0.0
  %4204 = vmatpush1.msra.mxu0 0.0
  %4205 = vmatprep.subr.mxu0 0.0
  %4206 = vmatpush1.msra.mxu0 0.0
  %4207 = vmatprep.subr.mxu0 0.0
  %4208 = vmatpush1.msra.mxu0 0.0
  %4209 = vmatprep.subr.mxu0 0.0
  %4210 = vmatpush1.msra.mxu0 0.0
  %4211 = vmatprep.subr.mxu0 0.0
  %4212 = vmatpush1.msra.mxu0 0.0
  %4213 = vmatprep.subr.mxu0 0.0
  %4214 = vmatpush1.msra.mxu0 0.0
  %4215 = vmatprep.subr.mxu0 0.0
  %4216 = vmatpush1.msra.mxu0 0.0
  %4217 = vmatprep.subr.mxu0 0.0
  %4218 = vmatpush1.msra.mxu0 0.0
  %4219 = vmatprep.subr.mxu0 0.0
  %4220 = vmatpush1.msra.mxu0 0.0
  %4221 = vmatprep.mubr.f32.mxu0 0.0
  %v4222 = vand.u32 %v3679, 4294901760
  %v4223 = vsub.f32 %v3679, %v4222
  %v4224 = vand.u32 %v4223, 4294901760
  %v4225 = vsub.f32 %v4223, %v4224
  %v4226 = vand.u32 %v4225, 4294901760
  %4227 = vmatmul.mubr.f32.gmra.mrb[0].mxu0 %v4226
  %v4228 = vpop.f32.mrb[0].mxu0
  %v4229 = vadd.f32 0.0, %v4228
  %v4230 = vpop.f32.mrb[0].mxu0
  %4231 = vdwg.mxu0
  %4232 = vmatprep.subr.mxu0 0.0
  %v4233 = vand.u32 %v3689, 4294901760
  %v4234 = vsub.f32 %v3689, %v4233
  %v4235 = vand.u32 %v4234, 4294901760
  %v4236 = vsub.f32 %v4234, %v4235
  %v4237 = vand.u32 %v4236, 4294901760
  %4238 = vmatpush1.msra.mxu0 %v4237
  %4239 = vmatprep.subr.mxu0 0.0
  %4240 = vmatpush1.msra.mxu0 0.0
  %4241 = vmatprep.subr.mxu0 0.0
  %4242 = vmatpush1.msra.mxu0 0.0
  %4243 = vmatprep.subr.mxu0 0.0
  %4244 = vmatpush1.msra.mxu0 0.0
  %4245 = vmatprep.subr.mxu0 0.0
  %4246 = vmatpush1.msra.mxu0 0.0
  %4247 = vmatprep.subr.mxu0 0.0
  %4248 = vmatpush1.msra.mxu0 0.0
  %4249 = vmatprep.subr.mxu0 0.0
  %4250 = vmatpush1.msra.mxu0 0.0
  %4251 = vmatprep.subr.mxu0 0.0
  %4252 = vmatpush1.msra.mxu0 0.0
  %4253 = vmatprep.subr.mxu0 0.0
  %4254 = vmatpush1.msra.mxu0 0.0
  %4255 = vmatprep.subr.mxu0 0.0
  %4256 = vmatpush1.msra.mxu0 0.0
  %4257 = vmatprep.subr.mxu0 0.0
  %4258 = vmatpush1.msra.mxu0 0.0
  %4259 = vmatprep.subr.mxu0 0.0
  %4260 = vmatpush1.msra.mxu0 0.0
  %4261 = vmatprep.subr.mxu0 0.0
  %4262 = vmatpush1.msra.mxu0 0.0
  %4263 = vmatprep.subr.mxu0 0.0
  %4264 = vmatpush1.msra.mxu0 0.0
  %4265 = vmatprep.subr.mxu0 0.0
  %4266 = vmatpush1.msra.mxu0 0.0
  %4267 = vmatprep.subr.mxu0 0.0
  %4268 = vmatpush1.msra.mxu0 0.0
  %4269 = vmatprep.subr.mxu0 0.0
  %4270 = vmatpush1.msra.mxu0 0.0
  %4271 = vmatprep.subr.mxu0 0.0
  %4272 = vmatpush1.msra.mxu0 0.0
  %4273 = vmatprep.subr.mxu0 0.0
  %4274 = vmatpush1.msra.mxu0 0.0
  %4275 = vmatprep.subr.mxu0 0.0
  %4276 = vmatpush1.msra.mxu0 0.0
  %4277 = vmatprep.subr.mxu0 0.0
  %4278 = vmatpush1.msra.mxu0 0.0
  %4279 = vmatprep.subr.mxu0 0.0
  %4280 = vmatpush1.msra.mxu0 0.0
  %4281 = vmatprep.subr.mxu0 0.0
  %4282 = vmatpush1.msra.mxu0 0.0
  %4283 = vmatprep.subr.mxu0 0.0
  %4284 = vmatpush1.msra.mxu0 0.0
  %4285 = vmatprep.subr.mxu0 0.0
  %4286 = vmatpush1.msra.mxu0 0.0
  %4287 = vmatprep.subr.mxu0 0.0
  %4288 = vmatpush1.msra.mxu0 0.0
  %4289 = vmatprep.subr.mxu0 0.0
  %4290 = vmatpush1.msra.mxu0 0.0
  %4291 = vmatprep.subr.mxu0 0.0
  %4292 = vmatpush1.msra.mxu0 0.0
  %4293 = vmatprep.subr.mxu0 0.0
  %4294 = vmatpush1.msra.mxu0 0.0
  %4295 = vmatprep.subr.mxu0 0.0
  %4296 = vmatpush1.msra.mxu0 0.0
  %4297 = vmatprep.subr.mxu0 0.0
  %4298 = vmatpush1.msra.mxu0 0.0
  %4299 = vmatprep.subr.mxu0 0.0
  %4300 = vmatpush1.msra.mxu0 0.0
  %4301 = vmatprep.mubr.f32.mxu0 0.0
  %v4302 = vand.u32 %v3679, 4294901760
  %4303 = vmatmul.mubr.f32.gmra.mrb[0].mxu0 %v4302
  %v4304 = vpop.f32.mrb[0].mxu0
  %v4305 = vadd.f32 %v4229, %v4304
  %v4306 = vpop.f32.mrb[0].mxu0
  %4307 = vdwg.mxu0
  %4308 = vmatprep.subr.mxu0 0.0
  %v4309 = vand.u32 %v3689, 4294901760
  %v4310 = vsub.f32 %v3689, %v4309
  %4311 = vmatpush1.msra.mxu0 %v4310
  %4312 = vmatprep.subr.mxu0 0.0
  %4313 = vmatpush1.msra.mxu0 0.0
  %4314 = vmatprep.subr.mxu0 0.0
  %4315 = vmatpush1.msra.mxu0 0.0
  %4316 = vmatprep.subr.mxu0 0.0
  %4317 = vmatpush1.msra.mxu0 0.0
  %4318 = vmatprep.subr.mxu0 0.0
  %4319 = vmatpush1.msra.mxu0 0.0
  %4320 = vmatprep.subr.mxu0 0.0
  %4321 = vmatpush1.msra.mxu0 0.0
  %4322 = vmatprep.subr.mxu0 0.0
  %4323 = vmatpush1.msra.mxu0 0.0
  %4324 = vmatprep.subr.mxu0 0.0
  %4325 = vmatpush1.msra.mxu0 0.0
  %4326 = vmatprep.subr.mxu0 0.0
  %4327 = vmatpush1.msra.mxu0 0.0
  %4328 = vmatprep.subr.mxu0 0.0
  %4329 = vmatpush1.msra.mxu0 0.0
  %4330 = vmatprep.subr.mxu0 0.0
  %4331 = vmatpush1.msra.mxu0 0.0
  %4332 = vmatprep.subr.mxu0 0.0
  %4333 = vmatpush1.msra.mxu0 0.0
  %4334 = vmatprep.subr.mxu0 0.0
  %4335 = vmatpush1.msra.mxu0 0.0
  %4336 = vmatprep.subr.mxu0 0.0
  %4337 = vmatpush1.msra.mxu0 0.0
  %4338 = vmatprep.subr.mxu0 0.0
  %4339 = vmatpush1.msra.mxu0 0.0
  %4340 = vmatprep.subr.mxu0 0.0
  %4341 = vmatpush1.msra.mxu0 0.0
  %4342 = vmatprep.subr.mxu0 0.0
  %4343 = vmatpush1.msra.mxu0 0.0
  %4344 = vmatprep.subr.mxu0 0.0
  %4345 = vmatpush1.msra.mxu0 0.0
  %4346 = vmatprep.subr.mxu0 0.0
  %4347 = vmatpush1.msra.mxu0 0.0
  %4348 = vmatprep.subr.mxu0 0.0
  %4349 = vmatpush1.msra.mxu0 0.0
  %4350 = vmatprep.subr.mxu0 0.0
  %4351 = vmatpush1.msra.mxu0 0.0
  %4352 = vmatprep.subr.mxu0 0.0
  %4353 = vmatpush1.msra.mxu0 0.0
  %4354 = vmatprep.subr.mxu0 0.0
  %4355 = vmatpush1.msra.mxu0 0.0
  %4356 = vmatprep.subr.mxu0 0.0
  %4357 = vmatpush1.msra.mxu0 0.0
  %4358 = vmatprep.subr.mxu0 0.0
  %4359 = vmatpush1.msra.mxu0 0.0
  %4360 = vmatprep.subr.mxu0 0.0
  %4361 = vmatpush1.msra.mxu0 0.0
  %4362 = vmatprep.subr.mxu0 0.0
  %4363 = vmatpush1.msra.mxu0 0.0
  %4364 = vmatprep.subr.mxu0 0.0
  %4365 = vmatpush1.msra.mxu0 0.0
  %4366 = vmatprep.subr.mxu0 0.0
  %4367 = vmatpush1.msra.mxu0 0.0
  %4368 = vmatprep.subr.mxu0 0.0
  %4369 = vmatpush1.msra.mxu0 0.0
  %4370 = vmatprep.subr.mxu0 0.0
  %4371 = vmatpush1.msra.mxu0 0.0
  %4372 = vmatprep.subr.mxu0 0.0
  %4373 = vmatpush1.msra.mxu0 0.0
  %4374 = vmatprep.mubr.f32.mxu0 0.0
  %v4375 = vand.u32 %v3679, 4294901760
  %v4376 = vsub.f32 %v3679, %v4375
  %4377 = vmatmul.mubr.f32.gmra.mrb[0].mxu0 %v4376
  %v4378 = vpop.f32.mrb[0].mxu0
  %v4379 = vadd.f32 %v4305, %v4378
  %v4380 = vpop.f32.mrb[0].mxu0
  %4381 = vdwg.mxu0
  %4382 = vmatprep.subr.mxu0 0.0
  %v4383 = vand.u32 %v3689, 4294901760
  %4384 = vmatpush1.msra.mxu0 %v4383
  %4385 = vmatprep.subr.mxu0 0.0
  %4386 = vmatpush1.msra.mxu0 0.0
  %4387 = vmatprep.subr.mxu0 0.0
  %4388 = vmatpush1.msra.mxu0 0.0
  %4389 = vmatprep.subr.mxu0 0.0
  %4390 = vmatpush1.msra.mxu0 0.0
  %4391 = vmatprep.subr.mxu0 0.0
  %4392 = vmatpush1.msra.mxu0 0.0
  %4393 = vmatprep.subr.mxu0 0.0
  %4394 = vmatpush1.msra.mxu0 0.0
  %4395 = vmatprep.subr.mxu0 0.0
  %4396 = vmatpush1.msra.mxu0 0.0
  %4397 = vmatprep.subr.mxu0 0.0
  %4398 = vmatpush1.msra.mxu0 0.0
  %4399 = vmatprep.subr.mxu0 0.0
  %4400 = vmatpush1.msra.mxu0 0.0
  %4401 = vmatprep.subr.mxu0 0.0
  %4402 = vmatpush1.msra.mxu0 0.0
  %4403 = vmatprep.subr.mxu0 0.0
  %4404 = vmatpush1.msra.mxu0 0.0
  %4405 = vmatprep.subr.mxu0 0.0
  %4406 = vmatpush1.msra.mxu0 0.0
  %4407 = vmatprep.subr.mxu0 0.0
  %4408 = vmatpush1.msra.mxu0 0.0
  %4409 = vmatprep.subr.mxu0 0.0
  %4410 = vmatpush1.msra.mxu0 0.0
  %4411 = vmatprep.subr.mxu0 0.0
  %4412 = vmatpush1.msra.mxu0 0.0
  %4413 = vmatprep.subr.mxu0 0.0
  %4414 = vmatpush1.msra.mxu0 0.0
  %4415 = vmatprep.subr.mxu0 0.0
  %4416 = vmatpush1.msra.mxu0 0.0
  %4417 = vmatprep.subr.mxu0 0.0
  %4418 = vmatpush1.msra.mxu0 0.0
  %4419 = vmatprep.subr.mxu0 0.0
  %4420 = vmatpush1.msra.mxu0 0.0
  %4421 = vmatprep.subr.mxu0 0.0
  %4422 = vmatpush1.msra.mxu0 0.0
  %4423 = vmatprep.subr.mxu0 0.0
  %4424 = vmatpush1.msra.mxu0 0.0
  %4425 = vmatprep.subr.mxu0 0.0
  %4426 = vmatpush1.msra.mxu0 0.0
  %4427 = vmatprep.subr.mxu0 0.0
  %4428 = vmatpush1.msra.mxu0 0.0
  %4429 = vmatprep.subr.mxu0 0.0
  %4430 = vmatpush1.msra.mxu0 0.0
  %4431 = vmatprep.subr.mxu0 0.0
  %4432 = vmatpush1.msra.mxu0 0.0
  %4433 = vmatprep.subr.mxu0 0.0
  %4434 = vmatpush1.msra.mxu0 0.0
  %4435 = vmatprep.subr.mxu0 0.0
  %4436 = vmatpush1.msra.mxu0 0.0
  %4437 = vmatprep.subr.mxu0 0.0
  %4438 = vmatpush1.msra.mxu0 0.0
  %4439 = vmatprep.subr.mxu0 0.0
  %4440 = vmatpush1.msra.mxu0 0.0
  %4441 = vmatprep.subr.mxu0 0.0
  %4442 = vmatpush1.msra.mxu0 0.0
  %4443 = vmatprep.subr.mxu0 0.0
  %4444 = vmatpush1.msra.mxu0 0.0
  %4445 = vmatprep.subr.mxu0 0.0
  %4446 = vmatpush1.msra.mxu0 0.0
  %4447 = vmatprep.mubr.f32.mxu0 0.0
  %v4448 = vand.u32 %v3679, 4294901760
  %v4449 = vsub.f32 %v3679, %v4448
  %v4450 = vand.u32 %v4449, 4294901760
  %4451 = vmatmul.mubr.f32.gmra.mrb[0].mxu0 %v4450
  %v4452 = vpop.f32.mrb[0].mxu0
  %v4453 = vadd.f32 %v4379, %v4452
  %v4454 = vpop.f32.mrb[0].mxu0
  %4455 = vdwg.mxu0
  %4456 = vmatprep.subr.mxu0 0.0
  %v4457 = vand.u32 %v3689, 4294901760
  %v4458 = vsub.f32 %v3689, %v4457
  %v4459 = vand.u32 %v4458, 4294901760
  %4460 = vmatpush1.msra.mxu0 %v4459
  %4461 = vmatprep.subr.mxu0 0.0
  %4462 = vmatpush1.msra.mxu0 0.0
  %4463 = vmatprep.subr.mxu0 0.0
  %4464 = vmatpush1.msra.mxu0 0.0
  %4465 = vmatprep.subr.mxu0 0.0
  %4466 = vmatpush1.msra.mxu0 0.0
  %4467 = vmatprep.subr.mxu0 0.0
  %4468 = vmatpush1.msra.mxu0 0.0
  %4469 = vmatprep.subr.mxu0 0.0
  %4470 = vmatpush1.msra.mxu0 0.0
  %4471 = vmatprep.subr.mxu0 0.0
  %4472 = vmatpush1.msra.mxu0 0.0
  %4473 = vmatprep.subr.mxu0 0.0
  %4474 = vmatpush1.msra.mxu0 0.0
  %4475 = vmatprep.subr.mxu0 0.0
  %4476 = vmatpush1.msra.mxu0 0.0
  %4477 = vmatprep.subr.mxu0 0.0
  %4478 = vmatpush1.msra.mxu0 0.0
  %4479 = vmatprep.subr.mxu0 0.0
  %4480 = vmatpush1.msra.mxu0 0.0
  %4481 = vmatprep.subr.mxu0 0.0
  %4482 = vmatpush1.msra.mxu0 0.0
  %4483 = vmatprep.subr.mxu0 0.0
  %4484 = vmatpush1.msra.mxu0 0.0
  %4485 = vmatprep.subr.mxu0 0.0
  %4486 = vmatpush1.msra.mxu0 0.0
  %4487 = vmatprep.subr.mxu0 0.0
  %4488 = vmatpush1.msra.mxu0 0.0
  %4489 = vmatprep.subr.mxu0 0.0
  %4490 = vmatpush1.msra.mxu0 0.0
  %4491 = vmatprep.subr.mxu0 0.0
  %4492 = vmatpush1.msra.mxu0 0.0
  %4493 = vmatprep.subr.mxu0 0.0
  %4494 = vmatpush1.msra.mxu0 0.0
  %4495 = vmatprep.subr.mxu0 0.0
  %4496 = vmatpush1.msra.mxu0 0.0
  %4497 = vmatprep.subr.mxu0 0.0
  %4498 = vmatpush1.msra.mxu0 0.0
  %4499 = vmatprep.subr.mxu0 0.0
  %4500 = vmatpush1.msra.mxu0 0.0
  %4501 = vmatprep.subr.mxu0 0.0
  %4502 = vmatpush1.msra.mxu0 0.0
  %4503 = vmatprep.subr.mxu0 0.0
  %4504 = vmatpush1.msra.mxu0 0.0
  %4505 = vmatprep.subr.mxu0 0.0
  %4506 = vmatpush1.msra.mxu0 0.0
  %4507 = vmatprep.subr.mxu0 0.0
  %4508 = vmatpush1.msra.mxu0 0.0
  %4509 = vmatprep.subr.mxu0 0.0
  %4510 = vmatpush1.msra.mxu0 0.0
  %4511 = vmatprep.subr.mxu0 0.0
  %4512 = vmatpush1.msra.mxu0 0.0
  %4513 = vmatprep.subr.mxu0 0.0
  %4514 = vmatpush1.msra.mxu0 0.0
  %4515 = vmatprep.subr.mxu0 0.0
  %4516 = vmatpush1.msra.mxu0 0.0
  %4517 = vmatprep.subr.mxu0 0.0
  %4518 = vmatpush1.msra.mxu0 0.0
  %4519 = vmatprep.subr.mxu0 0.0
  %4520 = vmatpush1.msra.mxu0 0.0
  %4521 = vmatprep.subr.mxu0 0.0
  %4522 = vmatpush1.msra.mxu0 0.0
  %4523 = vmatprep.mubr.f32.mxu0 0.0
  %v4524 = vand.u32 %v3679, 4294901760
  %4525 = vmatmul.mubr.f32.gmra.mrb[0].mxu0 %v4524
  %v4526 = vpop.f32.mrb[0].mxu0
  %v4527 = vadd.f32 %v4453, %v4526
  %v4528 = vpop.f32.mrb[0].mxu0
  %4529 = vdwg.mxu0
  %4530 = vmatprep.subr.mxu0 0.0
  %v4531 = vand.u32 %v3689, 4294901760
  %4532 = vmatpush1.msra.mxu0 %v4531
  %4533 = vmatprep.subr.mxu0 0.0
  %4534 = vmatpush1.msra.mxu0 0.0
  %4535 = vmatprep.subr.mxu0 0.0
  %4536 = vmatpush1.msra.mxu0 0.0
  %4537 = vmatprep.subr.mxu0 0.0
  %4538 = vmatpush1.msra.mxu0 0.0
  %4539 = vmatprep.subr.mxu0 0.0
  %4540 = vmatpush1.msra.mxu0 0.0
  %4541 = vmatprep.subr.mxu0 0.0
  %4542 = vmatpush1.msra.mxu0 0.0
  %4543 = vmatprep.subr.mxu0 0.0
  %4544 = vmatpush1.msra.mxu0 0.0
  %4545 = vmatprep.subr.mxu0 0.0
  %4546 = vmatpush1.msra.mxu0 0.0
  %4547 = vmatprep.subr.mxu0 0.0
  %4548 = vmatpush1.msra.mxu0 0.0
  %4549 = vmatprep.subr.mxu0 0.0
  %4550 = vmatpush1.msra.mxu0 0.0
  %4551 = vmatprep.subr.mxu0 0.0
  %4552 = vmatpush1.msra.mxu0 0.0
  %4553 = vmatprep.subr.mxu0 0.0
  %4554 = vmatpush1.msra.mxu0 0.0
  %4555 = vmatprep.subr.mxu0 0.0
  %4556 = vmatpush1.msra.mxu0 0.0
  %4557 = vmatprep.subr.mxu0 0.0
  %4558 = vmatpush1.msra.mxu0 0.0
  %4559 = vmatprep.subr.mxu0 0.0
  %4560 = vmatpush1.msra.mxu0 0.0
  %4561 = vmatprep.subr.mxu0 0.0
  %4562 = vmatpush1.msra.mxu0 0.0
  %4563 = vmatprep.subr.mxu0 0.0
  %4564 = vmatpush1.msra.mxu0 0.0
  %4565 = vmatprep.subr.mxu0 0.0
  %4566 = vmatpush1.msra.mxu0 0.0
  %4567 = vmatprep.subr.mxu0 0.0
  %4568 = vmatpush1.msra.mxu0 0.0
  %4569 = vmatprep.subr.mxu0 0.0
  %4570 = vmatpush1.msra.mxu0 0.0
  %4571 = vmatprep.subr.mxu0 0.0
  %4572 = vmatpush1.msra.mxu0 0.0
  %4573 = vmatprep.subr.mxu0 0.0
  %4574 = vmatpush1.msra.mxu0 0.0
  %4575 = vmatprep.subr.mxu0 0.0
  %4576 = vmatpush1.msra.mxu0 0.0
  %4577 = vmatprep.subr.mxu0 0.0
  %4578 = vmatpush1.msra.mxu0 0.0
  %4579 = vmatprep.subr.mxu0 0.0
  %4580 = vmatpush1.msra.mxu0 0.0
  %4581 = vmatprep.subr.mxu0 0.0
  %4582 = vmatpush1.msra.mxu0 0.0
  %4583 = vmatprep.subr.mxu0 0.0
  %4584 = vmatpush1.msra.mxu0 0.0
  %4585 = vmatprep.subr.mxu0 0.0
  %4586 = vmatpush1.msra.mxu0 0.0
  %4587 = vmatprep.subr.mxu0 0.0
  %4588 = vmatpush1.msra.mxu0 0.0
  %4589 = vmatprep.subr.mxu0 0.0
  %4590 = vmatpush1.msra.mxu0 0.0
  %4591 = vmatprep.subr.mxu0 0.0
  %4592 = vmatpush1.msra.mxu0 0.0
  %4593 = vmatprep.subr.mxu0 0.0
  %4594 = vmatpush1.msra.mxu0 0.0
  %4595 = vmatprep.mubr.f32.mxu0 0.0
  %v4596 = vand.u32 %v3679, 4294901760
  %4597 = vmatmul.mubr.f32.gmra.mrb[0].mxu0 %v4596
  %v4598 = vpop.f32.mrb[0].mxu0
  %v4599 = vadd.f32 %v4527, %v4598
  %v4600 = vpop.f32.mrb[0].mxu0
  %4601 = vdwg.mxu0
  %v4602 = vmul.f32 %v20, %v3133
  %v4603 = vmul.f32 %v21, %v3135
  %v4604 = vmul.f32 %v22, %v3671
  %v4605 = vmul.f32 %v4602, %v4152
  %v4606 = vmul.f32 %v4603, %v4154
  %v4607 = vmul.f32 %v4604, %v4599
  %4608 = vst [vmem:[%s5] sm:$0xff] %v4605
  %4609 = vst [vmem:[%s5 + $0x8] sm:$0xff] %v4606
  %4610 = vst [vmem:[%s5 + $0x10] sm:$0xff] %v4607
  // Predicated region
  $region22: #{attention_forward.3} parent=0 // pred_check
    _
  $region23: #{attention_forward.3} parent=0 // pred_check_branch
    %4612 = sbr.rel (0) target = $region25
  $region24: #{attention_forward.3} parent=0 // pred_region
    _
  $region25: #{attention_forward.3} parent=0 // pred_fallthru
    _
  // Predicated region
  $region26: #{attention_forward.3} parent=0 // pred_check
    _
  $region27: #{attention_forward.3} parent=0 // pred_check_branch
    %4614 = sbr.rel (0) target = $region29
  $region28: #{attention_forward.3} parent=0 // pred_region
    _
  $region29: #{attention_forward.3} parent=0 // pred_fallthru
    _

</llo_original>
